<compile_context>
chip_gen: v7x
topology: tpu7x:2x2x1
jax: 0.10.0
libtpu: 0.0.40
codegen_flags: <defaults>
</compile_context>

<pallas_src>
import functools

import numpy as np
import jax
import jax.numpy as jnp
from jax.experimental import pallas as pl
from jax.experimental.pallas import tpu as pltpu

SIGMA = 4.0  # AnomalyMapGenerator hardcodes sigma = 4.0


def _tpu_vmem_bytes():
    try:
        return int(pltpu.get_tpu_info().vmem_capacity_bytes)
    except Exception:
        return 64 * 1024 * 1024  # conservative default (v7x per-core VMEM)


# ----------------------------- Pallas kernels ------------------------------

def _plane_transform_kernel(l_ref, x_ref, r_ref, o_ref, *, planes, rows):
    """o[p] = L @ x[p] @ R for a group of `planes` planes.

    x arrives flattened as (planes*rows, W), so the right-multiply is a single
    MXU matmul with M = planes*rows and a lane-dense N; only the small
    L @ y[p] left-multiplies run per plane (static unroll).
    """
    L = l_ref[...]
    y = jnp.dot(x_ref[...], r_ref[...], preferred_element_type=jnp.float32)
    y = y.astype(L.dtype)
    for p in range(planes):                       # static unroll
        o_ref[p] = jnp.dot(L, y[p * rows:(p + 1) * rows, :],
                           preferred_element_type=jnp.float32
                           ).astype(o_ref.dtype)


def plane_transform(L, x, R, *, out_dtype=jnp.float32, mx_dtype=jnp.float32,
                    pad_lanes=False, max_planes=64):
    """Apply out[n] = L @ x[n] @ R to every plane of x: (N,H,W) -> (N,Ho,Wo).

    `pad_lanes=True` zero-pads the output lane dim up to a multiple of 128
    (unmasked stores) and crops it back in the wrapper.  `mx_dtype`/`out_dtype`
    select bf16 operands/outputs for the feature path (f32 accumulation).
    """
    L = np.asarray(L, np.float32)
    R = np.asarray(R, np.float32)
    N, H, W = x.shape
    Ho, Wo = L.shape[0], R.shape[1]

    Wo_pad = Wo
    if pad_lanes and Wo % 128 != 0:
        Wo_pad = ((Wo + 127) // 128) * 128
        R = np.pad(R, ((0, 0), (0, Wo_pad - Wo)))

    P = min(N, max_planes)                        # planes per grid step
    N_pad = ((N + P - 1) // P) * P                # pad N, no divisor search
    xj = x.astype(mx_dtype)
    if N_pad != N:
        xj = jnp.pad(xj, ((0, N_pad - N), (0, 0), (0, 0)))
    x2d = xj.reshape(N_pad * H, W)                # leading-dim merge (free)

    kernel = functools.partial(_plane_transform_kernel, planes=P, rows=H)

    out = pl.pallas_call(
        kernel,
        out_shape=jax.ShapeDtypeStruct((N_pad, Ho, Wo_pad), out_dtype),
        grid=(N_pad // P,),
        in_specs=[pl.BlockSpec((Ho, H), lambda n: (0, 0)),       # L resident
                  pl.BlockSpec((P * H, W), lambda n: (n, 0)),    # plane group
                  pl.BlockSpec((W, Wo_pad), lambda n: (0, 0))],  # R resident
        out_specs=pl.BlockSpec((P, Ho, Wo_pad), lambda n: (n, 0, 0)),
        compiler_params=pltpu.CompilerParams(dimension_semantics=("parallel",)),
    )(jnp.asarray(L, mx_dtype), x2d, jnp.asarray(R, mx_dtype))

    if N_pad != N:
        out = out[:N]
    if Wo_pad != Wo:
        out = out[..., :Wo]
    return out


def _mlp_head_kernel(e1_ref, e2_ref, w1a_ref, w1b_ref, b1_ref,
                     w2_ref, b2_ref, w3_ref, scores_ref, tmax_ref,
                     *, ts, s_valid):
    # Channel-as-contraction: features enter as (C, ts) columns straight from
    # the NCHW layout; weights arrive pre-cast bf16 and are VMEM-resident.
    s_idx = pl.program_id(1)

    e1 = e1_ref[0]                                 # (C1, ts) bf16
    e2 = e2_ref[0]                                 # (C2, ts) bf16

    # Adaptor Linear (+ folded BN); channel concat folded into two matmuls.
    h1 = (jnp.dot(w1a_ref[...], e1, preferred_element_type=jnp.float32)
          + jnp.dot(w1b_ref[...], e2, preferred_element_type=jnp.float32)
          + b1_ref[...])                           # (h, ts) f32

    # Discriminator Linear (+ folded BN) + ReLU.
    h2 = jnp.dot(w2_ref[...], h1.astype(jnp.bfloat16),
                 preferred_element_type=jnp.float32) + b2_ref[...]
    h2 = jnp.maximum(h2, 0.0)

    # Final (h -> 1) projection: VPU multiply + sublane reduce (no N=1 matmul).
    logits = jnp.sum(h2 * w3_ref[...], axis=0, keepdims=True)   # (1, ts) f32
    scores = jax.nn.sigmoid(logits)                             # eval mode
    scores_ref[0] = scores

    # Per-tile partial max (spatial-padding columns masked out); the final max
    # is done in the wrapper so BOTH grid axes can stay "parallel" (megacore).
    col = s_idx * ts + jax.lax.broadcasted_iota(jnp.int32, (1, ts), 1)
    masked = jnp.where(col < s_valid, scores, -jnp.inf)
    tmax_ref[0] = jnp.max(masked, axis=1, keepdims=True)


def _pick_spatial_tile(s_pad, c_in, h, vmem_budget):
    # Bytes per spatial column: double-buffered bf16 inputs, double-buffered
    # f32 score row, plus the two f32 (h, ts) intermediates (h1 / h2).
    per_col = 2 * c_in * 2 + 2 * 4 + 2 * h * 4
    fixed = 2 * (h * (c_in + h) * 2 + 4 * h * 4)   # resident weights + biases
    cap = max(128, (int(vmem_budget * 0.75) - fixed) // per_col)
    cap = min(cap, 8192)
    if s_pad <= cap:
        return s_pad
    t = (cap // 128) * 128
    while t >= 128:
        if s_pad % t == 0:
            return t
        t -= 128
    return 128


def mlp_head(e1, e2, p, *, s_valid):
    """e1: (B,C1,S_pad) bf16, e2: (B,C2,S_pad) bf16 -> (scores (B,s_valid), image max (B,))."""
    B, C1, S_pad = e1.shape
    C2 = e2.shape[1]
    h = p["w2"].shape[0]

    vmem_cap = _tpu_vmem_bytes()
    vmem_limit = (64 << 20) if vmem_cap >= (100 << 20) else (48 << 20)
    ts = _pick_spatial_tile(S_pad, C1 + C2, h, vmem_limit)
    n_s = S_pad // ts

    kernel = functools.partial(_mlp_head_kernel, ts=ts, s_valid=s_valid)

    scores3, tmax3 = pl.pallas_call(
        kernel,
        out_shape=(jax.ShapeDtypeStruct((B, 1, S_pad), jnp.float32),
                   jax.ShapeDtypeStruct((B, 1, n_s), jnp.float32)),
        grid=(B, n_s),
        in_specs=[
            pl.BlockSpec((1, C1, ts), lambda b, s: (b, 0, s)),
            pl.BlockSpec((1, C2, ts), lambda b, s: (b, 0, s)),
            pl.BlockSpec((h, C1), lambda b, s: (0, 0)),   # bf16, VMEM-resident
            pl.BlockSpec((h, C2), lambda b, s: (0, 0)),   # bf16, VMEM-resident
            pl.BlockSpec((h, 1), lambda b, s: (0, 0)),    # f32 bias
            pl.BlockSpec((h, h), lambda b, s: (0, 0)),    # bf16, VMEM-resident
            pl.BlockSpec((h, 1), lambda b, s: (0, 0)),    # f32 bias
            pl.BlockSpec((h, 1), lambda b, s: (0, 0)),    # f32 (VPU path)
        ],
        out_specs=(pl.BlockSpec((1, 1, ts), lambda b, s: (b, 0, s)),
                   pl.BlockSpec((1, 1, 1), lambda b, s: (b, 0, s))),
        compiler_params=pltpu.CompilerParams(
            dimension_semantics=("parallel", "parallel"),
            vmem_limit_bytes=vmem_limit),
    )(e1, e2, p["w1a"], p["w1b"], p["b1"], p["w2"], p["b2"], p["w3"])

    scores = scores3.reshape(B, S_pad)[:, :s_valid]
    image_scores = jnp.max(tmax3.reshape(B, n_s), axis=1)
    return scores, image_scores


# ------------------------ separable-operator matrices ----------------------

def band3(n):
    # 3x3 AvgPool (stride 1, pad 1, count_include_pad=True) as banded matrix / 3
    i = np.arange(n)
    return (np.abs(i[:, None] - i[None, :]) <= 1).astype(np.float32)


def bilinear_matrix(s_in, s_out):
    # Matches F.interpolate(mode='bilinear', align_corners=False).
    M = np.zeros((s_out, s_in), np.float32)
    scale = s_in / s_out
    for i in range(s_out):
        src = max(0.0, (i + 0.5) * scale - 0.5)
        i0 = min(int(np.floor(src)), s_in - 1)
        i1 = min(i0 + 1, s_in - 1)
        lam = src - i0
        M[i, i0] += 1.0 - lam
        M[i, i1] += lam
    return M


def nearest_matrix(s_in, s_out):
    # Matches F.interpolate default mode='nearest' (exact integer arithmetic).
    M = np.zeros((s_out, s_in), np.float32)
    for i in range(s_out):
        M[i, min((i * s_in) // s_out, s_in - 1)] = 1.0
    return M


def gaussian_toeplitz(n, sigma):
    # 1-D Gaussian kernel (ks = 2*int(4*sigma+0.5)+1) as a Toeplitz convolution
    # matrix with REFLECT padding (kornia GaussianBlur2d default border_type).
    ks = 2 * int(4.0 * sigma + 0.5) + 1
    pad = ks // 2
    half = (ks - 1) * 0.5
    xs = np.linspace(-half, half, ks)
    pdf = np.exp(-0.5 * (xs / sigma) ** 2)
    k1d = (pdf / pdf.sum()).astype(np.float32)
    T = np.zeros((n, n), np.float32)
    for i in range(n):
        for u in range(ks):
            j = i + u - pad
            while j < 0 or j >= n:          # reflect (edge not repeated)
                if j < 0:
                    j = -j
                if j >= n:
                    j = 2 * (n - 1) - j
            T[i, j] += k1d[u]
    return T


# ------------------------------- parameters --------------------------------

def make_params(key, cin, c1, c2):
    h = c1 + c2
    ks = jax.random.split(key, 7)

    def xavier(k, out_f, in_f):
        std = float(np.sqrt(2.0 / (in_f + out_f)))
        return std * jax.random.normal(k, (out_f, in_f), jnp.float32)

    eps = 1e-5
    # BatchNorm1d in eval mode with fresh running stats (mean=0, var=1,
    # gamma=1, beta=0): y = s*(Wx+b)+t  with s = 1/sqrt(1+eps), t = 0.
    s = jnp.full((h, 1), 1.0 / np.sqrt(1.0 + eps), jnp.float32)
    t = jnp.zeros((h, 1), jnp.float32)

    bnd = 1.0 / np.sqrt(h)
    w1 = xavier(ks[0], h, h)                                  # Adaptor Linear
    b1 = jax.random.uniform(ks[1], (h, 1), jnp.float32, -bnd, bnd)
    w2 = xavier(ks[2], h, h)                                  # Discriminator Linear 1
    b2 = jax.random.uniform(ks[3], (h, 1), jnp.float32, -bnd, bnd)
    w3 = xavier(ks[4], 1, h)                                  # Discriminator Linear 2 (no bias)
    p1 = 0.1 * jax.random.normal(ks[5], (c1, cin), jnp.float32)  # synthetic backbone proj
    p2 = 0.1 * jax.random.normal(ks[6], (c2, cin), jnp.float32)

    # Fold BN (eval) into the preceding Linear in f32, THEN pre-cast the MXU
    # weights to bf16 (no per-step casts in the kernel).  Biases stay f32;
    # w3 stays f32 because it feeds a VPU multiply, not the MXU.
    w1f = s * w1
    b1f = s * b1 + t
    w2f = s * w2
    b2f = s * b2 + t
    return dict(w1a=w1f[:, :c1].astype(jnp.bfloat16),
                w1b=w1f[:, c1:].astype(jnp.bfloat16),
                b1=b1f,
                w2=w2f.astype(jnp.bfloat16), b2=b2f,
                w3=w3.T,                      # (h, 1) f32 column
                p1=p1, p2=p2)


# -------------------------------- forward ----------------------------------

def simplenet_forward(x, params):
    B, Cin, H, W = x.shape

    # --- Backbone (layers [2, 3] of resnet18 => stride-8 / stride-16 features)
    # TODO(synk): pretrained timm resnet18 weights cannot be reproduced in a
    # Pallas kernel; replaced with a deterministic synthetic extractor of
    # matching stride/channel structure (avg-pool downsample + 1x1 proj + ReLU).
    f1 = jax.nn.relu(jnp.einsum(
        "bchw,oc->bohw",
        x.reshape(B, Cin, H // 8, 8, W // 8, 8).mean(axis=(3, 5)), params["p1"]))
    f2 = jax.nn.relu(jnp.einsum(
        "bchw,oc->bohw",
        x.reshape(B, Cin, H // 16, 16, W // 16, 16).mean(axis=(3, 5)), params["p2"]))
    C1, H1, W1 = f1.shape[1:]
    C2, H2, W2 = f2.shape[1:]

    # --- Adaptor: AvgPool2d(3,1,1) on each feature, bilinear resize of feats[1:]
    #     to feats[0] spatial size.  Feature-path plane_transforms use bf16
    #     operands (f32 accumulation) and EMIT bf16 so e1/e2 DMA is half-width.
    A1h, A1w = band3(H1) / 3.0, band3(W1) / 3.0
    pooled1 = plane_transform(A1h, f1.reshape(B * C1, H1, W1), A1w,
                              out_dtype=jnp.bfloat16, mx_dtype=jnp.bfloat16)
    A2h, A2w = band3(H2) / 3.0, band3(W2) / 3.0
    Wr = bilinear_matrix(H2, H1)                 # (H1, H2)
    Wc = bilinear_matrix(W2, W1)                 # (W1, W2)
    f2u = plane_transform(Wr @ A2h, f2.reshape(B * C2, H2, W2), A2w @ Wc.T,
                          out_dtype=jnp.bfloat16, mx_dtype=jnp.bfloat16)

    # --- Adaptor Linear(+BN) + Discriminator MLP + sigmoid + per-image max,
    #     fused, reading the NCHW layout directly (no transpose / concat copy).
    #     Spatial axis padded to a multiple of 128 for lane-dense matmul N and
    #     unmasked stores.
    S = H1 * W1
    S_pad = ((S + 127) // 128) * 128
    e1 = pooled1.reshape(B, C1, S)
    e2 = f2u.reshape(B, C2, S)
    if S_pad != S:
        e1 = jnp.pad(e1, ((0, 0), (0, 0), (0, S_pad - S)))
        e2 = jnp.pad(e2, ((0, 0), (0, 0), (0, S_pad - S)))
    scores, image_scores = mlp_head(e1, e2, params, s_valid=S)   # (B, S), (B,)

    # --- AnomalyMapGenerator: nearest resize (H1,W1)->(H,W), 33x33 Gaussian
    #     blur (sigma=4), channel mean over the size-1 axis (no-op).
    #     Output path stays f32 end-to-end.
    Ny = nearest_matrix(H1, H)                   # (H, H1)
    Nx = nearest_matrix(W1, W)                   # (W, W1)
    Ty = gaussian_toeplitz(H, SIGMA)             # (H, H)
    Tx = gaussian_toeplitz(W, SIGMA)             # (W, W)
    pmap = scores.reshape(B, H1, W1)
    anomaly_map = plane_transform(Ty @ Ny, pmap, Nx.T @ Tx.T,
                                  pad_lanes=True)                # (B, H, W)
    return anomaly_map, image_scores


# ---------------------------------- main ------------------------------------

if __name__ == "__main__":
    B, Cin, H, W = 2, 3, 128, 128
    C1, C2 = 16, 32                      # synthetic stand-in for resnet18 (128, 256)
    key = jax.random.PRNGKey(0)
    kx, kp = jax.random.split(key)
    x = jax.random.normal(kx, (B, Cin, H, W), jnp.float32)
    params = make_params(kp, Cin, C1, C2)

    fwd = jax.jit(lambda inp: simplenet_forward(inp, params))
    anomaly_map, image_scores = fwd(x)
    jax.block_until_ready((anomaly_map, image_scores))

    assert anomaly_map.shape == (B, H, W), anomaly_map.shape
    assert image_scores.shape == (B,), image_scores.shape
    assert bool(jnp.all(jnp.isfinite(anomaly_map)))
    assert bool(jnp.all((image_scores >= 0.0) & (image_scores <= 1.0)))
    print("KERNEL_OK")
</pallas_src>

<mosaic_0001>
module attributes {stable_mosaic.version = 11 : i64} {
  func.func @_plane_transform_kernel(%arg0: i32, %arg1: memref<16x16xbf16, #tpu.memory_space<vmem>>, %arg2: memref<512x16xbf16, #tpu.memory_space<vmem>>, %arg3: memref<16x16xbf16, #tpu.memory_space<vmem>>, %arg4: memref<32x16x16xbf16, #tpu.memory_space<vmem>>) attributes {dimension_semantics = [#tpu.dimension_semantics<parallel>], iteration_bounds = array<i64: 1>, scalar_prefetch = 0 : i64, scratch_operands = 0 : i64, tpu.core_type = #tpu.core_type<tc>, window_params = [{pipeline_mode = #tpu.pipeline_mode<synchronous>, transform_indices = @transform_0, window_bounds = array<i64: 16, 16>}, {transform_indices = @transform_1, window_bounds = array<i64: 512, 16>}, {pipeline_mode = #tpu.pipeline_mode<synchronous>, transform_indices = @transform_2, window_bounds = array<i64: 16, 16>}, {transform_indices = @transform_3, window_bounds = array<i64: 32, 16, 16>}]} {
    %c0 = arith.constant 0 : index
    %c0_0 = arith.constant 0 : index
    %0 = vector.load %arg1[%c0, %c0_0] : memref<16x16xbf16, #tpu.memory_space<vmem>>, vector<16x16xbf16>
    %c0_1 = arith.constant 0 : index
    %c0_2 = arith.constant 0 : index
    %1 = vector.load %arg2[%c0_1, %c0_2] : memref<512x16xbf16, #tpu.memory_space<vmem>>, vector<512x16xbf16>
    %c0_3 = arith.constant 0 : index
    %c0_4 = arith.constant 0 : index
    %2 = vector.load %arg3[%c0_3, %c0_4] : memref<16x16xbf16, #tpu.memory_space<vmem>>, vector<16x16xbf16>
    %cst = arith.constant dense<0.000000e+00> : vector<512x16xf32>
    %3 = tpu.matmul %1, %2, %cst {dimension_numbers = #tpu.dot_dimension_numbers<[1], [0], [0], [1], [0, 0, 1, 1], [], []>} : vector<512x16xbf16>, vector<16x16xbf16>, vector<512x16xf32> -> vector<512x16xf32>
    %4 = arith.truncf %3 : vector<512x16xf32> to vector<512x16xbf16>
    %5 = vector.extract_strided_slice %4 {offsets = [0, 0], sizes = [16, 16], strides = [1, 1]} : vector<512x16xbf16> to vector<16x16xbf16>
    %cst_5 = arith.constant dense<0.000000e+00> : vector<16x16xf32>
    %6 = tpu.matmul %0, %5, %cst_5 {dimension_numbers = #tpu.dot_dimension_numbers<[1], [0], [0], [1], [0, 0, 1, 1], [], []>} : vector<16x16xbf16>, vector<16x16xbf16>, vector<16x16xf32> -> vector<16x16xf32>
    %7 = arith.truncf %6 : vector<16x16xf32> to vector<16x16xbf16>
    %c0_6 = arith.constant 0 : index
    %c0_7 = arith.constant 0 : index
    %c0_8 = arith.constant 0 : index
    %8 = vector.load %arg4[%c0_6, %c0_7, %c0_8] : memref<32x16x16xbf16, #tpu.memory_space<vmem>>, vector<1x16x16xbf16>
    %9 = vector.shape_cast %8 : vector<1x16x16xbf16> to vector<16x16xbf16>
    %10 = vector.shape_cast %7 : vector<16x16xbf16> to vector<1x16x16xbf16>
    tpu.vector_store %arg4[%c0_6, %c0_7, %c0_8], %10 {strides = array<i32>} : memref<32x16x16xbf16, #tpu.memory_space<vmem>>, vector<1x16x16xbf16>,
    %11 = vector.extract_strided_slice %4 {offsets = [16, 0], sizes = [16, 16], strides = [1, 1]} : vector<512x16xbf16> to vector<16x16xbf16>
    %cst_9 = arith.constant dense<0.000000e+00> : vector<16x16xf32>
    %12 = tpu.matmul %0, %11, %cst_9 {dimension_numbers = #tpu.dot_dimension_numbers<[1], [0], [0], [1], [0, 0, 1, 1], [], []>} : vector<16x16xbf16>, vector<16x16xbf16>, vector<16x16xf32> -> vector<16x16xf32>
    %13 = arith.truncf %12 : vector<16x16xf32> to vector<16x16xbf16>
    %c1 = arith.constant 1 : index
    %c0_10 = arith.constant 0 : index
    %c0_11 = arith.constant 0 : index
    %14 = vector.load %arg4[%c1, %c0_10, %c0_11] : memref<32x16x16xbf16, #tpu.memory_space<vmem>>, vector<1x16x16xbf16>
    %15 = vector.shape_cast %14 : vector<1x16x16xbf16> to vector<16x16xbf16>
    %16 = vector.shape_cast %13 : vector<16x16xbf16> to vector<1x16x16xbf16>
    tpu.vector_store %arg4[%c1, %c0_10, %c0_11], %16 {strides = array<i32>} : memref<32x16x16xbf16, #tpu.memory_space<vmem>>, vector<1x16x16xbf16>,
    %17 = vector.extract_strided_slice %4 {offsets = [32, 0], sizes = [16, 16], strides = [1, 1]} : vector<512x16xbf16> to vector<16x16xbf16>
    %cst_12 = arith.constant dense<0.000000e+00> : vector<16x16xf32>
    %18 = tpu.matmul %0, %17, %cst_12 {dimension_numbers = #tpu.dot_dimension_numbers<[1], [0], [0], [1], [0, 0, 1, 1], [], []>} : vector<16x16xbf16>, vector<16x16xbf16>, vector<16x16xf32> -> vector<16x16xf32>
    %19 = arith.truncf %18 : vector<16x16xf32> to vector<16x16xbf16>
    %c2 = arith.constant 2 : index
    %c0_13 = arith.constant 0 : index
    %c0_14 = arith.constant 0 : index
    %20 = vector.load %arg4[%c2, %c0_13, %c0_14] : memref<32x16x16xbf16, #tpu.memory_space<vmem>>, vector<1x16x16xbf16>
    %21 = vector.shape_cast %20 : vector<1x16x16xbf16> to vector<16x16xbf16>
    %22 = vector.shape_cast %19 : vector<16x16xbf16> to vector<1x16x16xbf16>
    tpu.vector_store %arg4[%c2, %c0_13, %c0_14], %22 {strides = array<i32>} : memref<32x16x16xbf16, #tpu.memory_space<vmem>>, vector<1x16x16xbf16>,
    %23 = vector.extract_strided_slice %4 {offsets = [48, 0], sizes = [16, 16], strides = [1, 1]} : vector<512x16xbf16> to vector<16x16xbf16>
    %cst_15 = arith.constant dense<0.000000e+00> : vector<16x16xf32>
    %24 = tpu.matmul %0, %23, %cst_15 {dimension_numbers = #tpu.dot_dimension_numbers<[1], [0], [0], [1], [0, 0, 1, 1], [], []>} : vector<16x16xbf16>, vector<16x16xbf16>, vector<16x16xf32> -> vector<16x16xf32>
    %25 = arith.truncf %24 : vector<16x16xf32> to vector<16x16xbf16>
    %c3 = arith.constant 3 : index
    %c0_16 = arith.constant 0 : index
    %c0_17 = arith.constant 0 : index
    %26 = vector.load %arg4[%c3, %c0_16, %c0_17] : memref<32x16x16xbf16, #tpu.memory_space<vmem>>, vector<1x16x16xbf16>
    %27 = vector.shape_cast %26 : vector<1x16x16xbf16> to vector<16x16xbf16>
    %28 = vector.shape_cast %25 : vector<16x16xbf16> to vector<1x16x16xbf16>
    tpu.vector_store %arg4[%c3, %c0_16, %c0_17], %28 {strides = array<i32>} : memref<32x16x16xbf16, #tpu.memory_space<vmem>>, vector<1x16x16xbf16>,
    %29 = vector.extract_strided_slice %4 {offsets = [64, 0], sizes = [16, 16], strides = [1, 1]} : vector<512x16xbf16> to vector<16x16xbf16>
    %cst_18 = arith.constant dense<0.000000e+00> : vector<16x16xf32>
    %30 = tpu.matmul %0, %29, %cst_18 {dimension_numbers = #tpu.dot_dimension_numbers<[1], [0], [0], [1], [0, 0, 1, 1], [], []>} : vector<16x16xbf16>, vector<16x16xbf16>, vector<16x16xf32> -> vector<16x16xf32>
    %31 = arith.truncf %30 : vector<16x16xf32> to vector<16x16xbf16>
    %c4 = arith.constant 4 : index
    %c0_19 = arith.constant 0 : index
    %c0_20 = arith.constant 0 : index
    %32 = vector.load %arg4[%c4, %c0_19, %c0_20] : memref<32x16x16xbf16, #tpu.memory_space<vmem>>, vector<1x16x16xbf16>
    %33 = vector.shape_cast %32 : vector<1x16x16xbf16> to vector<16x16xbf16>
    %34 = vector.shape_cast %31 : vector<16x16xbf16> to vector<1x16x16xbf16>
    tpu.vector_store %arg4[%c4, %c0_19, %c0_20], %34 {strides = array<i32>} : memref<32x16x16xbf16, #tpu.memory_space<vmem>>, vector<1x16x16xbf16>,
    %35 = vector.extract_strided_slice %4 {offsets = [80, 0], sizes = [16, 16], strides = [1, 1]} : vector<512x16xbf16> to vector<16x16xbf16>
    %cst_21 = arith.constant dense<0.000000e+00> : vector<16x16xf32>
    %36 = tpu.matmul %0, %35, %cst_21 {dimension_numbers = #tpu.dot_dimension_numbers<[1], [0], [0], [1], [0, 0, 1, 1], [], []>} : vector<16x16xbf16>, vector<16x16xbf16>, vector<16x16xf32> -> vector<16x16xf32>
    %37 = arith.truncf %36 : vector<16x16xf32> to vector<16x16xbf16>
    %c5 = arith.constant 5 : index
    %c0_22 = arith.constant 0 : index
    %c0_23 = arith.constant 0 : index
    %38 = vector.load %arg4[%c5, %c0_22, %c0_23] : memref<32x16x16xbf16, #tpu.memory_space<vmem>>, vector<1x16x16xbf16>
    %39 = vector.shape_cast %38 : vector<1x16x16xbf16> to vector<16x16xbf16>
    %40 = vector.shape_cast %37 : vector<16x16xbf16> to vector<1x16x16xbf16>
    tpu.vector_store %arg4[%c5, %c0_22, %c0_23], %40 {strides = array<i32>} : memref<32x16x16xbf16, #tpu.memory_space<vmem>>, vector<1x16x16xbf16>,
    %41 = vector.extract_strided_slice %4 {offsets = [96, 0], sizes = [16, 16], strides = [1, 1]} : vector<512x16xbf16> to vector<16x16xbf16>
    %cst_24 = arith.constant dense<0.000000e+00> : vector<16x16xf32>
    %42 = tpu.matmul %0, %41, %cst_24 {dimension_numbers = #tpu.dot_dimension_numbers<[1], [0], [0], [1], [0, 0, 1, 1], [], []>} : vector<16x16xbf16>, vector<16x16xbf16>, vector<16x16xf32> -> vector<16x16xf32>
    %43 = arith.truncf %42 : vector<16x16xf32> to vector<16x16xbf16>
    %c6 = arith.constant 6 : index
    %c0_25 = arith.constant 0 : index
    %c0_26 = arith.constant 0 : index
    %44 = vector.load %arg4[%c6, %c0_25, %c0_26] : memref<32x16x16xbf16, #tpu.memory_space<vmem>>, vector<1x16x16xbf16>
    %45 = vector.shape_cast %44 : vector<1x16x16xbf16> to vector<16x16xbf16>
    %46 = vector.shape_cast %43 : vector<16x16xbf16> to vector<1x16x16xbf16>
    tpu.vector_store %arg4[%c6, %c0_25, %c0_26], %46 {strides = array<i32>} : memref<32x16x16xbf16, #tpu.memory_space<vmem>>, vector<1x16x16xbf16>,
    %47 = vector.extract_strided_slice %4 {offsets = [112, 0], sizes = [16, 16], strides = [1, 1]} : vector<512x16xbf16> to vector<16x16xbf16>
    %cst_27 = arith.constant dense<0.000000e+00> : vector<16x16xf32>
    %48 = tpu.matmul %0, %47, %cst_27 {dimension_numbers = #tpu.dot_dimension_numbers<[1], [0], [0], [1], [0, 0, 1, 1], [], []>} : vector<16x16xbf16>, vector<16x16xbf16>, vector<16x16xf32> -> vector<16x16xf32>
    %49 = arith.truncf %48 : vector<16x16xf32> to vector<16x16xbf16>
    %c7 = arith.constant 7 : index
    %c0_28 = arith.constant 0 : index
    %c0_29 = arith.constant 0 : index
    %50 = vector.load %arg4[%c7, %c0_28, %c0_29] : memref<32x16x16xbf16, #tpu.memory_space<vmem>>, vector<1x16x16xbf16>
    %51 = vector.shape_cast %50 : vector<1x16x16xbf16> to vector<16x16xbf16>
    %52 = vector.shape_cast %49 : vector<16x16xbf16> to vector<1x16x16xbf16>
    tpu.vector_store %arg4[%c7, %c0_28, %c0_29], %52 {strides = array<i32>} : memref<32x16x16xbf16, #tpu.memory_space<vmem>>, vector<1x16x16xbf16>,
    %53 = vector.extract_strided_slice %4 {offsets = [128, 0], sizes = [16, 16], strides = [1, 1]} : vector<512x16xbf16> to vector<16x16xbf16>
    %cst_30 = arith.constant dense<0.000000e+00> : vector<16x16xf32>
    %54 = tpu.matmul %0, %53, %cst_30 {dimension_numbers = #tpu.dot_dimension_numbers<[1], [0], [0], [1], [0, 0, 1, 1], [], []>} : vector<16x16xbf16>, vector<16x16xbf16>, vector<16x16xf32> -> vector<16x16xf32>
    %55 = arith.truncf %54 : vector<16x16xf32> to vector<16x16xbf16>
    %c8 = arith.constant 8 : index
    %c0_31 = arith.constant 0 : index
    %c0_32 = arith.constant 0 : index
    %56 = vector.load %arg4[%c8, %c0_31, %c0_32] : memref<32x16x16xbf16, #tpu.memory_space<vmem>>, vector<1x16x16xbf16>
    %57 = vector.shape_cast %56 : vector<1x16x16xbf16> to vector<16x16xbf16>
    %58 = vector.shape_cast %55 : vector<16x16xbf16> to vector<1x16x16xbf16>
    tpu.vector_store %arg4[%c8, %c0_31, %c0_32], %58 {strides = array<i32>} : memref<32x16x16xbf16, #tpu.memory_space<vmem>>, vector<1x16x16xbf16>,
    %59 = vector.extract_strided_slice %4 {offsets = [144, 0], sizes = [16, 16], strides = [1, 1]} : vector<512x16xbf16> to vector<16x16xbf16>
    %cst_33 = arith.constant dense<0.000000e+00> : vector<16x16xf32>
    %60 = tpu.matmul %0, %59, %cst_33 {dimension_numbers = #tpu.dot_dimension_numbers<[1], [0], [0], [1], [0, 0, 1, 1], [], []>} : vector<16x16xbf16>, vector<16x16xbf16>, vector<16x16xf32> -> vector<16x16xf32>
    %61 = arith.truncf %60 : vector<16x16xf32> to vector<16x16xbf16>
    %c9 = arith.constant 9 : index
    %c0_34 = arith.constant 0 : index
    %c0_35 = arith.constant 0 : index
    %62 = vector.load %arg4[%c9, %c0_34, %c0_35] : memref<32x16x16xbf16, #tpu.memory_space<vmem>>, vector<1x16x16xbf16>
    %63 = vector.shape_cast %62 : vector<1x16x16xbf16> to vector<16x16xbf16>
    %64 = vector.shape_cast %61 : vector<16x16xbf16> to vector<1x16x16xbf16>
    tpu.vector_store %arg4[%c9, %c0_34, %c0_35], %64 {strides = array<i32>} : memref<32x16x16xbf16, #tpu.memory_space<vmem>>, vector<1x16x16xbf16>,
    %65 = vector.extract_strided_slice %4 {offsets = [160, 0], sizes = [16, 16], strides = [1, 1]} : vector<512x16xbf16> to vector<16x16xbf16>
    %cst_36 = arith.constant dense<0.000000e+00> : vector<16x16xf32>
    %66 = tpu.matmul %0, %65, %cst_36 {dimension_numbers = #tpu.dot_dimension_numbers<[1], [0], [0], [1], [0, 0, 1, 1], [], []>} : vector<16x16xbf16>, vector<16x16xbf16>, vector<16x16xf32> -> vector<16x16xf32>
    %67 = arith.truncf %66 : vector<16x16xf32> to vector<16x16xbf16>
    %c10 = arith.constant 10 : index
    %c0_37 = arith.constant 0 : index
    %c0_38 = arith.constant 0 : index
    %68 = vector.load %arg4[%c10, %c0_37, %c0_38] : memref<32x16x16xbf16, #tpu.memory_space<vmem>>, vector<1x16x16xbf16>
    %69 = vector.shape_cast %68 : vector<1x16x16xbf16> to vector<16x16xbf16>
    %70 = vector.shape_cast %67 : vector<16x16xbf16> to vector<1x16x16xbf16>
    tpu.vector_store %arg4[%c10, %c0_37, %c0_38], %70 {strides = array<i32>} : memref<32x16x16xbf16, #tpu.memory_space<vmem>>, vector<1x16x16xbf16>,
    %71 = vector.extract_strided_slice %4 {offsets = [176, 0], sizes = [16, 16], strides = [1, 1]} : vector<512x16xbf16> to vector<16x16xbf16>
    %cst_39 = arith.constant dense<0.000000e+00> : vector<16x16xf32>
    %72 = tpu.matmul %0, %71, %cst_39 {dimension_numbers = #tpu.dot_dimension_numbers<[1], [0], [0], [1], [0, 0, 1, 1], [], []>} : vector<16x16xbf16>, vector<16x16xbf16>, vector<16x16xf32> -> vector<16x16xf32>
    %73 = arith.truncf %72 : vector<16x16xf32> to vector<16x16xbf16>
    %c11 = arith.constant 11 : index
    %c0_40 = arith.constant 0 : index
    %c0_41 = arith.constant 0 : index
    %74 = vector.load %arg4[%c11, %c0_40, %c0_41] : memref<32x16x16xbf16, #tpu.memory_space<vmem>>, vector<1x16x16xbf16>
    %75 = vector.shape_cast %74 : vector<1x16x16xbf16> to vector<16x16xbf16>
    %76 = vector.shape_cast %73 : vector<16x16xbf16> to vector<1x16x16xbf16>
    tpu.vector_store %arg4[%c11, %c0_40, %c0_41], %76 {strides = array<i32>} : memref<32x16x16xbf16, #tpu.memory_space<vmem>>, vector<1x16x16xbf16>,
    %77 = vector.extract_strided_slice %4 {offsets = [192, 0], sizes = [16, 16], strides = [1, 1]} : vector<512x16xbf16> to vector<16x16xbf16>
    %cst_42 = arith.constant dense<0.000000e+00> : vector<16x16xf32>
    %78 = tpu.matmul %0, %77, %cst_42 {dimension_numbers = #tpu.dot_dimension_numbers<[1], [0], [0], [1], [0, 0, 1, 1], [], []>} : vector<16x16xbf16>, vector<16x16xbf16>, vector<16x16xf32> -> vector<16x16xf32>
    %79 = arith.truncf %78 : vector<16x16xf32> to vector<16x16xbf16>
    %c12 = arith.constant 12 : index
    %c0_43 = arith.constant 0 : index
    %c0_44 = arith.constant 0 : index
    %80 = vector.load %arg4[%c12, %c0_43, %c0_44] : memref<32x16x16xbf16, #tpu.memory_space<vmem>>, vector<1x16x16xbf16>
    %81 = vector.shape_cast %80 : vector<1x16x16xbf16> to vector<16x16xbf16>
    %82 = vector.shape_cast %79 : vector<16x16xbf16> to vector<1x16x16xbf16>
    tpu.vector_store %arg4[%c12, %c0_43, %c0_44], %82 {strides = array<i32>} : memref<32x16x16xbf16, #tpu.memory_space<vmem>>, vector<1x16x16xbf16>,
    %83 = vector.extract_strided_slice %4 {offsets = [208, 0], sizes = [16, 16], strides = [1, 1]} : vector<512x16xbf16> to vector<16x16xbf16>
    %cst_45 = arith.constant dense<0.000000e+00> : vector<16x16xf32>
    %84 = tpu.matmul %0, %83, %cst_45 {dimension_numbers = #tpu.dot_dimension_numbers<[1], [0], [0], [1], [0, 0, 1, 1], [], []>} : vector<16x16xbf16>, vector<16x16xbf16>, vector<16x16xf32> -> vector<16x16xf32>
    %85 = arith.truncf %84 : vector<16x16xf32> to vector<16x16xbf16>
    %c13 = arith.constant 13 : index
    %c0_46 = arith.constant 0 : index
    %c0_47 = arith.constant 0 : index
    %86 = vector.load %arg4[%c13, %c0_46, %c0_47] : memref<32x16x16xbf16, #tpu.memory_space<vmem>>, vector<1x16x16xbf16>
    %87 = vector.shape_cast %86 : vector<1x16x16xbf16> to vector<16x16xbf16>
    %88 = vector.shape_cast %85 : vector<16x16xbf16> to vector<1x16x16xbf16>
    tpu.vector_store %arg4[%c13, %c0_46, %c0_47], %88 {strides = array<i32>} : memref<32x16x16xbf16, #tpu.memory_space<vmem>>, vector<1x16x16xbf16>,
    %89 = vector.extract_strided_slice %4 {offsets = [224, 0], sizes = [16, 16], strides = [1, 1]} : vector<512x16xbf16> to vector<16x16xbf16>
    %cst_48 = arith.constant dense<0.000000e+00> : vector<16x16xf32>
    %90 = tpu.matmul %0, %89, %cst_48 {dimension_numbers = #tpu.dot_dimension_numbers<[1], [0], [0], [1], [0, 0, 1, 1], [], []>} : vector<16x16xbf16>, vector<16x16xbf16>, vector<16x16xf32> -> vector<16x16xf32>
    %91 = arith.truncf %90 : vector<16x16xf32> to vector<16x16xbf16>
    %c14 = arith.constant 14 : index
    %c0_49 = arith.constant 0 : index
    %c0_50 = arith.constant 0 : index
    %92 = vector.load %arg4[%c14, %c0_49, %c0_50] : memref<32x16x16xbf16, #tpu.memory_space<vmem>>, vector<1x16x16xbf16>
    %93 = vector.shape_cast %92 : vector<1x16x16xbf16> to vector<16x16xbf16>
    %94 = vector.shape_cast %91 : vector<16x16xbf16> to vector<1x16x16xbf16>
    tpu.vector_store %arg4[%c14, %c0_49, %c0_50], %94 {strides = array<i32>} : memref<32x16x16xbf16, #tpu.memory_space<vmem>>, vector<1x16x16xbf16>,
    %95 = vector.extract_strided_slice %4 {offsets = [240, 0], sizes = [16, 16], strides = [1, 1]} : vector<512x16xbf16> to vector<16x16xbf16>
    %cst_51 = arith.constant dense<0.000000e+00> : vector<16x16xf32>
    %96 = tpu.matmul %0, %95, %cst_51 {dimension_numbers = #tpu.dot_dimension_numbers<[1], [0], [0], [1], [0, 0, 1, 1], [], []>} : vector<16x16xbf16>, vector<16x16xbf16>, vector<16x16xf32> -> vector<16x16xf32>
    %97 = arith.truncf %96 : vector<16x16xf32> to vector<16x16xbf16>
    %c15 = arith.constant 15 : index
    %c0_52 = arith.constant 0 : index
    %c0_53 = arith.constant 0 : index
    %98 = vector.load %arg4[%c15, %c0_52, %c0_53] : memref<32x16x16xbf16, #tpu.memory_space<vmem>>, vector<1x16x16xbf16>
    %99 = vector.shape_cast %98 : vector<1x16x16xbf16> to vector<16x16xbf16>
    %100 = vector.shape_cast %97 : vector<16x16xbf16> to vector<1x16x16xbf16>
    tpu.vector_store %arg4[%c15, %c0_52, %c0_53], %100 {strides = array<i32>} : memref<32x16x16xbf16, #tpu.memory_space<vmem>>, vector<1x16x16xbf16>,
    %101 = vector.extract_strided_slice %4 {offsets = [256, 0], sizes = [16, 16], strides = [1, 1]} : vector<512x16xbf16> to vector<16x16xbf16>
    %cst_54 = arith.constant dense<0.000000e+00> : vector<16x16xf32>
    %102 = tpu.matmul %0, %101, %cst_54 {dimension_numbers = #tpu.dot_dimension_numbers<[1], [0], [0], [1], [0, 0, 1, 1], [], []>} : vector<16x16xbf16>, vector<16x16xbf16>, vector<16x16xf32> -> vector<16x16xf32>
    %103 = arith.truncf %102 : vector<16x16xf32> to vector<16x16xbf16>
    %c16 = arith.constant 16 : index
    %c0_55 = arith.constant 0 : index
    %c0_56 = arith.constant 0 : index
    %104 = vector.load %arg4[%c16, %c0_55, %c0_56] : memref<32x16x16xbf16, #tpu.memory_space<vmem>>, vector<1x16x16xbf16>
    %105 = vector.shape_cast %104 : vector<1x16x16xbf16> to vector<16x16xbf16>
    %106 = vector.shape_cast %103 : vector<16x16xbf16> to vector<1x16x16xbf16>
    tpu.vector_store %arg4[%c16, %c0_55, %c0_56], %106 {strides = array<i32>} : memref<32x16x16xbf16, #tpu.memory_space<vmem>>, vector<1x16x16xbf16>,
    %107 = vector.extract_strided_slice %4 {offsets = [272, 0], sizes = [16, 16], strides = [1, 1]} : vector<512x16xbf16> to vector<16x16xbf16>
    %cst_57 = arith.constant dense<0.000000e+00> : vector<16x16xf32>
    %108 = tpu.matmul %0, %107, %cst_57 {dimension_numbers = #tpu.dot_dimension_numbers<[1], [0], [0], [1], [0, 0, 1, 1], [], []>} : vector<16x16xbf16>, vector<16x16xbf16>, vector<16x16xf32> -> vector<16x16xf32>
    %109 = arith.truncf %108 : vector<16x16xf32> to vector<16x16xbf16>
    %c17 = arith.constant 17 : index
    %c0_58 = arith.constant 0 : index
    %c0_59 = arith.constant 0 : index
    %110 = vector.load %arg4[%c17, %c0_58, %c0_59] : memref<32x16x16xbf16, #tpu.memory_space<vmem>>, vector<1x16x16xbf16>
    %111 = vector.shape_cast %110 : vector<1x16x16xbf16> to vector<16x16xbf16>
    %112 = vector.shape_cast %109 : vector<16x16xbf16> to vector<1x16x16xbf16>
    tpu.vector_store %arg4[%c17, %c0_58, %c0_59], %112 {strides = array<i32>} : memref<32x16x16xbf16, #tpu.memory_space<vmem>>, vector<1x16x16xbf16>,
    %113 = vector.extract_strided_slice %4 {offsets = [288, 0], sizes = [16, 16], strides = [1, 1]} : vector<512x16xbf16> to vector<16x16xbf16>
    %cst_60 = arith.constant dense<0.000000e+00> : vector<16x16xf32>
    %114 = tpu.matmul %0, %113, %cst_60 {dimension_numbers = #tpu.dot_dimension_numbers<[1], [0], [0], [1], [0, 0, 1, 1], [], []>} : vector<16x16xbf16>, vector<16x16xbf16>, vector<16x16xf32> -> vector<16x16xf32>
    %115 = arith.truncf %114 : vector<16x16xf32> to vector<16x16xbf16>
    %c18 = arith.constant 18 : index
    %c0_61 = arith.constant 0 : index
    %c0_62 = arith.constant 0 : index
    %116 = vector.load %arg4[%c18, %c0_61, %c0_62] : memref<32x16x16xbf16, #tpu.memory_space<vmem>>, vector<1x16x16xbf16>
    %117 = vector.shape_cast %116 : vector<1x16x16xbf16> to vector<16x16xbf16>
    %118 = vector.shape_cast %115 : vector<16x16xbf16> to vector<1x16x16xbf16>
    tpu.vector_store %arg4[%c18, %c0_61, %c0_62], %118 {strides = array<i32>} : memref<32x16x16xbf16, #tpu.memory_space<vmem>>, vector<1x16x16xbf16>,
    %119 = vector.extract_strided_slice %4 {offsets = [304, 0], sizes = [16, 16], strides = [1, 1]} : vector<512x16xbf16> to vector<16x16xbf16>
    %cst_63 = arith.constant dense<0.000000e+00> : vector<16x16xf32>
    %120 = tpu.matmul %0, %119, %cst_63 {dimension_numbers = #tpu.dot_dimension_numbers<[1], [0], [0], [1], [0, 0, 1, 1], [], []>} : vector<16x16xbf16>, vector<16x16xbf16>, vector<16x16xf32> -> vector<16x16xf32>
    %121 = arith.truncf %120 : vector<16x16xf32> to vector<16x16xbf16>
    %c19 = arith.constant 19 : index
    %c0_64 = arith.constant 0 : index
    %c0_65 = arith.constant 0 : index
    %122 = vector.load %arg4[%c19, %c0_64, %c0_65] : memref<32x16x16xbf16, #tpu.memory_space<vmem>>, vector<1x16x16xbf16>
    %123 = vector.shape_cast %122 : vector<1x16x16xbf16> to vector<16x16xbf16>
    %124 = vector.shape_cast %121 : vector<16x16xbf16> to vector<1x16x16xbf16>
    tpu.vector_store %arg4[%c19, %c0_64, %c0_65], %124 {strides = array<i32>} : memref<32x16x16xbf16, #tpu.memory_space<vmem>>, vector<1x16x16xbf16>,
    %125 = vector.extract_strided_slice %4 {offsets = [320, 0], sizes = [16, 16], strides = [1, 1]} : vector<512x16xbf16> to vector<16x16xbf16>
    %cst_66 = arith.constant dense<0.000000e+00> : vector<16x16xf32>
    %126 = tpu.matmul %0, %125, %cst_66 {dimension_numbers = #tpu.dot_dimension_numbers<[1], [0], [0], [1], [0, 0, 1, 1], [], []>} : vector<16x16xbf16>, vector<16x16xbf16>, vector<16x16xf32> -> vector<16x16xf32>
    %127 = arith.truncf %126 : vector<16x16xf32> to vector<16x16xbf16>
    %c20 = arith.constant 20 : index
    %c0_67 = arith.constant 0 : index
    %c0_68 = arith.constant 0 : index
    %128 = vector.load %arg4[%c20, %c0_67, %c0_68] : memref<32x16x16xbf16, #tpu.memory_space<vmem>>, vector<1x16x16xbf16>
    %129 = vector.shape_cast %128 : vector<1x16x16xbf16> to vector<16x16xbf16>
    %130 = vector.shape_cast %127 : vector<16x16xbf16> to vector<1x16x16xbf16>
    tpu.vector_store %arg4[%c20, %c0_67, %c0_68], %130 {strides = array<i32>} : memref<32x16x16xbf16, #tpu.memory_space<vmem>>, vector<1x16x16xbf16>,
    %131 = vector.extract_strided_slice %4 {offsets = [336, 0], sizes = [16, 16], strides = [1, 1]} : vector<512x16xbf16> to vector<16x16xbf16>
    %cst_69 = arith.constant dense<0.000000e+00> : vector<16x16xf32>
    %132 = tpu.matmul %0, %131, %cst_69 {dimension_numbers = #tpu.dot_dimension_numbers<[1], [0], [0], [1], [0, 0, 1, 1], [], []>} : vector<16x16xbf16>, vector<16x16xbf16>, vector<16x16xf32> -> vector<16x16xf32>
    %133 = arith.truncf %132 : vector<16x16xf32> to vector<16x16xbf16>
    %c21 = arith.constant 21 : index
    %c0_70 = arith.constant 0 : index
    %c0_71 = arith.constant 0 : index
    %134 = vector.load %arg4[%c21, %c0_70, %c0_71] : memref<32x16x16xbf16, #tpu.memory_space<vmem>>, vector<1x16x16xbf16>
    %135 = vector.shape_cast %134 : vector<1x16x16xbf16> to vector<16x16xbf16>
    %136 = vector.shape_cast %133 : vector<16x16xbf16> to vector<1x16x16xbf16>
    tpu.vector_store %arg4[%c21, %c0_70, %c0_71], %136 {strides = array<i32>} : memref<32x16x16xbf16, #tpu.memory_space<vmem>>, vector<1x16x16xbf16>,
    %137 = vector.extract_strided_slice %4 {offsets = [352, 0], sizes = [16, 16], strides = [1, 1]} : vector<512x16xbf16> to vector<16x16xbf16>
    %cst_72 = arith.constant dense<0.000000e+00> : vector<16x16xf32>
    %138 = tpu.matmul %0, %137, %cst_72 {dimension_numbers = #tpu.dot_dimension_numbers<[1], [0], [0], [1], [0, 0, 1, 1], [], []>} : vector<16x16xbf16>, vector<16x16xbf16>, vector<16x16xf32> -> vector<16x16xf32>
    %139 = arith.truncf %138 : vector<16x16xf32> to vector<16x16xbf16>
    %c22 = arith.constant 22 : index
    %c0_73 = arith.constant 0 : index
    %c0_74 = arith.constant 0 : index
    %140 = vector.load %arg4[%c22, %c0_73, %c0_74] : memref<32x16x16xbf16, #tpu.memory_space<vmem>>, vector<1x16x16xbf16>
    %141 = vector.shape_cast %140 : vector<1x16x16xbf16> to vector<16x16xbf16>
    %142 = vector.shape_cast %139 : vector<16x16xbf16> to vector<1x16x16xbf16>
    tpu.vector_store %arg4[%c22, %c0_73, %c0_74], %142 {strides = array<i32>} : memref<32x16x16xbf16, #tpu.memory_space<vmem>>, vector<1x16x16xbf16>,
    %143 = vector.extract_strided_slice %4 {offsets = [368, 0], sizes = [16, 16], strides = [1, 1]} : vector<512x16xbf16> to vector<16x16xbf16>
    %cst_75 = arith.constant dense<0.000000e+00> : vector<16x16xf32>
    %144 = tpu.matmul %0, %143, %cst_75 {dimension_numbers = #tpu.dot_dimension_numbers<[1], [0], [0], [1], [0, 0, 1, 1], [], []>} : vector<16x16xbf16>, vector<16x16xbf16>, vector<16x16xf32> -> vector<16x16xf32>
    %145 = arith.truncf %144 : vector<16x16xf32> to vector<16x16xbf16>
    %c23 = arith.constant 23 : index
    %c0_76 = arith.constant 0 : index
    %c0_77 = arith.constant 0 : index
    %146 = vector.load %arg4[%c23, %c0_76, %c0_77] : memref<32x16x16xbf16, #tpu.memory_space<vmem>>, vector<1x16x16xbf16>
    %147 = vector.shape_cast %146 : vector<1x16x16xbf16> to vector<16x16xbf16>
    %148 = vector.shape_cast %145 : vector<16x16xbf16> to vector<1x16x16xbf16>
    tpu.vector_store %arg4[%c23, %c0_76, %c0_77], %148 {strides = array<i32>} : memref<32x16x16xbf16, #tpu.memory_space<vmem>>, vector<1x16x16xbf16>,
    %149 = vector.extract_strided_slice %4 {offsets = [384, 0], sizes = [16, 16], strides = [1, 1]} : vector<512x16xbf16> to vector<16x16xbf16>
    %cst_78 = arith.constant dense<0.000000e+00> : vector<16x16xf32>
    %150 = tpu.matmul %0, %149, %cst_78 {dimension_numbers = #tpu.dot_dimension_numbers<[1], [0], [0], [1], [0, 0, 1, 1], [], []>} : vector<16x16xbf16>, vector<16x16xbf16>, vector<16x16xf32> -> vector<16x16xf32>
    %151 = arith.truncf %150 : vector<16x16xf32> to vector<16x16xbf16>
    %c24 = arith.constant 24 : index
    %c0_79 = arith.constant 0 : index
    %c0_80 = arith.constant 0 : index
    %152 = vector.load %arg4[%c24, %c0_79, %c0_80] : memref<32x16x16xbf16, #tpu.memory_space<vmem>>, vector<1x16x16xbf16>
    %153 = vector.shape_cast %152 : vector<1x16x16xbf16> to vector<16x16xbf16>
    %154 = vector.shape_cast %151 : vector<16x16xbf16> to vector<1x16x16xbf16>
    tpu.vector_store %arg4[%c24, %c0_79, %c0_80], %154 {strides = array<i32>} : memref<32x16x16xbf16, #tpu.memory_space<vmem>>, vector<1x16x16xbf16>,
    %155 = vector.extract_strided_slice %4 {offsets = [400, 0], sizes = [16, 16], strides = [1, 1]} : vector<512x16xbf16> to vector<16x16xbf16>
    %cst_81 = arith.constant dense<0.000000e+00> : vector<16x16xf32>
    %156 = tpu.matmul %0, %155, %cst_81 {dimension_numbers = #tpu.dot_dimension_numbers<[1], [0], [0], [1], [0, 0, 1, 1], [], []>} : vector<16x16xbf16>, vector<16x16xbf16>, vector<16x16xf32> -> vector<16x16xf32>
    %157 = arith.truncf %156 : vector<16x16xf32> to vector<16x16xbf16>
    %c25 = arith.constant 25 : index
    %c0_82 = arith.constant 0 : index
    %c0_83 = arith.constant 0 : index
    %158 = vector.load %arg4[%c25, %c0_82, %c0_83] : memref<32x16x16xbf16, #tpu.memory_space<vmem>>, vector<1x16x16xbf16>
    %159 = vector.shape_cast %158 : vector<1x16x16xbf16> to vector<16x16xbf16>
    %160 = vector.shape_cast %157 : vector<16x16xbf16> to vector<1x16x16xbf16>
    tpu.vector_store %arg4[%c25, %c0_82, %c0_83], %160 {strides = array<i32>} : memref<32x16x16xbf16, #tpu.memory_space<vmem>>, vector<1x16x16xbf16>,
    %161 = vector.extract_strided_slice %4 {offsets = [416, 0], sizes = [16, 16], strides = [1, 1]} : vector<512x16xbf16> to vector<16x16xbf16>
    %cst_84 = arith.constant dense<0.000000e+00> : vector<16x16xf32>
    %162 = tpu.matmul %0, %161, %cst_84 {dimension_numbers = #tpu.dot_dimension_numbers<[1], [0], [0], [1], [0, 0, 1, 1], [], []>} : vector<16x16xbf16>, vector<16x16xbf16>, vector<16x16xf32> -> vector<16x16xf32>
    %163 = arith.truncf %162 : vector<16x16xf32> to vector<16x16xbf16>
    %c26 = arith.constant 26 : index
    %c0_85 = arith.constant 0 : index
    %c0_86 = arith.constant 0 : index
    %164 = vector.load %arg4[%c26, %c0_85, %c0_86] : memref<32x16x16xbf16, #tpu.memory_space<vmem>>, vector<1x16x16xbf16>
    %165 = vector.shape_cast %164 : vector<1x16x16xbf16> to vector<16x16xbf16>
    %166 = vector.shape_cast %163 : vector<16x16xbf16> to vector<1x16x16xbf16>
    tpu.vector_store %arg4[%c26, %c0_85, %c0_86], %166 {strides = array<i32>} : memref<32x16x16xbf16, #tpu.memory_space<vmem>>, vector<1x16x16xbf16>,
    %167 = vector.extract_strided_slice %4 {offsets = [432, 0], sizes = [16, 16], strides = [1, 1]} : vector<512x16xbf16> to vector<16x16xbf16>
    %cst_87 = arith.constant dense<0.000000e+00> : vector<16x16xf32>
    %168 = tpu.matmul %0, %167, %cst_87 {dimension_numbers = #tpu.dot_dimension_numbers<[1], [0], [0], [1], [0, 0, 1, 1], [], []>} : vector<16x16xbf16>, vector<16x16xbf16>, vector<16x16xf32> -> vector<16x16xf32>
    %169 = arith.truncf %168 : vector<16x16xf32> to vector<16x16xbf16>
    %c27 = arith.constant 27 : index
    %c0_88 = arith.constant 0 : index
    %c0_89 = arith.constant 0 : index
    %170 = vector.load %arg4[%c27, %c0_88, %c0_89] : memref<32x16x16xbf16, #tpu.memory_space<vmem>>, vector<1x16x16xbf16>
    %171 = vector.shape_cast %170 : vector<1x16x16xbf16> to vector<16x16xbf16>
    %172 = vector.shape_cast %169 : vector<16x16xbf16> to vector<1x16x16xbf16>
    tpu.vector_store %arg4[%c27, %c0_88, %c0_89], %172 {strides = array<i32>} : memref<32x16x16xbf16, #tpu.memory_space<vmem>>, vector<1x16x16xbf16>,
    %173 = vector.extract_strided_slice %4 {offsets = [448, 0], sizes = [16, 16], strides = [1, 1]} : vector<512x16xbf16> to vector<16x16xbf16>
    %cst_90 = arith.constant dense<0.000000e+00> : vector<16x16xf32>
    %174 = tpu.matmul %0, %173, %cst_90 {dimension_numbers = #tpu.dot_dimension_numbers<[1], [0], [0], [1], [0, 0, 1, 1], [], []>} : vector<16x16xbf16>, vector<16x16xbf16>, vector<16x16xf32> -> vector<16x16xf32>
    %175 = arith.truncf %174 : vector<16x16xf32> to vector<16x16xbf16>
    %c28 = arith.constant 28 : index
    %c0_91 = arith.constant 0 : index
    %c0_92 = arith.constant 0 : index
    %176 = vector.load %arg4[%c28, %c0_91, %c0_92] : memref<32x16x16xbf16, #tpu.memory_space<vmem>>, vector<1x16x16xbf16>
    %177 = vector.shape_cast %176 : vector<1x16x16xbf16> to vector<16x16xbf16>
    %178 = vector.shape_cast %175 : vector<16x16xbf16> to vector<1x16x16xbf16>
    tpu.vector_store %arg4[%c28, %c0_91, %c0_92], %178 {strides = array<i32>} : memref<32x16x16xbf16, #tpu.memory_space<vmem>>, vector<1x16x16xbf16>,
    %179 = vector.extract_strided_slice %4 {offsets = [464, 0], sizes = [16, 16], strides = [1, 1]} : vector<512x16xbf16> to vector<16x16xbf16>
    %cst_93 = arith.constant dense<0.000000e+00> : vector<16x16xf32>
    %180 = tpu.matmul %0, %179, %cst_93 {dimension_numbers = #tpu.dot_dimension_numbers<[1], [0], [0], [1], [0, 0, 1, 1], [], []>} : vector<16x16xbf16>, vector<16x16xbf16>, vector<16x16xf32> -> vector<16x16xf32>
    %181 = arith.truncf %180 : vector<16x16xf32> to vector<16x16xbf16>
    %c29 = arith.constant 29 : index
    %c0_94 = arith.constant 0 : index
    %c0_95 = arith.constant 0 : index
    %182 = vector.load %arg4[%c29, %c0_94, %c0_95] : memref<32x16x16xbf16, #tpu.memory_space<vmem>>, vector<1x16x16xbf16>
    %183 = vector.shape_cast %182 : vector<1x16x16xbf16> to vector<16x16xbf16>
    %184 = vector.shape_cast %181 : vector<16x16xbf16> to vector<1x16x16xbf16>
    tpu.vector_store %arg4[%c29, %c0_94, %c0_95], %184 {strides = array<i32>} : memref<32x16x16xbf16, #tpu.memory_space<vmem>>, vector<1x16x16xbf16>,
    %185 = vector.extract_strided_slice %4 {offsets = [480, 0], sizes = [16, 16], strides = [1, 1]} : vector<512x16xbf16> to vector<16x16xbf16>
    %cst_96 = arith.constant dense<0.000000e+00> : vector<16x16xf32>
    %186 = tpu.matmul %0, %185, %cst_96 {dimension_numbers = #tpu.dot_dimension_numbers<[1], [0], [0], [1], [0, 0, 1, 1], [], []>} : vector<16x16xbf16>, vector<16x16xbf16>, vector<16x16xf32> -> vector<16x16xf32>
    %187 = arith.truncf %186 : vector<16x16xf32> to vector<16x16xbf16>
    %c30 = arith.constant 30 : index
    %c0_97 = arith.constant 0 : index
    %c0_98 = arith.constant 0 : index
    %188 = vector.load %arg4[%c30, %c0_97, %c0_98] : memref<32x16x16xbf16, #tpu.memory_space<vmem>>, vector<1x16x16xbf16>
    %189 = vector.shape_cast %188 : vector<1x16x16xbf16> to vector<16x16xbf16>
    %190 = vector.shape_cast %187 : vector<16x16xbf16> to vector<1x16x16xbf16>
    tpu.vector_store %arg4[%c30, %c0_97, %c0_98], %190 {strides = array<i32>} : memref<32x16x16xbf16, #tpu.memory_space<vmem>>, vector<1x16x16xbf16>,
    %191 = vector.extract_strided_slice %4 {offsets = [496, 0], sizes = [16, 16], strides = [1, 1]} : vector<512x16xbf16> to vector<16x16xbf16>
    %cst_99 = arith.constant dense<0.000000e+00> : vector<16x16xf32>
    %192 = tpu.matmul %0, %191, %cst_99 {dimension_numbers = #tpu.dot_dimension_numbers<[1], [0], [0], [1], [0, 0, 1, 1], [], []>} : vector<16x16xbf16>, vector<16x16xbf16>, vector<16x16xf32> -> vector<16x16xf32>
    %193 = arith.truncf %192 : vector<16x16xf32> to vector<16x16xbf16>
    %c31 = arith.constant 31 : index
    %c0_100 = arith.constant 0 : index
    %c0_101 = arith.constant 0 : index
    %194 = vector.load %arg4[%c31, %c0_100, %c0_101] : memref<32x16x16xbf16, #tpu.memory_space<vmem>>, vector<1x16x16xbf16>
    %195 = vector.shape_cast %194 : vector<1x16x16xbf16> to vector<16x16xbf16>
    %196 = vector.shape_cast %193 : vector<16x16xbf16> to vector<1x16x16xbf16>
    tpu.vector_store %arg4[%c31, %c0_100, %c0_101], %196 {strides = array<i32>} : memref<32x16x16xbf16, #tpu.memory_space<vmem>>, vector<1x16x16xbf16>,
    return
  }
  func.func @transform_0(%arg0: i32) -> (i32, i32) {
    %c0_i32 = arith.constant 0 : i32
    %c0_i32_0 = arith.constant 0 : i32
    %c0_i32_1 = arith.constant 0 : i32
    return %c0_i32, %c0_i32_0 : i32, i32
  }
  func.func @transform_1(%arg0: i32) -> (i32, i32) {
    %c0_i32 = arith.constant 0 : i32
    %c0_i32_0 = arith.constant 0 : i32
    return %arg0, %c0_i32 : i32, i32
  }
  func.func @transform_2(%arg0: i32) -> (i32, i32) {
    %c0_i32 = arith.constant 0 : i32
    %c0_i32_0 = arith.constant 0 : i32
    %c0_i32_1 = arith.constant 0 : i32
    return %c0_i32, %c0_i32_0 : i32, i32
  }
  func.func @transform_3(%arg0: i32) -> (i32, i32, i32) {
    %c0_i32 = arith.constant 0 : i32
    %c0_i32_0 = arith.constant 0 : i32
    %c0_i32_1 = arith.constant 0 : i32
    return %arg0, %c0_i32, %c0_i32_0 : i32, i32, i32
  }
}

module attributes {stable_mosaic.version = 11 : i64} {
  func.func @_plane_transform_kernel(%arg0: i32, %arg1: memref<16x8xbf16, #tpu.memory_space<vmem>>, %arg2: memref<512x8xbf16, #tpu.memory_space<vmem>>, %arg3: memref<8x16xbf16, #tpu.memory_space<vmem>>, %arg4: memref<64x16x16xbf16, #tpu.memory_space<vmem>>) attributes {dimension_semantics = [#tpu.dimension_semantics<parallel>], iteration_bounds = array<i64: 1>, scalar_prefetch = 0 : i64, scratch_operands = 0 : i64, tpu.core_type = #tpu.core_type<tc>, window_params = [{pipeline_mode = #tpu.pipeline_mode<synchronous>, transform_indices = @transform_0, window_bounds = array<i64: 16, 8>}, {transform_indices = @transform_1, window_bounds = array<i64: 512, 8>}, {pipeline_mode = #tpu.pipeline_mode<synchronous>, transform_indices = @transform_2, window_bounds = array<i64: 8, 16>}, {transform_indices = @transform_3, window_bounds = array<i64: 64, 16, 16>}]} {
    %c0 = arith.constant 0 : index
    %c0_0 = arith.constant 0 : index
    %0 = vector.load %arg1[%c0, %c0_0] : memref<16x8xbf16, #tpu.memory_space<vmem>>, vector<16x8xbf16>
    %c0_1 = arith.constant 0 : index
    %c0_2 = arith.constant 0 : index
    %1 = vector.load %arg2[%c0_1, %c0_2] : memref<512x8xbf16, #tpu.memory_space<vmem>>, vector<512x8xbf16>
    %c0_3 = arith.constant 0 : index
    %c0_4 = arith.constant 0 : index
    %2 = vector.load %arg3[%c0_3, %c0_4] : memref<8x16xbf16, #tpu.memory_space<vmem>>, vector<8x16xbf16>
    %cst = arith.constant dense<0.000000e+00> : vector<512x16xf32>
    %3 = tpu.matmul %1, %2, %cst {dimension_numbers = #tpu.dot_dimension_numbers<[1], [0], [0], [1], [0, 0, 1, 1], [], []>} : vector<512x8xbf16>, vector<8x16xbf16>, vector<512x16xf32> -> vector<512x16xf32>
    %4 = arith.truncf %3 : vector<512x16xf32> to vector<512x16xbf16>
    %5 = vector.extract_strided_slice %4 {offsets = [0, 0], sizes = [8, 16], strides = [1, 1]} : vector<512x16xbf16> to vector<8x16xbf16>
    %cst_5 = arith.constant dense<0.000000e+00> : vector<16x16xf32>
    %6 = tpu.matmul %0, %5, %cst_5 {dimension_numbers = #tpu.dot_dimension_numbers<[1], [0], [0], [1], [0, 0, 1, 1], [], []>} : vector<16x8xbf16>, vector<8x16xbf16>, vector<16x16xf32> -> vector<16x16xf32>
    %7 = arith.truncf %6 : vector<16x16xf32> to vector<16x16xbf16>
    %c0_6 = arith.constant 0 : index
    %c0_7 = arith.constant 0 : index
    %c0_8 = arith.constant 0 : index
    %8 = vector.load %arg4[%c0_6, %c0_7, %c0_8] : memref<64x16x16xbf16, #tpu.memory_space<vmem>>, vector<1x16x16xbf16>
    %9 = vector.shape_cast %8 : vector<1x16x16xbf16> to vector<16x16xbf16>
    %10 = vector.shape_cast %7 : vector<16x16xbf16> to vector<1x16x16xbf16>
    tpu.vector_store %arg4[%c0_6, %c0_7, %c0_8], %10 {strides = array<i32>} : memref<64x16x16xbf16, #tpu.memory_space<vmem>>, vector<1x16x16xbf16>,
    %11 = vector.extract_strided_slice %4 {offsets = [8, 0], sizes = [8, 16], strides = [1, 1]} : vector<512x16xbf16> to vector<8x16xbf16>
    %cst_9 = arith.constant dense<0.000000e+00> : vector<16x16xf32>
    %12 = tpu.matmul %0, %11, %cst_9 {dimension_numbers = #tpu.dot_dimension_numbers<[1], [0], [0], [1], [0, 0, 1, 1], [], []>} : vector<16x8xbf16>, vector<8x16xbf16>, vector<16x16xf32> -> vector<16x16xf32>
    %13 = arith.truncf %12 : vector<16x16xf32> to vector<16x16xbf16>
    %c1 = arith.constant 1 : index
    %c0_10 = arith.constant 0 : index
    %c0_11 = arith.constant 0 : index
    %14 = vector.load %arg4[%c1, %c0_10, %c0_11] : memref<64x16x16xbf16, #tpu.memory_space<vmem>>, vector<1x16x16xbf16>
    %15 = vector.shape_cast %14 : vector<1x16x16xbf16> to vector<16x16xbf16>
    %16 = vector.shape_cast %13 : vector<16x16xbf16> to vector<1x16x16xbf16>
    tpu.vector_store %arg4[%c1, %c0_10, %c0_11], %16 {strides = array<i32>} : memref<64x16x16xbf16, #tpu.memory_space<vmem>>, vector<1x16x16xbf16>,
    %17 = vector.extract_strided_slice %4 {offsets = [16, 0], sizes = [8, 16], strides = [1, 1]} : vector<512x16xbf16> to vector<8x16xbf16>
    %cst_12 = arith.constant dense<0.000000e+00> : vector<16x16xf32>
    %18 = tpu.matmul %0, %17, %cst_12 {dimension_numbers = #tpu.dot_dimension_numbers<[1], [0], [0], [1], [0, 0, 1, 1], [], []>} : vector<16x8xbf16>, vector<8x16xbf16>, vector<16x16xf32> -> vector<16x16xf32>
    %19 = arith.truncf %18 : vector<16x16xf32> to vector<16x16xbf16>
    %c2 = arith.constant 2 : index
    %c0_13 = arith.constant 0 : index
    %c0_14 = arith.constant 0 : index
    %20 = vector.load %arg4[%c2, %c0_13, %c0_14] : memref<64x16x16xbf16, #tpu.memory_space<vmem>>, vector<1x16x16xbf16>
    %21 = vector.shape_cast %20 : vector<1x16x16xbf16> to vector<16x16xbf16>
    %22 = vector.shape_cast %19 : vector<16x16xbf16> to vector<1x16x16xbf16>
    tpu.vector_store %arg4[%c2, %c0_13, %c0_14], %22 {strides = array<i32>} : memref<64x16x16xbf16, #tpu.memory_space<vmem>>, vector<1x16x16xbf16>,
    %23 = vector.extract_strided_slice %4 {offsets = [24, 0], sizes = [8, 16], strides = [1, 1]} : vector<512x16xbf16> to vector<8x16xbf16>
    %cst_15 = arith.constant dense<0.000000e+00> : vector<16x16xf32>
    %24 = tpu.matmul %0, %23, %cst_15 {dimension_numbers = #tpu.dot_dimension_numbers<[1], [0], [0], [1], [0, 0, 1, 1], [], []>} : vector<16x8xbf16>, vector<8x16xbf16>, vector<16x16xf32> -> vector<16x16xf32>
    %25 = arith.truncf %24 : vector<16x16xf32> to vector<16x16xbf16>
    %c3 = arith.constant 3 : index
    %c0_16 = arith.constant 0 : index
    %c0_17 = arith.constant 0 : index
    %26 = vector.load %arg4[%c3, %c0_16, %c0_17] : memref<64x16x16xbf16, #tpu.memory_space<vmem>>, vector<1x16x16xbf16>
    %27 = vector.shape_cast %26 : vector<1x16x16xbf16> to vector<16x16xbf16>
    %28 = vector.shape_cast %25 : vector<16x16xbf16> to vector<1x16x16xbf16>
    tpu.vector_store %arg4[%c3, %c0_16, %c0_17], %28 {strides = array<i32>} : memref<64x16x16xbf16, #tpu.memory_space<vmem>>, vector<1x16x16xbf16>,
    %29 = vector.extract_strided_slice %4 {offsets = [32, 0], sizes = [8, 16], strides = [1, 1]} : vector<512x16xbf16> to vector<8x16xbf16>
    %cst_18 = arith.constant dense<0.000000e+00> : vector<16x16xf32>
    %30 = tpu.matmul %0, %29, %cst_18 {dimension_numbers = #tpu.dot_dimension_numbers<[1], [0], [0], [1], [0, 0, 1, 1], [], []>} : vector<16x8xbf16>, vector<8x16xbf16>, vector<16x16xf32> -> vector<16x16xf32>
    %31 = arith.truncf %30 : vector<16x16xf32> to vector<16x16xbf16>
    %c4 = arith.constant 4 : index
    %c0_19 = arith.constant 0 : index
    %c0_20 = arith.constant 0 : index
    %32 = vector.load %arg4[%c4, %c0_19, %c0_20] : memref<64x16x16xbf16, #tpu.memory_space<vmem>>, vector<1x16x16xbf16>
    %33 = vector.shape_cast %32 : vector<1x16x16xbf16> to vector<16x16xbf16>
    %34 = vector.shape_cast %31 : vector<16x16xbf16> to vector<1x16x16xbf16>
    tpu.vector_store %arg4[%c4, %c0_19, %c0_20], %34 {strides = array<i32>} : memref<64x16x16xbf16, #tpu.memory_space<vmem>>, vector<1x16x16xbf16>,
    %35 = vector.extract_strided_slice %4 {offsets = [40, 0], sizes = [8, 16], strides = [1, 1]} : vector<512x16xbf16> to vector<8x16xbf16>
    %cst_21 = arith.constant dense<0.000000e+00> : vector<16x16xf32>
    %36 = tpu.matmul %0, %35, %cst_21 {dimension_numbers = #tpu.dot_dimension_numbers<[1], [0], [0], [1], [0, 0, 1, 1], [], []>} : vector<16x8xbf16>, vector<8x16xbf16>, vector<16x16xf32> -> vector<16x16xf32>
    %37 = arith.truncf %36 : vector<16x16xf32> to vector<16x16xbf16>
    %c5 = arith.constant 5 : index
    %c0_22 = arith.constant 0 : index
    %c0_23 = arith.constant 0 : index
    %38 = vector.load %arg4[%c5, %c0_22, %c0_23] : memref<64x16x16xbf16, #tpu.memory_space<vmem>>, vector<1x16x16xbf16>
    %39 = vector.shape_cast %38 : vector<1x16x16xbf16> to vector<16x16xbf16>
    %40 = vector.shape_cast %37 : vector<16x16xbf16> to vector<1x16x16xbf16>
    tpu.vector_store %arg4[%c5, %c0_22, %c0_23], %40 {strides = array<i32>} : memref<64x16x16xbf16, #tpu.memory_space<vmem>>, vector<1x16x16xbf16>,
    %41 = vector.extract_strided_slice %4 {offsets = [48, 0], sizes = [8, 16], strides = [1, 1]} : vector<512x16xbf16> to vector<8x16xbf16>
    %cst_24 = arith.constant dense<0.000000e+00> : vector<16x16xf32>
    %42 = tpu.matmul %0, %41, %cst_24 {dimension_numbers = #tpu.dot_dimension_numbers<[1], [0], [0], [1], [0, 0, 1, 1], [], []>} : vector<16x8xbf16>, vector<8x16xbf16>, vector<16x16xf32> -> vector<16x16xf32>
    %43 = arith.truncf %42 : vector<16x16xf32> to vector<16x16xbf16>
    %c6 = arith.constant 6 : index
    %c0_25 = arith.constant 0 : index
    %c0_26 = arith.constant 0 : index
    %44 = vector.load %arg4[%c6, %c0_25, %c0_26] : memref<64x16x16xbf16, #tpu.memory_space<vmem>>, vector<1x16x16xbf16>
    %45 = vector.shape_cast %44 : vector<1x16x16xbf16> to vector<16x16xbf16>
    %46 = vector.shape_cast %43 : vector<16x16xbf16> to vector<1x16x16xbf16>
    tpu.vector_store %arg4[%c6, %c0_25, %c0_26], %46 {strides = array<i32>} : memref<64x16x16xbf16, #tpu.memory_space<vmem>>, vector<1x16x16xbf16>,
    %47 = vector.extract_strided_slice %4 {offsets = [56, 0], sizes = [8, 16], strides = [1, 1]} : vector<512x16xbf16> to vector<8x16xbf16>
    %cst_27 = arith.constant dense<0.000000e+00> : vector<16x16xf32>
    %48 = tpu.matmul %0, %47, %cst_27 {dimension_numbers = #tpu.dot_dimension_numbers<[1], [0], [0], [1], [0, 0, 1, 1], [], []>} : vector<16x8xbf16>, vector<8x16xbf16>, vector<16x16xf32> -> vector<16x16xf32>
    %49 = arith.truncf %48 : vector<16x16xf32> to vector<16x16xbf16>
    %c7 = arith.constant 7 : index
    %c0_28 = arith.constant 0 : index
    %c0_29 = arith.constant 0 : index
    %50 = vector.load %arg4[%c7, %c0_28, %c0_29] : memref<64x16x16xbf16, #tpu.memory_space<vmem>>, vector<1x16x16xbf16>
    %51 = vector.shape_cast %50 : vector<1x16x16xbf16> to vector<16x16xbf16>
    %52 = vector.shape_cast %49 : vector<16x16xbf16> to vector<1x16x16xbf16>
    tpu.vector_store %arg4[%c7, %c0_28, %c0_29], %52 {strides = array<i32>} : memref<64x16x16xbf16, #tpu.memory_space<vmem>>, vector<1x16x16xbf16>,
    %53 = vector.extract_strided_slice %4 {offsets = [64, 0], sizes = [8, 16], strides = [1, 1]} : vector<512x16xbf16> to vector<8x16xbf16>
    %cst_30 = arith.constant dense<0.000000e+00> : vector<16x16xf32>
    %54 = tpu.matmul %0, %53, %cst_30 {dimension_numbers = #tpu.dot_dimension_numbers<[1], [0], [0], [1], [0, 0, 1, 1], [], []>} : vector<16x8xbf16>, vector<8x16xbf16>, vector<16x16xf32> -> vector<16x16xf32>
    %55 = arith.truncf %54 : vector<16x16xf32> to vector<16x16xbf16>
    %c8 = arith.constant 8 : index
    %c0_31 = arith.constant 0 : index
    %c0_32 = arith.constant 0 : index
    %56 = vector.load %arg4[%c8, %c0_31, %c0_32] : memref<64x16x16xbf16, #tpu.memory_space<vmem>>, vector<1x16x16xbf16>
    %57 = vector.shape_cast %56 : vector<1x16x16xbf16> to vector<16x16xbf16>
    %58 = vector.shape_cast %55 : vector<16x16xbf16> to vector<1x16x16xbf16>
    tpu.vector_store %arg4[%c8, %c0_31, %c0_32], %58 {strides = array<i32>} : memref<64x16x16xbf16, #tpu.memory_space<vmem>>, vector<1x16x16xbf16>,
    %59 = vector.extract_strided_slice %4 {offsets = [72, 0], sizes = [8, 16], strides = [1, 1]} : vector<512x16xbf16> to vector<8x16xbf16>
    %cst_33 = arith.constant dense<0.000000e+00> : vector<16x16xf32>
    %60 = tpu.matmul %0, %59, %cst_33 {dimension_numbers = #tpu.dot_dimension_numbers<[1], [0], [0], [1], [0, 0, 1, 1], [], []>} : vector<16x8xbf16>, vector<8x16xbf16>, vector<16x16xf32> -> vector<16x16xf32>
    %61 = arith.truncf %60 : vector<16x16xf32> to vector<16x16xbf16>
    %c9 = arith.constant 9 : index
    %c0_34 = arith.constant 0 : index
    %c0_35 = arith.constant 0 : index
    %62 = vector.load %arg4[%c9, %c0_34, %c0_35] : memref<64x16x16xbf16, #tpu.memory_space<vmem>>, vector<1x16x16xbf16>
    %63 = vector.shape_cast %62 : vector<1x16x16xbf16> to vector<16x16xbf16>
    %64 = vector.shape_cast %61 : vector<16x16xbf16> to vector<1x16x16xbf16>
    tpu.vector_store %arg4[%c9, %c0_34, %c0_35], %64 {strides = array<i32>} : memref<64x16x16xbf16, #tpu.memory_space<vmem>>, vector<1x16x16xbf16>,
    %65 = vector.extract_strided_slice %4 {offsets = [80, 0], sizes = [8, 16], strides = [1, 1]} : vector<512x16xbf16> to vector<8x16xbf16>
    %cst_36 = arith.constant dense<0.000000e+00> : vector<16x16xf32>
    %66 = tpu.matmul %0, %65, %cst_36 {dimension_numbers = #tpu.dot_dimension_numbers<[1], [0], [0], [1], [0, 0, 1, 1], [], []>} : vector<16x8xbf16>, vector<8x16xbf16>, vector<16x16xf32> -> vector<16x16xf32>
    %67 = arith.truncf %66 : vector<16x16xf32> to vector<16x16xbf16>
    %c10 = arith.constant 10 : index
    %c0_37 = arith.constant 0 : index
    %c0_38 = arith.constant 0 : index
    %68 = vector.load %arg4[%c10, %c0_37, %c0_38] : memref<64x16x16xbf16, #tpu.memory_space<vmem>>, vector<1x16x16xbf16>
    %69 = vector.shape_cast %68 : vector<1x16x16xbf16> to vector<16x16xbf16>
    %70 = vector.shape_cast %67 : vector<16x16xbf16> to vector<1x16x16xbf16>
    tpu.vector_store %arg4[%c10, %c0_37, %c0_38], %70 {strides = array<i32>} : memref<64x16x16xbf16, #tpu.memory_space<vmem>>, vector<1x16x16xbf16>,
    %71 = vector.extract_strided_slice %4 {offsets = [88, 0], sizes = [8, 16], strides = [1, 1]} : vector<512x16xbf16> to vector<8x16xbf16>
    %cst_39 = arith.constant dense<0.000000e+00> : vector<16x16xf32>
    %72 = tpu.matmul %0, %71, %cst_39 {dimension_numbers = #tpu.dot_dimension_numbers<[1], [0], [0], [1], [0, 0, 1, 1], [], []>} : vector<16x8xbf16>, vector<8x16xbf16>, vector<16x16xf32> -> vector<16x16xf32>
    %73 = arith.truncf %72 : vector<16x16xf32> to vector<16x16xbf16>
    %c11 = arith.constant 11 : index
    %c0_40 = arith.constant 0 : index
    %c0_41 = arith.constant 0 : index
    %74 = vector.load %arg4[%c11, %c0_40, %c0_41] : memref<64x16x16xbf16, #tpu.memory_space<vmem>>, vector<1x16x16xbf16>
    %75 = vector.shape_cast %74 : vector<1x16x16xbf16> to vector<16x16xbf16>
    %76 = vector.shape_cast %73 : vector<16x16xbf16> to vector<1x16x16xbf16>
    tpu.vector_store %arg4[%c11, %c0_40, %c0_41], %76 {strides = array<i32>} : memref<64x16x16xbf16, #tpu.memory_space<vmem>>, vector<1x16x16xbf16>,
    %77 = vector.extract_strided_slice %4 {offsets = [96, 0], sizes = [8, 16], strides = [1, 1]} : vector<512x16xbf16> to vector<8x16xbf16>
    %cst_42 = arith.constant dense<0.000000e+00> : vector<16x16xf32>
    %78 = tpu.matmul %0, %77, %cst_42 {dimension_numbers = #tpu.dot_dimension_numbers<[1], [0], [0], [1], [0, 0, 1, 1], [], []>} : vector<16x8xbf16>, vector<8x16xbf16>, vector<16x16xf32> -> vector<16x16xf32>
    %79 = arith.truncf %78 : vector<16x16xf32> to vector<16x16xbf16>
    %c12 = arith.constant 12 : index
    %c0_43 = arith.constant 0 : index
    %c0_44 = arith.constant 0 : index
    %80 = vector.load %arg4[%c12, %c0_43, %c0_44] : memref<64x16x16xbf16, #tpu.memory_space<vmem>>, vector<1x16x16xbf16>
    %81 = vector.shape_cast %80 : vector<1x16x16xbf16> to vector<16x16xbf16>
    %82 = vector.shape_cast %79 : vector<16x16xbf16> to vector<1x16x16xbf16>
    tpu.vector_store %arg4[%c12, %c0_43, %c0_44], %82 {strides = array<i32>} : memref<64x16x16xbf16, #tpu.memory_space<vmem>>, vector<1x16x16xbf16>,
    %83 = vector.extract_strided_slice %4 {offsets = [104, 0], sizes = [8, 16], strides = [1, 1]} : vector<512x16xbf16> to vector<8x16xbf16>
    %cst_45 = arith.constant dense<0.000000e+00> : vector<16x16xf32>
    %84 = tpu.matmul %0, %83, %cst_45 {dimension_numbers = #tpu.dot_dimension_numbers<[1], [0], [0], [1], [0, 0, 1, 1], [], []>} : vector<16x8xbf16>, vector<8x16xbf16>, vector<16x16xf32> -> vector<16x16xf32>
    %85 = arith.truncf %84 : vector<16x16xf32> to vector<16x16xbf16>
    %c13 = arith.constant 13 : index
    %c0_46 = arith.constant 0 : index
    %c0_47 = arith.constant 0 : index
    %86 = vector.load %arg4[%c13, %c0_46, %c0_47] : memref<64x16x16xbf16, #tpu.memory_space<vmem>>, vector<1x16x16xbf16>
    %87 = vector.shape_cast %86 : vector<1x16x16xbf16> to vector<16x16xbf16>
    %88 = vector.shape_cast %85 : vector<16x16xbf16> to vector<1x16x16xbf16>
    tpu.vector_store %arg4[%c13, %c0_46, %c0_47], %88 {strides = array<i32>} : memref<64x16x16xbf16, #tpu.memory_space<vmem>>, vector<1x16x16xbf16>,
    %89 = vector.extract_strided_slice %4 {offsets = [112, 0], sizes = [8, 16], strides = [1, 1]} : vector<512x16xbf16> to vector<8x16xbf16>
    %cst_48 = arith.constant dense<0.000000e+00> : vector<16x16xf32>
    %90 = tpu.matmul %0, %89, %cst_48 {dimension_numbers = #tpu.dot_dimension_numbers<[1], [0], [0], [1], [0, 0, 1, 1], [], []>} : vector<16x8xbf16>, vector<8x16xbf16>, vector<16x16xf32> -> vector<16x16xf32>
    %91 = arith.truncf %90 : vector<16x16xf32> to vector<16x16xbf16>
    %c14 = arith.constant 14 : index
    %c0_49 = arith.constant 0 : index
    %c0_50 = arith.constant 0 : index
    %92 = vector.load %arg4[%c14, %c0_49, %c0_50] : memref<64x16x16xbf16, #tpu.memory_space<vmem>>, vector<1x16x16xbf16>
    %93 = vector.shape_cast %92 : vector<1x16x16xbf16> to vector<16x16xbf16>
    %94 = vector.shape_cast %91 : vector<16x16xbf16> to vector<1x16x16xbf16>
    tpu.vector_store %arg4[%c14, %c0_49, %c0_50], %94 {strides = array<i32>} : memref<64x16x16xbf16, #tpu.memory_space<vmem>>, vector<1x16x16xbf16>,
    %95 = vector.extract_strided_slice %4 {offsets = [120, 0], sizes = [8, 16], strides = [1, 1]} : vector<512x16xbf16> to vector<8x16xbf16>
    %cst_51 = arith.constant dense<0.000000e+00> : vector<16x16xf32>
    %96 = tpu.matmul %0, %95, %cst_51 {dimension_numbers = #tpu.dot_dimension_numbers<[1], [0], [0], [1], [0, 0, 1, 1], [], []>} : vector<16x8xbf16>, vector<8x16xbf16>, vector<16x16xf32> -> vector<16x16xf32>
    %97 = arith.truncf %96 : vector<16x16xf32> to vector<16x16xbf16>
    %c15 = arith.constant 15 : index
    %c0_52 = arith.constant 0 : index
    %c0_53 = arith.constant 0 : index
    %98 = vector.load %arg4[%c15, %c0_52, %c0_53] : memref<64x16x16xbf16, #tpu.memory_space<vmem>>, vector<1x16x16xbf16>
    %99 = vector.shape_cast %98 : vector<1x16x16xbf16> to vector<16x16xbf16>
    %100 = vector.shape_cast %97 : vector<16x16xbf16> to vector<1x16x16xbf16>
    tpu.vector_store %arg4[%c15, %c0_52, %c0_53], %100 {strides = array<i32>} : memref<64x16x16xbf16, #tpu.memory_space<vmem>>, vector<1x16x16xbf16>,
    %101 = vector.extract_strided_slice %4 {offsets = [128, 0], sizes = [8, 16], strides = [1, 1]} : vector<512x16xbf16> to vector<8x16xbf16>
    %cst_54 = arith.constant dense<0.000000e+00> : vector<16x16xf32>
    %102 = tpu.matmul %0, %101, %cst_54 {dimension_numbers = #tpu.dot_dimension_numbers<[1], [0], [0], [1], [0, 0, 1, 1], [], []>} : vector<16x8xbf16>, vector<8x16xbf16>, vector<16x16xf32> -> vector<16x16xf32>
    %103 = arith.truncf %102 : vector<16x16xf32> to vector<16x16xbf16>
    %c16 = arith.constant 16 : index
    %c0_55 = arith.constant 0 : index
    %c0_56 = arith.constant 0 : index
    %104 = vector.load %arg4[%c16, %c0_55, %c0_56] : memref<64x16x16xbf16, #tpu.memory_space<vmem>>, vector<1x16x16xbf16>
    %105 = vector.shape_cast %104 : vector<1x16x16xbf16> to vector<16x16xbf16>
    %106 = vector.shape_cast %103 : vector<16x16xbf16> to vector<1x16x16xbf16>
    tpu.vector_store %arg4[%c16, %c0_55, %c0_56], %106 {strides = array<i32>} : memref<64x16x16xbf16, #tpu.memory_space<vmem>>, vector<1x16x16xbf16>,
    %107 = vector.extract_strided_slice %4 {offsets = [136, 0], sizes = [8, 16], strides = [1, 1]} : vector<512x16xbf16> to vector<8x16xbf16>
    %cst_57 = arith.constant dense<0.000000e+00> : vector<16x16xf32>
    %108 = tpu.matmul %0, %107, %cst_57 {dimension_numbers = #tpu.dot_dimension_numbers<[1], [0], [0], [1], [0, 0, 1, 1], [], []>} : vector<16x8xbf16>, vector<8x16xbf16>, vector<16x16xf32> -> vector<16x16xf32>
    %109 = arith.truncf %108 : vector<16x16xf32> to vector<16x16xbf16>
    %c17 = arith.constant 17 : index
    %c0_58 = arith.constant 0 : index
    %c0_59 = arith.constant 0 : index
    %110 = vector.load %arg4[%c17, %c0_58, %c0_59] : memref<64x16x16xbf16, #tpu.memory_space<vmem>>, vector<1x16x16xbf16>
    %111 = vector.shape_cast %110 : vector<1x16x16xbf16> to vector<16x16xbf16>
    %112 = vector.shape_cast %109 : vector<16x16xbf16> to vector<1x16x16xbf16>
    tpu.vector_store %arg4[%c17, %c0_58, %c0_59], %112 {strides = array<i32>} : memref<64x16x16xbf16, #tpu.memory_space<vmem>>, vector<1x16x16xbf16>,
    %113 = vector.extract_strided_slice %4 {offsets = [144, 0], sizes = [8, 16], strides = [1, 1]} : vector<512x16xbf16> to vector<8x16xbf16>
    %cst_60 = arith.constant dense<0.000000e+00> : vector<16x16xf32>
    %114 = tpu.matmul %0, %113, %cst_60 {dimension_numbers = #tpu.dot_dimension_numbers<[1], [0], [0], [1], [0, 0, 1, 1], [], []>} : vector<16x8xbf16>, vector<8x16xbf16>, vector<16x16xf32> -> vector<16x16xf32>
    %115 = arith.truncf %114 : vector<16x16xf32> to vector<16x16xbf16>
    %c18 = arith.constant 18 : index
    %c0_61 = arith.constant 0 : index
    %c0_62 = arith.constant 0 : index
    %116 = vector.load %arg4[%c18, %c0_61, %c0_62] : memref<64x16x16xbf16, #tpu.memory_space<vmem>>, vector<1x16x16xbf16>
    %117 = vector.shape_cast %116 : vector<1x16x16xbf16> to vector<16x16xbf16>
    %118 = vector.shape_cast %115 : vector<16x16xbf16> to vector<1x16x16xbf16>
    tpu.vector_store %arg4[%c18, %c0_61, %c0_62], %118 {strides = array<i32>} : memref<64x16x16xbf16, #tpu.memory_space<vmem>>, vector<1x16x16xbf16>,
    %119 = vector.extract_strided_slice %4 {offsets = [152, 0], sizes = [8, 16], strides = [1, 1]} : vector<512x16xbf16> to vector<8x16xbf16>
    %cst_63 = arith.constant dense<0.000000e+00> : vector<16x16xf32>
    %120 = tpu.matmul %0, %119, %cst_63 {dimension_numbers = #tpu.dot_dimension_numbers<[1], [0], [0], [1], [0, 0, 1, 1], [], []>} : vector<16x8xbf16>, vector<8x16xbf16>, vector<16x16xf32> -> vector<16x16xf32>
    %121 = arith.truncf %120 : vector<16x16xf32> to vector<16x16xbf16>
    %c19 = arith.constant 19 : index
    %c0_64 = arith.constant 0 : index
    %c0_65 = arith.constant 0 : index
    %122 = vector.load %arg4[%c19, %c0_64, %c0_65] : memref<64x16x16xbf16, #tpu.memory_space<vmem>>, vector<1x16x16xbf16>
    %123 = vector.shape_cast %122 : vector<1x16x16xbf16> to vector<16x16xbf16>
    %124 = vector.shape_cast %121 : vector<16x16xbf16> to vector<1x16x16xbf16>
    tpu.vector_store %arg4[%c19, %c0_64, %c0_65], %124 {strides = array<i32>} : memref<64x16x16xbf16, #tpu.memory_space<vmem>>, vector<1x16x16xbf16>,
    %125 = vector.extract_strided_slice %4 {offsets = [160, 0], sizes = [8, 16], strides = [1, 1]} : vector<512x16xbf16> to vector<8x16xbf16>
    %cst_66 = arith.constant dense<0.000000e+00> : vector<16x16xf32>
    %126 = tpu.matmul %0, %125, %cst_66 {dimension_numbers = #tpu.dot_dimension_numbers<[1], [0], [0], [1], [0, 0, 1, 1], [], []>} : vector<16x8xbf16>, vector<8x16xbf16>, vector<16x16xf32> -> vector<16x16xf32>
    %127 = arith.truncf %126 : vector<16x16xf32> to vector<16x16xbf16>
    %c20 = arith.constant 20 : index
    %c0_67 = arith.constant 0 : index
    %c0_68 = arith.constant 0 : index
    %128 = vector.load %arg4[%c20, %c0_67, %c0_68] : memref<64x16x16xbf16, #tpu.memory_space<vmem>>, vector<1x16x16xbf16>
    %129 = vector.shape_cast %128 : vector<1x16x16xbf16> to vector<16x16xbf16>
    %130 = vector.shape_cast %127 : vector<16x16xbf16> to vector<1x16x16xbf16>
    tpu.vector_store %arg4[%c20, %c0_67, %c0_68], %130 {strides = array<i32>} : memref<64x16x16xbf16, #tpu.memory_space<vmem>>, vector<1x16x16xbf16>,
    %131 = vector.extract_strided_slice %4 {offsets = [168, 0], sizes = [8, 16], strides = [1, 1]} : vector<512x16xbf16> to vector<8x16xbf16>
    %cst_69 = arith.constant dense<0.000000e+00> : vector<16x16xf32>
    %132 = tpu.matmul %0, %131, %cst_69 {dimension_numbers = #tpu.dot_dimension_numbers<[1], [0], [0], [1], [0, 0, 1, 1], [], []>} : vector<16x8xbf16>, vector<8x16xbf16>, vector<16x16xf32> -> vector<16x16xf32>
    %133 = arith.truncf %132 : vector<16x16xf32> to vector<16x16xbf16>
    %c21 = arith.constant 21 : index
    %c0_70 = arith.constant 0 : index
    %c0_71 = arith.constant 0 : index
    %134 = vector.load %arg4[%c21, %c0_70, %c0_71] : memref<64x16x16xbf16, #tpu.memory_space<vmem>>, vector<1x16x16xbf16>
    %135 = vector.shape_cast %134 : vector<1x16x16xbf16> to vector<16x16xbf16>
    %136 = vector.shape_cast %133 : vector<16x16xbf16> to vector<1x16x16xbf16>
    tpu.vector_store %arg4[%c21, %c0_70, %c0_71], %136 {strides = array<i32>} : memref<64x16x16xbf16, #tpu.memory_space<vmem>>, vector<1x16x16xbf16>,
    %137 = vector.extract_strided_slice %4 {offsets = [176, 0], sizes = [8, 16], strides = [1, 1]} : vector<512x16xbf16> to vector<8x16xbf16>
    %cst_72 = arith.constant dense<0.000000e+00> : vector<16x16xf32>
    %138 = tpu.matmul %0, %137, %cst_72 {dimension_numbers = #tpu.dot_dimension_numbers<[1], [0], [0], [1], [0, 0, 1, 1], [], []>} : vector<16x8xbf16>, vector<8x16xbf16>, vector<16x16xf32> -> vector<16x16xf32>
    %139 = arith.truncf %138 : vector<16x16xf32> to vector<16x16xbf16>
    %c22 = arith.constant 22 : index
    %c0_73 = arith.constant 0 : index
    %c0_74 = arith.constant 0 : index
    %140 = vector.load %arg4[%c22, %c0_73, %c0_74] : memref<64x16x16xbf16, #tpu.memory_space<vmem>>, vector<1x16x16xbf16>
    %141 = vector.shape_cast %140 : vector<1x16x16xbf16> to vector<16x16xbf16>
    %142 = vector.shape_cast %139 : vector<16x16xbf16> to vector<1x16x16xbf16>
    tpu.vector_store %arg4[%c22, %c0_73, %c0_74], %142 {strides = array<i32>} : memref<64x16x16xbf16, #tpu.memory_space<vmem>>, vector<1x16x16xbf16>,
    %143 = vector.extract_strided_slice %4 {offsets = [184, 0], sizes = [8, 16], strides = [1, 1]} : vector<512x16xbf16> to vector<8x16xbf16>
    %cst_75 = arith.constant dense<0.000000e+00> : vector<16x16xf32>
    %144 = tpu.matmul %0, %143, %cst_75 {dimension_numbers = #tpu.dot_dimension_numbers<[1], [0], [0], [1], [0, 0, 1, 1], [], []>} : vector<16x8xbf16>, vector<8x16xbf16>, vector<16x16xf32> -> vector<16x16xf32>
    %145 = arith.truncf %144 : vector<16x16xf32> to vector<16x16xbf16>
    %c23 = arith.constant 23 : index
    %c0_76 = arith.constant 0 : index
    %c0_77 = arith.constant 0 : index
    %146 = vector.load %arg4[%c23, %c0_76, %c0_77] : memref<64x16x16xbf16, #tpu.memory_space<vmem>>, vector<1x16x16xbf16>
    %147 = vector.shape_cast %146 : vector<1x16x16xbf16> to vector<16x16xbf16>
    %148 = vector.shape_cast %145 : vector<16x16xbf16> to vector<1x16x16xbf16>
    tpu.vector_store %arg4[%c23, %c0_76, %c0_77], %148 {strides = array<i32>} : memref<64x16x16xbf16, #tpu.memory_space<vmem>>, vector<1x16x16xbf16>,
    %149 = vector.extract_strided_slice %4 {offsets = [192, 0], sizes = [8, 16], strides = [1, 1]} : vector<512x16xbf16> to vector<8x16xbf16>
    %cst_78 = arith.constant dense<0.000000e+00> : vector<16x16xf32>
    %150 = tpu.matmul %0, %149, %cst_78 {dimension_numbers = #tpu.dot_dimension_numbers<[1], [0], [0], [1], [0, 0, 1, 1], [], []>} : vector<16x8xbf16>, vector<8x16xbf16>, vector<16x16xf32> -> vector<16x16xf32>
    %151 = arith.truncf %150 : vector<16x16xf32> to vector<16x16xbf16>
    %c24 = arith.constant 24 : index
    %c0_79 = arith.constant 0 : index
    %c0_80 = arith.constant 0 : index
    %152 = vector.load %arg4[%c24, %c0_79, %c0_80] : memref<64x16x16xbf16, #tpu.memory_space<vmem>>, vector<1x16x16xbf16>
    %153 = vector.shape_cast %152 : vector<1x16x16xbf16> to vector<16x16xbf16>
    %154 = vector.shape_cast %151 : vector<16x16xbf16> to vector<1x16x16xbf16>
    tpu.vector_store %arg4[%c24, %c0_79, %c0_80], %154 {strides = array<i32>} : memref<64x16x16xbf16, #tpu.memory_space<vmem>>, vector<1x16x16xbf16>,
    %155 = vector.extract_strided_slice %4 {offsets = [200, 0], sizes = [8, 16], strides = [1, 1]} : vector<512x16xbf16> to vector<8x16xbf16>
    %cst_81 = arith.constant dense<0.000000e+00> : vector<16x16xf32>
    %156 = tpu.matmul %0, %155, %cst_81 {dimension_numbers = #tpu.dot_dimension_numbers<[1], [0], [0], [1], [0, 0, 1, 1], [], []>} : vector<16x8xbf16>, vector<8x16xbf16>, vector<16x16xf32> -> vector<16x16xf32>
    %157 = arith.truncf %156 : vector<16x16xf32> to vector<16x16xbf16>
    %c25 = arith.constant 25 : index
    %c0_82 = arith.constant 0 : index
    %c0_83 = arith.constant 0 : index
    %158 = vector.load %arg4[%c25, %c0_82, %c0_83] : memref<64x16x16xbf16, #tpu.memory_space<vmem>>, vector<1x16x16xbf16>
    %159 = vector.shape_cast %158 : vector<1x16x16xbf16> to vector<16x16xbf16>
    %160 = vector.shape_cast %157 : vector<16x16xbf16> to vector<1x16x16xbf16>
    tpu.vector_store %arg4[%c25, %c0_82, %c0_83], %160 {strides = array<i32>} : memref<64x16x16xbf16, #tpu.memory_space<vmem>>, vector<1x16x16xbf16>,
    %161 = vector.extract_strided_slice %4 {offsets = [208, 0], sizes = [8, 16], strides = [1, 1]} : vector<512x16xbf16> to vector<8x16xbf16>
    %cst_84 = arith.constant dense<0.000000e+00> : vector<16x16xf32>
    %162 = tpu.matmul %0, %161, %cst_84 {dimension_numbers = #tpu.dot_dimension_numbers<[1], [0], [0], [1], [0, 0, 1, 1], [], []>} : vector<16x8xbf16>, vector<8x16xbf16>, vector<16x16xf32> -> vector<16x16xf32>
    %163 = arith.truncf %162 : vector<16x16xf32> to vector<16x16xbf16>
    %c26 = arith.constant 26 : index
    %c0_85 = arith.constant 0 : index
    %c0_86 = arith.constant 0 : index
    %164 = vector.load %arg4[%c26, %c0_85, %c0_86] : memref<64x16x16xbf16, #tpu.memory_space<vmem>>, vector<1x16x16xbf16>
    %165 = vector.shape_cast %164 : vector<1x16x16xbf16> to vector<16x16xbf16>
    %166 = vector.shape_cast %163 : vector<16x16xbf16> to vector<1x16x16xbf16>
    tpu.vector_store %arg4[%c26, %c0_85, %c0_86], %166 {strides = array<i32>} : memref<64x16x16xbf16, #tpu.memory_space<vmem>>, vector<1x16x16xbf16>,
    %167 = vector.extract_strided_slice %4 {offsets = [216, 0], sizes = [8, 16], strides = [1, 1]} : vector<512x16xbf16> to vector<8x16xbf16>
    %cst_87 = arith.constant dense<0.000000e+00> : vector<16x16xf32>
    %168 = tpu.matmul %0, %167, %cst_87 {dimension_numbers = #tpu.dot_dimension_numbers<[1], [0], [0], [1], [0, 0, 1, 1], [], []>} : vector<16x8xbf16>, vector<8x16xbf16>, vector<16x16xf32> -> vector<16x16xf32>
    %169 = arith.truncf %168 : vector<16x16xf32> to vector<16x16xbf16>
    %c27 = arith.constant 27 : index
    %c0_88 = arith.constant 0 : index
    %c0_89 = arith.constant 0 : index
    %170 = vector.load %arg4[%c27, %c0_88, %c0_89] : memref<64x16x16xbf16, #tpu.memory_space<vmem>>, vector<1x16x16xbf16>
    %171 = vector.shape_cast %170 : vector<1x16x16xbf16> to vector<16x16xbf16>
    %172 = vector.shape_cast %169 : vector<16x16xbf16> to vector<1x16x16xbf16>
    tpu.vector_store %arg4[%c27, %c0_88, %c0_89], %172 {strides = array<i32>} : memref<64x16x16xbf16, #tpu.memory_space<vmem>>, vector<1x16x16xbf16>,
    %173 = vector.extract_strided_slice %4 {offsets = [224, 0], sizes = [8, 16], strides = [1, 1]} : vector<512x16xbf16> to vector<8x16xbf16>
    %cst_90 = arith.constant dense<0.000000e+00> : vector<16x16xf32>
    %174 = tpu.matmul %0, %173, %cst_90 {dimension_numbers = #tpu.dot_dimension_numbers<[1], [0], [0], [1], [0, 0, 1, 1], [], []>} : vector<16x8xbf16>, vector<8x16xbf16>, vector<16x16xf32> -> vector<16x16xf32>
    %175 = arith.truncf %174 : vector<16x16xf32> to vector<16x16xbf16>
    %c28 = arith.constant 28 : index
    %c0_91 = arith.constant 0 : index
    %c0_92 = arith.constant 0 : index
    %176 = vector.load %arg4[%c28, %c0_91, %c0_92] : memref<64x16x16xbf16, #tpu.memory_space<vmem>>, vector<1x16x16xbf16>
    %177 = vector.shape_cast %176 : vector<1x16x16xbf16> to vector<16x16xbf16>
    %178 = vector.shape_cast %175 : vector<16x16xbf16> to vector<1x16x16xbf16>
    tpu.vector_store %arg4[%c28, %c0_91, %c0_92], %178 {strides = array<i32>} : memref<64x16x16xbf16, #tpu.memory_space<vmem>>, vector<1x16x16xbf16>,
    %179 = vector.extract_strided_slice %4 {offsets = [232, 0], sizes = [8, 16], strides = [1, 1]} : vector<512x16xbf16> to vector<8x16xbf16>
    %cst_93 = arith.constant dense<0.000000e+00> : vector<16x16xf32>
    %180 = tpu.matmul %0, %179, %cst_93 {dimension_numbers = #tpu.dot_dimension_numbers<[1], [0], [0], [1], [0, 0, 1, 1], [], []>} : vector<16x8xbf16>, vector<8x16xbf16>, vector<16x16xf32> -> vector<16x16xf32>
    %181 = arith.truncf %180 : vector<16x16xf32> to vector<16x16xbf16>
    %c29 = arith.constant 29 : index
    %c0_94 = arith.constant 0 : index
    %c0_95 = arith.constant 0 : index
    %182 = vector.load %arg4[%c29, %c0_94, %c0_95] : memref<64x16x16xbf16, #tpu.memory_space<vmem>>, vector<1x16x16xbf16>
    %183 = vector.shape_cast %182 : vector<1x16x16xbf16> to vector<16x16xbf16>
    %184 = vector.shape_cast %181 : vector<16x16xbf16> to vector<1x16x16xbf16>
    tpu.vector_store %arg4[%c29, %c0_94, %c0_95], %184 {strides = array<i32>} : memref<64x16x16xbf16, #tpu.memory_space<vmem>>, vector<1x16x16xbf16>,
    %185 = vector.extract_strided_slice %4 {offsets = [240, 0], sizes = [8, 16], strides = [1, 1]} : vector<512x16xbf16> to vector<8x16xbf16>
    %cst_96 = arith.constant dense<0.000000e+00> : vector<16x16xf32>
    %186 = tpu.matmul %0, %185, %cst_96 {dimension_numbers = #tpu.dot_dimension_numbers<[1], [0], [0], [1], [0, 0, 1, 1], [], []>} : vector<16x8xbf16>, vector<8x16xbf16>, vector<16x16xf32> -> vector<16x16xf32>
    %187 = arith.truncf %186 : vector<16x16xf32> to vector<16x16xbf16>
    %c30 = arith.constant 30 : index
    %c0_97 = arith.constant 0 : index
    %c0_98 = arith.constant 0 : index
    %188 = vector.load %arg4[%c30, %c0_97, %c0_98] : memref<64x16x16xbf16, #tpu.memory_space<vmem>>, vector<1x16x16xbf16>
    %189 = vector.shape_cast %188 : vector<1x16x16xbf16> to vector<16x16xbf16>
    %190 = vector.shape_cast %187 : vector<16x16xbf16> to vector<1x16x16xbf16>
    tpu.vector_store %arg4[%c30, %c0_97, %c0_98], %190 {strides = array<i32>} : memref<64x16x16xbf16, #tpu.memory_space<vmem>>, vector<1x16x16xbf16>,
    %191 = vector.extract_strided_slice %4 {offsets = [248, 0], sizes = [8, 16], strides = [1, 1]} : vector<512x16xbf16> to vector<8x16xbf16>
    %cst_99 = arith.constant dense<0.000000e+00> : vector<16x16xf32>
    %192 = tpu.matmul %0, %191, %cst_99 {dimension_numbers = #tpu.dot_dimension_numbers<[1], [0], [0], [1], [0, 0, 1, 1], [], []>} : vector<16x8xbf16>, vector<8x16xbf16>, vector<16x16xf32> -> vector<16x16xf32>
    %193 = arith.truncf %192 : vector<16x16xf32> to vector<16x16xbf16>
    %c31 = arith.constant 31 : index
    %c0_100 = arith.constant 0 : index
    %c0_101 = arith.constant 0 : index
    %194 = vector.load %arg4[%c31, %c0_100, %c0_101] : memref<64x16x16xbf16, #tpu.memory_space<vmem>>, vector<1x16x16xbf16>
    %195 = vector.shape_cast %194 : vector<1x16x16xbf16> to vector<16x16xbf16>
    %196 = vector.shape_cast %193 : vector<16x16xbf16> to vector<1x16x16xbf16>
    tpu.vector_store %arg4[%c31, %c0_100, %c0_101], %196 {strides = array<i32>} : memref<64x16x16xbf16, #tpu.memory_space<vmem>>, vector<1x16x16xbf16>,
    %197 = vector.extract_strided_slice %4 {offsets = [256, 0], sizes = [8, 16], strides = [1, 1]} : vector<512x16xbf16> to vector<8x16xbf16>
    %cst_102 = arith.constant dense<0.000000e+00> : vector<16x16xf32>
    %198 = tpu.matmul %0, %197, %cst_102 {dimension_numbers = #tpu.dot_dimension_numbers<[1], [0], [0], [1], [0, 0, 1, 1], [], []>} : vector<16x8xbf16>, vector<8x16xbf16>, vector<16x16xf32> -> vector<16x16xf32>
    %199 = arith.truncf %198 : vector<16x16xf32> to vector<16x16xbf16>
    %c32 = arith.constant 32 : index
    %c0_103 = arith.constant 0 : index
    %c0_104 = arith.constant 0 : index
    %200 = vector.load %arg4[%c32, %c0_103, %c0_104] : memref<64x16x16xbf16, #tpu.memory_space<vmem>>, vector<1x16x16xbf16>
    %201 = vector.shape_cast %200 : vector<1x16x16xbf16> to vector<16x16xbf16>
    %202 = vector.shape_cast %199 : vector<16x16xbf16> to vector<1x16x16xbf16>
    tpu.vector_store %arg4[%c32, %c0_103, %c0_104], %202 {strides = array<i32>} : memref<64x16x16xbf16, #tpu.memory_space<vmem>>, vector<1x16x16xbf16>,
    %203 = vector.extract_strided_slice %4 {offsets = [264, 0], sizes = [8, 16], strides = [1, 1]} : vector<512x16xbf16> to vector<8x16xbf16>
    %cst_105 = arith.constant dense<0.000000e+00> : vector<16x16xf32>
    %204 = tpu.matmul %0, %203, %cst_105 {dimension_numbers = #tpu.dot_dimension_numbers<[1], [0], [0], [1], [0, 0, 1, 1], [], []>} : vector<16x8xbf16>, vector<8x16xbf16>, vector<16x16xf32> -> vector<16x16xf32>
    %205 = arith.truncf %204 : vector<16x16xf32> to vector<16x16xbf16>
    %c33 = arith.constant 33 : index
    %c0_106 = arith.constant 0 : index
    %c0_107 = arith.constant 0 : index
    %206 = vector.load %arg4[%c33, %c0_106, %c0_107] : memref<64x16x16xbf16, #tpu.memory_space<vmem>>, vector<1x16x16xbf16>
    %207 = vector.shape_cast %206 : vector<1x16x16xbf16> to vector<16x16xbf16>
    %208 = vector.shape_cast %205 : vector<16x16xbf16> to vector<1x16x16xbf16>
    tpu.vector_store %arg4[%c33, %c0_106, %c0_107], %208 {strides = array<i32>} : memref<64x16x16xbf16, #tpu.memory_space<vmem>>, vector<1x16x16xbf16>,
    %209 = vector.extract_strided_slice %4 {offsets = [272, 0], sizes = [8, 16], strides = [1, 1]} : vector<512x16xbf16> to vector<8x16xbf16>
    %cst_108 = arith.constant dense<0.000000e+00> : vector<16x16xf32>
    %210 = tpu.matmul %0, %209, %cst_108 {dimension_numbers = #tpu.dot_dimension_numbers<[1], [0], [0], [1], [0, 0, 1, 1], [], []>} : vector<16x8xbf16>, vector<8x16xbf16>, vector<16x16xf32> -> vector<16x16xf32>
    %211 = arith.truncf %210 : vector<16x16xf32> to vector<16x16xbf16>
    %c34 = arith.constant 34 : index
    %c0_109 = arith.constant 0 : index
    %c0_110 = arith.constant 0 : index
    %212 = vector.load %arg4[%c34, %c0_109, %c0_110] : memref<64x16x16xbf16, #tpu.memory_space<vmem>>, vector<1x16x16xbf16>
    %213 = vector.shape_cast %212 : vector<1x16x16xbf16> to vector<16x16xbf16>
    %214 = vector.shape_cast %211 : vector<16x16xbf16> to vector<1x16x16xbf16>
    tpu.vector_store %arg4[%c34, %c0_109, %c0_110], %214 {strides = array<i32>} : memref<64x16x16xbf16, #tpu.memory_space<vmem>>, vector<1x16x16xbf16>,
    %215 = vector.extract_strided_slice %4 {offsets = [280, 0], sizes = [8, 16], strides = [1, 1]} : vector<512x16xbf16> to vector<8x16xbf16>
    %cst_111 = arith.constant dense<0.000000e+00> : vector<16x16xf32>
    %216 = tpu.matmul %0, %215, %cst_111 {dimension_numbers = #tpu.dot_dimension_numbers<[1], [0], [0], [1], [0, 0, 1, 1], [], []>} : vector<16x8xbf16>, vector<8x16xbf16>, vector<16x16xf32> -> vector<16x16xf32>
    %217 = arith.truncf %216 : vector<16x16xf32> to vector<16x16xbf16>
    %c35 = arith.constant 35 : index
    %c0_112 = arith.constant 0 : index
    %c0_113 = arith.constant 0 : index
    %218 = vector.load %arg4[%c35, %c0_112, %c0_113] : memref<64x16x16xbf16, #tpu.memory_space<vmem>>, vector<1x16x16xbf16>
    %219 = vector.shape_cast %218 : vector<1x16x16xbf16> to vector<16x16xbf16>
    %220 = vector.shape_cast %217 : vector<16x16xbf16> to vector<1x16x16xbf16>
    tpu.vector_store %arg4[%c35, %c0_112, %c0_113], %220 {strides = array<i32>} : memref<64x16x16xbf16, #tpu.memory_space<vmem>>, vector<1x16x16xbf16>,
    %221 = vector.extract_strided_slice %4 {offsets = [288, 0], sizes = [8, 16], strides = [1, 1]} : vector<512x16xbf16> to vector<8x16xbf16>
    %cst_114 = arith.constant dense<0.000000e+00> : vector<16x16xf32>
    %222 = tpu.matmul %0, %221, %cst_114 {dimension_numbers = #tpu.dot_dimension_numbers<[1], [0], [0], [1], [0, 0, 1, 1], [], []>} : vector<16x8xbf16>, vector<8x16xbf16>, vector<16x16xf32> -> vector<16x16xf32>
    %223 = arith.truncf %222 : vector<16x16xf32> to vector<16x16xbf16>
    %c36 = arith.constant 36 : index
    %c0_115 = arith.constant 0 : index
    %c0_116 = arith.constant 0 : index
    %224 = vector.load %arg4[%c36, %c0_115, %c0_116] : memref<64x16x16xbf16, #tpu.memory_space<vmem>>, vector<1x16x16xbf16>
    %225 = vector.shape_cast %224 : vector<1x16x16xbf16> to vector<16x16xbf16>
    %226 = vector.shape_cast %223 : vector<16x16xbf16> to vector<1x16x16xbf16>
    tpu.vector_store %arg4[%c36, %c0_115, %c0_116], %226 {strides = array<i32>} : memref<64x16x16xbf16, #tpu.memory_space<vmem>>, vector<1x16x16xbf16>,
    %227 = vector.extract_strided_slice %4 {offsets = [296, 0], sizes = [8, 16], strides = [1, 1]} : vector<512x16xbf16> to vector<8x16xbf16>
    %cst_117 = arith.constant dense<0.000000e+00> : vector<16x16xf32>
    %228 = tpu.matmul %0, %227, %cst_117 {dimension_numbers = #tpu.dot_dimension_numbers<[1], [0], [0], [1], [0, 0, 1, 1], [], []>} : vector<16x8xbf16>, vector<8x16xbf16>, vector<16x16xf32> -> vector<16x16xf32>
    %229 = arith.truncf %228 : vector<16x16xf32> to vector<16x16xbf16>
    %c37 = arith.constant 37 : index
    %c0_118 = arith.constant 0 : index
    %c0_119 = arith.constant 0 : index
    %230 = vector.load %arg4[%c37, %c0_118, %c0_119] : memref<64x16x16xbf16, #tpu.memory_space<vmem>>, vector<1x16x16xbf16>
    %231 = vector.shape_cast %230 : vector<1x16x16xbf16> to vector<16x16xbf16>
    %232 = vector.shape_cast %229 : vector<16x16xbf16> to vector<1x16x16xbf16>
    tpu.vector_store %arg4[%c37, %c0_118, %c0_119], %232 {strides = array<i32>} : memref<64x16x16xbf16, #tpu.memory_space<vmem>>, vector<1x16x16xbf16>,
    %233 = vector.extract_strided_slice %4 {offsets = [304, 0], sizes = [8, 16], strides = [1, 1]} : vector<512x16xbf16> to vector<8x16xbf16>
    %cst_120 = arith.constant dense<0.000000e+00> : vector<16x16xf32>
    %234 = tpu.matmul %0, %233, %cst_120 {dimension_numbers = #tpu.dot_dimension_numbers<[1], [0], [0], [1], [0, 0, 1, 1], [], []>} : vector<16x8xbf16>, vector<8x16xbf16>, vector<16x16xf32> -> vector<16x16xf32>
    %235 = arith.truncf %234 : vector<16x16xf32> to vector<16x16xbf16>
    %c38 = arith.constant 38 : index
    %c0_121 = arith.constant 0 : index
    %c0_122 = arith.constant 0 : index
    %236 = vector.load %arg4[%c38, %c0_121, %c0_122] : memref<64x16x16xbf16, #tpu.memory_space<vmem>>, vector<1x16x16xbf16>
    %237 = vector.shape_cast %236 : vector<1x16x16xbf16> to vector<16x16xbf16>
    %238 = vector.shape_cast %235 : vector<16x16xbf16> to vector<1x16x16xbf16>
    tpu.vector_store %arg4[%c38, %c0_121, %c0_122], %238 {strides = array<i32>} : memref<64x16x16xbf16, #tpu.memory_space<vmem>>, vector<1x16x16xbf16>,
    %239 = vector.extract_strided_slice %4 {offsets = [312, 0], sizes = [8, 16], strides = [1, 1]} : vector<512x16xbf16> to vector<8x16xbf16>
    %cst_123 = arith.constant dense<0.000000e+00> : vector<16x16xf32>
    %240 = tpu.matmul %0, %239, %cst_123 {dimension_numbers = #tpu.dot_dimension_numbers<[1], [0], [0], [1], [0, 0, 1, 1], [], []>} : vector<16x8xbf16>, vector<8x16xbf16>, vector<16x16xf32> -> vector<16x16xf32>
    %241 = arith.truncf %240 : vector<16x16xf32> to vector<16x16xbf16>
    %c39 = arith.constant 39 : index
    %c0_124 = arith.constant 0 : index
    %c0_125 = arith.constant 0 : index
    %242 = vector.load %arg4[%c39, %c0_124, %c0_125] : memref<64x16x16xbf16, #tpu.memory_space<vmem>>, vector<1x16x16xbf16>
    %243 = vector.shape_cast %242 : vector<1x16x16xbf16> to vector<16x16xbf16>
    %244 = vector.shape_cast %241 : vector<16x16xbf16> to vector<1x16x16xbf16>
    tpu.vector_store %arg4[%c39, %c0_124, %c0_125], %244 {strides = array<i32>} : memref<64x16x16xbf16, #tpu.memory_space<vmem>>, vector<1x16x16xbf16>,
    %245 = vector.extract_strided_slice %4 {offsets = [320, 0], sizes = [8, 16], strides = [1, 1]} : vector<512x16xbf16> to vector<8x16xbf16>
    %cst_126 = arith.constant dense<0.000000e+00> : vector<16x16xf32>
    %246 = tpu.matmul %0, %245, %cst_126 {dimension_numbers = #tpu.dot_dimension_numbers<[1], [0], [0], [1], [0, 0, 1, 1], [], []>} : vector<16x8xbf16>, vector<8x16xbf16>, vector<16x16xf32> -> vector<16x16xf32>
    %247 = arith.truncf %246 : vector<16x16xf32> to vector<16x16xbf16>
    %c40 = arith.constant 40 : index
    %c0_127 = arith.constant 0 : index
    %c0_128 = arith.constant 0 : index
    %248 = vector.load %arg4[%c40, %c0_127, %c0_128] : memref<64x16x16xbf16, #tpu.memory_space<vmem>>, vector<1x16x16xbf16>
    %249 = vector.shape_cast %248 : vector<1x16x16xbf16> to vector<16x16xbf16>
    %250 = vector.shape_cast %247 : vector<16x16xbf16> to vector<1x16x16xbf16>
    tpu.vector_store %arg4[%c40, %c0_127, %c0_128], %250 {strides = array<i32>} : memref<64x16x16xbf16, #tpu.memory_space<vmem>>, vector<1x16x16xbf16>,
    %251 = vector.extract_strided_slice %4 {offsets = [328, 0], sizes = [8, 16], strides = [1, 1]} : vector<512x16xbf16> to vector<8x16xbf16>
    %cst_129 = arith.constant dense<0.000000e+00> : vector<16x16xf32>
    %252 = tpu.matmul %0, %251, %cst_129 {dimension_numbers = #tpu.dot_dimension_numbers<[1], [0], [0], [1], [0, 0, 1, 1], [], []>} : vector<16x8xbf16>, vector<8x16xbf16>, vector<16x16xf32> -> vector<16x16xf32>
    %253 = arith.truncf %252 : vector<16x16xf32> to vector<16x16xbf16>
    %c41 = arith.constant 41 : index
    %c0_130 = arith.constant 0 : index
    %c0_131 = arith.constant 0 : index
    %254 = vector.load %arg4[%c41, %c0_130, %c0_131] : memref<64x16x16xbf16, #tpu.memory_space<vmem>>, vector<1x16x16xbf16>
    %255 = vector.shape_cast %254 : vector<1x16x16xbf16> to vector<16x16xbf16>
    %256 = vector.shape_cast %253 : vector<16x16xbf16> to vector<1x16x16xbf16>
    tpu.vector_store %arg4[%c41, %c0_130, %c0_131], %256 {strides = array<i32>} : memref<64x16x16xbf16, #tpu.memory_space<vmem>>, vector<1x16x16xbf16>,
    %257 = vector.extract_strided_slice %4 {offsets = [336, 0], sizes = [8, 16], strides = [1, 1]} : vector<512x16xbf16> to vector<8x16xbf16>
    %cst_132 = arith.constant dense<0.000000e+00> : vector<16x16xf32>
    %258 = tpu.matmul %0, %257, %cst_132 {dimension_numbers = #tpu.dot_dimension_numbers<[1], [0], [0], [1], [0, 0, 1, 1], [], []>} : vector<16x8xbf16>, vector<8x16xbf16>, vector<16x16xf32> -> vector<16x16xf32>
    %259 = arith.truncf %258 : vector<16x16xf32> to vector<16x16xbf16>
    %c42 = arith.constant 42 : index
    %c0_133 = arith.constant 0 : index
    %c0_134 = arith.constant 0 : index
    %260 = vector.load %arg4[%c42, %c0_133, %c0_134] : memref<64x16x16xbf16, #tpu.memory_space<vmem>>, vector<1x16x16xbf16>
    %261 = vector.shape_cast %260 : vector<1x16x16xbf16> to vector<16x16xbf16>
    %262 = vector.shape_cast %259 : vector<16x16xbf16> to vector<1x16x16xbf16>
    tpu.vector_store %arg4[%c42, %c0_133, %c0_134], %262 {strides = array<i32>} : memref<64x16x16xbf16, #tpu.memory_space<vmem>>, vector<1x16x16xbf16>,
    %263 = vector.extract_strided_slice %4 {offsets = [344, 0], sizes = [8, 16], strides = [1, 1]} : vector<512x16xbf16> to vector<8x16xbf16>
    %cst_135 = arith.constant dense<0.000000e+00> : vector<16x16xf32>
    %264 = tpu.matmul %0, %263, %cst_135 {dimension_numbers = #tpu.dot_dimension_numbers<[1], [0], [0], [1], [0, 0, 1, 1], [], []>} : vector<16x8xbf16>, vector<8x16xbf16>, vector<16x16xf32> -> vector<16x16xf32>
    %265 = arith.truncf %264 : vector<16x16xf32> to vector<16x16xbf16>
    %c43 = arith.constant 43 : index
    %c0_136 = arith.constant 0 : index
    %c0_137 = arith.constant 0 : index
    %266 = vector.load %arg4[%c43, %c0_136, %c0_137] : memref<64x16x16xbf16, #tpu.memory_space<vmem>>, vector<1x16x16xbf16>
    %267 = vector.shape_cast %266 : vector<1x16x16xbf16> to vector<16x16xbf16>
    %268 = vector.shape_cast %265 : vector<16x16xbf16> to vector<1x16x16xbf16>
    tpu.vector_store %arg4[%c43, %c0_136, %c0_137], %268 {strides = array<i32>} : memref<64x16x16xbf16, #tpu.memory_space<vmem>>, vector<1x16x16xbf16>,
    %269 = vector.extract_strided_slice %4 {offsets = [352, 0], sizes = [8, 16], strides = [1, 1]} : vector<512x16xbf16> to vector<8x16xbf16>
    %cst_138 = arith.constant dense<0.000000e+00> : vector<16x16xf32>
    %270 = tpu.matmul %0, %269, %cst_138 {dimension_numbers = #tpu.dot_dimension_numbers<[1], [0], [0], [1], [0, 0, 1, 1], [], []>} : vector<16x8xbf16>, vector<8x16xbf16>, vector<16x16xf32> -> vector<16x16xf32>
    %271 = arith.truncf %270 : vector<16x16xf32> to vector<16x16xbf16>
    %c44 = arith.constant 44 : index
    %c0_139 = arith.constant 0 : index
    %c0_140 = arith.constant 0 : index
    %272 = vector.load %arg4[%c44, %c0_139, %c0_140] : memref<64x16x16xbf16, #tpu.memory_space<vmem>>, vector<1x16x16xbf16>
    %273 = vector.shape_cast %272 : vector<1x16x16xbf16> to vector<16x16xbf16>
    %274 = vector.shape_cast %271 : vector<16x16xbf16> to vector<1x16x16xbf16>
    tpu.vector_store %arg4[%c44, %c0_139, %c0_140], %274 {strides = array<i32>} : memref<64x16x16xbf16, #tpu.memory_space<vmem>>, vector<1x16x16xbf16>,
    %275 = vector.extract_strided_slice %4 {offsets = [360, 0], sizes = [8, 16], strides = [1, 1]} : vector<512x16xbf16> to vector<8x16xbf16>
    %cst_141 = arith.constant dense<0.000000e+00> : vector<16x16xf32>
    %276 = tpu.matmul %0, %275, %cst_141 {dimension_numbers = #tpu.dot_dimension_numbers<[1], [0], [0], [1], [0, 0, 1, 1], [], []>} : vector<16x8xbf16>, vector<8x16xbf16>, vector<16x16xf32> -> vector<16x16xf32>
    %277 = arith.truncf %276 : vector<16x16xf32> to vector<16x16xbf16>
    %c45 = arith.constant 45 : index
    %c0_142 = arith.constant 0 : index
    %c0_143 = arith.constant 0 : index
    %278 = vector.load %arg4[%c45, %c0_142, %c0_143] : memref<64x16x16xbf16, #tpu.memory_space<vmem>>, vector<1x16x16xbf16>
    %279 = vector.shape_cast %278 : vector<1x16x16xbf16> to vector<16x16xbf16>
    %280 = vector.shape_cast %277 : vector<16x16xbf16> to vector<1x16x16xbf16>
    tpu.vector_store %arg4[%c45, %c0_142, %c0_143], %280 {strides = array<i32>} : memref<64x16x16xbf16, #tpu.memory_space<vmem>>, vector<1x16x16xbf16>,
    %281 = vector.extract_strided_slice %4 {offsets = [368, 0], sizes = [8, 16], strides = [1, 1]} : vector<512x16xbf16> to vector<8x16xbf16>
    %cst_144 = arith.constant dense<0.000000e+00> : vector<16x16xf32>
    %282 = tpu.matmul %0, %281, %cst_144 {dimension_numbers = #tpu.dot_dimension_numbers<[1], [0], [0], [1], [0, 0, 1, 1], [], []>} : vector<16x8xbf16>, vector<8x16xbf16>, vector<16x16xf32> -> vector<16x16xf32>
    %283 = arith.truncf %282 : vector<16x16xf32> to vector<16x16xbf16>
    %c46 = arith.constant 46 : index
    %c0_145 = arith.constant 0 : index
    %c0_146 = arith.constant 0 : index
    %284 = vector.load %arg4[%c46, %c0_145, %c0_146] : memref<64x16x16xbf16, #tpu.memory_space<vmem>>, vector<1x16x16xbf16>
    %285 = vector.shape_cast %284 : vector<1x16x16xbf16> to vector<16x16xbf16>
    %286 = vector.shape_cast %283 : vector<16x16xbf16> to vector<1x16x16xbf16>
    tpu.vector_store %arg4[%c46, %c0_145, %c0_146], %286 {strides = array<i32>} : memref<64x16x16xbf16, #tpu.memory_space<vmem>>, vector<1x16x16xbf16>,
    %287 = vector.extract_strided_slice %4 {offsets = [376, 0], sizes = [8, 16], strides = [1, 1]} : vector<512x16xbf16> to vector<8x16xbf16>
    %cst_147 = arith.constant dense<0.000000e+00> : vector<16x16xf32>
    %288 = tpu.matmul %0, %287, %cst_147 {dimension_numbers = #tpu.dot_dimension_numbers<[1], [0], [0], [1], [0, 0, 1, 1], [], []>} : vector<16x8xbf16>, vector<8x16xbf16>, vector<16x16xf32> -> vector<16x16xf32>
    %289 = arith.truncf %288 : vector<16x16xf32> to vector<16x16xbf16>
    %c47 = arith.constant 47 : index
    %c0_148 = arith.constant 0 : index
    %c0_149 = arith.constant 0 : index
    %290 = vector.load %arg4[%c47, %c0_148, %c0_149] : memref<64x16x16xbf16, #tpu.memory_space<vmem>>, vector<1x16x16xbf16>
    %291 = vector.shape_cast %290 : vector<1x16x16xbf16> to vector<16x16xbf16>
    %292 = vector.shape_cast %289 : vector<16x16xbf16> to vector<1x16x16xbf16>
    tpu.vector_store %arg4[%c47, %c0_148, %c0_149], %292 {strides = array<i32>} : memref<64x16x16xbf16, #tpu.memory_space<vmem>>, vector<1x16x16xbf16>,
    %293 = vector.extract_strided_slice %4 {offsets = [384, 0], sizes = [8, 16], strides = [1, 1]} : vector<512x16xbf16> to vector<8x16xbf16>
    %cst_150 = arith.constant dense<0.000000e+00> : vector<16x16xf32>
    %294 = tpu.matmul %0, %293, %cst_150 {dimension_numbers = #tpu.dot_dimension_numbers<[1], [0], [0], [1], [0, 0, 1, 1], [], []>} : vector<16x8xbf16>, vector<8x16xbf16>, vector<16x16xf32> -> vector<16x16xf32>
    %295 = arith.truncf %294 : vector<16x16xf32> to vector<16x16xbf16>
    %c48 = arith.constant 48 : index
    %c0_151 = arith.constant 0 : index
    %c0_152 = arith.constant 0 : index
    %296 = vector.load %arg4[%c48, %c0_151, %c0_152] : memref<64x16x16xbf16, #tpu.memory_space<vmem>>, vector<1x16x16xbf16>
    %297 = vector.shape_cast %296 : vector<1x16x16xbf16> to vector<16x16xbf16>
    %298 = vector.shape_cast %295 : vector<16x16xbf16> to vector<1x16x16xbf16>
    tpu.vector_store %arg4[%c48, %c0_151, %c0_152], %298 {strides = array<i32>} : memref<64x16x16xbf16, #tpu.memory_space<vmem>>, vector<1x16x16xbf16>,
    %299 = vector.extract_strided_slice %4 {offsets = [392, 0], sizes = [8, 16], strides = [1, 1]} : vector<512x16xbf16> to vector<8x16xbf16>
    %cst_153 = arith.constant dense<0.000000e+00> : vector<16x16xf32>
    %300 = tpu.matmul %0, %299, %cst_153 {dimension_numbers = #tpu.dot_dimension_numbers<[1], [0], [0], [1], [0, 0, 1, 1], [], []>} : vector<16x8xbf16>, vector<8x16xbf16>, vector<16x16xf32> -> vector<16x16xf32>
    %301 = arith.truncf %300 : vector<16x16xf32> to vector<16x16xbf16>
    %c49 = arith.constant 49 : index
    %c0_154 = arith.constant 0 : index
    %c0_155 = arith.constant 0 : index
    %302 = vector.load %arg4[%c49, %c0_154, %c0_155] : memref<64x16x16xbf16, #tpu.memory_space<vmem>>, vector<1x16x16xbf16>
    %303 = vector.shape_cast %302 : vector<1x16x16xbf16> to vector<16x16xbf16>
    %304 = vector.shape_cast %301 : vector<16x16xbf16> to vector<1x16x16xbf16>
    tpu.vector_store %arg4[%c49, %c0_154, %c0_155], %304 {strides = array<i32>} : memref<64x16x16xbf16, #tpu.memory_space<vmem>>, vector<1x16x16xbf16>,
    %305 = vector.extract_strided_slice %4 {offsets = [400, 0], sizes = [8, 16], strides = [1, 1]} : vector<512x16xbf16> to vector<8x16xbf16>
    %cst_156 = arith.constant dense<0.000000e+00> : vector<16x16xf32>
    %306 = tpu.matmul %0, %305, %cst_156 {dimension_numbers = #tpu.dot_dimension_numbers<[1], [0], [0], [1], [0, 0, 1, 1], [], []>} : vector<16x8xbf16>, vector<8x16xbf16>, vector<16x16xf32> -> vector<16x16xf32>
    %307 = arith.truncf %306 : vector<16x16xf32> to vector<16x16xbf16>
    %c50 = arith.constant 50 : index
    %c0_157 = arith.constant 0 : index
    %c0_158 = arith.constant 0 : index
    %308 = vector.load %arg4[%c50, %c0_157, %c0_158] : memref<64x16x16xbf16, #tpu.memory_space<vmem>>, vector<1x16x16xbf16>
    %309 = vector.shape_cast %308 : vector<1x16x16xbf16> to vector<16x16xbf16>
    %310 = vector.shape_cast %307 : vector<16x16xbf16> to vector<1x16x16xbf16>
    tpu.vector_store %arg4[%c50, %c0_157, %c0_158], %310 {strides = array<i32>} : memref<64x16x16xbf16, #tpu.memory_space<vmem>>, vector<1x16x16xbf16>,
    %311 = vector.extract_strided_slice %4 {offsets = [408, 0], sizes = [8, 16], strides = [1, 1]} : vector<512x16xbf16> to vector<8x16xbf16>
    %cst_159 = arith.constant dense<0.000000e+00> : vector<16x16xf32>
    %312 = tpu.matmul %0, %311, %cst_159 {dimension_numbers = #tpu.dot_dimension_numbers<[1], [0], [0], [1], [0, 0, 1, 1], [], []>} : vector<16x8xbf16>, vector<8x16xbf16>, vector<16x16xf32> -> vector<16x16xf32>
    %313 = arith.truncf %312 : vector<16x16xf32> to vector<16x16xbf16>
    %c51 = arith.constant 51 : index
    %c0_160 = arith.constant 0 : index
    %c0_161 = arith.constant 0 : index
    %314 = vector.load %arg4[%c51, %c0_160, %c0_161] : memref<64x16x16xbf16, #tpu.memory_space<vmem>>, vector<1x16x16xbf16>
    %315 = vector.shape_cast %314 : vector<1x16x16xbf16> to vector<16x16xbf16>
    %316 = vector.shape_cast %313 : vector<16x16xbf16> to vector<1x16x16xbf16>
    tpu.vector_store %arg4[%c51, %c0_160, %c0_161], %316 {strides = array<i32>} : memref<64x16x16xbf16, #tpu.memory_space<vmem>>, vector<1x16x16xbf16>,
    %317 = vector.extract_strided_slice %4 {offsets = [416, 0], sizes = [8, 16], strides = [1, 1]} : vector<512x16xbf16> to vector<8x16xbf16>
    %cst_162 = arith.constant dense<0.000000e+00> : vector<16x16xf32>
    %318 = tpu.matmul %0, %317, %cst_162 {dimension_numbers = #tpu.dot_dimension_numbers<[1], [0], [0], [1], [0, 0, 1, 1], [], []>} : vector<16x8xbf16>, vector<8x16xbf16>, vector<16x16xf32> -> vector<16x16xf32>
    %319 = arith.truncf %318 : vector<16x16xf32> to vector<16x16xbf16>
    %c52 = arith.constant 52 : index
    %c0_163 = arith.constant 0 : index
    %c0_164 = arith.constant 0 : index
    %320 = vector.load %arg4[%c52, %c0_163, %c0_164] : memref<64x16x16xbf16, #tpu.memory_space<vmem>>, vector<1x16x16xbf16>
    %321 = vector.shape_cast %320 : vector<1x16x16xbf16> to vector<16x16xbf16>
    %322 = vector.shape_cast %319 : vector<16x16xbf16> to vector<1x16x16xbf16>
    tpu.vector_store %arg4[%c52, %c0_163, %c0_164], %322 {strides = array<i32>} : memref<64x16x16xbf16, #tpu.memory_space<vmem>>, vector<1x16x16xbf16>,
    %323 = vector.extract_strided_slice %4 {offsets = [424, 0], sizes = [8, 16], strides = [1, 1]} : vector<512x16xbf16> to vector<8x16xbf16>
    %cst_165 = arith.constant dense<0.000000e+00> : vector<16x16xf32>
    %324 = tpu.matmul %0, %323, %cst_165 {dimension_numbers = #tpu.dot_dimension_numbers<[1], [0], [0], [1], [0, 0, 1, 1], [], []>} : vector<16x8xbf16>, vector<8x16xbf16>, vector<16x16xf32> -> vector<16x16xf32>
    %325 = arith.truncf %324 : vector<16x16xf32> to vector<16x16xbf16>
    %c53 = arith.constant 53 : index
    %c0_166 = arith.constant 0 : index
    %c0_167 = arith.constant 0 : index
    %326 = vector.load %arg4[%c53, %c0_166, %c0_167] : memref<64x16x16xbf16, #tpu.memory_space<vmem>>, vector<1x16x16xbf16>
    %327 = vector.shape_cast %326 : vector<1x16x16xbf16> to vector<16x16xbf16>
    %328 = vector.shape_cast %325 : vector<16x16xbf16> to vector<1x16x16xbf16>
    tpu.vector_store %arg4[%c53, %c0_166, %c0_167], %328 {strides = array<i32>} : memref<64x16x16xbf16, #tpu.memory_space<vmem>>, vector<1x16x16xbf16>,
    %329 = vector.extract_strided_slice %4 {offsets = [432, 0], sizes = [8, 16], strides = [1, 1]} : vector<512x16xbf16> to vector<8x16xbf16>
    %cst_168 = arith.constant dense<0.000000e+00> : vector<16x16xf32>
    %330 = tpu.matmul %0, %329, %cst_168 {dimension_numbers = #tpu.dot_dimension_numbers<[1], [0], [0], [1], [0, 0, 1, 1], [], []>} : vector<16x8xbf16>, vector<8x16xbf16>, vector<16x16xf32> -> vector<16x16xf32>
    %331 = arith.truncf %330 : vector<16x16xf32> to vector<16x16xbf16>
    %c54 = arith.constant 54 : index
    %c0_169 = arith.constant 0 : index
    %c0_170 = arith.constant 0 : index
    %332 = vector.load %arg4[%c54, %c0_169, %c0_170] : memref<64x16x16xbf16, #tpu.memory_space<vmem>>, vector<1x16x16xbf16>
    %333 = vector.shape_cast %332 : vector<1x16x16xbf16> to vector<16x16xbf16>
    %334 = vector.shape_cast %331 : vector<16x16xbf16> to vector<1x16x16xbf16>
    tpu.vector_store %arg4[%c54, %c0_169, %c0_170], %334 {strides = array<i32>} : memref<64x16x16xbf16, #tpu.memory_space<vmem>>, vector<1x16x16xbf16>,
    %335 = vector.extract_strided_slice %4 {offsets = [440, 0], sizes = [8, 16], strides = [1, 1]} : vector<512x16xbf16> to vector<8x16xbf16>
    %cst_171 = arith.constant dense<0.000000e+00> : vector<16x16xf32>
    %336 = tpu.matmul %0, %335, %cst_171 {dimension_numbers = #tpu.dot_dimension_numbers<[1], [0], [0], [1], [0, 0, 1, 1], [], []>} : vector<16x8xbf16>, vector<8x16xbf16>, vector<16x16xf32> -> vector<16x16xf32>
    %337 = arith.truncf %336 : vector<16x16xf32> to vector<16x16xbf16>
    %c55 = arith.constant 55 : index
    %c0_172 = arith.constant 0 : index
    %c0_173 = arith.constant 0 : index
    %338 = vector.load %arg4[%c55, %c0_172, %c0_173] : memref<64x16x16xbf16, #tpu.memory_space<vmem>>, vector<1x16x16xbf16>
    %339 = vector.shape_cast %338 : vector<1x16x16xbf16> to vector<16x16xbf16>
    %340 = vector.shape_cast %337 : vector<16x16xbf16> to vector<1x16x16xbf16>
    tpu.vector_store %arg4[%c55, %c0_172, %c0_173], %340 {strides = array<i32>} : memref<64x16x16xbf16, #tpu.memory_space<vmem>>, vector<1x16x16xbf16>,
    %341 = vector.extract_strided_slice %4 {offsets = [448, 0], sizes = [8, 16], strides = [1, 1]} : vector<512x16xbf16> to vector<8x16xbf16>
    %cst_174 = arith.constant dense<0.000000e+00> : vector<16x16xf32>
    %342 = tpu.matmul %0, %341, %cst_174 {dimension_numbers = #tpu.dot_dimension_numbers<[1], [0], [0], [1], [0, 0, 1, 1], [], []>} : vector<16x8xbf16>, vector<8x16xbf16>, vector<16x16xf32> -> vector<16x16xf32>
    %343 = arith.truncf %342 : vector<16x16xf32> to vector<16x16xbf16>
    %c56 = arith.constant 56 : index
    %c0_175 = arith.constant 0 : index
    %c0_176 = arith.constant 0 : index
    %344 = vector.load %arg4[%c56, %c0_175, %c0_176] : memref<64x16x16xbf16, #tpu.memory_space<vmem>>, vector<1x16x16xbf16>
    %345 = vector.shape_cast %344 : vector<1x16x16xbf16> to vector<16x16xbf16>
    %346 = vector.shape_cast %343 : vector<16x16xbf16> to vector<1x16x16xbf16>
    tpu.vector_store %arg4[%c56, %c0_175, %c0_176], %346 {strides = array<i32>} : memref<64x16x16xbf16, #tpu.memory_space<vmem>>, vector<1x16x16xbf16>,
    %347 = vector.extract_strided_slice %4 {offsets = [456, 0], sizes = [8, 16], strides = [1, 1]} : vector<512x16xbf16> to vector<8x16xbf16>
    %cst_177 = arith.constant dense<0.000000e+00> : vector<16x16xf32>
    %348 = tpu.matmul %0, %347, %cst_177 {dimension_numbers = #tpu.dot_dimension_numbers<[1], [0], [0], [1], [0, 0, 1, 1], [], []>} : vector<16x8xbf16>, vector<8x16xbf16>, vector<16x16xf32> -> vector<16x16xf32>
    %349 = arith.truncf %348 : vector<16x16xf32> to vector<16x16xbf16>
    %c57 = arith.constant 57 : index
    %c0_178 = arith.constant 0 : index
    %c0_179 = arith.constant 0 : index
    %350 = vector.load %arg4[%c57, %c0_178, %c0_179] : memref<64x16x16xbf16, #tpu.memory_space<vmem>>, vector<1x16x16xbf16>
    %351 = vector.shape_cast %350 : vector<1x16x16xbf16> to vector<16x16xbf16>
    %352 = vector.shape_cast %349 : vector<16x16xbf16> to vector<1x16x16xbf16>
    tpu.vector_store %arg4[%c57, %c0_178, %c0_179], %352 {strides = array<i32>} : memref<64x16x16xbf16, #tpu.memory_space<vmem>>, vector<1x16x16xbf16>,
    %353 = vector.extract_strided_slice %4 {offsets = [464, 0], sizes = [8, 16], strides = [1, 1]} : vector<512x16xbf16> to vector<8x16xbf16>
    %cst_180 = arith.constant dense<0.000000e+00> : vector<16x16xf32>
    %354 = tpu.matmul %0, %353, %cst_180 {dimension_numbers = #tpu.dot_dimension_numbers<[1], [0], [0], [1], [0, 0, 1, 1], [], []>} : vector<16x8xbf16>, vector<8x16xbf16>, vector<16x16xf32> -> vector<16x16xf32>
    %355 = arith.truncf %354 : vector<16x16xf32> to vector<16x16xbf16>
    %c58 = arith.constant 58 : index
    %c0_181 = arith.constant 0 : index
    %c0_182 = arith.constant 0 : index
    %356 = vector.load %arg4[%c58, %c0_181, %c0_182] : memref<64x16x16xbf16, #tpu.memory_space<vmem>>, vector<1x16x16xbf16>
    %357 = vector.shape_cast %356 : vector<1x16x16xbf16> to vector<16x16xbf16>
    %358 = vector.shape_cast %355 : vector<16x16xbf16> to vector<1x16x16xbf16>
    tpu.vector_store %arg4[%c58, %c0_181, %c0_182], %358 {strides = array<i32>} : memref<64x16x16xbf16, #tpu.memory_space<vmem>>, vector<1x16x16xbf16>,
    %359 = vector.extract_strided_slice %4 {offsets = [472, 0], sizes = [8, 16], strides = [1, 1]} : vector<512x16xbf16> to vector<8x16xbf16>
    %cst_183 = arith.constant dense<0.000000e+00> : vector<16x16xf32>
    %360 = tpu.matmul %0, %359, %cst_183 {dimension_numbers = #tpu.dot_dimension_numbers<[1], [0], [0], [1], [0, 0, 1, 1], [], []>} : vector<16x8xbf16>, vector<8x16xbf16>, vector<16x16xf32> -> vector<16x16xf32>
    %361 = arith.truncf %360 : vector<16x16xf32> to vector<16x16xbf16>
    %c59 = arith.constant 59 : index
    %c0_184 = arith.constant 0 : index
    %c0_185 = arith.constant 0 : index
    %362 = vector.load %arg4[%c59, %c0_184, %c0_185] : memref<64x16x16xbf16, #tpu.memory_space<vmem>>, vector<1x16x16xbf16>
    %363 = vector.shape_cast %362 : vector<1x16x16xbf16> to vector<16x16xbf16>
    %364 = vector.shape_cast %361 : vector<16x16xbf16> to vector<1x16x16xbf16>
    tpu.vector_store %arg4[%c59, %c0_184, %c0_185], %364 {strides = array<i32>} : memref<64x16x16xbf16, #tpu.memory_space<vmem>>, vector<1x16x16xbf16>,
    %365 = vector.extract_strided_slice %4 {offsets = [480, 0], sizes = [8, 16], strides = [1, 1]} : vector<512x16xbf16> to vector<8x16xbf16>
    %cst_186 = arith.constant dense<0.000000e+00> : vector<16x16xf32>
    %366 = tpu.matmul %0, %365, %cst_186 {dimension_numbers = #tpu.dot_dimension_numbers<[1], [0], [0], [1], [0, 0, 1, 1], [], []>} : vector<16x8xbf16>, vector<8x16xbf16>, vector<16x16xf32> -> vector<16x16xf32>
    %367 = arith.truncf %366 : vector<16x16xf32> to vector<16x16xbf16>
    %c60 = arith.constant 60 : index
    %c0_187 = arith.constant 0 : index
    %c0_188 = arith.constant 0 : index
    %368 = vector.load %arg4[%c60, %c0_187, %c0_188] : memref<64x16x16xbf16, #tpu.memory_space<vmem>>, vector<1x16x16xbf16>
    %369 = vector.shape_cast %368 : vector<1x16x16xbf16> to vector<16x16xbf16>
    %370 = vector.shape_cast %367 : vector<16x16xbf16> to vector<1x16x16xbf16>
    tpu.vector_store %arg4[%c60, %c0_187, %c0_188], %370 {strides = array<i32>} : memref<64x16x16xbf16, #tpu.memory_space<vmem>>, vector<1x16x16xbf16>,
    %371 = vector.extract_strided_slice %4 {offsets = [488, 0], sizes = [8, 16], strides = [1, 1]} : vector<512x16xbf16> to vector<8x16xbf16>
    %cst_189 = arith.constant dense<0.000000e+00> : vector<16x16xf32>
    %372 = tpu.matmul %0, %371, %cst_189 {dimension_numbers = #tpu.dot_dimension_numbers<[1], [0], [0], [1], [0, 0, 1, 1], [], []>} : vector<16x8xbf16>, vector<8x16xbf16>, vector<16x16xf32> -> vector<16x16xf32>
    %373 = arith.truncf %372 : vector<16x16xf32> to vector<16x16xbf16>
    %c61 = arith.constant 61 : index
    %c0_190 = arith.constant 0 : index
    %c0_191 = arith.constant 0 : index
    %374 = vector.load %arg4[%c61, %c0_190, %c0_191] : memref<64x16x16xbf16, #tpu.memory_space<vmem>>, vector<1x16x16xbf16>
    %375 = vector.shape_cast %374 : vector<1x16x16xbf16> to vector<16x16xbf16>
    %376 = vector.shape_cast %373 : vector<16x16xbf16> to vector<1x16x16xbf16>
    tpu.vector_store %arg4[%c61, %c0_190, %c0_191], %376 {strides = array<i32>} : memref<64x16x16xbf16, #tpu.memory_space<vmem>>, vector<1x16x16xbf16>,
    %377 = vector.extract_strided_slice %4 {offsets = [496, 0], sizes = [8, 16], strides = [1, 1]} : vector<512x16xbf16> to vector<8x16xbf16>
    %cst_192 = arith.constant dense<0.000000e+00> : vector<16x16xf32>
    %378 = tpu.matmul %0, %377, %cst_192 {dimension_numbers = #tpu.dot_dimension_numbers<[1], [0], [0], [1], [0, 0, 1, 1], [], []>} : vector<16x8xbf16>, vector<8x16xbf16>, vector<16x16xf32> -> vector<16x16xf32>
    %379 = arith.truncf %378 : vector<16x16xf32> to vector<16x16xbf16>
    %c62 = arith.constant 62 : index
    %c0_193 = arith.constant 0 : index
    %c0_194 = arith.constant 0 : index
    %380 = vector.load %arg4[%c62, %c0_193, %c0_194] : memref<64x16x16xbf16, #tpu.memory_space<vmem>>, vector<1x16x16xbf16>
    %381 = vector.shape_cast %380 : vector<1x16x16xbf16> to vector<16x16xbf16>
    %382 = vector.shape_cast %379 : vector<16x16xbf16> to vector<1x16x16xbf16>
    tpu.vector_store %arg4[%c62, %c0_193, %c0_194], %382 {strides = array<i32>} : memref<64x16x16xbf16, #tpu.memory_space<vmem>>, vector<1x16x16xbf16>,
    %383 = vector.extract_strided_slice %4 {offsets = [504, 0], sizes = [8, 16], strides = [1, 1]} : vector<512x16xbf16> to vector<8x16xbf16>
    %cst_195 = arith.constant dense<0.000000e+00> : vector<16x16xf32>
    %384 = tpu.matmul %0, %383, %cst_195 {dimension_numbers = #tpu.dot_dimension_numbers<[1], [0], [0], [1], [0, 0, 1, 1], [], []>} : vector<16x8xbf16>, vector<8x16xbf16>, vector<16x16xf32> -> vector<16x16xf32>
    %385 = arith.truncf %384 : vector<16x16xf32> to vector<16x16xbf16>
    %c63 = arith.constant 63 : index
    %c0_196 = arith.constant 0 : index
    %c0_197 = arith.constant 0 : index
    %386 = vector.load %arg4[%c63, %c0_196, %c0_197] : memref<64x16x16xbf16, #tpu.memory_space<vmem>>, vector<1x16x16xbf16>
    %387 = vector.shape_cast %386 : vector<1x16x16xbf16> to vector<16x16xbf16>
    %388 = vector.shape_cast %385 : vector<16x16xbf16> to vector<1x16x16xbf16>
    tpu.vector_store %arg4[%c63, %c0_196, %c0_197], %388 {strides = array<i32>} : memref<64x16x16xbf16, #tpu.memory_space<vmem>>, vector<1x16x16xbf16>,
    return
  }
  func.func @transform_0(%arg0: i32) -> (i32, i32) {
    %c0_i32 = arith.constant 0 : i32
    %c0_i32_0 = arith.constant 0 : i32
    %c0_i32_1 = arith.constant 0 : i32
    return %c0_i32, %c0_i32_0 : i32, i32
  }
  func.func @transform_1(%arg0: i32) -> (i32, i32) {
    %c0_i32 = arith.constant 0 : i32
    %c0_i32_0 = arith.constant 0 : i32
    return %arg0, %c0_i32 : i32, i32
  }
  func.func @transform_2(%arg0: i32) -> (i32, i32) {
    %c0_i32 = arith.constant 0 : i32
    %c0_i32_0 = arith.constant 0 : i32
    %c0_i32_1 = arith.constant 0 : i32
    return %c0_i32, %c0_i32_0 : i32, i32
  }
  func.func @transform_3(%arg0: i32) -> (i32, i32, i32) {
    %c0_i32 = arith.constant 0 : i32
    %c0_i32_0 = arith.constant 0 : i32
    %c0_i32_1 = arith.constant 0 : i32
    return %arg0, %c0_i32, %c0_i32_0 : i32, i32, i32
  }
}

module attributes {stable_mosaic.version = 11 : i64} {
  func.func @_mlp_head_kernel(%arg0: i32, %arg1: i32, %arg2: memref<1x16x256xbf16, #tpu.memory_space<vmem>>, %arg3: memref<1x32x256xbf16, #tpu.memory_space<vmem>>, %arg4: memref<48x16xbf16, #tpu.memory_space<vmem>>, %arg5: memref<48x32xbf16, #tpu.memory_space<vmem>>, %arg6: memref<48x1xf32, #tpu.memory_space<vmem>>, %arg7: memref<48x48xbf16, #tpu.memory_space<vmem>>, %arg8: memref<48x1xf32, #tpu.memory_space<vmem>>, %arg9: memref<48x1xf32, #tpu.memory_space<vmem>>, %arg10: memref<1x1x256xf32, #tpu.memory_space<vmem>>, %arg11: memref<1x1x1xf32, #tpu.memory_space<vmem>>) attributes {dimension_semantics = [#tpu.dimension_semantics<parallel>, #tpu.dimension_semantics<parallel>], iteration_bounds = array<i64: 2, 1>, scalar_prefetch = 0 : i64, scratch_operands = 0 : i64, tpu.core_type = #tpu.core_type<tc>, window_params = [{transform_indices = @transform_0, window_bounds = array<i64: 1, 16, 256>}, {transform_indices = @transform_1, window_bounds = array<i64: 1, 32, 256>}, {pipeline_mode = #tpu.pipeline_mode<synchronous>, transform_indices = @transform_2, window_bounds = array<i64: 48, 16>}, {pipeline_mode = #tpu.pipeline_mode<synchronous>, transform_indices = @transform_3, window_bounds = array<i64: 48, 32>}, {pipeline_mode = #tpu.pipeline_mode<synchronous>, transform_indices = @transform_4, window_bounds = array<i64: 48, 1>}, {pipeline_mode = #tpu.pipeline_mode<synchronous>, transform_indices = @transform_5, window_bounds = array<i64: 48, 48>}, {pipeline_mode = #tpu.pipeline_mode<synchronous>, transform_indices = @transform_6, window_bounds = array<i64: 48, 1>}, {pipeline_mode = #tpu.pipeline_mode<synchronous>, transform_indices = @transform_7, window_bounds = array<i64: 48, 1>}, {transform_indices = @transform_8, window_bounds = array<i64: 1, 1, 256>}, {transform_indices = @transform_9, window_bounds = array<i64: 1, 1, 1>}]} {
    %c0 = arith.constant 0 : index
    %c0_0 = arith.constant 0 : index
    %c0_1 = arith.constant 0 : index
    %0 = vector.load %arg2[%c0, %c0_0, %c0_1] : memref<1x16x256xbf16, #tpu.memory_space<vmem>>, vector<1x16x256xbf16>
    %1 = vector.shape_cast %0 : vector<1x16x256xbf16> to vector<16x256xbf16>
    %c0_2 = arith.constant 0 : index
    %c0_3 = arith.constant 0 : index
    %c0_4 = arith.constant 0 : index
    %2 = vector.load %arg3[%c0_2, %c0_3, %c0_4] : memref<1x32x256xbf16, #tpu.memory_space<vmem>>, vector<1x32x256xbf16>
    %3 = vector.shape_cast %2 : vector<1x32x256xbf16> to vector<32x256xbf16>
    %c0_5 = arith.constant 0 : index
    %c0_6 = arith.constant 0 : index
    %4 = vector.load %arg4[%c0_5, %c0_6] : memref<48x16xbf16, #tpu.memory_space<vmem>>, vector<48x16xbf16>
    %cst = arith.constant dense<0.000000e+00> : vector<48x256xf32>
    %5 = tpu.matmul %4, %1, %cst {dimension_numbers = #tpu.dot_dimension_numbers<[1], [0], [0], [1], [0, 0, 1, 1], [], []>} : vector<48x16xbf16>, vector<16x256xbf16>, vector<48x256xf32> -> vector<48x256xf32>
    %c0_7 = arith.constant 0 : index
    %c0_8 = arith.constant 0 : index
    %6 = vector.load %arg5[%c0_7, %c0_8] : memref<48x32xbf16, #tpu.memory_space<vmem>>, vector<48x32xbf16>
    %cst_9 = arith.constant dense<0.000000e+00> : vector<48x256xf32>
    %7 = tpu.matmul %6, %3, %cst_9 {dimension_numbers = #tpu.dot_dimension_numbers<[1], [0], [0], [1], [0, 0, 1, 1], [], []>} : vector<48x32xbf16>, vector<32x256xbf16>, vector<48x256xf32> -> vector<48x256xf32>
    %8 = arith.addf %5, %7 : vector<48x256xf32>
    %c0_10 = arith.constant 0 : index
    %c0_11 = arith.constant 0 : index
    %9 = vector.load %arg6[%c0_10, %c0_11] : memref<48x1xf32, #tpu.memory_space<vmem>>, vector<48x1xf32>
    %10 = vector.broadcast %9 : vector<48x1xf32> to vector<48x256xf32>
    %11 = arith.addf %8, %10 : vector<48x256xf32>
    %c0_12 = arith.constant 0 : index
    %c0_13 = arith.constant 0 : index
    %12 = vector.load %arg7[%c0_12, %c0_13] : memref<48x48xbf16, #tpu.memory_space<vmem>>, vector<48x48xbf16>
    %13 = arith.truncf %11 : vector<48x256xf32> to vector<48x256xbf16>
    %cst_14 = arith.constant dense<0.000000e+00> : vector<48x256xf32>
    %14 = tpu.matmul %12, %13, %cst_14 {dimension_numbers = #tpu.dot_dimension_numbers<[1], [0], [0], [1], [0, 0, 1, 1], [], []>} : vector<48x48xbf16>, vector<48x256xbf16>, vector<48x256xf32> -> vector<48x256xf32>
    %c0_15 = arith.constant 0 : index
    %c0_16 = arith.constant 0 : index
    %15 = vector.load %arg8[%c0_15, %c0_16] : memref<48x1xf32, #tpu.memory_space<vmem>>, vector<48x1xf32>
    %16 = vector.broadcast %15 : vector<48x1xf32> to vector<48x256xf32>
    %17 = arith.addf %14, %16 : vector<48x256xf32>
    %cst_17 = arith.constant 0.000000e+00 : f32
    %18 = vector.broadcast %cst_17 : f32 to vector<48x256xf32>
    %19 = arith.maximumf %17, %18 : vector<48x256xf32>
    %c0_18 = arith.constant 0 : index
    %c0_19 = arith.constant 0 : index
    %20 = vector.load %arg9[%c0_18, %c0_19] : memref<48x1xf32, #tpu.memory_space<vmem>>, vector<48x1xf32>
    %21 = vector.broadcast %20 : vector<48x1xf32> to vector<48x256xf32>
    %22 = arith.mulf %19, %21 : vector<48x256xf32>
    %cst_20 = arith.constant dense<0.000000e+00> : vector<256xf32>
    %23 = vector.multi_reduction <add>, %22, %cst_20 [0] : vector<48x256xf32> to vector<256xf32>
    %24 = vector.shape_cast %23 : vector<256xf32> to vector<1x256xf32>
    %25 = arith.negf %24 : vector<1x256xf32>
    %26 = math.exp %25 : vector<1x256xf32>
    %cst_21 = arith.constant 1.000000e+00 : f32
    %27 = vector.broadcast %cst_21 : f32 to vector<1x256xf32>
    %28 = arith.addf %27, %26 : vector<1x256xf32>
    %29 = arith.divf %27, %28 : vector<1x256xf32>
    %c0_22 = arith.constant 0 : index
    %c0_23 = arith.constant 0 : index
    %c0_24 = arith.constant 0 : index
    %30 = vector.load %arg10[%c0_22, %c0_23, %c0_24] : memref<1x1x256xf32, #tpu.memory_space<vmem>>, vector<1x1x256xf32>
    %31 = vector.shape_cast %30 : vector<1x1x256xf32> to vector<1x256xf32>
    %32 = vector.shape_cast %29 : vector<1x256xf32> to vector<1x1x256xf32>
    tpu.vector_store %arg10[%c0_22, %c0_23, %c0_24], %32 {strides = array<i32>} : memref<1x1x256xf32, #tpu.memory_space<vmem>>, vector<1x1x256xf32>,
    %c256_i32 = arith.constant 256 : i32
    %33 = arith.muli %arg1, %c256_i32 : i32
    %34 = tpu.iota {dimensions = array<i32: 1>} : vector<1x256xi32>
    %35 = vector.broadcast %33 : i32 to vector<1x256xi32>
    %36 = arith.addi %35, %34 : vector<1x256xi32>
    %c256_i32_25 = arith.constant 256 : i32
    %37 = vector.broadcast %c256_i32_25 : i32 to vector<1x256xi32>
    %38 = arith.cmpi slt, %36, %37 : vector<1x256xi32>
    %cst_26 = arith.constant 0xFF800000 : f32
    %39 = vector.broadcast %cst_26 : f32 to vector<1x256xf32>
    %40 = arith.select %38, %29, %39 : vector<1x256xi1>, vector<1x256xf32>
    %cst_27 = arith.constant dense<0xFF800000> : vector<1xf32>
    %41 = vector.multi_reduction <maximumf>, %40, %cst_27 [1] : vector<1x256xf32> to vector<1xf32>
    %42 = vector.shape_cast %41 : vector<1xf32> to vector<1x1xf32>
    %c0_28 = arith.constant 0 : index
    %c0_29 = arith.constant 0 : index
    %c0_30 = arith.constant 0 : index
    %43 = vector.load %arg11[%c0_28, %c0_29, %c0_30] : memref<1x1x1xf32, #tpu.memory_space<vmem>>, vector<1x1x1xf32>
    %44 = vector.shape_cast %43 : vector<1x1x1xf32> to vector<1x1xf32>
    %45 = vector.shape_cast %42 : vector<1x1xf32> to vector<1x1x1xf32>
    tpu.vector_store %arg11[%c0_28, %c0_29, %c0_30], %45 {strides = array<i32>} : memref<1x1x1xf32, #tpu.memory_space<vmem>>, vector<1x1x1xf32>,
    return
  }
  func.func @transform_0(%arg0: i32, %arg1: i32) -> (i32, i32, i32) {
    %c0_i32 = arith.constant 0 : i32
    %c0_i32_0 = arith.constant 0 : i32
    return %arg0, %c0_i32, %arg1 : i32, i32, i32
  }
  func.func @transform_1(%arg0: i32, %arg1: i32) -> (i32, i32, i32) {
    %c0_i32 = arith.constant 0 : i32
    %c0_i32_0 = arith.constant 0 : i32
    return %arg0, %c0_i32, %arg1 : i32, i32, i32
  }
  func.func @transform_2(%arg0: i32, %arg1: i32) -> (i32, i32) {
    %c0_i32 = arith.constant 0 : i32
    %c0_i32_0 = arith.constant 0 : i32
    %c0_i32_1 = arith.constant 0 : i32
    return %c0_i32, %c0_i32_0 : i32, i32
  }
  func.func @transform_3(%arg0: i32, %arg1: i32) -> (i32, i32) {
    %c0_i32 = arith.constant 0 : i32
    %c0_i32_0 = arith.constant 0 : i32
    %c0_i32_1 = arith.constant 0 : i32
    return %c0_i32, %c0_i32_0 : i32, i32
  }
  func.func @transform_4(%arg0: i32, %arg1: i32) -> (i32, i32) {
    %c0_i32 = arith.constant 0 : i32
    %c0_i32_0 = arith.constant 0 : i32
    %c0_i32_1 = arith.constant 0 : i32
    return %c0_i32, %c0_i32_0 : i32, i32
  }
  func.func @transform_5(%arg0: i32, %arg1: i32) -> (i32, i32) {
    %c0_i32 = arith.constant 0 : i32
    %c0_i32_0 = arith.constant 0 : i32
    %c0_i32_1 = arith.constant 0 : i32
    return %c0_i32, %c0_i32_0 : i32, i32
  }
  func.func @transform_6(%arg0: i32, %arg1: i32) -> (i32, i32) {
    %c0_i32 = arith.constant 0 : i32
    %c0_i32_0 = arith.constant 0 : i32
    %c0_i32_1 = arith.constant 0 : i32
    return %c0_i32, %c0_i32_0 : i32, i32
  }
  func.func @transform_7(%arg0: i32, %arg1: i32) -> (i32, i32) {
    %c0_i32 = arith.constant 0 : i32
    %c0_i32_0 = arith.constant 0 : i32
    %c0_i32_1 = arith.constant 0 : i32
    return %c0_i32, %c0_i32_0 : i32, i32
  }
  func.func @transform_8(%arg0: i32, %arg1: i32) -> (i32, i32, i32) {
    %c0_i32 = arith.constant 0 : i32
    %c0_i32_0 = arith.constant 0 : i32
    return %arg0, %c0_i32, %arg1 : i32, i32, i32
  }
  func.func @transform_9(%arg0: i32, %arg1: i32) -> (i32, i32, i32) {
    %c0_i32 = arith.constant 0 : i32
    %c0_i32_0 = arith.constant 0 : i32
    return %arg0, %c0_i32, %arg1 : i32, i32, i32
  }
}

module attributes {stable_mosaic.version = 11 : i64} {
  func.func @_plane_transform_kernel(%arg0: i32, %arg1: memref<128x16xf32, #tpu.memory_space<vmem>>, %arg2: memref<32x16xf32, #tpu.memory_space<vmem>>, %arg3: memref<16x128xf32, #tpu.memory_space<vmem>>, %arg4: memref<2x128x128xf32, #tpu.memory_space<vmem>>) attributes {dimension_semantics = [#tpu.dimension_semantics<parallel>], iteration_bounds = array<i64: 1>, scalar_prefetch = 0 : i64, scratch_operands = 0 : i64, tpu.core_type = #tpu.core_type<tc>, window_params = [{pipeline_mode = #tpu.pipeline_mode<synchronous>, transform_indices = @transform_0, window_bounds = array<i64: 128, 16>}, {transform_indices = @transform_1, window_bounds = array<i64: 32, 16>}, {pipeline_mode = #tpu.pipeline_mode<synchronous>, transform_indices = @transform_2, window_bounds = array<i64: 16, 128>}, {transform_indices = @transform_3, window_bounds = array<i64: 2, 128, 128>}]} {
    %c0 = arith.constant 0 : index
    %c0_0 = arith.constant 0 : index
    %0 = vector.load %arg1[%c0, %c0_0] : memref<128x16xf32, #tpu.memory_space<vmem>>, vector<128x16xf32>
    %c0_1 = arith.constant 0 : index
    %c0_2 = arith.constant 0 : index
    %1 = vector.load %arg2[%c0_1, %c0_2] : memref<32x16xf32, #tpu.memory_space<vmem>>, vector<32x16xf32>
    %c0_3 = arith.constant 0 : index
    %c0_4 = arith.constant 0 : index
    %2 = vector.load %arg3[%c0_3, %c0_4] : memref<16x128xf32, #tpu.memory_space<vmem>>, vector<16x128xf32>
    %cst = arith.constant dense<0.000000e+00> : vector<32x128xf32>
    %3 = tpu.matmul %1, %2, %cst {dimension_numbers = #tpu.dot_dimension_numbers<[1], [0], [0], [1], [0, 0, 1, 1], [], []>} : vector<32x16xf32>, vector<16x128xf32>, vector<32x128xf32> -> vector<32x128xf32>
    %4 = vector.extract_strided_slice %3 {offsets = [0, 0], sizes = [16, 128], strides = [1, 1]} : vector<32x128xf32> to vector<16x128xf32>
    %cst_5 = arith.constant dense<0.000000e+00> : vector<128x128xf32>
    %5 = tpu.matmul %0, %4, %cst_5 {dimension_numbers = #tpu.dot_dimension_numbers<[1], [0], [0], [1], [0, 0, 1, 1], [], []>} : vector<128x16xf32>, vector<16x128xf32>, vector<128x128xf32> -> vector<128x128xf32>
    %c0_6 = arith.constant 0 : index
    %c0_7 = arith.constant 0 : index
    %c0_8 = arith.constant 0 : index
    %6 = vector.load %arg4[%c0_6, %c0_7, %c0_8] : memref<2x128x128xf32, #tpu.memory_space<vmem>>, vector<1x128x128xf32>
    %7 = vector.shape_cast %6 : vector<1x128x128xf32> to vector<128x128xf32>
    %8 = vector.shape_cast %5 : vector<128x128xf32> to vector<1x128x128xf32>
    tpu.vector_store %arg4[%c0_6, %c0_7, %c0_8], %8 {strides = array<i32>} : memref<2x128x128xf32, #tpu.memory_space<vmem>>, vector<1x128x128xf32>,
    %9 = vector.extract_strided_slice %3 {offsets = [16, 0], sizes = [16, 128], strides = [1, 1]} : vector<32x128xf32> to vector<16x128xf32>
    %cst_9 = arith.constant dense<0.000000e+00> : vector<128x128xf32>
    %10 = tpu.matmul %0, %9, %cst_9 {dimension_numbers = #tpu.dot_dimension_numbers<[1], [0], [0], [1], [0, 0, 1, 1], [], []>} : vector<128x16xf32>, vector<16x128xf32>, vector<128x128xf32> -> vector<128x128xf32>
    %c1 = arith.constant 1 : index
    %c0_10 = arith.constant 0 : index
    %c0_11 = arith.constant 0 : index
    %11 = vector.load %arg4[%c1, %c0_10, %c0_11] : memref<2x128x128xf32, #tpu.memory_space<vmem>>, vector<1x128x128xf32>
    %12 = vector.shape_cast %11 : vector<1x128x128xf32> to vector<128x128xf32>
    %13 = vector.shape_cast %10 : vector<128x128xf32> to vector<1x128x128xf32>
    tpu.vector_store %arg4[%c1, %c0_10, %c0_11], %13 {strides = array<i32>} : memref<2x128x128xf32, #tpu.memory_space<vmem>>, vector<1x128x128xf32>,
    return
  }
  func.func @transform_0(%arg0: i32) -> (i32, i32) {
    %c0_i32 = arith.constant 0 : i32
    %c0_i32_0 = arith.constant 0 : i32
    %c0_i32_1 = arith.constant 0 : i32
    return %c0_i32, %c0_i32_0 : i32, i32
  }
  func.func @transform_1(%arg0: i32) -> (i32, i32) {
    %c0_i32 = arith.constant 0 : i32
    %c0_i32_0 = arith.constant 0 : i32
    return %arg0, %c0_i32 : i32, i32
  }
  func.func @transform_2(%arg0: i32) -> (i32, i32) {
    %c0_i32 = arith.constant 0 : i32
    %c0_i32_0 = arith.constant 0 : i32
    %c0_i32_1 = arith.constant 0 : i32
    return %c0_i32, %c0_i32_0 : i32, i32
  }
  func.func @transform_3(%arg0: i32) -> (i32, i32, i32) {
    %c0_i32 = arith.constant 0 : i32
    %c0_i32_0 = arith.constant 0 : i32
    %c0_i32_1 = arith.constant 0 : i32
    return %arg0, %c0_i32, %c0_i32_0 : i32, i32, i32
  }
}

</mosaic_0001>

<llo_original>
// kernel: _lambda_.4
$region0: #{_lambda_.4}
  #allocation0 [shape = 'u32[]', space=smem, size = 0x4, offset = 0x4, fixed_abs, tag = 'smem constant byte address 0x4 - core index']
  #allocation1 [shape = 'u32[144,128]{1,0:T(1,128)}', space=vmem, size = 0x12000, scoped, tag = 'internal scratch']
  %s0 = inlined_call_operand.vmem [shape: bf16[16,16], index: 0, kind: input, shape index: {}, may-alias: {0,2}]
  %s1 = inlined_call_operand.vmem [shape: bf16[512,16], index: 1, kind: input, shape index: {}]
  %s2 = inlined_call_operand.vmem [shape: bf16[16,16], index: 2, kind: input, shape index: {}, may-alias: {0,2}]
  %s3 = inlined_call_operand.vmem [shape: bf16[32,16,16], index: 3, kind: output, shape index: {}]
  %s4 = sld [smem:[#allocation0]]
  $region22: #{_lambda_.4} parent=0
    _
  %s6 = ssub.s32 1, %s4
  %s7 = scalar_select 0, %s6, %s4
  // Predicated region
  $region2: #{_lambda_.4} parent=0 // pred_check
    _
  $region3: #{_lambda_.4} parent=0 // pred_check_branch
    %9 = sbr.rel (0) target = $region5
  $region4: #{_lambda_.4} parent=0 // pred_region
    _
  $region5: #{_lambda_.4} parent=0 // pred_fallthru
    _
  // Predicated region
  $region6: #{_lambda_.4} parent=0 // pred_check
    _
  $region7: #{_lambda_.4} parent=0 // pred_check_branch
    %11 = sbr.rel (0) target = $region9
  $region8: #{_lambda_.4} parent=0 // pred_region
    _
  $region9: #{_lambda_.4} parent=0 // pred_fallthru
    _
  // Predicated region
  $region10: #{_lambda_.4} parent=0 // pred_check
    _
  $region11: #{_lambda_.4} parent=0 // pred_check_branch
    %13 = sbr.rel (0) target = $region13
  $region12: #{_lambda_.4} parent=0 // pred_region
    _
  $region13: #{_lambda_.4} parent=0 // pred_fallthru
    _
  %v15 = vld [vmem:[%s0] sm:$0xf]
  %v16 = vld [vmem:[%s0 + $0x4] sm:$0xf]
  %v17 = vld [vmem:[%s1] sm:$0xf]
  %v18 = vld [vmem:[%s1 + $0x4] sm:$0xf]
  %v19 = vld [vmem:[%s1 + $0x8] sm:$0xf]
  %v20 = vld [vmem:[%s1 + $0xc] sm:$0xf]
  %v21 = vld [vmem:[%s1 + $0x10] sm:$0xf]
  %v22 = vld [vmem:[%s1 + $0x14] sm:$0xf]
  %v23 = vld [vmem:[%s1 + $0x18] sm:$0xf]
  %v24 = vld [vmem:[%s1 + $0x1c] sm:$0xf]
  %v25 = vld [vmem:[%s1 + $0x20] sm:$0xf]
  %v26 = vld [vmem:[%s1 + $0x24] sm:$0xf]
  %v27 = vld [vmem:[%s1 + $0x28] sm:$0xf]
  %v28 = vld [vmem:[%s1 + $0x2c] sm:$0xf]
  %v29 = vld [vmem:[%s1 + $0x30] sm:$0xf]
  %v30 = vld [vmem:[%s1 + $0x34] sm:$0xf]
  %v31 = vld [vmem:[%s1 + $0x38] sm:$0xf]
  %v32 = vld [vmem:[%s1 + $0x3c] sm:$0xf]
  %v33 = vld [vmem:[%s1 + $0x40] sm:$0xf]
  %v34 = vld [vmem:[%s1 + $0x44] sm:$0xf]
  %v35 = vld [vmem:[%s1 + $0x48] sm:$0xf]
  %v36 = vld [vmem:[%s1 + $0x4c] sm:$0xf]
  %v37 = vld [vmem:[%s1 + $0x50] sm:$0xf]
  %v38 = vld [vmem:[%s1 + $0x54] sm:$0xf]
  %v39 = vld [vmem:[%s1 + $0x58] sm:$0xf]
  %v40 = vld [vmem:[%s1 + $0x5c] sm:$0xf]
  %v41 = vld [vmem:[%s1 + $0x60] sm:$0xf]
  %v42 = vld [vmem:[%s1 + $0x64] sm:$0xf]
  %v43 = vld [vmem:[%s1 + $0x68] sm:$0xf]
  %v44 = vld [vmem:[%s1 + $0x6c] sm:$0xf]
  %v45 = vld [vmem:[%s1 + $0x70] sm:$0xf]
  %v46 = vld [vmem:[%s1 + $0x74] sm:$0xf]
  %v47 = vld [vmem:[%s1 + $0x78] sm:$0xf]
  %v48 = vld [vmem:[%s1 + $0x7c] sm:$0xf]
  %v49 = vld [vmem:[%s1 + $0x80] sm:$0xf]
  %v50 = vld [vmem:[%s1 + $0x84] sm:$0xf]
  %v51 = vld [vmem:[%s1 + $0x88] sm:$0xf]
  %v52 = vld [vmem:[%s1 + $0x8c] sm:$0xf]
  %v53 = vld [vmem:[%s1 + $0x90] sm:$0xf]
  %v54 = vld [vmem:[%s1 + $0x94] sm:$0xf]
  %v55 = vld [vmem:[%s1 + $0x98] sm:$0xf]
  %v56 = vld [vmem:[%s1 + $0x9c] sm:$0xf]
  %v57 = vld [vmem:[%s1 + $0xa0] sm:$0xf]
  %v58 = vld [vmem:[%s1 + $0xa4] sm:$0xf]
  %v59 = vld [vmem:[%s1 + $0xa8] sm:$0xf]
  %v60 = vld [vmem:[%s1 + $0xac] sm:$0xf]
  %v61 = vld [vmem:[%s1 + $0xb0] sm:$0xf]
  %v62 = vld [vmem:[%s1 + $0xb4] sm:$0xf]
  %v63 = vld [vmem:[%s1 + $0xb8] sm:$0xf]
  %v64 = vld [vmem:[%s1 + $0xbc] sm:$0xf]
  %v65 = vld [vmem:[%s1 + $0xc0] sm:$0xf]
  %v66 = vld [vmem:[%s1 + $0xc4] sm:$0xf]
  %v67 = vld [vmem:[%s1 + $0xc8] sm:$0xf]
  %v68 = vld [vmem:[%s1 + $0xcc] sm:$0xf]
  %v69 = vld [vmem:[%s1 + $0xd0] sm:$0xf]
  %v70 = vld [vmem:[%s1 + $0xd4] sm:$0xf]
  %v71 = vld [vmem:[%s1 + $0xd8] sm:$0xf]
  %v72 = vld [vmem:[%s1 + $0xdc] sm:$0xf]
  %v73 = vld [vmem:[%s1 + $0xe0] sm:$0xf]
  %v74 = vld [vmem:[%s1 + $0xe4] sm:$0xf]
  %v75 = vld [vmem:[%s1 + $0xe8] sm:$0xf]
  %v76 = vld [vmem:[%s1 + $0xec] sm:$0xf]
  %v77 = vld [vmem:[%s1 + $0xf0] sm:$0xf]
  %v78 = vld [vmem:[%s1 + $0xf4] sm:$0xf]
  %v79 = vld [vmem:[%s1 + $0xf8] sm:$0xf]
  %v80 = vld [vmem:[%s1 + $0xfc] sm:$0xf]
  %v81 = vld [vmem:[%s2] sm:$0xf]
  %v82 = vld [vmem:[%s2 + $0x4] sm:$0xf]
  %v147 = vunpack.c.l.b16 %v17
  %v148 = vunpack.c.l.b16 %v18
  %v149 = vunpack.c.l.b16 %v19
  %v150 = vunpack.c.l.b16 %v20
  %v151 = vunpack.c.l.b16 %v21
  %v152 = vunpack.c.l.b16 %v22
  %v153 = vunpack.c.l.b16 %v23
  %v154 = vunpack.c.l.b16 %v24
  %v155 = vunpack.c.l.b16 %v25
  %v156 = vunpack.c.l.b16 %v26
  %v157 = vunpack.c.l.b16 %v27
  %v158 = vunpack.c.l.b16 %v28
  %v159 = vunpack.c.l.b16 %v29
  %v160 = vunpack.c.l.b16 %v30
  %v161 = vunpack.c.l.b16 %v31
  %v162 = vunpack.c.l.b16 %v32
  %v163 = vunpack.c.l.b16 %v33
  %v164 = vunpack.c.l.b16 %v34
  %v165 = vunpack.c.l.b16 %v35
  %v166 = vunpack.c.l.b16 %v36
  %v167 = vunpack.c.l.b16 %v37
  %v168 = vunpack.c.l.b16 %v38
  %v169 = vunpack.c.l.b16 %v39
  %v170 = vunpack.c.l.b16 %v40
  %v171 = vunpack.c.l.b16 %v41
  %v172 = vunpack.c.l.b16 %v42
  %v173 = vunpack.c.l.b16 %v43
  %v174 = vunpack.c.l.b16 %v44
  %v175 = vunpack.c.l.b16 %v45
  %v176 = vunpack.c.l.b16 %v46
  %v177 = vunpack.c.l.b16 %v47
  %v178 = vunpack.c.l.b16 %v48
  %v179 = vunpack.c.l.b16 %v49
  %v180 = vunpack.c.l.b16 %v50
  %v181 = vunpack.c.l.b16 %v51
  %v182 = vunpack.c.l.b16 %v52
  %v183 = vunpack.c.l.b16 %v53
  %v184 = vunpack.c.l.b16 %v54
  %v185 = vunpack.c.l.b16 %v55
  %v186 = vunpack.c.l.b16 %v56
  %v187 = vunpack.c.l.b16 %v57
  %v188 = vunpack.c.l.b16 %v58
  %v189 = vunpack.c.l.b16 %v59
  %v190 = vunpack.c.l.b16 %v60
  %v191 = vunpack.c.l.b16 %v61
  %v192 = vunpack.c.l.b16 %v62
  %v193 = vunpack.c.l.b16 %v63
  %v194 = vunpack.c.l.b16 %v64
  %v195 = vunpack.c.l.b16 %v65
  %v196 = vunpack.c.l.b16 %v66
  %v197 = vunpack.c.l.b16 %v67
  %v198 = vunpack.c.l.b16 %v68
  %v199 = vunpack.c.l.b16 %v69
  %v200 = vunpack.c.l.b16 %v70
  %v201 = vunpack.c.l.b16 %v71
  %v202 = vunpack.c.l.b16 %v72
  %v203 = vunpack.c.l.b16 %v73
  %v204 = vunpack.c.l.b16 %v74
  %v205 = vunpack.c.l.b16 %v75
  %v206 = vunpack.c.l.b16 %v76
  %v207 = vunpack.c.l.b16 %v77
  %v208 = vunpack.c.l.b16 %v78
  %v209 = vunpack.c.l.b16 %v79
  %v210 = vunpack.c.l.b16 %v80
  %v211 = vpack.c.b16 %v148, %v147
  %v212 = vpack.c.b16 %v150, %v149
  %v213 = vpack.c.b16 %v152, %v151
  %v214 = vpack.c.b16 %v154, %v153
  %v215 = vpack.c.b16 %v156, %v155
  %v216 = vpack.c.b16 %v158, %v157
  %v217 = vpack.c.b16 %v160, %v159
  %v218 = vpack.c.b16 %v162, %v161
  %v219 = vpack.c.b16 %v164, %v163
  %v220 = vpack.c.b16 %v166, %v165
  %v221 = vpack.c.b16 %v168, %v167
  %v222 = vpack.c.b16 %v170, %v169
  %v223 = vpack.c.b16 %v172, %v171
  %v224 = vpack.c.b16 %v174, %v173
  %v225 = vpack.c.b16 %v176, %v175
  %v226 = vpack.c.b16 %v178, %v177
  %v227 = vpack.c.b16 %v180, %v179
  %v228 = vpack.c.b16 %v182, %v181
  %v229 = vpack.c.b16 %v184, %v183
  %v230 = vpack.c.b16 %v186, %v185
  %v231 = vpack.c.b16 %v188, %v187
  %v232 = vpack.c.b16 %v190, %v189
  %v233 = vpack.c.b16 %v192, %v191
  %v234 = vpack.c.b16 %v194, %v193
  %v235 = vpack.c.b16 %v196, %v195
  %v236 = vpack.c.b16 %v198, %v197
  %v237 = vpack.c.b16 %v200, %v199
  %v238 = vpack.c.b16 %v202, %v201
  %v239 = vpack.c.b16 %v204, %v203
  %v240 = vpack.c.b16 %v206, %v205
  %v241 = vpack.c.b16 %v208, %v207
  %v242 = vpack.c.b16 %v210, %v209
  %v245 = vunpack.c.l.b16 %v81
  %v246 = vunpack.c.l.b16 %v82
  %v247 = vpack.c.b16 %v246, %v245
  %vm249 = vcmask 130048
  %v251 = vsel %vm249, %v211, 0
  %v254 = vsel %vm249, %v212, 0
  %v257 = vsel %vm249, %v213, 0
  %v260 = vsel %vm249, %v214, 0
  %v263 = vsel %vm249, %v215, 0
  %v266 = vsel %vm249, %v216, 0
  %v269 = vsel %vm249, %v217, 0
  %v272 = vsel %vm249, %v218, 0
  %v275 = vsel %vm249, %v219, 0
  %v278 = vsel %vm249, %v220, 0
  %v281 = vsel %vm249, %v221, 0
  %v284 = vsel %vm249, %v222, 0
  %v287 = vsel %vm249, %v223, 0
  %v290 = vsel %vm249, %v224, 0
  %v293 = vsel %vm249, %v225, 0
  %v296 = vsel %vm249, %v226, 0
  %v299 = vsel %vm249, %v227, 0
  %v302 = vsel %vm249, %v228, 0
  %v305 = vsel %vm249, %v229, 0
  %v308 = vsel %vm249, %v230, 0
  %v311 = vsel %vm249, %v231, 0
  %v314 = vsel %vm249, %v232, 0
  %v317 = vsel %vm249, %v233, 0
  %v320 = vsel %vm249, %v234, 0
  %v323 = vsel %vm249, %v235, 0
  %v326 = vsel %vm249, %v236, 0
  %v329 = vsel %vm249, %v237, 0
  %v332 = vsel %vm249, %v238, 0
  %v335 = vsel %vm249, %v239, 0
  %v338 = vsel %vm249, %v240, 0
  %v341 = vsel %vm249, %v241, 0
  %v344 = vsel %vm249, %v242, 0
  %346 = vmatprep.subr.bf16.mxu0 0
  %347 = vmatpush1.bf16.msra.mxu0 %v247
  %348 = vmatprep.subr.bf16.mxu0 0
  %349 = vmatpush1.bf16.msra.mxu0 0
  %350 = vmatprep.subr.bf16.mxu0 0
  %351 = vmatpush1.bf16.msra.mxu0 0
  %352 = vmatprep.subr.bf16.mxu0 0
  %353 = vmatpush1.bf16.msra.mxu0 0
  %354 = vmatprep.subr.bf16.mxu0 0
  %355 = vmatpush1.bf16.msra.mxu0 0
  %356 = vmatprep.subr.bf16.mxu0 0
  %357 = vmatpush1.bf16.msra.mxu0 0
  %358 = vmatprep.subr.bf16.mxu0 0
  %359 = vmatpush1.bf16.msra.mxu0 0
  %360 = vmatprep.subr.bf16.mxu0 0
  %361 = vmatpush1.bf16.msra.mxu0 0
  %362 = vmatprep.subr.bf16.mxu0 0
  %363 = vmatpush1.bf16.msra.mxu0 0
  %364 = vmatprep.subr.bf16.mxu0 0
  %365 = vmatpush1.bf16.msra.mxu0 0
  %366 = vmatprep.subr.bf16.mxu0 0
  %367 = vmatpush1.bf16.msra.mxu0 0
  %368 = vmatprep.subr.bf16.mxu0 0
  %369 = vmatpush1.bf16.msra.mxu0 0
  %370 = vmatprep.subr.bf16.mxu0 0
  %371 = vmatpush1.bf16.msra.mxu0 0
  %372 = vmatprep.subr.bf16.mxu0 0
  %373 = vmatpush1.bf16.msra.mxu0 0
  %374 = vmatprep.subr.bf16.mxu0 0
  %375 = vmatpush1.bf16.msra.mxu0 0
  %376 = vmatprep.subr.bf16.mxu0 0
  %377 = vmatpush1.bf16.msra.mxu0 0
  %378 = vmatprep.mubr.bf16.mxu0 0
  %379 = vmatmul.mubr.bf16.gmra.mrb[0].mxu0 %v251
  %v380 = vpop.f32.mrb[0].mxu0
  %v381 = vadd.f32 0.0, %v380
  %v382 = vpop.f32.mrb[0].mxu0
  %v383 = vpop.f32.mrb[0].mxu0
  %v384 = vadd.f32 0.0, %v383
  %v385 = vpop.f32.mrb[0].mxu0
  %386 = vmatprep.mubr.bf16.mxu0 0
  %387 = vmatmul.mubr.bf16.gmra.mrb[0].mxu0 %v254
  %v388 = vpop.f32.mrb[0].mxu0
  %v389 = vadd.f32 0.0, %v388
  %v390 = vpop.f32.mrb[0].mxu0
  %v391 = vpop.f32.mrb[0].mxu0
  %v392 = vadd.f32 0.0, %v391
  %v393 = vpop.f32.mrb[0].mxu0
  %394 = vmatprep.mubr.bf16.mxu0 0
  %395 = vmatmul.mubr.bf16.gmra.mrb[0].mxu0 %v257
  %v396 = vpop.f32.mrb[0].mxu0
  %v397 = vadd.f32 0.0, %v396
  %v398 = vpop.f32.mrb[0].mxu0
  %v399 = vpop.f32.mrb[0].mxu0
  %v400 = vadd.f32 0.0, %v399
  %v401 = vpop.f32.mrb[0].mxu0
  %402 = vmatprep.mubr.bf16.mxu0 0
  %403 = vmatmul.mubr.bf16.gmra.mrb[0].mxu0 %v260
  %v404 = vpop.f32.mrb[0].mxu0
  %v405 = vadd.f32 0.0, %v404
  %v406 = vpop.f32.mrb[0].mxu0
  %v407 = vpop.f32.mrb[0].mxu0
  %v408 = vadd.f32 0.0, %v407
  %v409 = vpop.f32.mrb[0].mxu0
  %410 = vmatprep.mubr.bf16.mxu0 0
  %411 = vmatmul.mubr.bf16.gmra.mrb[0].mxu0 %v263
  %v412 = vpop.f32.mrb[0].mxu0
  %v413 = vadd.f32 0.0, %v412
  %v414 = vpop.f32.mrb[0].mxu0
  %v415 = vpop.f32.mrb[0].mxu0
  %v416 = vadd.f32 0.0, %v415
  %v417 = vpop.f32.mrb[0].mxu0
  %418 = vmatprep.mubr.bf16.mxu0 0
  %419 = vmatmul.mubr.bf16.gmra.mrb[0].mxu0 %v266
  %v420 = vpop.f32.mrb[0].mxu0
  %v421 = vadd.f32 0.0, %v420
  %v422 = vpop.f32.mrb[0].mxu0
  %v423 = vpop.f32.mrb[0].mxu0
  %v424 = vadd.f32 0.0, %v423
  %v425 = vpop.f32.mrb[0].mxu0
  %426 = vmatprep.mubr.bf16.mxu0 0
  %427 = vmatmul.mubr.bf16.gmra.mrb[0].mxu0 %v269
  %v428 = vpop.f32.mrb[0].mxu0
  %v429 = vadd.f32 0.0, %v428
  %v430 = vpop.f32.mrb[0].mxu0
  %v431 = vpop.f32.mrb[0].mxu0
  %v432 = vadd.f32 0.0, %v431
  %v433 = vpop.f32.mrb[0].mxu0
  %434 = vmatprep.mubr.bf16.mxu0 0
  %435 = vmatmul.mubr.bf16.gmra.mrb[0].mxu0 %v272
  %v436 = vpop.f32.mrb[0].mxu0
  %v437 = vadd.f32 0.0, %v436
  %v438 = vpop.f32.mrb[0].mxu0
  %v439 = vpop.f32.mrb[0].mxu0
  %v440 = vadd.f32 0.0, %v439
  %v441 = vpop.f32.mrb[0].mxu0
  %442 = vmatprep.mubr.bf16.mxu0 0
  %443 = vmatmul.mubr.bf16.gmra.mrb[0].mxu0 %v275
  %v444 = vpop.f32.mrb[0].mxu0
  %v445 = vadd.f32 0.0, %v444
  %v446 = vpop.f32.mrb[0].mxu0
  %v447 = vpop.f32.mrb[0].mxu0
  %v448 = vadd.f32 0.0, %v447
  %v449 = vpop.f32.mrb[0].mxu0
  %450 = vmatprep.mubr.bf16.mxu0 0
  %451 = vmatmul.mubr.bf16.gmra.mrb[0].mxu0 %v278
  %v452 = vpop.f32.mrb[0].mxu0
  %v453 = vadd.f32 0.0, %v452
  %v454 = vpop.f32.mrb[0].mxu0
  %v455 = vpop.f32.mrb[0].mxu0
  %v456 = vadd.f32 0.0, %v455
  %v457 = vpop.f32.mrb[0].mxu0
  %458 = vmatprep.mubr.bf16.mxu0 0
  %459 = vmatmul.mubr.bf16.gmra.mrb[0].mxu0 %v281
  %v460 = vpop.f32.mrb[0].mxu0
  %v461 = vadd.f32 0.0, %v460
  %v462 = vpop.f32.mrb[0].mxu0
  %v463 = vpop.f32.mrb[0].mxu0
  %v464 = vadd.f32 0.0, %v463
  %v465 = vpop.f32.mrb[0].mxu0
  %466 = vmatprep.mubr.bf16.mxu0 0
  %467 = vmatmul.mubr.bf16.gmra.mrb[0].mxu0 %v284
  %v468 = vpop.f32.mrb[0].mxu0
  %v469 = vadd.f32 0.0, %v468
  %v470 = vpop.f32.mrb[0].mxu0
  %v471 = vpop.f32.mrb[0].mxu0
  %v472 = vadd.f32 0.0, %v471
  %v473 = vpop.f32.mrb[0].mxu0
  %474 = vmatprep.mubr.bf16.mxu0 0
  %475 = vmatmul.mubr.bf16.gmra.mrb[0].mxu0 %v287
  %v476 = vpop.f32.mrb[0].mxu0
  %v477 = vadd.f32 0.0, %v476
  %v478 = vpop.f32.mrb[0].mxu0
  %v479 = vpop.f32.mrb[0].mxu0
  %v480 = vadd.f32 0.0, %v479
  %v481 = vpop.f32.mrb[0].mxu0
  %482 = vmatprep.mubr.bf16.mxu0 0
  %483 = vmatmul.mubr.bf16.gmra.mrb[0].mxu0 %v290
  %v484 = vpop.f32.mrb[0].mxu0
  %v485 = vadd.f32 0.0, %v484
  %v486 = vpop.f32.mrb[0].mxu0
  %v487 = vpop.f32.mrb[0].mxu0
  %v488 = vadd.f32 0.0, %v487
  %v489 = vpop.f32.mrb[0].mxu0
  %490 = vmatprep.mubr.bf16.mxu0 0
  %491 = vmatmul.mubr.bf16.gmra.mrb[0].mxu0 %v293
  %v492 = vpop.f32.mrb[0].mxu0
  %v493 = vadd.f32 0.0, %v492
  %v494 = vpop.f32.mrb[0].mxu0
  %v495 = vpop.f32.mrb[0].mxu0
  %v496 = vadd.f32 0.0, %v495
  %v497 = vpop.f32.mrb[0].mxu0
  %498 = vmatprep.mubr.bf16.mxu0 0
  %499 = vmatmul.mubr.bf16.gmra.mrb[0].mxu0 %v296
  %v500 = vpop.f32.mrb[0].mxu0
  %v501 = vadd.f32 0.0, %v500
  %v502 = vpop.f32.mrb[0].mxu0
  %v503 = vpop.f32.mrb[0].mxu0
  %v504 = vadd.f32 0.0, %v503
  %v505 = vpop.f32.mrb[0].mxu0
  %506 = vmatprep.mubr.bf16.mxu0 0
  %507 = vmatmul.mubr.bf16.gmra.mrb[0].mxu0 %v299
  %v508 = vpop.f32.mrb[0].mxu0
  %v509 = vadd.f32 0.0, %v508
  %v510 = vpop.f32.mrb[0].mxu0
  %v511 = vpop.f32.mrb[0].mxu0
  %v512 = vadd.f32 0.0, %v511
  %v513 = vpop.f32.mrb[0].mxu0
  %514 = vmatprep.mubr.bf16.mxu0 0
  %515 = vmatmul.mubr.bf16.gmra.mrb[0].mxu0 %v302
  %v516 = vpop.f32.mrb[0].mxu0
  %v517 = vadd.f32 0.0, %v516
  %v518 = vpop.f32.mrb[0].mxu0
  %v519 = vpop.f32.mrb[0].mxu0
  %v520 = vadd.f32 0.0, %v519
  %v521 = vpop.f32.mrb[0].mxu0
  %522 = vmatprep.mubr.bf16.mxu0 0
  %523 = vmatmul.mubr.bf16.gmra.mrb[0].mxu0 %v305
  %v524 = vpop.f32.mrb[0].mxu0
  %v525 = vadd.f32 0.0, %v524
  %v526 = vpop.f32.mrb[0].mxu0
  %v527 = vpop.f32.mrb[0].mxu0
  %v528 = vadd.f32 0.0, %v527
  %v529 = vpop.f32.mrb[0].mxu0
  %530 = vmatprep.mubr.bf16.mxu0 0
  %531 = vmatmul.mubr.bf16.gmra.mrb[0].mxu0 %v308
  %v532 = vpop.f32.mrb[0].mxu0
  %v533 = vadd.f32 0.0, %v532
  %v534 = vpop.f32.mrb[0].mxu0
  %v535 = vpop.f32.mrb[0].mxu0
  %v536 = vadd.f32 0.0, %v535
  %v537 = vpop.f32.mrb[0].mxu0
  %538 = vmatprep.mubr.bf16.mxu0 0
  %539 = vmatmul.mubr.bf16.gmra.mrb[0].mxu0 %v311
  %v540 = vpop.f32.mrb[0].mxu0
  %v541 = vadd.f32 0.0, %v540
  %v542 = vpop.f32.mrb[0].mxu0
  %v543 = vpop.f32.mrb[0].mxu0
  %v544 = vadd.f32 0.0, %v543
  %v545 = vpop.f32.mrb[0].mxu0
  %546 = vmatprep.mubr.bf16.mxu0 0
  %547 = vmatmul.mubr.bf16.gmra.mrb[0].mxu0 %v314
  %v548 = vpop.f32.mrb[0].mxu0
  %v549 = vadd.f32 0.0, %v548
  %v550 = vpop.f32.mrb[0].mxu0
  %v551 = vpop.f32.mrb[0].mxu0
  %v552 = vadd.f32 0.0, %v551
  %v553 = vpop.f32.mrb[0].mxu0
  %554 = vmatprep.mubr.bf16.mxu0 0
  %555 = vmatmul.mubr.bf16.gmra.mrb[0].mxu0 %v317
  %v556 = vpop.f32.mrb[0].mxu0
  %v557 = vadd.f32 0.0, %v556
  %v558 = vpop.f32.mrb[0].mxu0
  %v559 = vpop.f32.mrb[0].mxu0
  %v560 = vadd.f32 0.0, %v559
  %v561 = vpop.f32.mrb[0].mxu0
  %562 = vmatprep.mubr.bf16.mxu0 0
  %563 = vmatmul.mubr.bf16.gmra.mrb[0].mxu0 %v320
  %v564 = vpop.f32.mrb[0].mxu0
  %v565 = vadd.f32 0.0, %v564
  %v566 = vpop.f32.mrb[0].mxu0
  %v567 = vpop.f32.mrb[0].mxu0
  %v568 = vadd.f32 0.0, %v567
  %v569 = vpop.f32.mrb[0].mxu0
  %570 = vmatprep.mubr.bf16.mxu0 0
  %571 = vmatmul.mubr.bf16.gmra.mrb[0].mxu0 %v323
  %v572 = vpop.f32.mrb[0].mxu0
  %v573 = vadd.f32 0.0, %v572
  %v574 = vpop.f32.mrb[0].mxu0
  %v575 = vpop.f32.mrb[0].mxu0
  %v576 = vadd.f32 0.0, %v575
  %v577 = vpop.f32.mrb[0].mxu0
  %578 = vmatprep.mubr.bf16.mxu0 0
  %579 = vmatmul.mubr.bf16.gmra.mrb[0].mxu0 %v326
  %v580 = vpop.f32.mrb[0].mxu0
  %v581 = vadd.f32 0.0, %v580
  %v582 = vpop.f32.mrb[0].mxu0
  %v583 = vpop.f32.mrb[0].mxu0
  %v584 = vadd.f32 0.0, %v583
  %v585 = vpop.f32.mrb[0].mxu0
  %586 = vmatprep.mubr.bf16.mxu0 0
  %587 = vmatmul.mubr.bf16.gmra.mrb[0].mxu0 %v329
  %v588 = vpop.f32.mrb[0].mxu0
  %v589 = vadd.f32 0.0, %v588
  %v590 = vpop.f32.mrb[0].mxu0
  %v591 = vpop.f32.mrb[0].mxu0
  %v592 = vadd.f32 0.0, %v591
  %v593 = vpop.f32.mrb[0].mxu0
  %594 = vmatprep.mubr.bf16.mxu0 0
  %595 = vmatmul.mubr.bf16.gmra.mrb[0].mxu0 %v332
  %v596 = vpop.f32.mrb[0].mxu0
  %v597 = vadd.f32 0.0, %v596
  %v598 = vpop.f32.mrb[0].mxu0
  %v599 = vpop.f32.mrb[0].mxu0
  %v600 = vadd.f32 0.0, %v599
  %v601 = vpop.f32.mrb[0].mxu0
  %602 = vmatprep.mubr.bf16.mxu0 0
  %603 = vmatmul.mubr.bf16.gmra.mrb[0].mxu0 %v335
  %v604 = vpop.f32.mrb[0].mxu0
  %v605 = vadd.f32 0.0, %v604
  %v606 = vpop.f32.mrb[0].mxu0
  %v607 = vpop.f32.mrb[0].mxu0
  %v608 = vadd.f32 0.0, %v607
  %v609 = vpop.f32.mrb[0].mxu0
  %610 = vmatprep.mubr.bf16.mxu0 0
  %611 = vmatmul.mubr.bf16.gmra.mrb[0].mxu0 %v338
  %v612 = vpop.f32.mrb[0].mxu0
  %v613 = vadd.f32 0.0, %v612
  %v614 = vpop.f32.mrb[0].mxu0
  %v615 = vpop.f32.mrb[0].mxu0
  %v616 = vadd.f32 0.0, %v615
  %v617 = vpop.f32.mrb[0].mxu0
  %618 = vmatprep.mubr.bf16.mxu0 0
  %619 = vmatmul.mubr.bf16.gmra.mrb[0].mxu0 %v341
  %v620 = vpop.f32.mrb[0].mxu0
  %v621 = vadd.f32 0.0, %v620
  %v622 = vpop.f32.mrb[0].mxu0
  %v623 = vpop.f32.mrb[0].mxu0
  %v624 = vadd.f32 0.0, %v623
  %v625 = vpop.f32.mrb[0].mxu0
  %626 = vmatprep.mubr.bf16.mxu0 0
  %627 = vmatmul.mubr.bf16.gmra.mrb[0].mxu0 %v344
  %v628 = vpop.f32.mrb[0].mxu0
  %v629 = vadd.f32 0.0, %v628
  %v630 = vpop.f32.mrb[0].mxu0
  %v631 = vpop.f32.mrb[0].mxu0
  %v632 = vadd.f32 0.0, %v631
  %v633 = vpop.f32.mrb[0].mxu0
  %634 = vdwg.mxu0
  %v635 = vpack.c.bf16 %v384, %v381
  %v636 = vpack.c.bf16 %v392, %v389
  %v637 = vpack.c.bf16 %v400, %v397
  %v638 = vpack.c.bf16 %v408, %v405
  %v639 = vpack.c.bf16 %v416, %v413
  %v640 = vpack.c.bf16 %v424, %v421
  %v641 = vpack.c.bf16 %v432, %v429
  %v642 = vpack.c.bf16 %v440, %v437
  %v643 = vpack.c.bf16 %v448, %v445
  %v644 = vpack.c.bf16 %v456, %v453
  %v645 = vpack.c.bf16 %v464, %v461
  %v646 = vpack.c.bf16 %v472, %v469
  %v647 = vpack.c.bf16 %v480, %v477
  %v648 = vpack.c.bf16 %v488, %v485
  %v649 = vpack.c.bf16 %v496, %v493
  %v650 = vpack.c.bf16 %v504, %v501
  %v651 = vpack.c.bf16 %v512, %v509
  %v652 = vpack.c.bf16 %v520, %v517
  %v653 = vpack.c.bf16 %v528, %v525
  %v654 = vpack.c.bf16 %v536, %v533
  %v655 = vpack.c.bf16 %v544, %v541
  %v656 = vpack.c.bf16 %v552, %v549
  %v657 = vpack.c.bf16 %v560, %v557
  %v658 = vpack.c.bf16 %v568, %v565
  %v659 = vpack.c.bf16 %v576, %v573
  %v660 = vpack.c.bf16 %v584, %v581
  %v661 = vpack.c.bf16 %v592, %v589
  %v662 = vpack.c.bf16 %v600, %v597
  %v663 = vpack.c.bf16 %v608, %v605
  %v664 = vpack.c.bf16 %v616, %v613
  %v665 = vpack.c.bf16 %v624, %v621
  %v666 = vpack.c.bf16 %v632, %v629
  %v669 = vunpack.c.l.b16 %v15
  %v670 = vunpack.c.l.b16 %v16
  %v671 = vpack.c.b16 %v670, %v669
  %v673 = vsel %vm249, %v671, 0
  %675 = vmatprep.subr.bf16.mxu0 0
  %676 = vmatpush1.bf16.msra.mxu0 %v635
  %677 = vmatprep.subr.bf16.mxu0 0
  %678 = vmatpush1.bf16.msra.mxu0 0
  %679 = vmatprep.subr.bf16.mxu0 0
  %680 = vmatpush1.bf16.msra.mxu0 0
  %681 = vmatprep.subr.bf16.mxu0 0
  %682 = vmatpush1.bf16.msra.mxu0 0
  %683 = vmatprep.subr.bf16.mxu0 0
  %684 = vmatpush1.bf16.msra.mxu0 0
  %685 = vmatprep.subr.bf16.mxu0 0
  %686 = vmatpush1.bf16.msra.mxu0 0
  %687 = vmatprep.subr.bf16.mxu0 0
  %688 = vmatpush1.bf16.msra.mxu0 0
  %689 = vmatprep.subr.bf16.mxu0 0
  %690 = vmatpush1.bf16.msra.mxu0 0
  %691 = vmatprep.subr.bf16.mxu0 0
  %692 = vmatpush1.bf16.msra.mxu0 0
  %693 = vmatprep.subr.bf16.mxu0 0
  %694 = vmatpush1.bf16.msra.mxu0 0
  %695 = vmatprep.subr.bf16.mxu0 0
  %696 = vmatpush1.bf16.msra.mxu0 0
  %697 = vmatprep.subr.bf16.mxu0 0
  %698 = vmatpush1.bf16.msra.mxu0 0
  %699 = vmatprep.subr.bf16.mxu0 0
  %700 = vmatpush1.bf16.msra.mxu0 0
  %701 = vmatprep.subr.bf16.mxu0 0
  %702 = vmatpush1.bf16.msra.mxu0 0
  %703 = vmatprep.subr.bf16.mxu0 0
  %704 = vmatpush1.bf16.msra.mxu0 0
  %705 = vmatprep.subr.bf16.mxu0 0
  %706 = vmatpush1.bf16.msra.mxu0 0
  %707 = vmatprep.mubr.bf16.mxu0 0
  %708 = vmatmul.mubr.bf16.gmra.mrb[0].mxu0 %v673
  %v709 = vpop.f32.mrb[0].mxu0
  %v710 = vadd.f32 0.0, %v709
  %v711 = vpop.f32.mrb[0].mxu0
  %v712 = vpop.f32.mrb[0].mxu0
  %v713 = vadd.f32 0.0, %v712
  %v714 = vpop.f32.mrb[0].mxu0
  %715 = vdwg.mxu0
  %v716 = vpack.c.bf16 %v713, %v710
  %v718 = vunpack.c.l.b16 %v716
  %v719 = vunpack.c.h.b16 %v716
  %v720 = vpack.c.b16 %v718, %v718
  %v721 = vpack.c.b16 %v719, %v719
  %vm724 = vcmask 125952
  %725 = vst.msk [vmem:[%s3] sm:$0xf] %vm724, %v720
  %726 = vst.msk [vmem:[%s3 + $0x4] sm:$0xf] %vm724, %v721
  %727 = vmatprep.subr.bf16.mxu0 0
  %728 = vmatpush1.bf16.msra.mxu0 %v636
  %729 = vmatprep.subr.bf16.mxu0 0
  %730 = vmatpush1.bf16.msra.mxu0 0
  %731 = vmatprep.subr.bf16.mxu0 0
  %732 = vmatpush1.bf16.msra.mxu0 0
  %733 = vmatprep.subr.bf16.mxu0 0
  %734 = vmatpush1.bf16.msra.mxu0 0
  %735 = vmatprep.subr.bf16.mxu0 0
  %736 = vmatpush1.bf16.msra.mxu0 0
  %737 = vmatprep.subr.bf16.mxu0 0
  %738 = vmatpush1.bf16.msra.mxu0 0
  %739 = vmatprep.subr.bf16.mxu0 0
  %740 = vmatpush1.bf16.msra.mxu0 0
  %741 = vmatprep.subr.bf16.mxu0 0
  %742 = vmatpush1.bf16.msra.mxu0 0
  %743 = vmatprep.subr.bf16.mxu0 0
  %744 = vmatpush1.bf16.msra.mxu0 0
  %745 = vmatprep.subr.bf16.mxu0 0
  %746 = vmatpush1.bf16.msra.mxu0 0
  %747 = vmatprep.subr.bf16.mxu0 0
  %748 = vmatpush1.bf16.msra.mxu0 0
  %749 = vmatprep.subr.bf16.mxu0 0
  %750 = vmatpush1.bf16.msra.mxu0 0
  %751 = vmatprep.subr.bf16.mxu0 0
  %752 = vmatpush1.bf16.msra.mxu0 0
  %753 = vmatprep.subr.bf16.mxu0 0
  %754 = vmatpush1.bf16.msra.mxu0 0
  %755 = vmatprep.subr.bf16.mxu0 0
  %756 = vmatpush1.bf16.msra.mxu0 0
  %757 = vmatprep.subr.bf16.mxu0 0
  %758 = vmatpush1.bf16.msra.mxu0 0
  %759 = vmatprep.mubr.bf16.mxu0 0
  %760 = vmatmul.mubr.bf16.gmra.mrb[0].mxu0 %v673
  %v761 = vpop.f32.mrb[0].mxu0
  %v762 = vadd.f32 0.0, %v761
  %v763 = vpop.f32.mrb[0].mxu0
  %v764 = vpop.f32.mrb[0].mxu0
  %v765 = vadd.f32 0.0, %v764
  %v766 = vpop.f32.mrb[0].mxu0
  %767 = vdwg.mxu0
  %v768 = vpack.c.bf16 %v765, %v762
  %v770 = vunpack.c.l.b16 %v768
  %v771 = vunpack.c.h.b16 %v768
  %v772 = vpack.c.b16 %v770, %v770
  %v773 = vpack.c.b16 %v771, %v771
  %s776 = scalar_lea.vmem %s3, 8
  %777 = vst.msk [vmem:[%s776] sm:$0xf] %vm724, %v772
  %778 = vst.msk [vmem:[%s776 + $0x4] sm:$0xf] %vm724, %v773
  %779 = vmatprep.subr.bf16.mxu0 0
  %780 = vmatpush1.bf16.msra.mxu0 %v637
  %781 = vmatprep.subr.bf16.mxu0 0
  %782 = vmatpush1.bf16.msra.mxu0 0
  %783 = vmatprep.subr.bf16.mxu0 0
  %784 = vmatpush1.bf16.msra.mxu0 0
  %785 = vmatprep.subr.bf16.mxu0 0
  %786 = vmatpush1.bf16.msra.mxu0 0
  %787 = vmatprep.subr.bf16.mxu0 0
  %788 = vmatpush1.bf16.msra.mxu0 0
  %789 = vmatprep.subr.bf16.mxu0 0
  %790 = vmatpush1.bf16.msra.mxu0 0
  %791 = vmatprep.subr.bf16.mxu0 0
  %792 = vmatpush1.bf16.msra.mxu0 0
  %793 = vmatprep.subr.bf16.mxu0 0
  %794 = vmatpush1.bf16.msra.mxu0 0
  %795 = vmatprep.subr.bf16.mxu0 0
  %796 = vmatpush1.bf16.msra.mxu0 0
  %797 = vmatprep.subr.bf16.mxu0 0
  %798 = vmatpush1.bf16.msra.mxu0 0
  %799 = vmatprep.subr.bf16.mxu0 0
  %800 = vmatpush1.bf16.msra.mxu0 0
  %801 = vmatprep.subr.bf16.mxu0 0
  %802 = vmatpush1.bf16.msra.mxu0 0
  %803 = vmatprep.subr.bf16.mxu0 0
  %804 = vmatpush1.bf16.msra.mxu0 0
  %805 = vmatprep.subr.bf16.mxu0 0
  %806 = vmatpush1.bf16.msra.mxu0 0
  %807 = vmatprep.subr.bf16.mxu0 0
  %808 = vmatpush1.bf16.msra.mxu0 0
  %809 = vmatprep.subr.bf16.mxu0 0
  %810 = vmatpush1.bf16.msra.mxu0 0
  %811 = vmatprep.mubr.bf16.mxu0 0
  %812 = vmatmul.mubr.bf16.gmra.mrb[0].mxu0 %v673
  %v813 = vpop.f32.mrb[0].mxu0
  %v814 = vadd.f32 0.0, %v813
  %v815 = vpop.f32.mrb[0].mxu0
  %v816 = vpop.f32.mrb[0].mxu0
  %v817 = vadd.f32 0.0, %v816
  %v818 = vpop.f32.mrb[0].mxu0
  %819 = vdwg.mxu0
  %v820 = vpack.c.bf16 %v817, %v814
  %v822 = vunpack.c.l.b16 %v820
  %v823 = vunpack.c.h.b16 %v820
  %v824 = vpack.c.b16 %v822, %v822
  %v825 = vpack.c.b16 %v823, %v823
  %s828 = scalar_lea.vmem %s3, 16
  %829 = vst.msk [vmem:[%s828] sm:$0xf] %vm724, %v824
  %830 = vst.msk [vmem:[%s828 + $0x4] sm:$0xf] %vm724, %v825
  %831 = vmatprep.subr.bf16.mxu0 0
  %832 = vmatpush1.bf16.msra.mxu0 %v638
  %833 = vmatprep.subr.bf16.mxu0 0
  %834 = vmatpush1.bf16.msra.mxu0 0
  %835 = vmatprep.subr.bf16.mxu0 0
  %836 = vmatpush1.bf16.msra.mxu0 0
  %837 = vmatprep.subr.bf16.mxu0 0
  %838 = vmatpush1.bf16.msra.mxu0 0
  %839 = vmatprep.subr.bf16.mxu0 0
  %840 = vmatpush1.bf16.msra.mxu0 0
  %841 = vmatprep.subr.bf16.mxu0 0
  %842 = vmatpush1.bf16.msra.mxu0 0
  %843 = vmatprep.subr.bf16.mxu0 0
  %844 = vmatpush1.bf16.msra.mxu0 0
  %845 = vmatprep.subr.bf16.mxu0 0
  %846 = vmatpush1.bf16.msra.mxu0 0
  %847 = vmatprep.subr.bf16.mxu0 0
  %848 = vmatpush1.bf16.msra.mxu0 0
  %849 = vmatprep.subr.bf16.mxu0 0
  %850 = vmatpush1.bf16.msra.mxu0 0
  %851 = vmatprep.subr.bf16.mxu0 0
  %852 = vmatpush1.bf16.msra.mxu0 0
  %853 = vmatprep.subr.bf16.mxu0 0
  %854 = vmatpush1.bf16.msra.mxu0 0
  %855 = vmatprep.subr.bf16.mxu0 0
  %856 = vmatpush1.bf16.msra.mxu0 0
  %857 = vmatprep.subr.bf16.mxu0 0
  %858 = vmatpush1.bf16.msra.mxu0 0
  %859 = vmatprep.subr.bf16.mxu0 0
  %860 = vmatpush1.bf16.msra.mxu0 0
  %861 = vmatprep.subr.bf16.mxu0 0
  %862 = vmatpush1.bf16.msra.mxu0 0
  %863 = vmatprep.mubr.bf16.mxu0 0
  %864 = vmatmul.mubr.bf16.gmra.mrb[0].mxu0 %v673
  %v865 = vpop.f32.mrb[0].mxu0
  %v866 = vadd.f32 0.0, %v865
  %v867 = vpop.f32.mrb[0].mxu0
  %v868 = vpop.f32.mrb[0].mxu0
  %v869 = vadd.f32 0.0, %v868
  %v870 = vpop.f32.mrb[0].mxu0
  %871 = vdwg.mxu0
  %v872 = vpack.c.bf16 %v869, %v866
  %v874 = vunpack.c.l.b16 %v872
  %v875 = vunpack.c.h.b16 %v872
  %v876 = vpack.c.b16 %v874, %v874
  %v877 = vpack.c.b16 %v875, %v875
  %s880 = scalar_lea.vmem %s3, 24
  %881 = vst.msk [vmem:[%s880] sm:$0xf] %vm724, %v876
  %882 = vst.msk [vmem:[%s880 + $0x4] sm:$0xf] %vm724, %v877
  %883 = vmatprep.subr.bf16.mxu0 0
  %884 = vmatpush1.bf16.msra.mxu0 %v639
  %885 = vmatprep.subr.bf16.mxu0 0
  %886 = vmatpush1.bf16.msra.mxu0 0
  %887 = vmatprep.subr.bf16.mxu0 0
  %888 = vmatpush1.bf16.msra.mxu0 0
  %889 = vmatprep.subr.bf16.mxu0 0
  %890 = vmatpush1.bf16.msra.mxu0 0
  %891 = vmatprep.subr.bf16.mxu0 0
  %892 = vmatpush1.bf16.msra.mxu0 0
  %893 = vmatprep.subr.bf16.mxu0 0
  %894 = vmatpush1.bf16.msra.mxu0 0
  %895 = vmatprep.subr.bf16.mxu0 0
  %896 = vmatpush1.bf16.msra.mxu0 0
  %897 = vmatprep.subr.bf16.mxu0 0
  %898 = vmatpush1.bf16.msra.mxu0 0
  %899 = vmatprep.subr.bf16.mxu0 0
  %900 = vmatpush1.bf16.msra.mxu0 0
  %901 = vmatprep.subr.bf16.mxu0 0
  %902 = vmatpush1.bf16.msra.mxu0 0
  %903 = vmatprep.subr.bf16.mxu0 0
  %904 = vmatpush1.bf16.msra.mxu0 0
  %905 = vmatprep.subr.bf16.mxu0 0
  %906 = vmatpush1.bf16.msra.mxu0 0
  %907 = vmatprep.subr.bf16.mxu0 0
  %908 = vmatpush1.bf16.msra.mxu0 0
  %909 = vmatprep.subr.bf16.mxu0 0
  %910 = vmatpush1.bf16.msra.mxu0 0
  %911 = vmatprep.subr.bf16.mxu0 0
  %912 = vmatpush1.bf16.msra.mxu0 0
  %913 = vmatprep.subr.bf16.mxu0 0
  %914 = vmatpush1.bf16.msra.mxu0 0
  %915 = vmatprep.mubr.bf16.mxu0 0
  %916 = vmatmul.mubr.bf16.gmra.mrb[0].mxu0 %v673
  %v917 = vpop.f32.mrb[0].mxu0
  %v918 = vadd.f32 0.0, %v917
  %v919 = vpop.f32.mrb[0].mxu0
  %v920 = vpop.f32.mrb[0].mxu0
  %v921 = vadd.f32 0.0, %v920
  %v922 = vpop.f32.mrb[0].mxu0
  %923 = vdwg.mxu0
  %v924 = vpack.c.bf16 %v921, %v918
  %v926 = vunpack.c.l.b16 %v924
  %v927 = vunpack.c.h.b16 %v924
  %v928 = vpack.c.b16 %v926, %v926
  %v929 = vpack.c.b16 %v927, %v927
  %s932 = scalar_lea.vmem %s3, 32
  %933 = vst.msk [vmem:[%s932] sm:$0xf] %vm724, %v928
  %934 = vst.msk [vmem:[%s932 + $0x4] sm:$0xf] %vm724, %v929
  %935 = vmatprep.subr.bf16.mxu0 0
  %936 = vmatpush1.bf16.msra.mxu0 %v640
  %937 = vmatprep.subr.bf16.mxu0 0
  %938 = vmatpush1.bf16.msra.mxu0 0
  %939 = vmatprep.subr.bf16.mxu0 0
  %940 = vmatpush1.bf16.msra.mxu0 0
  %941 = vmatprep.subr.bf16.mxu0 0
  %942 = vmatpush1.bf16.msra.mxu0 0
  %943 = vmatprep.subr.bf16.mxu0 0
  %944 = vmatpush1.bf16.msra.mxu0 0
  %945 = vmatprep.subr.bf16.mxu0 0
  %946 = vmatpush1.bf16.msra.mxu0 0
  %947 = vmatprep.subr.bf16.mxu0 0
  %948 = vmatpush1.bf16.msra.mxu0 0
  %949 = vmatprep.subr.bf16.mxu0 0
  %950 = vmatpush1.bf16.msra.mxu0 0
  %951 = vmatprep.subr.bf16.mxu0 0
  %952 = vmatpush1.bf16.msra.mxu0 0
  %953 = vmatprep.subr.bf16.mxu0 0
  %954 = vmatpush1.bf16.msra.mxu0 0
  %955 = vmatprep.subr.bf16.mxu0 0
  %956 = vmatpush1.bf16.msra.mxu0 0
  %957 = vmatprep.subr.bf16.mxu0 0
  %958 = vmatpush1.bf16.msra.mxu0 0
  %959 = vmatprep.subr.bf16.mxu0 0
  %960 = vmatpush1.bf16.msra.mxu0 0
  %961 = vmatprep.subr.bf16.mxu0 0
  %962 = vmatpush1.bf16.msra.mxu0 0
  %963 = vmatprep.subr.bf16.mxu0 0
  %964 = vmatpush1.bf16.msra.mxu0 0
  %965 = vmatprep.subr.bf16.mxu0 0
  %966 = vmatpush1.bf16.msra.mxu0 0
  %967 = vmatprep.mubr.bf16.mxu0 0
  %968 = vmatmul.mubr.bf16.gmra.mrb[0].mxu0 %v673
  %v969 = vpop.f32.mrb[0].mxu0
  %v970 = vadd.f32 0.0, %v969
  %v971 = vpop.f32.mrb[0].mxu0
  %v972 = vpop.f32.mrb[0].mxu0
  %v973 = vadd.f32 0.0, %v972
  %v974 = vpop.f32.mrb[0].mxu0
  %975 = vdwg.mxu0
  %v976 = vpack.c.bf16 %v973, %v970
  %v978 = vunpack.c.l.b16 %v976
  %v979 = vunpack.c.h.b16 %v976
  %v980 = vpack.c.b16 %v978, %v978
  %v981 = vpack.c.b16 %v979, %v979
  %s984 = scalar_lea.vmem %s3, 40
  %985 = vst.msk [vmem:[%s984] sm:$0xf] %vm724, %v980
  %986 = vst.msk [vmem:[%s984 + $0x4] sm:$0xf] %vm724, %v981
  %987 = vmatprep.subr.bf16.mxu0 0
  %988 = vmatpush1.bf16.msra.mxu0 %v641
  %989 = vmatprep.subr.bf16.mxu0 0
  %990 = vmatpush1.bf16.msra.mxu0 0
  %991 = vmatprep.subr.bf16.mxu0 0
  %992 = vmatpush1.bf16.msra.mxu0 0
  %993 = vmatprep.subr.bf16.mxu0 0
  %994 = vmatpush1.bf16.msra.mxu0 0
  %995 = vmatprep.subr.bf16.mxu0 0
  %996 = vmatpush1.bf16.msra.mxu0 0
  %997 = vmatprep.subr.bf16.mxu0 0
  %998 = vmatpush1.bf16.msra.mxu0 0
  %999 = vmatprep.subr.bf16.mxu0 0
  %1000 = vmatpush1.bf16.msra.mxu0 0
  %1001 = vmatprep.subr.bf16.mxu0 0
  %1002 = vmatpush1.bf16.msra.mxu0 0
  %1003 = vmatprep.subr.bf16.mxu0 0
  %1004 = vmatpush1.bf16.msra.mxu0 0
  %1005 = vmatprep.subr.bf16.mxu0 0
  %1006 = vmatpush1.bf16.msra.mxu0 0
  %1007 = vmatprep.subr.bf16.mxu0 0
  %1008 = vmatpush1.bf16.msra.mxu0 0
  %1009 = vmatprep.subr.bf16.mxu0 0
  %1010 = vmatpush1.bf16.msra.mxu0 0
  %1011 = vmatprep.subr.bf16.mxu0 0
  %1012 = vmatpush1.bf16.msra.mxu0 0
  %1013 = vmatprep.subr.bf16.mxu0 0
  %1014 = vmatpush1.bf16.msra.mxu0 0
  %1015 = vmatprep.subr.bf16.mxu0 0
  %1016 = vmatpush1.bf16.msra.mxu0 0
  %1017 = vmatprep.subr.bf16.mxu0 0
  %1018 = vmatpush1.bf16.msra.mxu0 0
  %1019 = vmatprep.mubr.bf16.mxu0 0
  %1020 = vmatmul.mubr.bf16.gmra.mrb[0].mxu0 %v673
  %v1021 = vpop.f32.mrb[0].mxu0
  %v1022 = vadd.f32 0.0, %v1021
  %v1023 = vpop.f32.mrb[0].mxu0
  %v1024 = vpop.f32.mrb[0].mxu0
  %v1025 = vadd.f32 0.0, %v1024
  %v1026 = vpop.f32.mrb[0].mxu0
  %1027 = vdwg.mxu0
  %v1028 = vpack.c.bf16 %v1025, %v1022
  %v1030 = vunpack.c.l.b16 %v1028
  %v1031 = vunpack.c.h.b16 %v1028
  %v1032 = vpack.c.b16 %v1030, %v1030
  %v1033 = vpack.c.b16 %v1031, %v1031
  %s1036 = scalar_lea.vmem %s3, 48
  %1037 = vst.msk [vmem:[%s1036] sm:$0xf] %vm724, %v1032
  %1038 = vst.msk [vmem:[%s1036 + $0x4] sm:$0xf] %vm724, %v1033
  %1039 = vmatprep.subr.bf16.mxu0 0
  %1040 = vmatpush1.bf16.msra.mxu0 %v642
  %1041 = vmatprep.subr.bf16.mxu0 0
  %1042 = vmatpush1.bf16.msra.mxu0 0
  %1043 = vmatprep.subr.bf16.mxu0 0
  %1044 = vmatpush1.bf16.msra.mxu0 0
  %1045 = vmatprep.subr.bf16.mxu0 0
  %1046 = vmatpush1.bf16.msra.mxu0 0
  %1047 = vmatprep.subr.bf16.mxu0 0
  %1048 = vmatpush1.bf16.msra.mxu0 0
  %1049 = vmatprep.subr.bf16.mxu0 0
  %1050 = vmatpush1.bf16.msra.mxu0 0
  %1051 = vmatprep.subr.bf16.mxu0 0
  %1052 = vmatpush1.bf16.msra.mxu0 0
  %1053 = vmatprep.subr.bf16.mxu0 0
  %1054 = vmatpush1.bf16.msra.mxu0 0
  %1055 = vmatprep.subr.bf16.mxu0 0
  %1056 = vmatpush1.bf16.msra.mxu0 0
  %1057 = vmatprep.subr.bf16.mxu0 0
  %1058 = vmatpush1.bf16.msra.mxu0 0
  %1059 = vmatprep.subr.bf16.mxu0 0
  %1060 = vmatpush1.bf16.msra.mxu0 0
  %1061 = vmatprep.subr.bf16.mxu0 0
  %1062 = vmatpush1.bf16.msra.mxu0 0
  %1063 = vmatprep.subr.bf16.mxu0 0
  %1064 = vmatpush1.bf16.msra.mxu0 0
  %1065 = vmatprep.subr.bf16.mxu0 0
  %1066 = vmatpush1.bf16.msra.mxu0 0
  %1067 = vmatprep.subr.bf16.mxu0 0
  %1068 = vmatpush1.bf16.msra.mxu0 0
  %1069 = vmatprep.subr.bf16.mxu0 0
  %1070 = vmatpush1.bf16.msra.mxu0 0
  %1071 = vmatprep.mubr.bf16.mxu0 0
  %1072 = vmatmul.mubr.bf16.gmra.mrb[0].mxu0 %v673
  %v1073 = vpop.f32.mrb[0].mxu0
  %v1074 = vadd.f32 0.0, %v1073
  %v1075 = vpop.f32.mrb[0].mxu0
  %v1076 = vpop.f32.mrb[0].mxu0
  %v1077 = vadd.f32 0.0, %v1076
  %v1078 = vpop.f32.mrb[0].mxu0
  %1079 = vdwg.mxu0
  %v1080 = vpack.c.bf16 %v1077, %v1074
  %v1082 = vunpack.c.l.b16 %v1080
  %v1083 = vunpack.c.h.b16 %v1080
  %v1084 = vpack.c.b16 %v1082, %v1082
  %v1085 = vpack.c.b16 %v1083, %v1083
  %s1088 = scalar_lea.vmem %s3, 56
  %1089 = vst.msk [vmem:[%s1088] sm:$0xf] %vm724, %v1084
  %1090 = vst.msk [vmem:[%s1088 + $0x4] sm:$0xf] %vm724, %v1085
  %1091 = vmatprep.subr.bf16.mxu0 0
  %1092 = vmatpush1.bf16.msra.mxu0 %v643
  %1093 = vmatprep.subr.bf16.mxu0 0
  %1094 = vmatpush1.bf16.msra.mxu0 0
  %1095 = vmatprep.subr.bf16.mxu0 0
  %1096 = vmatpush1.bf16.msra.mxu0 0
  %1097 = vmatprep.subr.bf16.mxu0 0
  %1098 = vmatpush1.bf16.msra.mxu0 0
  %1099 = vmatprep.subr.bf16.mxu0 0
  %1100 = vmatpush1.bf16.msra.mxu0 0
  %1101 = vmatprep.subr.bf16.mxu0 0
  %1102 = vmatpush1.bf16.msra.mxu0 0
  %1103 = vmatprep.subr.bf16.mxu0 0
  %1104 = vmatpush1.bf16.msra.mxu0 0
  %1105 = vmatprep.subr.bf16.mxu0 0
  %1106 = vmatpush1.bf16.msra.mxu0 0
  %1107 = vmatprep.subr.bf16.mxu0 0
  %1108 = vmatpush1.bf16.msra.mxu0 0
  %1109 = vmatprep.subr.bf16.mxu0 0
  %1110 = vmatpush1.bf16.msra.mxu0 0
  %1111 = vmatprep.subr.bf16.mxu0 0
  %1112 = vmatpush1.bf16.msra.mxu0 0
  %1113 = vmatprep.subr.bf16.mxu0 0
  %1114 = vmatpush1.bf16.msra.mxu0 0
  %1115 = vmatprep.subr.bf16.mxu0 0
  %1116 = vmatpush1.bf16.msra.mxu0 0
  %1117 = vmatprep.subr.bf16.mxu0 0
  %1118 = vmatpush1.bf16.msra.mxu0 0
  %1119 = vmatprep.subr.bf16.mxu0 0
  %1120 = vmatpush1.bf16.msra.mxu0 0
  %1121 = vmatprep.subr.bf16.mxu0 0
  %1122 = vmatpush1.bf16.msra.mxu0 0
  %1123 = vmatprep.mubr.bf16.mxu0 0
  %1124 = vmatmul.mubr.bf16.gmra.mrb[0].mxu0 %v673
  %v1125 = vpop.f32.mrb[0].mxu0
  %v1126 = vadd.f32 0.0, %v1125
  %v1127 = vpop.f32.mrb[0].mxu0
  %v1128 = vpop.f32.mrb[0].mxu0
  %v1129 = vadd.f32 0.0, %v1128
  %v1130 = vpop.f32.mrb[0].mxu0
  %1131 = vdwg.mxu0
  %v1132 = vpack.c.bf16 %v1129, %v1126
  %v1134 = vunpack.c.l.b16 %v1132
  %v1135 = vunpack.c.h.b16 %v1132
  %v1136 = vpack.c.b16 %v1134, %v1134
  %v1137 = vpack.c.b16 %v1135, %v1135
  %s1140 = scalar_lea.vmem %s3, 64
  %1141 = vst.msk [vmem:[%s1140] sm:$0xf] %vm724, %v1136
  %1142 = vst.msk [vmem:[%s1140 + $0x4] sm:$0xf] %vm724, %v1137
  %1143 = vmatprep.subr.bf16.mxu0 0
  %1144 = vmatpush1.bf16.msra.mxu0 %v644
  %1145 = vmatprep.subr.bf16.mxu0 0
  %1146 = vmatpush1.bf16.msra.mxu0 0
  %1147 = vmatprep.subr.bf16.mxu0 0
  %1148 = vmatpush1.bf16.msra.mxu0 0
  %1149 = vmatprep.subr.bf16.mxu0 0
  %1150 = vmatpush1.bf16.msra.mxu0 0
  %1151 = vmatprep.subr.bf16.mxu0 0
  %1152 = vmatpush1.bf16.msra.mxu0 0
  %1153 = vmatprep.subr.bf16.mxu0 0
  %1154 = vmatpush1.bf16.msra.mxu0 0
  %1155 = vmatprep.subr.bf16.mxu0 0
  %1156 = vmatpush1.bf16.msra.mxu0 0
  %1157 = vmatprep.subr.bf16.mxu0 0
  %1158 = vmatpush1.bf16.msra.mxu0 0
  %1159 = vmatprep.subr.bf16.mxu0 0
  %1160 = vmatpush1.bf16.msra.mxu0 0
  %1161 = vmatprep.subr.bf16.mxu0 0
  %1162 = vmatpush1.bf16.msra.mxu0 0
  %1163 = vmatprep.subr.bf16.mxu0 0
  %1164 = vmatpush1.bf16.msra.mxu0 0
  %1165 = vmatprep.subr.bf16.mxu0 0
  %1166 = vmatpush1.bf16.msra.mxu0 0
  %1167 = vmatprep.subr.bf16.mxu0 0
  %1168 = vmatpush1.bf16.msra.mxu0 0
  %1169 = vmatprep.subr.bf16.mxu0 0
  %1170 = vmatpush1.bf16.msra.mxu0 0
  %1171 = vmatprep.subr.bf16.mxu0 0
  %1172 = vmatpush1.bf16.msra.mxu0 0
  %1173 = vmatprep.subr.bf16.mxu0 0
  %1174 = vmatpush1.bf16.msra.mxu0 0
  %1175 = vmatprep.mubr.bf16.mxu0 0
  %1176 = vmatmul.mubr.bf16.gmra.mrb[0].mxu0 %v673
  %v1177 = vpop.f32.mrb[0].mxu0
  %v1178 = vadd.f32 0.0, %v1177
  %v1179 = vpop.f32.mrb[0].mxu0
  %v1180 = vpop.f32.mrb[0].mxu0
  %v1181 = vadd.f32 0.0, %v1180
  %v1182 = vpop.f32.mrb[0].mxu0
  %1183 = vdwg.mxu0
  %v1184 = vpack.c.bf16 %v1181, %v1178
  %v1186 = vunpack.c.l.b16 %v1184
  %v1187 = vunpack.c.h.b16 %v1184
  %v1188 = vpack.c.b16 %v1186, %v1186
  %v1189 = vpack.c.b16 %v1187, %v1187
  %s1192 = scalar_lea.vmem %s3, 72
  %1193 = vst.msk [vmem:[%s1192] sm:$0xf] %vm724, %v1188
  %1194 = vst.msk [vmem:[%s1192 + $0x4] sm:$0xf] %vm724, %v1189
  %1195 = vmatprep.subr.bf16.mxu0 0
  %1196 = vmatpush1.bf16.msra.mxu0 %v645
  %1197 = vmatprep.subr.bf16.mxu0 0
  %1198 = vmatpush1.bf16.msra.mxu0 0
  %1199 = vmatprep.subr.bf16.mxu0 0
  %1200 = vmatpush1.bf16.msra.mxu0 0
  %1201 = vmatprep.subr.bf16.mxu0 0
  %1202 = vmatpush1.bf16.msra.mxu0 0
  %1203 = vmatprep.subr.bf16.mxu0 0
  %1204 = vmatpush1.bf16.msra.mxu0 0
  %1205 = vmatprep.subr.bf16.mxu0 0
  %1206 = vmatpush1.bf16.msra.mxu0 0
  %1207 = vmatprep.subr.bf16.mxu0 0
  %1208 = vmatpush1.bf16.msra.mxu0 0
  %1209 = vmatprep.subr.bf16.mxu0 0
  %1210 = vmatpush1.bf16.msra.mxu0 0
  %1211 = vmatprep.subr.bf16.mxu0 0
  %1212 = vmatpush1.bf16.msra.mxu0 0
  %1213 = vmatprep.subr.bf16.mxu0 0
  %1214 = vmatpush1.bf16.msra.mxu0 0
  %1215 = vmatprep.subr.bf16.mxu0 0
  %1216 = vmatpush1.bf16.msra.mxu0 0
  %1217 = vmatprep.subr.bf16.mxu0 0
  %1218 = vmatpush1.bf16.msra.mxu0 0
  %1219 = vmatprep.subr.bf16.mxu0 0
  %1220 = vmatpush1.bf16.msra.mxu0 0
  %1221 = vmatprep.subr.bf16.mxu0 0
  %1222 = vmatpush1.bf16.msra.mxu0 0
  %1223 = vmatprep.subr.bf16.mxu0 0
  %1224 = vmatpush1.bf16.msra.mxu0 0
  %1225 = vmatprep.subr.bf16.mxu0 0
  %1226 = vmatpush1.bf16.msra.mxu0 0
  %1227 = vmatprep.mubr.bf16.mxu0 0
  %1228 = vmatmul.mubr.bf16.gmra.mrb[0].mxu0 %v673
  %v1229 = vpop.f32.mrb[0].mxu0
  %v1230 = vadd.f32 0.0, %v1229
  %v1231 = vpop.f32.mrb[0].mxu0
  %v1232 = vpop.f32.mrb[0].mxu0
  %v1233 = vadd.f32 0.0, %v1232
  %v1234 = vpop.f32.mrb[0].mxu0
  %1235 = vdwg.mxu0
  %v1236 = vpack.c.bf16 %v1233, %v1230
  %v1238 = vunpack.c.l.b16 %v1236
  %v1239 = vunpack.c.h.b16 %v1236
  %v1240 = vpack.c.b16 %v1238, %v1238
  %v1241 = vpack.c.b16 %v1239, %v1239
  %s1244 = scalar_lea.vmem %s3, 80
  %1245 = vst.msk [vmem:[%s1244] sm:$0xf] %vm724, %v1240
  %1246 = vst.msk [vmem:[%s1244 + $0x4] sm:$0xf] %vm724, %v1241
  %1247 = vmatprep.subr.bf16.mxu0 0
  %1248 = vmatpush1.bf16.msra.mxu0 %v646
  %1249 = vmatprep.subr.bf16.mxu0 0
  %1250 = vmatpush1.bf16.msra.mxu0 0
  %1251 = vmatprep.subr.bf16.mxu0 0
  %1252 = vmatpush1.bf16.msra.mxu0 0
  %1253 = vmatprep.subr.bf16.mxu0 0
  %1254 = vmatpush1.bf16.msra.mxu0 0
  %1255 = vmatprep.subr.bf16.mxu0 0
  %1256 = vmatpush1.bf16.msra.mxu0 0
  %1257 = vmatprep.subr.bf16.mxu0 0
  %1258 = vmatpush1.bf16.msra.mxu0 0
  %1259 = vmatprep.subr.bf16.mxu0 0
  %1260 = vmatpush1.bf16.msra.mxu0 0
  %1261 = vmatprep.subr.bf16.mxu0 0
  %1262 = vmatpush1.bf16.msra.mxu0 0
  %1263 = vmatprep.subr.bf16.mxu0 0
  %1264 = vmatpush1.bf16.msra.mxu0 0
  %1265 = vmatprep.subr.bf16.mxu0 0
  %1266 = vmatpush1.bf16.msra.mxu0 0
  %1267 = vmatprep.subr.bf16.mxu0 0
  %1268 = vmatpush1.bf16.msra.mxu0 0
  %1269 = vmatprep.subr.bf16.mxu0 0
  %1270 = vmatpush1.bf16.msra.mxu0 0
  %1271 = vmatprep.subr.bf16.mxu0 0
  %1272 = vmatpush1.bf16.msra.mxu0 0
  %1273 = vmatprep.subr.bf16.mxu0 0
  %1274 = vmatpush1.bf16.msra.mxu0 0
  %1275 = vmatprep.subr.bf16.mxu0 0
  %1276 = vmatpush1.bf16.msra.mxu0 0
  %1277 = vmatprep.subr.bf16.mxu0 0
  %1278 = vmatpush1.bf16.msra.mxu0 0
  %1279 = vmatprep.mubr.bf16.mxu0 0
  %1280 = vmatmul.mubr.bf16.gmra.mrb[0].mxu0 %v673
  %v1281 = vpop.f32.mrb[0].mxu0
  %v1282 = vadd.f32 0.0, %v1281
  %v1283 = vpop.f32.mrb[0].mxu0
  %v1284 = vpop.f32.mrb[0].mxu0
  %v1285 = vadd.f32 0.0, %v1284
  %v1286 = vpop.f32.mrb[0].mxu0
  %1287 = vdwg.mxu0
  %v1288 = vpack.c.bf16 %v1285, %v1282
  %v1290 = vunpack.c.l.b16 %v1288
  %v1291 = vunpack.c.h.b16 %v1288
  %v1292 = vpack.c.b16 %v1290, %v1290
  %v1293 = vpack.c.b16 %v1291, %v1291
  %s1296 = scalar_lea.vmem %s3, 88
  %1297 = vst.msk [vmem:[%s1296] sm:$0xf] %vm724, %v1292
  %1298 = vst.msk [vmem:[%s1296 + $0x4] sm:$0xf] %vm724, %v1293
  %1299 = vmatprep.subr.bf16.mxu0 0
  %1300 = vmatpush1.bf16.msra.mxu0 %v647
  %1301 = vmatprep.subr.bf16.mxu0 0
  %1302 = vmatpush1.bf16.msra.mxu0 0
  %1303 = vmatprep.subr.bf16.mxu0 0
  %1304 = vmatpush1.bf16.msra.mxu0 0
  %1305 = vmatprep.subr.bf16.mxu0 0
  %1306 = vmatpush1.bf16.msra.mxu0 0
  %1307 = vmatprep.subr.bf16.mxu0 0
  %1308 = vmatpush1.bf16.msra.mxu0 0
  %1309 = vmatprep.subr.bf16.mxu0 0
  %1310 = vmatpush1.bf16.msra.mxu0 0
  %1311 = vmatprep.subr.bf16.mxu0 0
  %1312 = vmatpush1.bf16.msra.mxu0 0
  %1313 = vmatprep.subr.bf16.mxu0 0
  %1314 = vmatpush1.bf16.msra.mxu0 0
  %1315 = vmatprep.subr.bf16.mxu0 0
  %1316 = vmatpush1.bf16.msra.mxu0 0
  %1317 = vmatprep.subr.bf16.mxu0 0
  %1318 = vmatpush1.bf16.msra.mxu0 0
  %1319 = vmatprep.subr.bf16.mxu0 0
  %1320 = vmatpush1.bf16.msra.mxu0 0
  %1321 = vmatprep.subr.bf16.mxu0 0
  %1322 = vmatpush1.bf16.msra.mxu0 0
  %1323 = vmatprep.subr.bf16.mxu0 0
  %1324 = vmatpush1.bf16.msra.mxu0 0
  %1325 = vmatprep.subr.bf16.mxu0 0
  %1326 = vmatpush1.bf16.msra.mxu0 0
  %1327 = vmatprep.subr.bf16.mxu0 0
  %1328 = vmatpush1.bf16.msra.mxu0 0
  %1329 = vmatprep.subr.bf16.mxu0 0
  %1330 = vmatpush1.bf16.msra.mxu0 0
  %1331 = vmatprep.mubr.bf16.mxu0 0
  %1332 = vmatmul.mubr.bf16.gmra.mrb[0].mxu0 %v673
  %v1333 = vpop.f32.mrb[0].mxu0
  %v1334 = vadd.f32 0.0, %v1333
  %v1335 = vpop.f32.mrb[0].mxu0
  %v1336 = vpop.f32.mrb[0].mxu0
  %v1337 = vadd.f32 0.0, %v1336
  %v1338 = vpop.f32.mrb[0].mxu0
  %1339 = vdwg.mxu0
  %v1340 = vpack.c.bf16 %v1337, %v1334
  %v1342 = vunpack.c.l.b16 %v1340
  %v1343 = vunpack.c.h.b16 %v1340
  %v1344 = vpack.c.b16 %v1342, %v1342
  %v1345 = vpack.c.b16 %v1343, %v1343
  %s1348 = scalar_lea.vmem %s3, 96
  %1349 = vst.msk [vmem:[%s1348] sm:$0xf] %vm724, %v1344
  %1350 = vst.msk [vmem:[%s1348 + $0x4] sm:$0xf] %vm724, %v1345
  %1351 = vmatprep.subr.bf16.mxu0 0
  %1352 = vmatpush1.bf16.msra.mxu0 %v648
  %1353 = vmatprep.subr.bf16.mxu0 0
  %1354 = vmatpush1.bf16.msra.mxu0 0
  %1355 = vmatprep.subr.bf16.mxu0 0
  %1356 = vmatpush1.bf16.msra.mxu0 0
  %1357 = vmatprep.subr.bf16.mxu0 0
  %1358 = vmatpush1.bf16.msra.mxu0 0
  %1359 = vmatprep.subr.bf16.mxu0 0
  %1360 = vmatpush1.bf16.msra.mxu0 0
  %1361 = vmatprep.subr.bf16.mxu0 0
  %1362 = vmatpush1.bf16.msra.mxu0 0
  %1363 = vmatprep.subr.bf16.mxu0 0
  %1364 = vmatpush1.bf16.msra.mxu0 0
  %1365 = vmatprep.subr.bf16.mxu0 0
  %1366 = vmatpush1.bf16.msra.mxu0 0
  %1367 = vmatprep.subr.bf16.mxu0 0
  %1368 = vmatpush1.bf16.msra.mxu0 0
  %1369 = vmatprep.subr.bf16.mxu0 0
  %1370 = vmatpush1.bf16.msra.mxu0 0
  %1371 = vmatprep.subr.bf16.mxu0 0
  %1372 = vmatpush1.bf16.msra.mxu0 0
  %1373 = vmatprep.subr.bf16.mxu0 0
  %1374 = vmatpush1.bf16.msra.mxu0 0
  %1375 = vmatprep.subr.bf16.mxu0 0
  %1376 = vmatpush1.bf16.msra.mxu0 0
  %1377 = vmatprep.subr.bf16.mxu0 0
  %1378 = vmatpush1.bf16.msra.mxu0 0
  %1379 = vmatprep.subr.bf16.mxu0 0
  %1380 = vmatpush1.bf16.msra.mxu0 0
  %1381 = vmatprep.subr.bf16.mxu0 0
  %1382 = vmatpush1.bf16.msra.mxu0 0
  %1383 = vmatprep.mubr.bf16.mxu0 0
  %1384 = vmatmul.mubr.bf16.gmra.mrb[0].mxu0 %v673
  %v1385 = vpop.f32.mrb[0].mxu0
  %v1386 = vadd.f32 0.0, %v1385
  %v1387 = vpop.f32.mrb[0].mxu0
  %v1388 = vpop.f32.mrb[0].mxu0
  %v1389 = vadd.f32 0.0, %v1388
  %v1390 = vpop.f32.mrb[0].mxu0
  %1391 = vdwg.mxu0
  %v1392 = vpack.c.bf16 %v1389, %v1386
  %v1394 = vunpack.c.l.b16 %v1392
  %v1395 = vunpack.c.h.b16 %v1392
  %v1396 = vpack.c.b16 %v1394, %v1394
  %v1397 = vpack.c.b16 %v1395, %v1395
  %s1400 = scalar_lea.vmem %s3, 104
  %1401 = vst.msk [vmem:[%s1400] sm:$0xf] %vm724, %v1396
  %1402 = vst.msk [vmem:[%s1400 + $0x4] sm:$0xf] %vm724, %v1397
  %1403 = vmatprep.subr.bf16.mxu0 0
  %1404 = vmatpush1.bf16.msra.mxu0 %v649
  %1405 = vmatprep.subr.bf16.mxu0 0
  %1406 = vmatpush1.bf16.msra.mxu0 0
  %1407 = vmatprep.subr.bf16.mxu0 0
  %1408 = vmatpush1.bf16.msra.mxu0 0
  %1409 = vmatprep.subr.bf16.mxu0 0
  %1410 = vmatpush1.bf16.msra.mxu0 0
  %1411 = vmatprep.subr.bf16.mxu0 0
  %1412 = vmatpush1.bf16.msra.mxu0 0
  %1413 = vmatprep.subr.bf16.mxu0 0
  %1414 = vmatpush1.bf16.msra.mxu0 0
  %1415 = vmatprep.subr.bf16.mxu0 0
  %1416 = vmatpush1.bf16.msra.mxu0 0
  %1417 = vmatprep.subr.bf16.mxu0 0
  %1418 = vmatpush1.bf16.msra.mxu0 0
  %1419 = vmatprep.subr.bf16.mxu0 0
  %1420 = vmatpush1.bf16.msra.mxu0 0
  %1421 = vmatprep.subr.bf16.mxu0 0
  %1422 = vmatpush1.bf16.msra.mxu0 0
  %1423 = vmatprep.subr.bf16.mxu0 0
  %1424 = vmatpush1.bf16.msra.mxu0 0
  %1425 = vmatprep.subr.bf16.mxu0 0
  %1426 = vmatpush1.bf16.msra.mxu0 0
  %1427 = vmatprep.subr.bf16.mxu0 0
  %1428 = vmatpush1.bf16.msra.mxu0 0
  %1429 = vmatprep.subr.bf16.mxu0 0
  %1430 = vmatpush1.bf16.msra.mxu0 0
  %1431 = vmatprep.subr.bf16.mxu0 0
  %1432 = vmatpush1.bf16.msra.mxu0 0
  %1433 = vmatprep.subr.bf16.mxu0 0
  %1434 = vmatpush1.bf16.msra.mxu0 0
  %1435 = vmatprep.mubr.bf16.mxu0 0
  %1436 = vmatmul.mubr.bf16.gmra.mrb[0].mxu0 %v673
  %v1437 = vpop.f32.mrb[0].mxu0
  %v1438 = vadd.f32 0.0, %v1437
  %v1439 = vpop.f32.mrb[0].mxu0
  %v1440 = vpop.f32.mrb[0].mxu0
  %v1441 = vadd.f32 0.0, %v1440
  %v1442 = vpop.f32.mrb[0].mxu0
  %1443 = vdwg.mxu0
  %v1444 = vpack.c.bf16 %v1441, %v1438
  %v1446 = vunpack.c.l.b16 %v1444
  %v1447 = vunpack.c.h.b16 %v1444
  %v1448 = vpack.c.b16 %v1446, %v1446
  %v1449 = vpack.c.b16 %v1447, %v1447
  %s1452 = scalar_lea.vmem %s3, 112
  %1453 = vst.msk [vmem:[%s1452] sm:$0xf] %vm724, %v1448
  %1454 = vst.msk [vmem:[%s1452 + $0x4] sm:$0xf] %vm724, %v1449
  %1455 = vmatprep.subr.bf16.mxu0 0
  %1456 = vmatpush1.bf16.msra.mxu0 %v650
  %1457 = vmatprep.subr.bf16.mxu0 0
  %1458 = vmatpush1.bf16.msra.mxu0 0
  %1459 = vmatprep.subr.bf16.mxu0 0
  %1460 = vmatpush1.bf16.msra.mxu0 0
  %1461 = vmatprep.subr.bf16.mxu0 0
  %1462 = vmatpush1.bf16.msra.mxu0 0
  %1463 = vmatprep.subr.bf16.mxu0 0
  %1464 = vmatpush1.bf16.msra.mxu0 0
  %1465 = vmatprep.subr.bf16.mxu0 0
  %1466 = vmatpush1.bf16.msra.mxu0 0
  %1467 = vmatprep.subr.bf16.mxu0 0
  %1468 = vmatpush1.bf16.msra.mxu0 0
  %1469 = vmatprep.subr.bf16.mxu0 0
  %1470 = vmatpush1.bf16.msra.mxu0 0
  %1471 = vmatprep.subr.bf16.mxu0 0
  %1472 = vmatpush1.bf16.msra.mxu0 0
  %1473 = vmatprep.subr.bf16.mxu0 0
  %1474 = vmatpush1.bf16.msra.mxu0 0
  %1475 = vmatprep.subr.bf16.mxu0 0
  %1476 = vmatpush1.bf16.msra.mxu0 0
  %1477 = vmatprep.subr.bf16.mxu0 0
  %1478 = vmatpush1.bf16.msra.mxu0 0
  %1479 = vmatprep.subr.bf16.mxu0 0
  %1480 = vmatpush1.bf16.msra.mxu0 0
  %1481 = vmatprep.subr.bf16.mxu0 0
  %1482 = vmatpush1.bf16.msra.mxu0 0
  %1483 = vmatprep.subr.bf16.mxu0 0
  %1484 = vmatpush1.bf16.msra.mxu0 0
  %1485 = vmatprep.subr.bf16.mxu0 0
  %1486 = vmatpush1.bf16.msra.mxu0 0
  %1487 = vmatprep.mubr.bf16.mxu0 0
  %1488 = vmatmul.mubr.bf16.gmra.mrb[0].mxu0 %v673
  %v1489 = vpop.f32.mrb[0].mxu0
  %v1490 = vadd.f32 0.0, %v1489
  %v1491 = vpop.f32.mrb[0].mxu0
  %v1492 = vpop.f32.mrb[0].mxu0
  %v1493 = vadd.f32 0.0, %v1492
  %v1494 = vpop.f32.mrb[0].mxu0
  %1495 = vdwg.mxu0
  %v1496 = vpack.c.bf16 %v1493, %v1490
  %v1498 = vunpack.c.l.b16 %v1496
  %v1499 = vunpack.c.h.b16 %v1496
  %v1500 = vpack.c.b16 %v1498, %v1498
  %v1501 = vpack.c.b16 %v1499, %v1499
  %s1504 = scalar_lea.vmem %s3, 120
  %1505 = vst.msk [vmem:[%s1504] sm:$0xf] %vm724, %v1500
  %1506 = vst.msk [vmem:[%s1504 + $0x4] sm:$0xf] %vm724, %v1501
  %1507 = vmatprep.subr.bf16.mxu0 0
  %1508 = vmatpush1.bf16.msra.mxu0 %v651
  %1509 = vmatprep.subr.bf16.mxu0 0
  %1510 = vmatpush1.bf16.msra.mxu0 0
  %1511 = vmatprep.subr.bf16.mxu0 0
  %1512 = vmatpush1.bf16.msra.mxu0 0
  %1513 = vmatprep.subr.bf16.mxu0 0
  %1514 = vmatpush1.bf16.msra.mxu0 0
  %1515 = vmatprep.subr.bf16.mxu0 0
  %1516 = vmatpush1.bf16.msra.mxu0 0
  %1517 = vmatprep.subr.bf16.mxu0 0
  %1518 = vmatpush1.bf16.msra.mxu0 0
  %1519 = vmatprep.subr.bf16.mxu0 0
  %1520 = vmatpush1.bf16.msra.mxu0 0
  %1521 = vmatprep.subr.bf16.mxu0 0
  %1522 = vmatpush1.bf16.msra.mxu0 0
  %1523 = vmatprep.subr.bf16.mxu0 0
  %1524 = vmatpush1.bf16.msra.mxu0 0
  %1525 = vmatprep.subr.bf16.mxu0 0
  %1526 = vmatpush1.bf16.msra.mxu0 0
  %1527 = vmatprep.subr.bf16.mxu0 0
  %1528 = vmatpush1.bf16.msra.mxu0 0
  %1529 = vmatprep.subr.bf16.mxu0 0
  %1530 = vmatpush1.bf16.msra.mxu0 0
  %1531 = vmatprep.subr.bf16.mxu0 0
  %1532 = vmatpush1.bf16.msra.mxu0 0
  %1533 = vmatprep.subr.bf16.mxu0 0
  %1534 = vmatpush1.bf16.msra.mxu0 0
  %1535 = vmatprep.subr.bf16.mxu0 0
  %1536 = vmatpush1.bf16.msra.mxu0 0
  %1537 = vmatprep.subr.bf16.mxu0 0
  %1538 = vmatpush1.bf16.msra.mxu0 0
  %1539 = vmatprep.mubr.bf16.mxu0 0
  %1540 = vmatmul.mubr.bf16.gmra.mrb[0].mxu0 %v673
  %v1541 = vpop.f32.mrb[0].mxu0
  %v1542 = vadd.f32 0.0, %v1541
  %v1543 = vpop.f32.mrb[0].mxu0
  %v1544 = vpop.f32.mrb[0].mxu0
  %v1545 = vadd.f32 0.0, %v1544
  %v1546 = vpop.f32.mrb[0].mxu0
  %1547 = vdwg.mxu0
  %v1548 = vpack.c.bf16 %v1545, %v1542
  %v1550 = vunpack.c.l.b16 %v1548
  %v1551 = vunpack.c.h.b16 %v1548
  %v1552 = vpack.c.b16 %v1550, %v1550
  %v1553 = vpack.c.b16 %v1551, %v1551
  %s1556 = scalar_lea.vmem %s3, 128
  %1557 = vst.msk [vmem:[%s1556] sm:$0xf] %vm724, %v1552
  %1558 = vst.msk [vmem:[%s1556 + $0x4] sm:$0xf] %vm724, %v1553
  %1559 = vmatprep.subr.bf16.mxu0 0
  %1560 = vmatpush1.bf16.msra.mxu0 %v652
  %1561 = vmatprep.subr.bf16.mxu0 0
  %1562 = vmatpush1.bf16.msra.mxu0 0
  %1563 = vmatprep.subr.bf16.mxu0 0
  %1564 = vmatpush1.bf16.msra.mxu0 0
  %1565 = vmatprep.subr.bf16.mxu0 0
  %1566 = vmatpush1.bf16.msra.mxu0 0
  %1567 = vmatprep.subr.bf16.mxu0 0
  %1568 = vmatpush1.bf16.msra.mxu0 0
  %1569 = vmatprep.subr.bf16.mxu0 0
  %1570 = vmatpush1.bf16.msra.mxu0 0
  %1571 = vmatprep.subr.bf16.mxu0 0
  %1572 = vmatpush1.bf16.msra.mxu0 0
  %1573 = vmatprep.subr.bf16.mxu0 0
  %1574 = vmatpush1.bf16.msra.mxu0 0
  %1575 = vmatprep.subr.bf16.mxu0 0
  %1576 = vmatpush1.bf16.msra.mxu0 0
  %1577 = vmatprep.subr.bf16.mxu0 0
  %1578 = vmatpush1.bf16.msra.mxu0 0
  %1579 = vmatprep.subr.bf16.mxu0 0
  %1580 = vmatpush1.bf16.msra.mxu0 0
  %1581 = vmatprep.subr.bf16.mxu0 0
  %1582 = vmatpush1.bf16.msra.mxu0 0
  %1583 = vmatprep.subr.bf16.mxu0 0
  %1584 = vmatpush1.bf16.msra.mxu0 0
  %1585 = vmatprep.subr.bf16.mxu0 0
  %1586 = vmatpush1.bf16.msra.mxu0 0
  %1587 = vmatprep.subr.bf16.mxu0 0
  %1588 = vmatpush1.bf16.msra.mxu0 0
  %1589 = vmatprep.subr.bf16.mxu0 0
  %1590 = vmatpush1.bf16.msra.mxu0 0
  %1591 = vmatprep.mubr.bf16.mxu0 0
  %1592 = vmatmul.mubr.bf16.gmra.mrb[0].mxu0 %v673
  %v1593 = vpop.f32.mrb[0].mxu0
  %v1594 = vadd.f32 0.0, %v1593
  %v1595 = vpop.f32.mrb[0].mxu0
  %v1596 = vpop.f32.mrb[0].mxu0
  %v1597 = vadd.f32 0.0, %v1596
  %v1598 = vpop.f32.mrb[0].mxu0
  %1599 = vdwg.mxu0
  %v1600 = vpack.c.bf16 %v1597, %v1594
  %v1602 = vunpack.c.l.b16 %v1600
  %v1603 = vunpack.c.h.b16 %v1600
  %v1604 = vpack.c.b16 %v1602, %v1602
  %v1605 = vpack.c.b16 %v1603, %v1603
  %s1608 = scalar_lea.vmem %s3, 136
  %1609 = vst.msk [vmem:[%s1608] sm:$0xf] %vm724, %v1604
  %1610 = vst.msk [vmem:[%s1608 + $0x4] sm:$0xf] %vm724, %v1605
  %1611 = vmatprep.subr.bf16.mxu0 0
  %1612 = vmatpush1.bf16.msra.mxu0 %v653
  %1613 = vmatprep.subr.bf16.mxu0 0
  %1614 = vmatpush1.bf16.msra.mxu0 0
  %1615 = vmatprep.subr.bf16.mxu0 0
  %1616 = vmatpush1.bf16.msra.mxu0 0
  %1617 = vmatprep.subr.bf16.mxu0 0
  %1618 = vmatpush1.bf16.msra.mxu0 0
  %1619 = vmatprep.subr.bf16.mxu0 0
  %1620 = vmatpush1.bf16.msra.mxu0 0
  %1621 = vmatprep.subr.bf16.mxu0 0
  %1622 = vmatpush1.bf16.msra.mxu0 0
  %1623 = vmatprep.subr.bf16.mxu0 0
  %1624 = vmatpush1.bf16.msra.mxu0 0
  %1625 = vmatprep.subr.bf16.mxu0 0
  %1626 = vmatpush1.bf16.msra.mxu0 0
  %1627 = vmatprep.subr.bf16.mxu0 0
  %1628 = vmatpush1.bf16.msra.mxu0 0
  %1629 = vmatprep.subr.bf16.mxu0 0
  %1630 = vmatpush1.bf16.msra.mxu0 0
  %1631 = vmatprep.subr.bf16.mxu0 0
  %1632 = vmatpush1.bf16.msra.mxu0 0
  %1633 = vmatprep.subr.bf16.mxu0 0
  %1634 = vmatpush1.bf16.msra.mxu0 0
  %1635 = vmatprep.subr.bf16.mxu0 0
  %1636 = vmatpush1.bf16.msra.mxu0 0
  %1637 = vmatprep.subr.bf16.mxu0 0
  %1638 = vmatpush1.bf16.msra.mxu0 0
  %1639 = vmatprep.subr.bf16.mxu0 0
  %1640 = vmatpush1.bf16.msra.mxu0 0
  %1641 = vmatprep.subr.bf16.mxu0 0
  %1642 = vmatpush1.bf16.msra.mxu0 0
  %1643 = vmatprep.mubr.bf16.mxu0 0
  %1644 = vmatmul.mubr.bf16.gmra.mrb[0].mxu0 %v673
  %v1645 = vpop.f32.mrb[0].mxu0
  %v1646 = vadd.f32 0.0, %v1645
  %v1647 = vpop.f32.mrb[0].mxu0
  %v1648 = vpop.f32.mrb[0].mxu0
  %v1649 = vadd.f32 0.0, %v1648
  %v1650 = vpop.f32.mrb[0].mxu0
  %1651 = vdwg.mxu0
  %v1652 = vpack.c.bf16 %v1649, %v1646
  %v1654 = vunpack.c.l.b16 %v1652
  %v1655 = vunpack.c.h.b16 %v1652
  %v1656 = vpack.c.b16 %v1654, %v1654
  %v1657 = vpack.c.b16 %v1655, %v1655
  %s1660 = scalar_lea.vmem %s3, 144
  %1661 = vst.msk [vmem:[%s1660] sm:$0xf] %vm724, %v1656
  %1662 = vst.msk [vmem:[%s1660 + $0x4] sm:$0xf] %vm724, %v1657
  %1663 = vmatprep.subr.bf16.mxu0 0
  %1664 = vmatpush1.bf16.msra.mxu0 %v654
  %1665 = vmatprep.subr.bf16.mxu0 0
  %1666 = vmatpush1.bf16.msra.mxu0 0
  %1667 = vmatprep.subr.bf16.mxu0 0
  %1668 = vmatpush1.bf16.msra.mxu0 0
  %1669 = vmatprep.subr.bf16.mxu0 0
  %1670 = vmatpush1.bf16.msra.mxu0 0
  %1671 = vmatprep.subr.bf16.mxu0 0
  %1672 = vmatpush1.bf16.msra.mxu0 0
  %1673 = vmatprep.subr.bf16.mxu0 0
  %1674 = vmatpush1.bf16.msra.mxu0 0
  %1675 = vmatprep.subr.bf16.mxu0 0
  %1676 = vmatpush1.bf16.msra.mxu0 0
  %1677 = vmatprep.subr.bf16.mxu0 0
  %1678 = vmatpush1.bf16.msra.mxu0 0
  %1679 = vmatprep.subr.bf16.mxu0 0
  %1680 = vmatpush1.bf16.msra.mxu0 0
  %1681 = vmatprep.subr.bf16.mxu0 0
  %1682 = vmatpush1.bf16.msra.mxu0 0
  %1683 = vmatprep.subr.bf16.mxu0 0
  %1684 = vmatpush1.bf16.msra.mxu0 0
  %1685 = vmatprep.subr.bf16.mxu0 0
  %1686 = vmatpush1.bf16.msra.mxu0 0
  %1687 = vmatprep.subr.bf16.mxu0 0
  %1688 = vmatpush1.bf16.msra.mxu0 0
  %1689 = vmatprep.subr.bf16.mxu0 0
  %1690 = vmatpush1.bf16.msra.mxu0 0
  %1691 = vmatprep.subr.bf16.mxu0 0
  %1692 = vmatpush1.bf16.msra.mxu0 0
  %1693 = vmatprep.subr.bf16.mxu0 0
  %1694 = vmatpush1.bf16.msra.mxu0 0
  %1695 = vmatprep.mubr.bf16.mxu0 0
  %1696 = vmatmul.mubr.bf16.gmra.mrb[0].mxu0 %v673
  %v1697 = vpop.f32.mrb[0].mxu0
  %v1698 = vadd.f32 0.0, %v1697
  %v1699 = vpop.f32.mrb[0].mxu0
  %v1700 = vpop.f32.mrb[0].mxu0
  %v1701 = vadd.f32 0.0, %v1700
  %v1702 = vpop.f32.mrb[0].mxu0
  %1703 = vdwg.mxu0
  %v1704 = vpack.c.bf16 %v1701, %v1698
  %v1706 = vunpack.c.l.b16 %v1704
  %v1707 = vunpack.c.h.b16 %v1704
  %v1708 = vpack.c.b16 %v1706, %v1706
  %v1709 = vpack.c.b16 %v1707, %v1707
  %s1712 = scalar_lea.vmem %s3, 152
  %1713 = vst.msk [vmem:[%s1712] sm:$0xf] %vm724, %v1708
  %1714 = vst.msk [vmem:[%s1712 + $0x4] sm:$0xf] %vm724, %v1709
  %1715 = vmatprep.subr.bf16.mxu0 0
  %1716 = vmatpush1.bf16.msra.mxu0 %v655
  %1717 = vmatprep.subr.bf16.mxu0 0
  %1718 = vmatpush1.bf16.msra.mxu0 0
  %1719 = vmatprep.subr.bf16.mxu0 0
  %1720 = vmatpush1.bf16.msra.mxu0 0
  %1721 = vmatprep.subr.bf16.mxu0 0
  %1722 = vmatpush1.bf16.msra.mxu0 0
  %1723 = vmatprep.subr.bf16.mxu0 0
  %1724 = vmatpush1.bf16.msra.mxu0 0
  %1725 = vmatprep.subr.bf16.mxu0 0
  %1726 = vmatpush1.bf16.msra.mxu0 0
  %1727 = vmatprep.subr.bf16.mxu0 0
  %1728 = vmatpush1.bf16.msra.mxu0 0
  %1729 = vmatprep.subr.bf16.mxu0 0
  %1730 = vmatpush1.bf16.msra.mxu0 0
  %1731 = vmatprep.subr.bf16.mxu0 0
  %1732 = vmatpush1.bf16.msra.mxu0 0
  %1733 = vmatprep.subr.bf16.mxu0 0
  %1734 = vmatpush1.bf16.msra.mxu0 0
  %1735 = vmatprep.subr.bf16.mxu0 0
  %1736 = vmatpush1.bf16.msra.mxu0 0
  %1737 = vmatprep.subr.bf16.mxu0 0
  %1738 = vmatpush1.bf16.msra.mxu0 0
  %1739 = vmatprep.subr.bf16.mxu0 0
  %1740 = vmatpush1.bf16.msra.mxu0 0
  %1741 = vmatprep.subr.bf16.mxu0 0
  %1742 = vmatpush1.bf16.msra.mxu0 0
  %1743 = vmatprep.subr.bf16.mxu0 0
  %1744 = vmatpush1.bf16.msra.mxu0 0
  %1745 = vmatprep.subr.bf16.mxu0 0
  %1746 = vmatpush1.bf16.msra.mxu0 0
  %1747 = vmatprep.mubr.bf16.mxu0 0
  %1748 = vmatmul.mubr.bf16.gmra.mrb[0].mxu0 %v673
  %v1749 = vpop.f32.mrb[0].mxu0
  %v1750 = vadd.f32 0.0, %v1749
  %v1751 = vpop.f32.mrb[0].mxu0
  %v1752 = vpop.f32.mrb[0].mxu0
  %v1753 = vadd.f32 0.0, %v1752
  %v1754 = vpop.f32.mrb[0].mxu0
  %1755 = vdwg.mxu0
  %v1756 = vpack.c.bf16 %v1753, %v1750
  %v1758 = vunpack.c.l.b16 %v1756
  %v1759 = vunpack.c.h.b16 %v1756
  %v1760 = vpack.c.b16 %v1758, %v1758
  %v1761 = vpack.c.b16 %v1759, %v1759
  %s1764 = scalar_lea.vmem %s3, 160
  %1765 = vst.msk [vmem:[%s1764] sm:$0xf] %vm724, %v1760
  %1766 = vst.msk [vmem:[%s1764 + $0x4] sm:$0xf] %vm724, %v1761
  %1767 = vmatprep.subr.bf16.mxu0 0
  %1768 = vmatpush1.bf16.msra.mxu0 %v656
  %1769 = vmatprep.subr.bf16.mxu0 0
  %1770 = vmatpush1.bf16.msra.mxu0 0
  %1771 = vmatprep.subr.bf16.mxu0 0
  %1772 = vmatpush1.bf16.msra.mxu0 0
  %1773 = vmatprep.subr.bf16.mxu0 0
  %1774 = vmatpush1.bf16.msra.mxu0 0
  %1775 = vmatprep.subr.bf16.mxu0 0
  %1776 = vmatpush1.bf16.msra.mxu0 0
  %1777 = vmatprep.subr.bf16.mxu0 0
  %1778 = vmatpush1.bf16.msra.mxu0 0
  %1779 = vmatprep.subr.bf16.mxu0 0
  %1780 = vmatpush1.bf16.msra.mxu0 0
  %1781 = vmatprep.subr.bf16.mxu0 0
  %1782 = vmatpush1.bf16.msra.mxu0 0
  %1783 = vmatprep.subr.bf16.mxu0 0
  %1784 = vmatpush1.bf16.msra.mxu0 0
  %1785 = vmatprep.subr.bf16.mxu0 0
  %1786 = vmatpush1.bf16.msra.mxu0 0
  %1787 = vmatprep.subr.bf16.mxu0 0
  %1788 = vmatpush1.bf16.msra.mxu0 0
  %1789 = vmatprep.subr.bf16.mxu0 0
  %1790 = vmatpush1.bf16.msra.mxu0 0
  %1791 = vmatprep.subr.bf16.mxu0 0
  %1792 = vmatpush1.bf16.msra.mxu0 0
  %1793 = vmatprep.subr.bf16.mxu0 0
  %1794 = vmatpush1.bf16.msra.mxu0 0
  %1795 = vmatprep.subr.bf16.mxu0 0
  %1796 = vmatpush1.bf16.msra.mxu0 0
  %1797 = vmatprep.subr.bf16.mxu0 0
  %1798 = vmatpush1.bf16.msra.mxu0 0
  %1799 = vmatprep.mubr.bf16.mxu0 0
  %1800 = vmatmul.mubr.bf16.gmra.mrb[0].mxu0 %v673
  %v1801 = vpop.f32.mrb[0].mxu0
  %v1802 = vadd.f32 0.0, %v1801
  %v1803 = vpop.f32.mrb[0].mxu0
  %v1804 = vpop.f32.mrb[0].mxu0
  %v1805 = vadd.f32 0.0, %v1804
  %v1806 = vpop.f32.mrb[0].mxu0
  %1807 = vdwg.mxu0
  %v1808 = vpack.c.bf16 %v1805, %v1802
  %v1810 = vunpack.c.l.b16 %v1808
  %v1811 = vunpack.c.h.b16 %v1808
  %v1812 = vpack.c.b16 %v1810, %v1810
  %v1813 = vpack.c.b16 %v1811, %v1811
  %s1816 = scalar_lea.vmem %s3, 168
  %1817 = vst.msk [vmem:[%s1816] sm:$0xf] %vm724, %v1812
  %1818 = vst.msk [vmem:[%s1816 + $0x4] sm:$0xf] %vm724, %v1813
  %1819 = vmatprep.subr.bf16.mxu0 0
  %1820 = vmatpush1.bf16.msra.mxu0 %v657
  %1821 = vmatprep.subr.bf16.mxu0 0
  %1822 = vmatpush1.bf16.msra.mxu0 0
  %1823 = vmatprep.subr.bf16.mxu0 0
  %1824 = vmatpush1.bf16.msra.mxu0 0
  %1825 = vmatprep.subr.bf16.mxu0 0
  %1826 = vmatpush1.bf16.msra.mxu0 0
  %1827 = vmatprep.subr.bf16.mxu0 0
  %1828 = vmatpush1.bf16.msra.mxu0 0
  %1829 = vmatprep.subr.bf16.mxu0 0
  %1830 = vmatpush1.bf16.msra.mxu0 0
  %1831 = vmatprep.subr.bf16.mxu0 0
  %1832 = vmatpush1.bf16.msra.mxu0 0
  %1833 = vmatprep.subr.bf16.mxu0 0
  %1834 = vmatpush1.bf16.msra.mxu0 0
  %1835 = vmatprep.subr.bf16.mxu0 0
  %1836 = vmatpush1.bf16.msra.mxu0 0
  %1837 = vmatprep.subr.bf16.mxu0 0
  %1838 = vmatpush1.bf16.msra.mxu0 0
  %1839 = vmatprep.subr.bf16.mxu0 0
  %1840 = vmatpush1.bf16.msra.mxu0 0
  %1841 = vmatprep.subr.bf16.mxu0 0
  %1842 = vmatpush1.bf16.msra.mxu0 0
  %1843 = vmatprep.subr.bf16.mxu0 0
  %1844 = vmatpush1.bf16.msra.mxu0 0
  %1845 = vmatprep.subr.bf16.mxu0 0
  %1846 = vmatpush1.bf16.msra.mxu0 0
  %1847 = vmatprep.subr.bf16.mxu0 0
  %1848 = vmatpush1.bf16.msra.mxu0 0
  %1849 = vmatprep.subr.bf16.mxu0 0
  %1850 = vmatpush1.bf16.msra.mxu0 0
  %1851 = vmatprep.mubr.bf16.mxu0 0
  %1852 = vmatmul.mubr.bf16.gmra.mrb[0].mxu0 %v673
  %v1853 = vpop.f32.mrb[0].mxu0
  %v1854 = vadd.f32 0.0, %v1853
  %v1855 = vpop.f32.mrb[0].mxu0
  %v1856 = vpop.f32.mrb[0].mxu0
  %v1857 = vadd.f32 0.0, %v1856
  %v1858 = vpop.f32.mrb[0].mxu0
  %1859 = vdwg.mxu0
  %v1860 = vpack.c.bf16 %v1857, %v1854
  %v1862 = vunpack.c.l.b16 %v1860
  %v1863 = vunpack.c.h.b16 %v1860
  %v1864 = vpack.c.b16 %v1862, %v1862
  %v1865 = vpack.c.b16 %v1863, %v1863
  %s1868 = scalar_lea.vmem %s3, 176
  %1869 = vst.msk [vmem:[%s1868] sm:$0xf] %vm724, %v1864
  %1870 = vst.msk [vmem:[%s1868 + $0x4] sm:$0xf] %vm724, %v1865
  %1871 = vmatprep.subr.bf16.mxu0 0
  %1872 = vmatpush1.bf16.msra.mxu0 %v658
  %1873 = vmatprep.subr.bf16.mxu0 0
  %1874 = vmatpush1.bf16.msra.mxu0 0
  %1875 = vmatprep.subr.bf16.mxu0 0
  %1876 = vmatpush1.bf16.msra.mxu0 0
  %1877 = vmatprep.subr.bf16.mxu0 0
  %1878 = vmatpush1.bf16.msra.mxu0 0
  %1879 = vmatprep.subr.bf16.mxu0 0
  %1880 = vmatpush1.bf16.msra.mxu0 0
  %1881 = vmatprep.subr.bf16.mxu0 0
  %1882 = vmatpush1.bf16.msra.mxu0 0
  %1883 = vmatprep.subr.bf16.mxu0 0
  %1884 = vmatpush1.bf16.msra.mxu0 0
  %1885 = vmatprep.subr.bf16.mxu0 0
  %1886 = vmatpush1.bf16.msra.mxu0 0
  %1887 = vmatprep.subr.bf16.mxu0 0
  %1888 = vmatpush1.bf16.msra.mxu0 0
  %1889 = vmatprep.subr.bf16.mxu0 0
  %1890 = vmatpush1.bf16.msra.mxu0 0
  %1891 = vmatprep.subr.bf16.mxu0 0
  %1892 = vmatpush1.bf16.msra.mxu0 0
  %1893 = vmatprep.subr.bf16.mxu0 0
  %1894 = vmatpush1.bf16.msra.mxu0 0
  %1895 = vmatprep.subr.bf16.mxu0 0
  %1896 = vmatpush1.bf16.msra.mxu0 0
  %1897 = vmatprep.subr.bf16.mxu0 0
  %1898 = vmatpush1.bf16.msra.mxu0 0
  %1899 = vmatprep.subr.bf16.mxu0 0
  %1900 = vmatpush1.bf16.msra.mxu0 0
  %1901 = vmatprep.subr.bf16.mxu0 0
  %1902 = vmatpush1.bf16.msra.mxu0 0
  %1903 = vmatprep.mubr.bf16.mxu0 0
  %1904 = vmatmul.mubr.bf16.gmra.mrb[0].mxu0 %v673
  %v1905 = vpop.f32.mrb[0].mxu0
  %v1906 = vadd.f32 0.0, %v1905
  %v1907 = vpop.f32.mrb[0].mxu0
  %v1908 = vpop.f32.mrb[0].mxu0
  %v1909 = vadd.f32 0.0, %v1908
  %v1910 = vpop.f32.mrb[0].mxu0
  %1911 = vdwg.mxu0
  %v1912 = vpack.c.bf16 %v1909, %v1906
  %v1914 = vunpack.c.l.b16 %v1912
  %v1915 = vunpack.c.h.b16 %v1912
  %v1916 = vpack.c.b16 %v1914, %v1914
  %v1917 = vpack.c.b16 %v1915, %v1915
  %s1920 = scalar_lea.vmem %s3, 184
  %1921 = vst.msk [vmem:[%s1920] sm:$0xf] %vm724, %v1916
  %1922 = vst.msk [vmem:[%s1920 + $0x4] sm:$0xf] %vm724, %v1917
  %1923 = vmatprep.subr.bf16.mxu0 0
  %1924 = vmatpush1.bf16.msra.mxu0 %v659
  %1925 = vmatprep.subr.bf16.mxu0 0
  %1926 = vmatpush1.bf16.msra.mxu0 0
  %1927 = vmatprep.subr.bf16.mxu0 0
  %1928 = vmatpush1.bf16.msra.mxu0 0
  %1929 = vmatprep.subr.bf16.mxu0 0
  %1930 = vmatpush1.bf16.msra.mxu0 0
  %1931 = vmatprep.subr.bf16.mxu0 0
  %1932 = vmatpush1.bf16.msra.mxu0 0
  %1933 = vmatprep.subr.bf16.mxu0 0
  %1934 = vmatpush1.bf16.msra.mxu0 0
  %1935 = vmatprep.subr.bf16.mxu0 0
  %1936 = vmatpush1.bf16.msra.mxu0 0
  %1937 = vmatprep.subr.bf16.mxu0 0
  %1938 = vmatpush1.bf16.msra.mxu0 0
  %1939 = vmatprep.subr.bf16.mxu0 0
  %1940 = vmatpush1.bf16.msra.mxu0 0
  %1941 = vmatprep.subr.bf16.mxu0 0
  %1942 = vmatpush1.bf16.msra.mxu0 0
  %1943 = vmatprep.subr.bf16.mxu0 0
  %1944 = vmatpush1.bf16.msra.mxu0 0
  %1945 = vmatprep.subr.bf16.mxu0 0
  %1946 = vmatpush1.bf16.msra.mxu0 0
  %1947 = vmatprep.subr.bf16.mxu0 0
  %1948 = vmatpush1.bf16.msra.mxu0 0
  %1949 = vmatprep.subr.bf16.mxu0 0
  %1950 = vmatpush1.bf16.msra.mxu0 0
  %1951 = vmatprep.subr.bf16.mxu0 0
  %1952 = vmatpush1.bf16.msra.mxu0 0
  %1953 = vmatprep.subr.bf16.mxu0 0
  %1954 = vmatpush1.bf16.msra.mxu0 0
  %1955 = vmatprep.mubr.bf16.mxu0 0
  %1956 = vmatmul.mubr.bf16.gmra.mrb[0].mxu0 %v673
  %v1957 = vpop.f32.mrb[0].mxu0
  %v1958 = vadd.f32 0.0, %v1957
  %v1959 = vpop.f32.mrb[0].mxu0
  %v1960 = vpop.f32.mrb[0].mxu0
  %v1961 = vadd.f32 0.0, %v1960
  %v1962 = vpop.f32.mrb[0].mxu0
  %1963 = vdwg.mxu0
  %v1964 = vpack.c.bf16 %v1961, %v1958
  %v1966 = vunpack.c.l.b16 %v1964
  %v1967 = vunpack.c.h.b16 %v1964
  %v1968 = vpack.c.b16 %v1966, %v1966
  %v1969 = vpack.c.b16 %v1967, %v1967
  %s1972 = scalar_lea.vmem %s3, 192
  %1973 = vst.msk [vmem:[%s1972] sm:$0xf] %vm724, %v1968
  %1974 = vst.msk [vmem:[%s1972 + $0x4] sm:$0xf] %vm724, %v1969
  %1975 = vmatprep.subr.bf16.mxu0 0
  %1976 = vmatpush1.bf16.msra.mxu0 %v660
  %1977 = vmatprep.subr.bf16.mxu0 0
  %1978 = vmatpush1.bf16.msra.mxu0 0
  %1979 = vmatprep.subr.bf16.mxu0 0
  %1980 = vmatpush1.bf16.msra.mxu0 0
  %1981 = vmatprep.subr.bf16.mxu0 0
  %1982 = vmatpush1.bf16.msra.mxu0 0
  %1983 = vmatprep.subr.bf16.mxu0 0
  %1984 = vmatpush1.bf16.msra.mxu0 0
  %1985 = vmatprep.subr.bf16.mxu0 0
  %1986 = vmatpush1.bf16.msra.mxu0 0
  %1987 = vmatprep.subr.bf16.mxu0 0
  %1988 = vmatpush1.bf16.msra.mxu0 0
  %1989 = vmatprep.subr.bf16.mxu0 0
  %1990 = vmatpush1.bf16.msra.mxu0 0
  %1991 = vmatprep.subr.bf16.mxu0 0
  %1992 = vmatpush1.bf16.msra.mxu0 0
  %1993 = vmatprep.subr.bf16.mxu0 0
  %1994 = vmatpush1.bf16.msra.mxu0 0
  %1995 = vmatprep.subr.bf16.mxu0 0
  %1996 = vmatpush1.bf16.msra.mxu0 0
  %1997 = vmatprep.subr.bf16.mxu0 0
  %1998 = vmatpush1.bf16.msra.mxu0 0
  %1999 = vmatprep.subr.bf16.mxu0 0
  %2000 = vmatpush1.bf16.msra.mxu0 0
  %2001 = vmatprep.subr.bf16.mxu0 0
  %2002 = vmatpush1.bf16.msra.mxu0 0
  %2003 = vmatprep.subr.bf16.mxu0 0
  %2004 = vmatpush1.bf16.msra.mxu0 0
  %2005 = vmatprep.subr.bf16.mxu0 0
  %2006 = vmatpush1.bf16.msra.mxu0 0
  %2007 = vmatprep.mubr.bf16.mxu0 0
  %2008 = vmatmul.mubr.bf16.gmra.mrb[0].mxu0 %v673
  %v2009 = vpop.f32.mrb[0].mxu0
  %v2010 = vadd.f32 0.0, %v2009
  %v2011 = vpop.f32.mrb[0].mxu0
  %v2012 = vpop.f32.mrb[0].mxu0
  %v2013 = vadd.f32 0.0, %v2012
  %v2014 = vpop.f32.mrb[0].mxu0
  %2015 = vdwg.mxu0
  %v2016 = vpack.c.bf16 %v2013, %v2010
  %v2018 = vunpack.c.l.b16 %v2016
  %v2019 = vunpack.c.h.b16 %v2016
  %v2020 = vpack.c.b16 %v2018, %v2018
  %v2021 = vpack.c.b16 %v2019, %v2019
  %s2024 = scalar_lea.vmem %s3, 200
  %2025 = vst.msk [vmem:[%s2024] sm:$0xf] %vm724, %v2020
  %2026 = vst.msk [vmem:[%s2024 + $0x4] sm:$0xf] %vm724, %v2021
  %2027 = vmatprep.subr.bf16.mxu0 0
  %2028 = vmatpush1.bf16.msra.mxu0 %v661
  %2029 = vmatprep.subr.bf16.mxu0 0
  %2030 = vmatpush1.bf16.msra.mxu0 0
  %2031 = vmatprep.subr.bf16.mxu0 0
  %2032 = vmatpush1.bf16.msra.mxu0 0
  %2033 = vmatprep.subr.bf16.mxu0 0
  %2034 = vmatpush1.bf16.msra.mxu0 0
  %2035 = vmatprep.subr.bf16.mxu0 0
  %2036 = vmatpush1.bf16.msra.mxu0 0
  %2037 = vmatprep.subr.bf16.mxu0 0
  %2038 = vmatpush1.bf16.msra.mxu0 0
  %2039 = vmatprep.subr.bf16.mxu0 0
  %2040 = vmatpush1.bf16.msra.mxu0 0
  %2041 = vmatprep.subr.bf16.mxu0 0
  %2042 = vmatpush1.bf16.msra.mxu0 0
  %2043 = vmatprep.subr.bf16.mxu0 0
  %2044 = vmatpush1.bf16.msra.mxu0 0
  %2045 = vmatprep.subr.bf16.mxu0 0
  %2046 = vmatpush1.bf16.msra.mxu0 0
  %2047 = vmatprep.subr.bf16.mxu0 0
  %2048 = vmatpush1.bf16.msra.mxu0 0
  %2049 = vmatprep.subr.bf16.mxu0 0
  %2050 = vmatpush1.bf16.msra.mxu0 0
  %2051 = vmatprep.subr.bf16.mxu0 0
  %2052 = vmatpush1.bf16.msra.mxu0 0
  %2053 = vmatprep.subr.bf16.mxu0 0
  %2054 = vmatpush1.bf16.msra.mxu0 0
  %2055 = vmatprep.subr.bf16.mxu0 0
  %2056 = vmatpush1.bf16.msra.mxu0 0
  %2057 = vmatprep.subr.bf16.mxu0 0
  %2058 = vmatpush1.bf16.msra.mxu0 0
  %2059 = vmatprep.mubr.bf16.mxu0 0
  %2060 = vmatmul.mubr.bf16.gmra.mrb[0].mxu0 %v673
  %v2061 = vpop.f32.mrb[0].mxu0
  %v2062 = vadd.f32 0.0, %v2061
  %v2063 = vpop.f32.mrb[0].mxu0
  %v2064 = vpop.f32.mrb[0].mxu0
  %v2065 = vadd.f32 0.0, %v2064
  %v2066 = vpop.f32.mrb[0].mxu0
  %2067 = vdwg.mxu0
  %v2068 = vpack.c.bf16 %v2065, %v2062
  %v2070 = vunpack.c.l.b16 %v2068
  %v2071 = vunpack.c.h.b16 %v2068
  %v2072 = vpack.c.b16 %v2070, %v2070
  %v2073 = vpack.c.b16 %v2071, %v2071
  %s2076 = scalar_lea.vmem %s3, 208
  %2077 = vst.msk [vmem:[%s2076] sm:$0xf] %vm724, %v2072
  %2078 = vst.msk [vmem:[%s2076 + $0x4] sm:$0xf] %vm724, %v2073
  %2079 = vmatprep.subr.bf16.mxu0 0
  %2080 = vmatpush1.bf16.msra.mxu0 %v662
  %2081 = vmatprep.subr.bf16.mxu0 0
  %2082 = vmatpush1.bf16.msra.mxu0 0
  %2083 = vmatprep.subr.bf16.mxu0 0
  %2084 = vmatpush1.bf16.msra.mxu0 0
  %2085 = vmatprep.subr.bf16.mxu0 0
  %2086 = vmatpush1.bf16.msra.mxu0 0
  %2087 = vmatprep.subr.bf16.mxu0 0
  %2088 = vmatpush1.bf16.msra.mxu0 0
  %2089 = vmatprep.subr.bf16.mxu0 0
  %2090 = vmatpush1.bf16.msra.mxu0 0
  %2091 = vmatprep.subr.bf16.mxu0 0
  %2092 = vmatpush1.bf16.msra.mxu0 0
  %2093 = vmatprep.subr.bf16.mxu0 0
  %2094 = vmatpush1.bf16.msra.mxu0 0
  %2095 = vmatprep.subr.bf16.mxu0 0
  %2096 = vmatpush1.bf16.msra.mxu0 0
  %2097 = vmatprep.subr.bf16.mxu0 0
  %2098 = vmatpush1.bf16.msra.mxu0 0
  %2099 = vmatprep.subr.bf16.mxu0 0
  %2100 = vmatpush1.bf16.msra.mxu0 0
  %2101 = vmatprep.subr.bf16.mxu0 0
  %2102 = vmatpush1.bf16.msra.mxu0 0
  %2103 = vmatprep.subr.bf16.mxu0 0
  %2104 = vmatpush1.bf16.msra.mxu0 0
  %2105 = vmatprep.subr.bf16.mxu0 0
  %2106 = vmatpush1.bf16.msra.mxu0 0
  %2107 = vmatprep.subr.bf16.mxu0 0
  %2108 = vmatpush1.bf16.msra.mxu0 0
  %2109 = vmatprep.subr.bf16.mxu0 0
  %2110 = vmatpush1.bf16.msra.mxu0 0
  %2111 = vmatprep.mubr.bf16.mxu0 0
  %2112 = vmatmul.mubr.bf16.gmra.mrb[0].mxu0 %v673
  %v2113 = vpop.f32.mrb[0].mxu0
  %v2114 = vadd.f32 0.0, %v2113
  %v2115 = vpop.f32.mrb[0].mxu0
  %v2116 = vpop.f32.mrb[0].mxu0
  %v2117 = vadd.f32 0.0, %v2116
  %v2118 = vpop.f32.mrb[0].mxu0
  %2119 = vdwg.mxu0
  %v2120 = vpack.c.bf16 %v2117, %v2114
  %v2122 = vunpack.c.l.b16 %v2120
  %v2123 = vunpack.c.h.b16 %v2120
  %v2124 = vpack.c.b16 %v2122, %v2122
  %v2125 = vpack.c.b16 %v2123, %v2123
  %s2128 = scalar_lea.vmem %s3, 216
  %2129 = vst.msk [vmem:[%s2128] sm:$0xf] %vm724, %v2124
  %2130 = vst.msk [vmem:[%s2128 + $0x4] sm:$0xf] %vm724, %v2125
  %2131 = vmatprep.subr.bf16.mxu0 0
  %2132 = vmatpush1.bf16.msra.mxu0 %v663
  %2133 = vmatprep.subr.bf16.mxu0 0
  %2134 = vmatpush1.bf16.msra.mxu0 0
  %2135 = vmatprep.subr.bf16.mxu0 0
  %2136 = vmatpush1.bf16.msra.mxu0 0
  %2137 = vmatprep.subr.bf16.mxu0 0
  %2138 = vmatpush1.bf16.msra.mxu0 0
  %2139 = vmatprep.subr.bf16.mxu0 0
  %2140 = vmatpush1.bf16.msra.mxu0 0
  %2141 = vmatprep.subr.bf16.mxu0 0
  %2142 = vmatpush1.bf16.msra.mxu0 0
  %2143 = vmatprep.subr.bf16.mxu0 0
  %2144 = vmatpush1.bf16.msra.mxu0 0
  %2145 = vmatprep.subr.bf16.mxu0 0
  %2146 = vmatpush1.bf16.msra.mxu0 0
  %2147 = vmatprep.subr.bf16.mxu0 0
  %2148 = vmatpush1.bf16.msra.mxu0 0
  %2149 = vmatprep.subr.bf16.mxu0 0
  %2150 = vmatpush1.bf16.msra.mxu0 0
  %2151 = vmatprep.subr.bf16.mxu0 0
  %2152 = vmatpush1.bf16.msra.mxu0 0
  %2153 = vmatprep.subr.bf16.mxu0 0
  %2154 = vmatpush1.bf16.msra.mxu0 0
  %2155 = vmatprep.subr.bf16.mxu0 0
  %2156 = vmatpush1.bf16.msra.mxu0 0
  %2157 = vmatprep.subr.bf16.mxu0 0
  %2158 = vmatpush1.bf16.msra.mxu0 0
  %2159 = vmatprep.subr.bf16.mxu0 0
  %2160 = vmatpush1.bf16.msra.mxu0 0
  %2161 = vmatprep.subr.bf16.mxu0 0
  %2162 = vmatpush1.bf16.msra.mxu0 0
  %2163 = vmatprep.mubr.bf16.mxu0 0
  %2164 = vmatmul.mubr.bf16.gmra.mrb[0].mxu0 %v673
  %v2165 = vpop.f32.mrb[0].mxu0
  %v2166 = vadd.f32 0.0, %v2165
  %v2167 = vpop.f32.mrb[0].mxu0
  %v2168 = vpop.f32.mrb[0].mxu0
  %v2169 = vadd.f32 0.0, %v2168
  %v2170 = vpop.f32.mrb[0].mxu0
  %2171 = vdwg.mxu0
  %v2172 = vpack.c.bf16 %v2169, %v2166
  %v2174 = vunpack.c.l.b16 %v2172
  %v2175 = vunpack.c.h.b16 %v2172
  %v2176 = vpack.c.b16 %v2174, %v2174
  %v2177 = vpack.c.b16 %v2175, %v2175
  %s2180 = scalar_lea.vmem %s3, 224
  %2181 = vst.msk [vmem:[%s2180] sm:$0xf] %vm724, %v2176
  %2182 = vst.msk [vmem:[%s2180 + $0x4] sm:$0xf] %vm724, %v2177
  %2183 = vmatprep.subr.bf16.mxu0 0
  %2184 = vmatpush1.bf16.msra.mxu0 %v664
  %2185 = vmatprep.subr.bf16.mxu0 0
  %2186 = vmatpush1.bf16.msra.mxu0 0
  %2187 = vmatprep.subr.bf16.mxu0 0
  %2188 = vmatpush1.bf16.msra.mxu0 0
  %2189 = vmatprep.subr.bf16.mxu0 0
  %2190 = vmatpush1.bf16.msra.mxu0 0
  %2191 = vmatprep.subr.bf16.mxu0 0
  %2192 = vmatpush1.bf16.msra.mxu0 0
  %2193 = vmatprep.subr.bf16.mxu0 0
  %2194 = vmatpush1.bf16.msra.mxu0 0
  %2195 = vmatprep.subr.bf16.mxu0 0
  %2196 = vmatpush1.bf16.msra.mxu0 0
  %2197 = vmatprep.subr.bf16.mxu0 0
  %2198 = vmatpush1.bf16.msra.mxu0 0
  %2199 = vmatprep.subr.bf16.mxu0 0
  %2200 = vmatpush1.bf16.msra.mxu0 0
  %2201 = vmatprep.subr.bf16.mxu0 0
  %2202 = vmatpush1.bf16.msra.mxu0 0
  %2203 = vmatprep.subr.bf16.mxu0 0
  %2204 = vmatpush1.bf16.msra.mxu0 0
  %2205 = vmatprep.subr.bf16.mxu0 0
  %2206 = vmatpush1.bf16.msra.mxu0 0
  %2207 = vmatprep.subr.bf16.mxu0 0
  %2208 = vmatpush1.bf16.msra.mxu0 0
  %2209 = vmatprep.subr.bf16.mxu0 0
  %2210 = vmatpush1.bf16.msra.mxu0 0
  %2211 = vmatprep.subr.bf16.mxu0 0
  %2212 = vmatpush1.bf16.msra.mxu0 0
  %2213 = vmatprep.subr.bf16.mxu0 0
  %2214 = vmatpush1.bf16.msra.mxu0 0
  %2215 = vmatprep.mubr.bf16.mxu0 0
  %2216 = vmatmul.mubr.bf16.gmra.mrb[0].mxu0 %v673
  %v2217 = vpop.f32.mrb[0].mxu0
  %v2218 = vadd.f32 0.0, %v2217
  %v2219 = vpop.f32.mrb[0].mxu0
  %v2220 = vpop.f32.mrb[0].mxu0
  %v2221 = vadd.f32 0.0, %v2220
  %v2222 = vpop.f32.mrb[0].mxu0
  %2223 = vdwg.mxu0
  %v2224 = vpack.c.bf16 %v2221, %v2218
  %v2226 = vunpack.c.l.b16 %v2224
  %v2227 = vunpack.c.h.b16 %v2224
  %v2228 = vpack.c.b16 %v2226, %v2226
  %v2229 = vpack.c.b16 %v2227, %v2227
  %s2232 = scalar_lea.vmem %s3, 232
  %2233 = vst.msk [vmem:[%s2232] sm:$0xf] %vm724, %v2228
  %2234 = vst.msk [vmem:[%s2232 + $0x4] sm:$0xf] %vm724, %v2229
  %2235 = vmatprep.subr.bf16.mxu0 0
  %2236 = vmatpush1.bf16.msra.mxu0 %v665
  %2237 = vmatprep.subr.bf16.mxu0 0
  %2238 = vmatpush1.bf16.msra.mxu0 0
  %2239 = vmatprep.subr.bf16.mxu0 0
  %2240 = vmatpush1.bf16.msra.mxu0 0
  %2241 = vmatprep.subr.bf16.mxu0 0
  %2242 = vmatpush1.bf16.msra.mxu0 0
  %2243 = vmatprep.subr.bf16.mxu0 0
  %2244 = vmatpush1.bf16.msra.mxu0 0
  %2245 = vmatprep.subr.bf16.mxu0 0
  %2246 = vmatpush1.bf16.msra.mxu0 0
  %2247 = vmatprep.subr.bf16.mxu0 0
  %2248 = vmatpush1.bf16.msra.mxu0 0
  %2249 = vmatprep.subr.bf16.mxu0 0
  %2250 = vmatpush1.bf16.msra.mxu0 0
  %2251 = vmatprep.subr.bf16.mxu0 0
  %2252 = vmatpush1.bf16.msra.mxu0 0
  %2253 = vmatprep.subr.bf16.mxu0 0
  %2254 = vmatpush1.bf16.msra.mxu0 0
  %2255 = vmatprep.subr.bf16.mxu0 0
  %2256 = vmatpush1.bf16.msra.mxu0 0
  %2257 = vmatprep.subr.bf16.mxu0 0
  %2258 = vmatpush1.bf16.msra.mxu0 0
  %2259 = vmatprep.subr.bf16.mxu0 0
  %2260 = vmatpush1.bf16.msra.mxu0 0
  %2261 = vmatprep.subr.bf16.mxu0 0
  %2262 = vmatpush1.bf16.msra.mxu0 0
  %2263 = vmatprep.subr.bf16.mxu0 0
  %2264 = vmatpush1.bf16.msra.mxu0 0
  %2265 = vmatprep.subr.bf16.mxu0 0
  %2266 = vmatpush1.bf16.msra.mxu0 0
  %2267 = vmatprep.mubr.bf16.mxu0 0
  %2268 = vmatmul.mubr.bf16.gmra.mrb[0].mxu0 %v673
  %v2269 = vpop.f32.mrb[0].mxu0
  %v2270 = vadd.f32 0.0, %v2269
  %v2271 = vpop.f32.mrb[0].mxu0
  %v2272 = vpop.f32.mrb[0].mxu0
  %v2273 = vadd.f32 0.0, %v2272
  %v2274 = vpop.f32.mrb[0].mxu0
  %2275 = vdwg.mxu0
  %v2276 = vpack.c.bf16 %v2273, %v2270
  %v2278 = vunpack.c.l.b16 %v2276
  %v2279 = vunpack.c.h.b16 %v2276
  %v2280 = vpack.c.b16 %v2278, %v2278
  %v2281 = vpack.c.b16 %v2279, %v2279
  %s2284 = scalar_lea.vmem %s3, 240
  %2285 = vst.msk [vmem:[%s2284] sm:$0xf] %vm724, %v2280
  %2286 = vst.msk [vmem:[%s2284 + $0x4] sm:$0xf] %vm724, %v2281
  %2287 = vmatprep.subr.bf16.mxu0 0
  %2288 = vmatpush1.bf16.msra.mxu0 %v666
  %2289 = vmatprep.subr.bf16.mxu0 0
  %2290 = vmatpush1.bf16.msra.mxu0 0
  %2291 = vmatprep.subr.bf16.mxu0 0
  %2292 = vmatpush1.bf16.msra.mxu0 0
  %2293 = vmatprep.subr.bf16.mxu0 0
  %2294 = vmatpush1.bf16.msra.mxu0 0
  %2295 = vmatprep.subr.bf16.mxu0 0
  %2296 = vmatpush1.bf16.msra.mxu0 0
  %2297 = vmatprep.subr.bf16.mxu0 0
  %2298 = vmatpush1.bf16.msra.mxu0 0
  %2299 = vmatprep.subr.bf16.mxu0 0
  %2300 = vmatpush1.bf16.msra.mxu0 0
  %2301 = vmatprep.subr.bf16.mxu0 0
  %2302 = vmatpush1.bf16.msra.mxu0 0
  %2303 = vmatprep.subr.bf16.mxu0 0
  %2304 = vmatpush1.bf16.msra.mxu0 0
  %2305 = vmatprep.subr.bf16.mxu0 0
  %2306 = vmatpush1.bf16.msra.mxu0 0
  %2307 = vmatprep.subr.bf16.mxu0 0
  %2308 = vmatpush1.bf16.msra.mxu0 0
  %2309 = vmatprep.subr.bf16.mxu0 0
  %2310 = vmatpush1.bf16.msra.mxu0 0
  %2311 = vmatprep.subr.bf16.mxu0 0
  %2312 = vmatpush1.bf16.msra.mxu0 0
  %2313 = vmatprep.subr.bf16.mxu0 0
  %2314 = vmatpush1.bf16.msra.mxu0 0
  %2315 = vmatprep.subr.bf16.mxu0 0
  %2316 = vmatpush1.bf16.msra.mxu0 0
  %2317 = vmatprep.subr.bf16.mxu0 0
  %2318 = vmatpush1.bf16.msra.mxu0 0
  %2319 = vmatprep.mubr.bf16.mxu0 0
  %2320 = vmatmul.mubr.bf16.gmra.mrb[0].mxu0 %v673
  %v2321 = vpop.f32.mrb[0].mxu0
  %v2322 = vadd.f32 0.0, %v2321
  %v2323 = vpop.f32.mrb[0].mxu0
  %v2324 = vpop.f32.mrb[0].mxu0
  %v2325 = vadd.f32 0.0, %v2324
  %v2326 = vpop.f32.mrb[0].mxu0
  %2327 = vdwg.mxu0
  %v2328 = vpack.c.bf16 %v2325, %v2322
  %v2330 = vunpack.c.l.b16 %v2328
  %v2331 = vunpack.c.h.b16 %v2328
  %v2332 = vpack.c.b16 %v2330, %v2330
  %v2333 = vpack.c.b16 %v2331, %v2331
  %s2336 = scalar_lea.vmem %s3, 248
  %2337 = vst.msk [vmem:[%s2336] sm:$0xf] %vm724, %v2332
  %2338 = vst.msk [vmem:[%s2336 + $0x4] sm:$0xf] %vm724, %v2333
  // Predicated region
  $region14: #{_lambda_.4} parent=0 // pred_check
    _
  $region15: #{_lambda_.4} parent=0 // pred_check_branch
    %2340 = sbr.rel (0) target = $region17
  $region16: #{_lambda_.4} parent=0 // pred_region
    _
  $region17: #{_lambda_.4} parent=0 // pred_fallthru
    _
  // Predicated region
  $region18: #{_lambda_.4} parent=0 // pred_check
    _
  $region19: #{_lambda_.4} parent=0 // pred_check_branch
    %2342 = sbr.rel (0) target = $region21
  $region20: #{_lambda_.4} parent=0 // pred_region
    _
  $region21: #{_lambda_.4} parent=0 // pred_fallthru
    _

// kernel: _lambda_.6
$region0: #{_lambda_.6}
  #allocation0 [shape = 'u32[]', space=smem, size = 0x4, offset = 0x4, fixed_abs, tag = 'smem constant byte address 0x4 - core index']
  #allocation1 [shape = 'u32[144,128]{1,0:T(1,128)}', space=vmem, size = 0x12000, scoped, tag = 'internal scratch']
  %s0 = inlined_call_operand.vmem [shape: bf16[2,16,256], index: 0, kind: input, shape index: {}]
  %s1 = inlined_call_operand.vmem [shape: bf16[2,32,256], index: 1, kind: input, shape index: {}]
  %s2 = inlined_call_operand.vmem [shape: bf16[48,16], index: 2, kind: input, shape index: {}]
  %s3 = inlined_call_operand.vmem [shape: bf16[48,32], index: 3, kind: input, shape index: {}]
  %s4 = inlined_call_operand.vmem [shape: f32[48,1], index: 4, kind: input, shape index: {}]
  %s5 = inlined_call_operand.vmem [shape: bf16[48,48], index: 5, kind: input, shape index: {}]
  %s6 = inlined_call_operand.vmem [shape: f32[48,1], index: 6, kind: input, shape index: {}]
  %s7 = inlined_call_operand.vmem [shape: f32[48,1], index: 7, kind: input, shape index: {}]
  %s8 = inlined_call_operand.vmem [shape: f32[2,1,256], index: 8, kind: output, shape index: {0}]
  %s9 = inlined_call_operand.vmem [shape: f32[2,1,1], index: 9, kind: output, shape index: {1}]
  %10 = xla_tuple %s8, %s9
  %s11 = sld [smem:[#allocation0]]
  $region73: #{_lambda_.6} parent=0
    _
  %s13 = ssub.s32 1, %s11
  %s14 = scalar_select 0, %s13, %s11
  loop: start=0, step=1, limit=4
  $region2: #{_lambda_.6} parent=0 // loop_pre_header
    _
  $region3: #{_lambda_.6} parent=0 // loop_header
    %s16 = sphi 0, %s20
    %p17 = scmp.ge.s32.totalorder %s16, 4
    %s23 = sphi 0, %s35
    %s24 = sphi 0, %s31
    %s25 = sphi 0, %s23
    %s26 = sphi 0, %s24
    %s27 = sphi 0, %s25
    %s28 = sphi 0, %s26
    %s40 = sphi 0, %s42
    %s43 = sphi 0, %s40
    %s44 = sphi 0, %s43
    %s60 = sphi 0, %s44
    %s68 = sphi 0, %s70
    %s71 = sphi 0, %s68
    %s72 = sphi 0, %s71
    %s88 = sphi 0, %s72
    %s92 = sphi 0, %s92
    %s94 = sphi 0, %s92
    %s95 = sphi 0, %s94
    %s109 = sphi 0, %s95
    %s113 = sphi 0, %s113
    %s115 = sphi 0, %s113
    %s116 = sphi 0, %s115
    %s130 = sphi 0, %s116
    %s134 = sphi 0, %s134
    %s136 = sphi 0, %s134
    %s137 = sphi 0, %s136
    %s151 = sphi 0, %s137
    %s155 = sphi 0, %s155
    %s157 = sphi 0, %s155
    %s158 = sphi 0, %s157
    %s172 = sphi 0, %s158
    %s176 = sphi 0, %s176
    %s178 = sphi 0, %s176
    %s179 = sphi 0, %s178
    %s193 = sphi 0, %s179
    %s197 = sphi 0, %s197
    %s199 = sphi 0, %s197
    %s200 = sphi 0, %s199
    %s214 = sphi 0, %s200
    %s222 = sphi 0, %s224
    %s225 = sphi 0, %s222
    %s226 = sphi 0, %s225
    %s242 = sphi 0, %s226
    %s250 = sphi 0, %s252
    %s253 = sphi 0, %s250
    %s254 = sphi 0, %s253
    %s270 = sphi 0, %s254
  $region4: #{_lambda_.6} parent=0 // loop_header_branch
    %19 = sbr.rel (%p17) target = $region8
  $region5: #{_lambda_.6} parent=0 // loop_body
    %s21 = ssub.s32 %s16, 1
    %s22 = ssub.s32 %s16, 2
    %s29 = sadd.s32 1, %s24
    %p30 = scmp.ge.s32.totalorder %s29, 1
    %s31 = scalar_select %p30, 0, %s29
    %s32 = sadd.s32 1, %s23
    %s33 = scalar_select %p30, %s32, %s23
    %p34 = scmp.ge.s32.totalorder %s33, 2
    %s35 = scalar_select %p34, 0, %s33
    %s36 = ssub.s32 %s23, %s35
    %s37 = ssub.s32 %s24, %s31
    %s38 = sor.u32 %s36, %s37
    %p39 = scmp.eq.s32.totalorder %s38, 0
    %s41 = sadd.s32 %s40, 1
    %s42 = scalar_select %p39, %s40, %s41
    %p45 = pneg %p39
    %p46 = scmp.eq.s32.totalorder %s16, 1
    %p47 = por %p45, %p46
    %p48 = scmp.ne.s32.totalorder %s40, %s43
    %p49 = scmp.eq.s32.totalorder %s16, 0
    %p50 = por %p48, %p49
    %p51 = scmp.ne.s32.totalorder %s40, %s43
    %p52 = scmp.eq.s32.totalorder %s21, 1
    %p53 = por %p51, %p52
    %p54 = scmp.ne.s32.totalorder %s43, %s44
    %p55 = scmp.eq.s32.totalorder %s21, 0
    %p56 = por %p54, %p55
    %p57 = scmp.ne.s32.totalorder %s43, %s44
    %p58 = scmp.eq.s32.totalorder %s22, 1
    %p59 = por %p57, %p58
    %p61 = scmp.ne.s32.totalorder %s44, %s60
    %p62 = scmp.eq.s32.totalorder %s22, 0
    %p63 = por %p61, %p62
    %s64 = ssub.s32 %s23, %s35
    %s65 = ssub.s32 %s24, %s31
    %s66 = sor.u32 %s64, %s65
    %p67 = scmp.eq.s32.totalorder %s66, 0
    %s69 = sadd.s32 %s68, 1
    %s70 = scalar_select %p67, %s68, %s69
    %p73 = pneg %p67
    %p74 = scmp.eq.s32.totalorder %s16, 1
    %p75 = por %p73, %p74
    %p76 = scmp.ne.s32.totalorder %s68, %s71
    %p77 = scmp.eq.s32.totalorder %s16, 0
    %p78 = por %p76, %p77
    %p79 = scmp.ne.s32.totalorder %s68, %s71
    %p80 = scmp.eq.s32.totalorder %s21, 1
    %p81 = por %p79, %p80
    %p82 = scmp.ne.s32.totalorder %s71, %s72
    %p83 = scmp.eq.s32.totalorder %s21, 0
    %p84 = por %p82, %p83
    %p85 = scmp.ne.s32.totalorder %s71, %s72
    %p86 = scmp.eq.s32.totalorder %s22, 1
    %p87 = por %p85, %p86
    %p89 = scmp.ne.s32.totalorder %s72, %s88
    %p90 = scmp.eq.s32.totalorder %s22, 0
    %p91 = por %p89, %p90
    %s93 = sadd.s32 %s92, 1
    %p96 = scmp.eq.s32.totalorder %s16, 1
    %p97 = scmp.ne.s32.totalorder %s92, %s94
    %p98 = scmp.eq.s32.totalorder %s16, 0
    %p99 = por %p97, %p98
    %p100 = scmp.ne.s32.totalorder %s92, %s94
    %p101 = scmp.eq.s32.totalorder %s21, 1
    %p102 = por %p100, %p101
    %p103 = scmp.ne.s32.totalorder %s94, %s95
    %p104 = scmp.eq.s32.totalorder %s21, 0
    %p105 = por %p103, %p104
    %p106 = scmp.ne.s32.totalorder %s94, %s95
    %p107 = scmp.eq.s32.totalorder %s22, 1
    %p108 = por %p106, %p107
    %p110 = scmp.ne.s32.totalorder %s95, %s109
    %p111 = scmp.eq.s32.totalorder %s22, 0
    %p112 = por %p110, %p111
    %s114 = sadd.s32 %s113, 1
    %p117 = scmp.eq.s32.totalorder %s16, 1
    %p118 = scmp.ne.s32.totalorder %s113, %s115
    %p119 = scmp.eq.s32.totalorder %s16, 0
    %p120 = por %p118, %p119
    %p121 = scmp.ne.s32.totalorder %s113, %s115
    %p122 = scmp.eq.s32.totalorder %s21, 1
    %p123 = por %p121, %p122
    %p124 = scmp.ne.s32.totalorder %s115, %s116
    %p125 = scmp.eq.s32.totalorder %s21, 0
    %p126 = por %p124, %p125
    %p127 = scmp.ne.s32.totalorder %s115, %s116
    %p128 = scmp.eq.s32.totalorder %s22, 1
    %p129 = por %p127, %p128
    %p131 = scmp.ne.s32.totalorder %s116, %s130
    %p132 = scmp.eq.s32.totalorder %s22, 0
    %p133 = por %p131, %p132
    %s135 = sadd.s32 %s134, 1
    %p138 = scmp.eq.s32.totalorder %s16, 1
    %p139 = scmp.ne.s32.totalorder %s134, %s136
    %p140 = scmp.eq.s32.totalorder %s16, 0
    %p141 = por %p139, %p140
    %p142 = scmp.ne.s32.totalorder %s134, %s136
    %p143 = scmp.eq.s32.totalorder %s21, 1
    %p144 = por %p142, %p143
    %p145 = scmp.ne.s32.totalorder %s136, %s137
    %p146 = scmp.eq.s32.totalorder %s21, 0
    %p147 = por %p145, %p146
    %p148 = scmp.ne.s32.totalorder %s136, %s137
    %p149 = scmp.eq.s32.totalorder %s22, 1
    %p150 = por %p148, %p149
    %p152 = scmp.ne.s32.totalorder %s137, %s151
    %p153 = scmp.eq.s32.totalorder %s22, 0
    %p154 = por %p152, %p153
    %s156 = sadd.s32 %s155, 1
    %p159 = scmp.eq.s32.totalorder %s16, 1
    %p160 = scmp.ne.s32.totalorder %s155, %s157
    %p161 = scmp.eq.s32.totalorder %s16, 0
    %p162 = por %p160, %p161
    %p163 = scmp.ne.s32.totalorder %s155, %s157
    %p164 = scmp.eq.s32.totalorder %s21, 1
    %p165 = por %p163, %p164
    %p166 = scmp.ne.s32.totalorder %s157, %s158
    %p167 = scmp.eq.s32.totalorder %s21, 0
    %p168 = por %p166, %p167
    %p169 = scmp.ne.s32.totalorder %s157, %s158
    %p170 = scmp.eq.s32.totalorder %s22, 1
    %p171 = por %p169, %p170
    %p173 = scmp.ne.s32.totalorder %s158, %s172
    %p174 = scmp.eq.s32.totalorder %s22, 0
    %p175 = por %p173, %p174
    %s177 = sadd.s32 %s176, 1
    %p180 = scmp.eq.s32.totalorder %s16, 1
    %p181 = scmp.ne.s32.totalorder %s176, %s178
    %p182 = scmp.eq.s32.totalorder %s16, 0
    %p183 = por %p181, %p182
    %p184 = scmp.ne.s32.totalorder %s176, %s178
    %p185 = scmp.eq.s32.totalorder %s21, 1
    %p186 = por %p184, %p185
    %p187 = scmp.ne.s32.totalorder %s178, %s179
    %p188 = scmp.eq.s32.totalorder %s21, 0
    %p189 = por %p187, %p188
    %p190 = scmp.ne.s32.totalorder %s178, %s179
    %p191 = scmp.eq.s32.totalorder %s22, 1
    %p192 = por %p190, %p191
    %p194 = scmp.ne.s32.totalorder %s179, %s193
    %p195 = scmp.eq.s32.totalorder %s22, 0
    %p196 = por %p194, %p195
    %s198 = sadd.s32 %s197, 1
    %p201 = scmp.eq.s32.totalorder %s16, 1
    %p202 = scmp.ne.s32.totalorder %s197, %s199
    %p203 = scmp.eq.s32.totalorder %s16, 0
    %p204 = por %p202, %p203
    %p205 = scmp.ne.s32.totalorder %s197, %s199
    %p206 = scmp.eq.s32.totalorder %s21, 1
    %p207 = por %p205, %p206
    %p208 = scmp.ne.s32.totalorder %s199, %s200
    %p209 = scmp.eq.s32.totalorder %s21, 0
    %p210 = por %p208, %p209
    %p211 = scmp.ne.s32.totalorder %s199, %s200
    %p212 = scmp.eq.s32.totalorder %s22, 1
    %p213 = por %p211, %p212
    %p215 = scmp.ne.s32.totalorder %s200, %s214
    %p216 = scmp.eq.s32.totalorder %s22, 0
    %p217 = por %p215, %p216
    %s218 = ssub.s32 %s23, %s35
    %s219 = ssub.s32 %s24, %s31
    %s220 = sor.u32 %s218, %s219
    %p221 = scmp.eq.s32.totalorder %s220, 0
    %s223 = sadd.s32 %s222, 1
    %s224 = scalar_select %p221, %s222, %s223
    %p227 = pneg %p221
    %p228 = scmp.eq.s32.totalorder %s16, 1
    %p229 = por %p227, %p228
    %p230 = scmp.ne.s32.totalorder %s222, %s225
    %p231 = scmp.eq.s32.totalorder %s16, 0
    %p232 = por %p230, %p231
    %p233 = scmp.ne.s32.totalorder %s222, %s225
    %p234 = scmp.eq.s32.totalorder %s21, 1
    %p235 = por %p233, %p234
    %p236 = scmp.ne.s32.totalorder %s225, %s226
    %p237 = scmp.eq.s32.totalorder %s21, 0
    %p238 = por %p236, %p237
    %p239 = scmp.ne.s32.totalorder %s225, %s226
    %p240 = scmp.eq.s32.totalorder %s22, 1
    %p241 = por %p239, %p240
    %p243 = scmp.ne.s32.totalorder %s226, %s242
    %p244 = scmp.eq.s32.totalorder %s22, 0
    %p245 = por %p243, %p244
    %s246 = ssub.s32 %s23, %s35
    %s247 = ssub.s32 %s24, %s31
    %s248 = sor.u32 %s246, %s247
    %p249 = scmp.eq.s32.totalorder %s248, 0
    %s251 = sadd.s32 %s250, 1
    %s252 = scalar_select %p249, %s250, %s251
    %p255 = pneg %p249
    %p256 = scmp.eq.s32.totalorder %s16, 1
    %p257 = por %p255, %p256
    %p258 = scmp.ne.s32.totalorder %s250, %s253
    %p259 = scmp.eq.s32.totalorder %s16, 0
    %p260 = por %p258, %p259
    %p261 = scmp.ne.s32.totalorder %s250, %s253
    %p262 = scmp.eq.s32.totalorder %s21, 1
    %p263 = por %p261, %p262
    %p264 = scmp.ne.s32.totalorder %s253, %s254
    %p265 = scmp.eq.s32.totalorder %s21, 0
    %p266 = por %p264, %p265
    %p267 = scmp.ne.s32.totalorder %s253, %s254
    %p268 = scmp.eq.s32.totalorder %s22, 1
    %p269 = por %p267, %p268
    %p271 = scmp.ne.s32.totalorder %s254, %s270
    %p272 = scmp.eq.s32.totalorder %s22, 0
    %p273 = por %p271, %p272
    %p274 = scmp.le.s32.totalorder 1, %s16
    %p275 = scmp.lt.s32.totalorder %s16, 3
    %p276 = pnand %p274, %p275
    %p277 = pneg %p276
    // Predicated region
    $region9: #{_lambda_.6} parent=5 // pred_check
      _
    $region10: #{_lambda_.6} parent=5 // pred_check_branch
      %279 = sbr.rel (%p276) target = $region12
    $region11: #{_lambda_.6} parent=5 // pred_region
      %s280 = ssub.s32 %s16, 1
      // Predicated region
      $region13: #{_lambda_.6} parent=11 // pred_check
        %p281 = pneg %p105
      $region14: #{_lambda_.6} parent=11 // pred_check_branch
        %283 = sbr.rel (%p281) target = $region16
      $region15: #{_lambda_.6} parent=11 // pred_region
        _
      $region16: #{_lambda_.6} parent=11 // pred_fallthru
        _
      // Predicated region
      $region17: #{_lambda_.6} parent=11 // pred_check
        %p284 = pneg %p126
      $region18: #{_lambda_.6} parent=11 // pred_check_branch
        %286 = sbr.rel (%p284) target = $region20
      $region19: #{_lambda_.6} parent=11 // pred_region
        _
      $region20: #{_lambda_.6} parent=11 // pred_fallthru
        _
      // Predicated region
      $region21: #{_lambda_.6} parent=11 // pred_check
        %p287 = pneg %p147
      $region22: #{_lambda_.6} parent=11 // pred_check_branch
        %289 = sbr.rel (%p287) target = $region24
      $region23: #{_lambda_.6} parent=11 // pred_region
        _
      $region24: #{_lambda_.6} parent=11 // pred_fallthru
        _
      // Predicated region
      $region25: #{_lambda_.6} parent=11 // pred_check
        %p290 = pneg %p168
      $region26: #{_lambda_.6} parent=11 // pred_check_branch
        %292 = sbr.rel (%p290) target = $region28
      $region27: #{_lambda_.6} parent=11 // pred_region
        _
      $region28: #{_lambda_.6} parent=11 // pred_fallthru
        _
      // Predicated region
      $region29: #{_lambda_.6} parent=11 // pred_check
        %p293 = pneg %p189
      $region30: #{_lambda_.6} parent=11 // pred_check_branch
        %295 = sbr.rel (%p293) target = $region32
      $region31: #{_lambda_.6} parent=11 // pred_region
        _
      $region32: #{_lambda_.6} parent=11 // pred_fallthru
        _
      // Predicated region
      $region33: #{_lambda_.6} parent=11 // pred_check
        %p296 = pneg %p210
      $region34: #{_lambda_.6} parent=11 // pred_check_branch
        %298 = sbr.rel (%p296) target = $region36
      $region35: #{_lambda_.6} parent=11 // pred_region
        _
      $region36: #{_lambda_.6} parent=11 // pred_fallthru
        _
    $region12: #{_lambda_.6} parent=5 // pred_fallthru
      _
    %p299 = scmp.lt.s32.totalorder %s16, 2
    // Predicated region
    $region37: #{_lambda_.6} parent=5 // pred_check
      %p300 = pneg %p299
    $region38: #{_lambda_.6} parent=5 // pred_check_branch
      %302 = sbr.rel (%p300) target = $region40
    $region39: #{_lambda_.6} parent=5 // pred_region
      // Predicated region
      $region41: #{_lambda_.6} parent=39 // pred_check
        %p303 = pneg %p50
      $region42: #{_lambda_.6} parent=39 // pred_check_branch
        %305 = sbr.rel (%p303) target = $region44
      $region43: #{_lambda_.6} parent=39 // pred_region
        %s306 = smul.u32 2, %s24
        %p307 = scmp.lt.s32.totalorder %s23, 1
        %s308 = scalar_select %p307, %s23, 1
        %p309 = scmp.lt.s32.totalorder %s306, 1
        %s310 = scalar_select %p309, %s306, 1
        %s311 = smul.addr %s308, 4
        %s312 = sadd.s32 %s310, %s311
        %s313 = smul.addr %s312, 4
        %s314 = scalar_lea.vmem %s0, %s313
        %s315 = smul.u32 2, %s24
      $region44: #{_lambda_.6} parent=39 // pred_fallthru
        _
      // Predicated region
      $region45: #{_lambda_.6} parent=39 // pred_check
        %p316 = pneg %p78
      $region46: #{_lambda_.6} parent=39 // pred_check_branch
        %318 = sbr.rel (%p316) target = $region48
      $region47: #{_lambda_.6} parent=39 // pred_region
        %s319 = smul.u32 2, %s24
        %p320 = scmp.lt.s32.totalorder %s23, 1
        %s321 = scalar_select %p320, %s23, 1
        %p322 = scmp.lt.s32.totalorder %s319, 1
        %s323 = scalar_select %p322, %s319, 1
        %s324 = smul.addr %s321, 8
        %s325 = sadd.s32 %s323, %s324
        %s326 = smul.addr %s325, 4
        %s327 = scalar_lea.vmem %s1, %s326
        %s328 = smul.u32 2, %s24
      $region48: #{_lambda_.6} parent=39 // pred_fallthru
        _
    $region40: #{_lambda_.6} parent=5 // pred_fallthru
      _
    %p329 = scmp.le.s32.totalorder 1, %s16
    %p330 = scmp.lt.s32.totalorder %s16, 3
    %p331 = pnand %p329, %p330
    %p332 = pneg %p331
    // Predicated region
    $region49: #{_lambda_.6} parent=5 // pred_check
      _
    $region50: #{_lambda_.6} parent=5 // pred_check_branch
      %334 = sbr.rel (%p331) target = $region52
    $region51: #{_lambda_.6} parent=5 // pred_region
      %s335 = ssub.s32 %s16, 1
      %s336 = smul.u32 2, %s26
      %p337 = scmp.lt.s32.totalorder %s25, 1
      %s338 = scalar_select %p337, %s25, 1
      %p339 = scmp.lt.s32.totalorder %s336, 1
      %s340 = scalar_select %p339, %s336, 1
      %s341 = smul.addr %s338, 4
      %s342 = sadd.s32 %s340, %s341
      %s343 = smul.addr %s342, 4
      %s344 = scalar_lea.vmem %s0, %s343
      %p345 = pneg %p56
      %p346 = pneg %p53
      %s347 = smul.u32 2, %s26
      %p348 = scmp.lt.s32.totalorder %s25, 1
      %s349 = scalar_select %p348, %s25, 1
      %p350 = scmp.lt.s32.totalorder %s347, 1
      %s351 = scalar_select %p350, %s347, 1
      %s352 = smul.addr %s349, 8
      %s353 = sadd.s32 %s351, %s352
      %s354 = smul.addr %s353, 4
      %s355 = scalar_lea.vmem %s1, %s354
      %p356 = pneg %p84
      %p357 = pneg %p81
      %p358 = pneg %p105
      %p359 = pneg %p102
      %p360 = pneg %p126
      %p361 = pneg %p123
      %p362 = pneg %p147
      %p363 = pneg %p144
      %p364 = pneg %p168
      %p365 = pneg %p165
      %p366 = pneg %p189
      %p367 = pneg %p186
      %p368 = pneg %p210
      %p369 = pneg %p207
      %p370 = pneg %p238
      %p371 = pneg %p235
      %s372 = smul.u32 2, %s26
      %p373 = scmp.lt.s32.totalorder %s25, 1
      %s374 = scalar_select %p373, %s25, 1
      %p375 = scmp.lt.s32.totalorder %s372, 1
      %s376 = scalar_select %p375, %s372, 1
      %s377 = smul.addr %s374, 2
      %s378 = sadd.s32 %s376, %s377
      %s379 = scalar_lea.vmem %s8, %s378
      %p380 = pneg %p266
      %p381 = pneg %p263
      %p382 = scmp.lt.s32.totalorder %s25, 1
      %s383 = scalar_select %p382, %s25, 1
      %p384 = scmp.lt.s32.totalorder %s26, 0
      %s385 = scalar_select %p384, %s26, 0
      %s386 = sadd.s32 %s385, %s383
      %s387 = scalar_lea.vmem %s9, %s386
      %s388 = smul.u32 2, %s26
      %p389 = scmp.lt.s32.totalorder %s25, 1
      %s390 = scalar_select %p389, %s25, 1
      %p391 = scmp.lt.s32.totalorder %s388, 1
      %s392 = scalar_select %p391, %s388, 1
      %s393 = smul.addr %s390, 4
      %s394 = sadd.s32 %s392, %s393
      %s395 = smul.addr %s394, 4
      %s396 = scalar_lea.vmem %s0, %s395
      %s397 = smul.u32 2, %s26
      %s398 = smul.u32 2, %s26
      %p399 = scmp.lt.s32.totalorder %s25, 1
      %s400 = scalar_select %p399, %s25, 1
      %p401 = scmp.lt.s32.totalorder %s398, 1
      %s402 = scalar_select %p401, %s398, 1
      %s403 = smul.addr %s400, 8
      %s404 = sadd.s32 %s402, %s403
      %s405 = smul.addr %s404, 4
      %s406 = scalar_lea.vmem %s1, %s405
      %s407 = smul.u32 2, %s26
      %s408 = smul.u32 2, %s26
      %p409 = scmp.lt.s32.totalorder %s25, 1
      %s410 = scalar_select %p409, %s25, 1
      %p411 = scmp.lt.s32.totalorder %s408, 1
      %s412 = scalar_select %p411, %s408, 1
      %s413 = smul.addr %s410, 2
      %s414 = sadd.s32 %s412, %s413
      %s415 = scalar_lea.vmem %s8, %s414
      %s416 = smul.u32 2, %s26
      %p417 = scmp.lt.s32.totalorder %s25, 1
      %s418 = scalar_select %p417, %s25, 1
      %p419 = scmp.lt.s32.totalorder %s26, 0
      %s420 = scalar_select %p419, %s26, 0
      %s421 = sadd.s32 %s420, %s418
      %s422 = scalar_lea.vmem %s9, %s421
      %v424 = vld [vmem:[%s396] sm:$0xff]
      %v425 = vld [vmem:[%s396 + $0x8] sm:$0xff]
      %v426 = vld [vmem:[%s406] sm:$0xff]
      %v427 = vld [vmem:[%s406 + $0x8] sm:$0xff]
      %v428 = vld [vmem:[%s406 + $0x10] sm:$0xff]
      %v429 = vld [vmem:[%s406 + $0x18] sm:$0xff]
      %v430 = vld [vmem:[%s2] sm:$0xf]
      %v431 = vld [vmem:[%s2 + $0x4] sm:$0xf]
      %v432 = vld [vmem:[%s2 + $0x8] sm:$0xf]
      %v433 = vld [vmem:[%s2 + $0xc] sm:$0xf]
      %v434 = vld [vmem:[%s2 + $0x10] sm:$0xf]
      %v435 = vld [vmem:[%s2 + $0x14] sm:$0xf]
      %v436 = vld [vmem:[%s3] sm:$0xf]
      %v437 = vld [vmem:[%s3 + $0x4] sm:$0xf]
      %v438 = vld [vmem:[%s3 + $0x8] sm:$0xf]
      %v439 = vld [vmem:[%s3 + $0xc] sm:$0xf]
      %v440 = vld [vmem:[%s3 + $0x10] sm:$0xf]
      %v441 = vld [vmem:[%s3 + $0x14] sm:$0xf]
      %v448 = vunpack.c.l.b16 %v436
      %v449 = vunpack.c.l.b16 %v437
      %v450 = vunpack.c.l.b16 %v438
      %v451 = vunpack.c.l.b16 %v439
      %v452 = vunpack.c.l.b16 %v440
      %v453 = vunpack.c.l.b16 %v441
      %v454 = vpack.c.b16 %v449, %v448
      %v455 = vpack.c.b16 %v451, %v450
      %v456 = vpack.c.b16 %v453, %v452
      %v461 = vunpack.c.l.b16 %v426
      %v462 = vunpack.c.h.b16 %v426
      %v463 = vunpack.c.l.b16 %v427
      %v464 = vunpack.c.h.b16 %v427
      %v465 = vunpack.c.l.b16 %v428
      %v466 = vunpack.c.h.b16 %v428
      %v467 = vunpack.c.l.b16 %v429
      %v468 = vunpack.c.h.b16 %v429
      %v469 = vpack.c.b16 %v463, %v461
      %v470 = vpack.c.b16 %v464, %v462
      %v471 = vpack.c.b16 %v467, %v465
      %v472 = vpack.c.b16 %v468, %v466
      %vm477 = vcmask 261120
      %v479 = vsel %vm477, %v454, 0
      %v482 = vsel %vm477, %v455, 0
      %v485 = vsel %vm477, %v456, 0
      %487 = vmatprep.subr.bf16.mxu0 %v470
      %488 = vmatpush1.bf16.msra.mxu0 %v469
      %489 = vmatprep.subr.bf16.mxu0 %v472
      %490 = vmatpush1.bf16.msra.mxu0 %v471
      %491 = vmatprep.subr.bf16.mxu0 0
      %492 = vmatpush1.bf16.msra.mxu0 0
      %493 = vmatprep.subr.bf16.mxu0 0
      %494 = vmatpush1.bf16.msra.mxu0 0
      %495 = vmatprep.subr.bf16.mxu0 0
      %496 = vmatpush1.bf16.msra.mxu0 0
      %497 = vmatprep.subr.bf16.mxu0 0
      %498 = vmatpush1.bf16.msra.mxu0 0
      %499 = vmatprep.subr.bf16.mxu0 0
      %500 = vmatpush1.bf16.msra.mxu0 0
      %501 = vmatprep.subr.bf16.mxu0 0
      %502 = vmatpush1.bf16.msra.mxu0 0
      %503 = vmatprep.subr.bf16.mxu0 0
      %504 = vmatpush1.bf16.msra.mxu0 0
      %505 = vmatprep.subr.bf16.mxu0 0
      %506 = vmatpush1.bf16.msra.mxu0 0
      %507 = vmatprep.subr.bf16.mxu0 0
      %508 = vmatpush1.bf16.msra.mxu0 0
      %509 = vmatprep.subr.bf16.mxu0 0
      %510 = vmatpush1.bf16.msra.mxu0 0
      %511 = vmatprep.subr.bf16.mxu0 0
      %512 = vmatpush1.bf16.msra.mxu0 0
      %513 = vmatprep.subr.bf16.mxu0 0
      %514 = vmatpush1.bf16.msra.mxu0 0
      %515 = vmatprep.subr.bf16.mxu0 0
      %516 = vmatpush1.bf16.msra.mxu0 0
      %517 = vmatprep.subr.bf16.mxu0 0
      %518 = vmatpush1.bf16.msra.mxu0 0
      %519 = vmatprep.mubr.bf16.mxu0 0
      %520 = vmatmul.mubr.bf16.gmra.mrb[0].mxu0 %v479
      %v521 = vpop.f32.mrb[0].mxu0
      %v522 = vadd.f32 0.0, %v521
      %v523 = vpop.f32.mrb[0].mxu0
      %v524 = vadd.f32 0.0, %v523
      %v525 = vpop.f32.mrb[0].mxu0
      %v526 = vadd.f32 0.0, %v525
      %v527 = vpop.f32.mrb[0].mxu0
      %v528 = vadd.f32 0.0, %v527
      %529 = vmatprep.mubr.bf16.mxu0 0
      %530 = vmatmul.mubr.bf16.gmra.mrb[0].mxu0 %v482
      %v531 = vpop.f32.mrb[0].mxu0
      %v532 = vadd.f32 0.0, %v531
      %v533 = vpop.f32.mrb[0].mxu0
      %v534 = vadd.f32 0.0, %v533
      %v535 = vpop.f32.mrb[0].mxu0
      %v536 = vadd.f32 0.0, %v535
      %v537 = vpop.f32.mrb[0].mxu0
      %v538 = vadd.f32 0.0, %v537
      %539 = vmatprep.mubr.bf16.mxu0 0
      %540 = vmatmul.mubr.bf16.gmra.mrb[0].mxu0 %v485
      %v541 = vpop.f32.mrb[0].mxu0
      %v542 = vadd.f32 0.0, %v541
      %v543 = vpop.f32.mrb[0].mxu0
      %v544 = vadd.f32 0.0, %v543
      %v545 = vpop.f32.mrb[0].mxu0
      %v546 = vadd.f32 0.0, %v545
      %v547 = vpop.f32.mrb[0].mxu0
      %v548 = vadd.f32 0.0, %v547
      %549 = vdwg.mxu0
      %v556 = vunpack.c.l.b16 %v430
      %v557 = vunpack.c.l.b16 %v431
      %v558 = vunpack.c.l.b16 %v432
      %v559 = vunpack.c.l.b16 %v433
      %v560 = vunpack.c.l.b16 %v434
      %v561 = vunpack.c.l.b16 %v435
      %v562 = vpack.c.b16 %v557, %v556
      %v563 = vpack.c.b16 %v559, %v558
      %v564 = vpack.c.b16 %v561, %v560
      %v567 = vunpack.c.l.b16 %v424
      %v568 = vunpack.c.h.b16 %v424
      %v569 = vunpack.c.l.b16 %v425
      %v570 = vunpack.c.h.b16 %v425
      %v571 = vpack.c.b16 %v569, %v567
      %v572 = vpack.c.b16 %v570, %v568
      %vm575 = vcmask 130048
      %v577 = vsel %vm575, %v562, 0
      %v580 = vsel %vm575, %v563, 0
      %v583 = vsel %vm575, %v564, 0
      %585 = vmatprep.subr.bf16.mxu0 %v572
      %586 = vmatpush1.bf16.msra.mxu0 %v571
      %587 = vmatprep.subr.bf16.mxu0 0
      %588 = vmatpush1.bf16.msra.mxu0 0
      %589 = vmatprep.subr.bf16.mxu0 0
      %590 = vmatpush1.bf16.msra.mxu0 0
      %591 = vmatprep.subr.bf16.mxu0 0
      %592 = vmatpush1.bf16.msra.mxu0 0
      %593 = vmatprep.subr.bf16.mxu0 0
      %594 = vmatpush1.bf16.msra.mxu0 0
      %595 = vmatprep.subr.bf16.mxu0 0
      %596 = vmatpush1.bf16.msra.mxu0 0
      %597 = vmatprep.subr.bf16.mxu0 0
      %598 = vmatpush1.bf16.msra.mxu0 0
      %599 = vmatprep.subr.bf16.mxu0 0
      %600 = vmatpush1.bf16.msra.mxu0 0
      %601 = vmatprep.subr.bf16.mxu0 0
      %602 = vmatpush1.bf16.msra.mxu0 0
      %603 = vmatprep.subr.bf16.mxu0 0
      %604 = vmatpush1.bf16.msra.mxu0 0
      %605 = vmatprep.subr.bf16.mxu0 0
      %606 = vmatpush1.bf16.msra.mxu0 0
      %607 = vmatprep.subr.bf16.mxu0 0
      %608 = vmatpush1.bf16.msra.mxu0 0
      %609 = vmatprep.subr.bf16.mxu0 0
      %610 = vmatpush1.bf16.msra.mxu0 0
      %611 = vmatprep.subr.bf16.mxu0 0
      %612 = vmatpush1.bf16.msra.mxu0 0
      %613 = vmatprep.subr.bf16.mxu0 0
      %614 = vmatpush1.bf16.msra.mxu0 0
      %615 = vmatprep.subr.bf16.mxu0 0
      %616 = vmatpush1.bf16.msra.mxu0 0
      %617 = vmatprep.mubr.bf16.mxu0 0
      %618 = vmatmul.mubr.bf16.gmra.mrb[0].mxu0 %v577
      %v619 = vpop.f32.mrb[0].mxu0
      %v620 = vadd.f32 %v522, %v619
      %v621 = vpop.f32.mrb[0].mxu0
      %v622 = vadd.f32 %v524, %v621
      %v623 = vpop.f32.mrb[0].mxu0
      %v624 = vadd.f32 %v526, %v623
      %v625 = vpop.f32.mrb[0].mxu0
      %v626 = vadd.f32 %v528, %v625
      %627 = vmatprep.mubr.bf16.mxu0 0
      %628 = vmatmul.mubr.bf16.gmra.mrb[0].mxu0 %v580
      %v629 = vpop.f32.mrb[0].mxu0
      %v630 = vadd.f32 %v532, %v629
      %v631 = vpop.f32.mrb[0].mxu0
      %v632 = vadd.f32 %v534, %v631
      %v633 = vpop.f32.mrb[0].mxu0
      %v634 = vadd.f32 %v536, %v633
      %v635 = vpop.f32.mrb[0].mxu0
      %v636 = vadd.f32 %v538, %v635
      %637 = vmatprep.mubr.bf16.mxu0 0
      %638 = vmatmul.mubr.bf16.gmra.mrb[0].mxu0 %v583
      %v639 = vpop.f32.mrb[0].mxu0
      %v640 = vadd.f32 %v542, %v639
      %v641 = vpop.f32.mrb[0].mxu0
      %v642 = vadd.f32 %v544, %v641
      %v643 = vpop.f32.mrb[0].mxu0
      %v644 = vadd.f32 %v546, %v643
      %v645 = vpop.f32.mrb[0].mxu0
      %v646 = vadd.f32 %v548, %v645
      %647 = vdwg.mxu0
      %v648 = vld [vmem:[%s4] sm:$0xff]
      %v649 = vld [vmem:[%s4 + $0x8] sm:$0xff]
      %v650 = vld [vmem:[%s4 + $0x10] sm:$0xff]
      %v651 = vld [vmem:[%s4 + $0x18] sm:$0xff]
      %v652 = vld [vmem:[%s4 + $0x20] sm:$0xff]
      %v653 = vld [vmem:[%s4 + $0x28] sm:$0xff]
      %655 = vset.pattern.permute.xlu0 0
      %656 = vperm.xlu0 %655, %v648
      %v657 = vpop.permute.xlu0 %656
      %660 = vset.pattern.permute.xlu0 0
      %661 = vperm.xlu0 %660, %v649
      %v662 = vpop.permute.xlu0 %661
      %665 = vset.pattern.permute.xlu0 0
      %666 = vperm.xlu0 %665, %v650
      %v667 = vpop.permute.xlu0 %666
      %670 = vset.pattern.permute.xlu0 0
      %671 = vperm.xlu0 %670, %v651
      %v672 = vpop.permute.xlu0 %671
      %675 = vset.pattern.permute.xlu0 0
      %676 = vperm.xlu0 %675, %v652
      %v677 = vpop.permute.xlu0 %676
      %680 = vset.pattern.permute.xlu0 0
      %681 = vperm.xlu0 %680, %v653
      %v682 = vpop.permute.xlu0 %681
      %v684 = vadd.f32 %v620, %v657
      %v685 = vadd.f32 %v622, %v657
      %v686 = vadd.f32 %v624, %v662
      %v687 = vadd.f32 %v626, %v662
      %v688 = vadd.f32 %v630, %v667
      %v689 = vadd.f32 %v632, %v667
      %v690 = vadd.f32 %v634, %v672
      %v691 = vadd.f32 %v636, %v672
      %v692 = vadd.f32 %v640, %v677
      %v693 = vadd.f32 %v642, %v677
      %v694 = vadd.f32 %v644, %v682
      %v695 = vadd.f32 %v646, %v682
      %v696 = vld [vmem:[%s5] sm:$0xf]
      %v697 = vld [vmem:[%s5 + $0x4] sm:$0xf]
      %v698 = vld [vmem:[%s5 + $0x8] sm:$0xf]
      %v699 = vld [vmem:[%s5 + $0xc] sm:$0xf]
      %v700 = vld [vmem:[%s5 + $0x10] sm:$0xf]
      %v701 = vld [vmem:[%s5 + $0x14] sm:$0xf]
      %v702 = vpack.c.bf16 %v686, %v684
      %v703 = vpack.c.bf16 %v687, %v685
      %v704 = vpack.c.bf16 %v690, %v688
      %v705 = vpack.c.bf16 %v691, %v689
      %v706 = vpack.c.bf16 %v694, %v692
      %v707 = vpack.c.bf16 %v695, %v693
      %v708 = vld [vmem:[%s6] sm:$0xff]
      %v709 = vld [vmem:[%s6 + $0x8] sm:$0xff]
      %v710 = vld [vmem:[%s6 + $0x10] sm:$0xff]
      %v711 = vld [vmem:[%s6 + $0x18] sm:$0xff]
      %v712 = vld [vmem:[%s6 + $0x20] sm:$0xff]
      %v713 = vld [vmem:[%s6 + $0x28] sm:$0xff]
      %715 = vset.pattern.permute.xlu0 0
      %716 = vperm.xlu0 %715, %v708
      %v717 = vpop.permute.xlu0 %716
      %720 = vset.pattern.permute.xlu0 0
      %721 = vperm.xlu0 %720, %v709
      %v722 = vpop.permute.xlu0 %721
      %725 = vset.pattern.permute.xlu0 0
      %726 = vperm.xlu0 %725, %v710
      %v727 = vpop.permute.xlu0 %726
      %730 = vset.pattern.permute.xlu0 0
      %731 = vperm.xlu0 %730, %v711
      %v732 = vpop.permute.xlu0 %731
      %735 = vset.pattern.permute.xlu0 0
      %736 = vperm.xlu0 %735, %v712
      %v737 = vpop.permute.xlu0 %736
      %740 = vset.pattern.permute.xlu0 0
      %741 = vperm.xlu0 %740, %v713
      %v742 = vpop.permute.xlu0 %741
      %v750 = vunpack.c.l.b16 %v696
      %v751 = vunpack.c.l.b16 %v697
      %v752 = vunpack.c.l.b16 %v698
      %v753 = vunpack.c.l.b16 %v699
      %v754 = vunpack.c.l.b16 %v700
      %v755 = vunpack.c.l.b16 %v701
      %v756 = vpack.c.b16 %v751, %v750
      %v757 = vpack.c.b16 %v753, %v752
      %v758 = vpack.c.b16 %v755, %v754
      %vm759 = vcmask 392192
      %v761 = vsel %vm759, %v756, 0
      %v764 = vsel %vm759, %v757, 0
      %v767 = vsel %vm759, %v758, 0
      %769 = vmatprep.subr.bf16.mxu0 %v703
      %770 = vmatpush1.bf16.msra.mxu0 %v702
      %771 = vmatprep.subr.bf16.mxu0 %v705
      %772 = vmatpush1.bf16.msra.mxu0 %v704
      %773 = vmatprep.subr.bf16.mxu0 %v707
      %774 = vmatpush1.bf16.msra.mxu0 %v706
      %775 = vmatprep.subr.bf16.mxu0 0
      %776 = vmatpush1.bf16.msra.mxu0 0
      %777 = vmatprep.subr.bf16.mxu0 0
      %778 = vmatpush1.bf16.msra.mxu0 0
      %779 = vmatprep.subr.bf16.mxu0 0
      %780 = vmatpush1.bf16.msra.mxu0 0
      %781 = vmatprep.subr.bf16.mxu0 0
      %782 = vmatpush1.bf16.msra.mxu0 0
      %783 = vmatprep.subr.bf16.mxu0 0
      %784 = vmatpush1.bf16.msra.mxu0 0
      %785 = vmatprep.subr.bf16.mxu0 0
      %786 = vmatpush1.bf16.msra.mxu0 0
      %787 = vmatprep.subr.bf16.mxu0 0
      %788 = vmatpush1.bf16.msra.mxu0 0
      %789 = vmatprep.subr.bf16.mxu0 0
      %790 = vmatpush1.bf16.msra.mxu0 0
      %791 = vmatprep.subr.bf16.mxu0 0
      %792 = vmatpush1.bf16.msra.mxu0 0
      %793 = vmatprep.subr.bf16.mxu0 0
      %794 = vmatpush1.bf16.msra.mxu0 0
      %795 = vmatprep.subr.bf16.mxu0 0
      %796 = vmatpush1.bf16.msra.mxu0 0
      %797 = vmatprep.subr.bf16.mxu0 0
      %798 = vmatpush1.bf16.msra.mxu0 0
      %799 = vmatprep.subr.bf16.mxu0 0
      %800 = vmatpush1.bf16.msra.mxu0 0
      %801 = vmatprep.mubr.bf16.mxu0 0
      %802 = vmatmul.mubr.bf16.gmra.mrb[0].mxu0 %v761
      %v803 = vpop.f32.mrb[0].mxu0
      %v804 = vadd.f32 %v717, %v803
      %v805 = vpop.f32.mrb[0].mxu0
      %v806 = vadd.f32 %v717, %v805
      %v807 = vpop.f32.mrb[0].mxu0
      %v808 = vadd.f32 %v722, %v807
      %v809 = vpop.f32.mrb[0].mxu0
      %v810 = vadd.f32 %v722, %v809
      %811 = vmatprep.mubr.bf16.mxu0 0
      %812 = vmatmul.mubr.bf16.gmra.mrb[0].mxu0 %v764
      %v813 = vpop.f32.mrb[0].mxu0
      %v814 = vadd.f32 %v727, %v813
      %v815 = vpop.f32.mrb[0].mxu0
      %v816 = vadd.f32 %v727, %v815
      %v817 = vpop.f32.mrb[0].mxu0
      %v818 = vadd.f32 %v732, %v817
      %v819 = vpop.f32.mrb[0].mxu0
      %v820 = vadd.f32 %v732, %v819
      %821 = vmatprep.mubr.bf16.mxu0 0
      %822 = vmatmul.mubr.bf16.gmra.mrb[0].mxu0 %v767
      %v823 = vpop.f32.mrb[0].mxu0
      %v824 = vadd.f32 %v737, %v823
      %v825 = vpop.f32.mrb[0].mxu0
      %v826 = vadd.f32 %v737, %v825
      %v827 = vpop.f32.mrb[0].mxu0
      %v828 = vadd.f32 %v742, %v827
      %v829 = vpop.f32.mrb[0].mxu0
      %v830 = vadd.f32 %v742, %v829
      %831 = vdwg.mxu0
      %v832 = vmax.f32 %v804, 0.0
      %v833 = vmax.f32 %v806, 0.0
      %v834 = vmax.f32 %v808, 0.0
      %v835 = vmax.f32 %v810, 0.0
      %v836 = vmax.f32 %v814, 0.0
      %v837 = vmax.f32 %v816, 0.0
      %v838 = vmax.f32 %v818, 0.0
      %v839 = vmax.f32 %v820, 0.0
      %v840 = vmax.f32 %v824, 0.0
      %v841 = vmax.f32 %v826, 0.0
      %v842 = vmax.f32 %v828, 0.0
      %v843 = vmax.f32 %v830, 0.0
      %v844 = vld [vmem:[%s7] sm:$0xff]
      %v845 = vld [vmem:[%s7 + $0x8] sm:$0xff]
      %v846 = vld [vmem:[%s7 + $0x10] sm:$0xff]
      %v847 = vld [vmem:[%s7 + $0x18] sm:$0xff]
      %v848 = vld [vmem:[%s7 + $0x20] sm:$0xff]
      %v849 = vld [vmem:[%s7 + $0x28] sm:$0xff]
      %851 = vset.pattern.permute.xlu0 0
      %852 = vperm.xlu0 %851, %v844
      %v853 = vpop.permute.xlu0 %852
      %856 = vset.pattern.permute.xlu0 0
      %857 = vperm.xlu0 %856, %v845
      %v858 = vpop.permute.xlu0 %857
      %861 = vset.pattern.permute.xlu0 0
      %862 = vperm.xlu0 %861, %v846
      %v863 = vpop.permute.xlu0 %862
      %866 = vset.pattern.permute.xlu0 0
      %867 = vperm.xlu0 %866, %v847
      %v868 = vpop.permute.xlu0 %867
      %871 = vset.pattern.permute.xlu0 0
      %872 = vperm.xlu0 %871, %v848
      %v873 = vpop.permute.xlu0 %872
      %876 = vset.pattern.permute.xlu0 0
      %877 = vperm.xlu0 %876, %v849
      %v878 = vpop.permute.xlu0 %877
      %v880 = vmul.f32 %v832, %v853
      %v881 = vmul.f32 %v833, %v853
      %v882 = vmul.f32 %v834, %v858
      %v883 = vmul.f32 %v835, %v858
      %v884 = vmul.f32 %v836, %v863
      %v885 = vmul.f32 %v837, %v863
      %v886 = vmul.f32 %v838, %v868
      %v887 = vmul.f32 %v839, %v868
      %v888 = vmul.f32 %v840, %v873
      %v889 = vmul.f32 %v841, %v873
      %v890 = vmul.f32 %v842, %v878
      %v891 = vmul.f32 %v843, %v878
      %v892 = vadd.f32 %v880, %v882
      %v893 = vadd.f32 %v892, %v884
      %v894 = vadd.f32 %v893, %v886
      %v895 = vadd.f32 %v894, %v888
      %v896 = vadd.f32 %v895, %v890
      %v897 = vrot.slane %v896, 4
      %v898 = vadd.f32 %v896, %v897
      %v899 = vrot.slane %v898, 2
      %v900 = vadd.f32 %v898, %v899
      %v901 = vrot.slane %v900, 1
      %v902 = vadd.f32 %v900, %v901
      %v903 = vadd.f32 %v881, %v883
      %v904 = vadd.f32 %v903, %v885
      %v905 = vadd.f32 %v904, %v887
      %v906 = vadd.f32 %v905, %v889
      %v907 = vadd.f32 %v906, %v891
      %v908 = vrot.slane %v907, 4
      %v909 = vadd.f32 %v907, %v908
      %v910 = vrot.slane %v909, 2
      %v911 = vadd.f32 %v909, %v910
      %v912 = vrot.slane %v911, 1
      %v913 = vadd.f32 %v911, %v912
      %v914 = vxor.u32 %v902, 2147483648
      %v915 = vxor.u32 %v913, 2147483648
      %v916 = vmul.f32 %v914, 1.442695
      %v917 = vpow.pop %v916
      %v918 = vmul.f32 %v915, 1.442695
      %v919 = vpow.pop %v918
      %v920 = vadd.f32 %v917, 1.0
      %v921 = vadd.f32 %v919, 1.0
      %v922 = vrcp.pop %v920
      %v923 = vmul.f32 1.0, %v922
      %v924 = vrcp.pop %v921
      %v925 = vmul.f32 1.0, %v924
      %v928 = vcombine.low %v923, %v925
      %v930 = vunpack.c.l.s4 1966171168
      %v931 = vunpack.c.0.s8 %v930
      %v932 = vlaneseq
      %v933 = vshrl.u32 %v932, 7
      %v934 = vsub.s32 %v931, %v933
      %v935 = vrot.slane %v928, %v934
      %v937 = vunpack.c.l.s4 1966171168
      %v938 = vunpack.c.0.s8 %v937
      %v939 = vlaneseq
      %v940 = vshrl.u32 %v939, 7
      %v941 = vsub.s32 %v938, %v940
      %v942 = vrot.slane %v935, %v941
      %v944 = vlaneseq
      %vm945 = vcmp.ge.s32.totalorder %v944, 0
      %vm946 = vcmp.lt.s32.totalorder %v944, 256
      %vm947 = vmand %vm945, %vm946
      %948 = vst.msk [vmem:[%s415] sm:$0x3] %vm947, %v942
      %s949 = smul.u32 %s26, 256
      %v950 = vlaneseq
      %v951 = vand.u32 %v950, 127
      %v952 = vadd.s32 %v951, 128
      %v953 = vstv %s949
      %v954 = vadd.s32 %v953, %v951
      %v955 = vadd.s32 %v953, %v952
      %vm956 = vcmp.lt.s32.totalorder %v954, 256
      %vm957 = vcmp.lt.s32.totalorder %v955, 256
      %v958 = vsel %vm956, %v923, -inf
      %v959 = vsel %vm957, %v925, -inf
      %v960 = vmax.f32 %v958, %v959
      %961 = vmax.xlane.f32.xlu0 %v960
      %v962 = vpop.xlane.xlu0 %961
      %vm963 = vcmask 0
      %964 = vst.msk [vmem:[%s422] sm:$0x1] %vm963, %v962
      %s965 = smul.u32 2, %s26
      %p966 = scmp.lt.s32.totalorder %s25, 1
      %s967 = scalar_select %p966, %s25, 1
      %p968 = scmp.lt.s32.totalorder %s965, 1
      %s969 = scalar_select %p968, %s965, 1
      %s970 = smul.addr %s967, 2
      %s971 = sadd.s32 %s969, %s970
      %s972 = scalar_lea.vmem %s8, %s971
      %p973 = scmp.lt.s32.totalorder %s25, 1
      %s974 = scalar_select %p973, %s25, 1
      %p975 = scmp.lt.s32.totalorder %s26, 0
      %s976 = scalar_select %p975, %s26, 0
      %s977 = sadd.s32 %s976, %s974
      %s978 = scalar_lea.vmem %s9, %s977
      // Predicated region
      $region53: #{_lambda_.6} parent=51 // pred_check
        %p979 = pneg %p235
      $region54: #{_lambda_.6} parent=51 // pred_check_branch
        %981 = sbr.rel (%p979) target = $region56
      $region55: #{_lambda_.6} parent=51 // pred_region
        %s982 = smul.u32 2, %s26
      $region56: #{_lambda_.6} parent=51 // pred_fallthru
        _
      // Predicated region
      $region57: #{_lambda_.6} parent=51 // pred_check
        %p983 = pneg %p263
      $region58: #{_lambda_.6} parent=51 // pred_check_branch
        %985 = sbr.rel (%p983) target = $region60
      $region59: #{_lambda_.6} parent=51 // pred_region
        _
      $region60: #{_lambda_.6} parent=51 // pred_fallthru
        _
    $region52: #{_lambda_.6} parent=5 // pred_fallthru
      _
    %p986 = scmp.le.s32.totalorder 2, %s16
    // Predicated region
    $region61: #{_lambda_.6} parent=5 // pred_check
      %p987 = pneg %p986
    $region62: #{_lambda_.6} parent=5 // pred_check_branch
      %989 = sbr.rel (%p987) target = $region64
    $region63: #{_lambda_.6} parent=5 // pred_region
      %s990 = ssub.s32 %s16, 2
      // Predicated region
      $region65: #{_lambda_.6} parent=63 // pred_check
        %p991 = pneg %p241
      $region66: #{_lambda_.6} parent=63 // pred_check_branch
        %993 = sbr.rel (%p991) target = $region68
      $region67: #{_lambda_.6} parent=63 // pred_region
        %s994 = smul.u32 2, %s28
        %p995 = scmp.lt.s32.totalorder %s27, 1
        %s996 = scalar_select %p995, %s27, 1
        %p997 = scmp.lt.s32.totalorder %s994, 1
        %s998 = scalar_select %p997, %s994, 1
        %s999 = smul.addr %s996, 2
        %s1000 = sadd.s32 %s998, %s999
        %s1001 = scalar_lea.vmem %s8, %s1000
      $region68: #{_lambda_.6} parent=63 // pred_fallthru
        _
      // Predicated region
      $region69: #{_lambda_.6} parent=63 // pred_check
        %p1002 = pneg %p269
      $region70: #{_lambda_.6} parent=63 // pred_check_branch
        %1004 = sbr.rel (%p1002) target = $region72
      $region71: #{_lambda_.6} parent=63 // pred_region
        %p1005 = scmp.lt.s32.totalorder %s27, 1
        %s1006 = scalar_select %p1005, %s27, 1
        %p1007 = scmp.lt.s32.totalorder %s28, 0
        %s1008 = scalar_select %p1007, %s28, 0
        %s1009 = sadd.s32 %s1008, %s1006
        %s1010 = scalar_lea.vmem %s9, %s1009
      $region72: #{_lambda_.6} parent=63 // pred_fallthru
        _
    $region64: #{_lambda_.6} parent=5 // pred_fallthru
      _
  $region6: #{_lambda_.6} parent=0 // loop_footer
    %s20 = sadd.s32 1, %s16
  $region7: #{_lambda_.6} parent=0 // loop_footer_branch
    %15 = sbr.rel target = $region3
  $region8: #{_lambda_.6} parent=0 // loop_exit
    _

// kernel: _lambda_.5
$region0: #{_lambda_.5}
  #allocation0 [shape = 'u32[]', space=smem, size = 0x4, offset = 0x4, fixed_abs, tag = 'smem constant byte address 0x4 - core index']
  #allocation1 [shape = 'u32[144,128]{1,0:T(1,128)}', space=vmem, size = 0x12000, scoped, tag = 'internal scratch']
  %s0 = inlined_call_operand.vmem [shape: bf16[16,8], index: 0, kind: input, shape index: {}]
  %s1 = inlined_call_operand.vmem [shape: bf16[512,8], index: 1, kind: input, shape index: {}]
  %s2 = inlined_call_operand.vmem [shape: bf16[8,16], index: 2, kind: input, shape index: {}]
  %s3 = inlined_call_operand.vmem [shape: bf16[64,16,16], index: 3, kind: output, shape index: {}]
  %s4 = sld [smem:[#allocation0]]
  $region22: #{_lambda_.5} parent=0
    _
  %s6 = ssub.s32 1, %s4
  %s7 = scalar_select 0, %s6, %s4
  // Predicated region
  $region2: #{_lambda_.5} parent=0 // pred_check
    _
  $region3: #{_lambda_.5} parent=0 // pred_check_branch
    %9 = sbr.rel (0) target = $region5
  $region4: #{_lambda_.5} parent=0 // pred_region
    _
  $region5: #{_lambda_.5} parent=0 // pred_fallthru
    _
  // Predicated region
  $region6: #{_lambda_.5} parent=0 // pred_check
    _
  $region7: #{_lambda_.5} parent=0 // pred_check_branch
    %11 = sbr.rel (0) target = $region9
  $region8: #{_lambda_.5} parent=0 // pred_region
    _
  $region9: #{_lambda_.5} parent=0 // pred_fallthru
    _
  // Predicated region
  $region10: #{_lambda_.5} parent=0 // pred_check
    _
  $region11: #{_lambda_.5} parent=0 // pred_check_branch
    %13 = sbr.rel (0) target = $region13
  $region12: #{_lambda_.5} parent=0 // pred_region
    _
  $region13: #{_lambda_.5} parent=0 // pred_fallthru
    _
  %v15 = vld [vmem:[%s0] sm:$0xf]
  %v16 = vld [vmem:[%s0 + $0x4] sm:$0xf]
  %v17 = vld [vmem:[%s1] sm:$0xf]
  %v18 = vld [vmem:[%s1 + $0x4] sm:$0xf]
  %v19 = vld [vmem:[%s1 + $0x8] sm:$0xf]
  %v20 = vld [vmem:[%s1 + $0xc] sm:$0xf]
  %v21 = vld [vmem:[%s1 + $0x10] sm:$0xf]
  %v22 = vld [vmem:[%s1 + $0x14] sm:$0xf]
  %v23 = vld [vmem:[%s1 + $0x18] sm:$0xf]
  %v24 = vld [vmem:[%s1 + $0x1c] sm:$0xf]
  %v25 = vld [vmem:[%s1 + $0x20] sm:$0xf]
  %v26 = vld [vmem:[%s1 + $0x24] sm:$0xf]
  %v27 = vld [vmem:[%s1 + $0x28] sm:$0xf]
  %v28 = vld [vmem:[%s1 + $0x2c] sm:$0xf]
  %v29 = vld [vmem:[%s1 + $0x30] sm:$0xf]
  %v30 = vld [vmem:[%s1 + $0x34] sm:$0xf]
  %v31 = vld [vmem:[%s1 + $0x38] sm:$0xf]
  %v32 = vld [vmem:[%s1 + $0x3c] sm:$0xf]
  %v33 = vld [vmem:[%s1 + $0x40] sm:$0xf]
  %v34 = vld [vmem:[%s1 + $0x44] sm:$0xf]
  %v35 = vld [vmem:[%s1 + $0x48] sm:$0xf]
  %v36 = vld [vmem:[%s1 + $0x4c] sm:$0xf]
  %v37 = vld [vmem:[%s1 + $0x50] sm:$0xf]
  %v38 = vld [vmem:[%s1 + $0x54] sm:$0xf]
  %v39 = vld [vmem:[%s1 + $0x58] sm:$0xf]
  %v40 = vld [vmem:[%s1 + $0x5c] sm:$0xf]
  %v41 = vld [vmem:[%s1 + $0x60] sm:$0xf]
  %v42 = vld [vmem:[%s1 + $0x64] sm:$0xf]
  %v43 = vld [vmem:[%s1 + $0x68] sm:$0xf]
  %v44 = vld [vmem:[%s1 + $0x6c] sm:$0xf]
  %v45 = vld [vmem:[%s1 + $0x70] sm:$0xf]
  %v46 = vld [vmem:[%s1 + $0x74] sm:$0xf]
  %v47 = vld [vmem:[%s1 + $0x78] sm:$0xf]
  %v48 = vld [vmem:[%s1 + $0x7c] sm:$0xf]
  %v49 = vld [vmem:[%s1 + $0x80] sm:$0xf]
  %v50 = vld [vmem:[%s1 + $0x84] sm:$0xf]
  %v51 = vld [vmem:[%s1 + $0x88] sm:$0xf]
  %v52 = vld [vmem:[%s1 + $0x8c] sm:$0xf]
  %v53 = vld [vmem:[%s1 + $0x90] sm:$0xf]
  %v54 = vld [vmem:[%s1 + $0x94] sm:$0xf]
  %v55 = vld [vmem:[%s1 + $0x98] sm:$0xf]
  %v56 = vld [vmem:[%s1 + $0x9c] sm:$0xf]
  %v57 = vld [vmem:[%s1 + $0xa0] sm:$0xf]
  %v58 = vld [vmem:[%s1 + $0xa4] sm:$0xf]
  %v59 = vld [vmem:[%s1 + $0xa8] sm:$0xf]
  %v60 = vld [vmem:[%s1 + $0xac] sm:$0xf]
  %v61 = vld [vmem:[%s1 + $0xb0] sm:$0xf]
  %v62 = vld [vmem:[%s1 + $0xb4] sm:$0xf]
  %v63 = vld [vmem:[%s1 + $0xb8] sm:$0xf]
  %v64 = vld [vmem:[%s1 + $0xbc] sm:$0xf]
  %v65 = vld [vmem:[%s1 + $0xc0] sm:$0xf]
  %v66 = vld [vmem:[%s1 + $0xc4] sm:$0xf]
  %v67 = vld [vmem:[%s1 + $0xc8] sm:$0xf]
  %v68 = vld [vmem:[%s1 + $0xcc] sm:$0xf]
  %v69 = vld [vmem:[%s1 + $0xd0] sm:$0xf]
  %v70 = vld [vmem:[%s1 + $0xd4] sm:$0xf]
  %v71 = vld [vmem:[%s1 + $0xd8] sm:$0xf]
  %v72 = vld [vmem:[%s1 + $0xdc] sm:$0xf]
  %v73 = vld [vmem:[%s1 + $0xe0] sm:$0xf]
  %v74 = vld [vmem:[%s1 + $0xe4] sm:$0xf]
  %v75 = vld [vmem:[%s1 + $0xe8] sm:$0xf]
  %v76 = vld [vmem:[%s1 + $0xec] sm:$0xf]
  %v77 = vld [vmem:[%s1 + $0xf0] sm:$0xf]
  %v78 = vld [vmem:[%s1 + $0xf4] sm:$0xf]
  %v79 = vld [vmem:[%s1 + $0xf8] sm:$0xf]
  %v80 = vld [vmem:[%s1 + $0xfc] sm:$0xf]
  %v81 = vld [vmem:[%s2] sm:$0xf]
  %v146 = vunpack.c.l.b16 %v17
  %v147 = vunpack.c.l.b16 %v18
  %v148 = vunpack.c.l.b16 %v19
  %v149 = vunpack.c.l.b16 %v20
  %v150 = vunpack.c.l.b16 %v21
  %v151 = vunpack.c.l.b16 %v22
  %v152 = vunpack.c.l.b16 %v23
  %v153 = vunpack.c.l.b16 %v24
  %v154 = vunpack.c.l.b16 %v25
  %v155 = vunpack.c.l.b16 %v26
  %v156 = vunpack.c.l.b16 %v27
  %v157 = vunpack.c.l.b16 %v28
  %v158 = vunpack.c.l.b16 %v29
  %v159 = vunpack.c.l.b16 %v30
  %v160 = vunpack.c.l.b16 %v31
  %v161 = vunpack.c.l.b16 %v32
  %v162 = vunpack.c.l.b16 %v33
  %v163 = vunpack.c.l.b16 %v34
  %v164 = vunpack.c.l.b16 %v35
  %v165 = vunpack.c.l.b16 %v36
  %v166 = vunpack.c.l.b16 %v37
  %v167 = vunpack.c.l.b16 %v38
  %v168 = vunpack.c.l.b16 %v39
  %v169 = vunpack.c.l.b16 %v40
  %v170 = vunpack.c.l.b16 %v41
  %v171 = vunpack.c.l.b16 %v42
  %v172 = vunpack.c.l.b16 %v43
  %v173 = vunpack.c.l.b16 %v44
  %v174 = vunpack.c.l.b16 %v45
  %v175 = vunpack.c.l.b16 %v46
  %v176 = vunpack.c.l.b16 %v47
  %v177 = vunpack.c.l.b16 %v48
  %v178 = vunpack.c.l.b16 %v49
  %v179 = vunpack.c.l.b16 %v50
  %v180 = vunpack.c.l.b16 %v51
  %v181 = vunpack.c.l.b16 %v52
  %v182 = vunpack.c.l.b16 %v53
  %v183 = vunpack.c.l.b16 %v54
  %v184 = vunpack.c.l.b16 %v55
  %v185 = vunpack.c.l.b16 %v56
  %v186 = vunpack.c.l.b16 %v57
  %v187 = vunpack.c.l.b16 %v58
  %v188 = vunpack.c.l.b16 %v59
  %v189 = vunpack.c.l.b16 %v60
  %v190 = vunpack.c.l.b16 %v61
  %v191 = vunpack.c.l.b16 %v62
  %v192 = vunpack.c.l.b16 %v63
  %v193 = vunpack.c.l.b16 %v64
  %v194 = vunpack.c.l.b16 %v65
  %v195 = vunpack.c.l.b16 %v66
  %v196 = vunpack.c.l.b16 %v67
  %v197 = vunpack.c.l.b16 %v68
  %v198 = vunpack.c.l.b16 %v69
  %v199 = vunpack.c.l.b16 %v70
  %v200 = vunpack.c.l.b16 %v71
  %v201 = vunpack.c.l.b16 %v72
  %v202 = vunpack.c.l.b16 %v73
  %v203 = vunpack.c.l.b16 %v74
  %v204 = vunpack.c.l.b16 %v75
  %v205 = vunpack.c.l.b16 %v76
  %v206 = vunpack.c.l.b16 %v77
  %v207 = vunpack.c.l.b16 %v78
  %v208 = vunpack.c.l.b16 %v79
  %v209 = vunpack.c.l.b16 %v80
  %v210 = vpack.c.b16 %v147, %v146
  %v211 = vpack.c.b16 %v149, %v148
  %v212 = vpack.c.b16 %v151, %v150
  %v213 = vpack.c.b16 %v153, %v152
  %v214 = vpack.c.b16 %v155, %v154
  %v215 = vpack.c.b16 %v157, %v156
  %v216 = vpack.c.b16 %v159, %v158
  %v217 = vpack.c.b16 %v161, %v160
  %v218 = vpack.c.b16 %v163, %v162
  %v219 = vpack.c.b16 %v165, %v164
  %v220 = vpack.c.b16 %v167, %v166
  %v221 = vpack.c.b16 %v169, %v168
  %v222 = vpack.c.b16 %v171, %v170
  %v223 = vpack.c.b16 %v173, %v172
  %v224 = vpack.c.b16 %v175, %v174
  %v225 = vpack.c.b16 %v177, %v176
  %v226 = vpack.c.b16 %v179, %v178
  %v227 = vpack.c.b16 %v181, %v180
  %v228 = vpack.c.b16 %v183, %v182
  %v229 = vpack.c.b16 %v185, %v184
  %v230 = vpack.c.b16 %v187, %v186
  %v231 = vpack.c.b16 %v189, %v188
  %v232 = vpack.c.b16 %v191, %v190
  %v233 = vpack.c.b16 %v193, %v192
  %v234 = vpack.c.b16 %v195, %v194
  %v235 = vpack.c.b16 %v197, %v196
  %v236 = vpack.c.b16 %v199, %v198
  %v237 = vpack.c.b16 %v201, %v200
  %v238 = vpack.c.b16 %v203, %v202
  %v239 = vpack.c.b16 %v205, %v204
  %v240 = vpack.c.b16 %v207, %v206
  %v241 = vpack.c.b16 %v209, %v208
  %vm242 = vcmask 64512
  %v244 = vsel %vm242, %v210, 0
  %v247 = vsel %vm242, %v211, 0
  %v250 = vsel %vm242, %v212, 0
  %v253 = vsel %vm242, %v213, 0
  %v256 = vsel %vm242, %v214, 0
  %v259 = vsel %vm242, %v215, 0
  %v262 = vsel %vm242, %v216, 0
  %v265 = vsel %vm242, %v217, 0
  %v268 = vsel %vm242, %v218, 0
  %v271 = vsel %vm242, %v219, 0
  %v274 = vsel %vm242, %v220, 0
  %v277 = vsel %vm242, %v221, 0
  %v280 = vsel %vm242, %v222, 0
  %v283 = vsel %vm242, %v223, 0
  %v286 = vsel %vm242, %v224, 0
  %v289 = vsel %vm242, %v225, 0
  %v292 = vsel %vm242, %v226, 0
  %v295 = vsel %vm242, %v227, 0
  %v298 = vsel %vm242, %v228, 0
  %v301 = vsel %vm242, %v229, 0
  %v304 = vsel %vm242, %v230, 0
  %v307 = vsel %vm242, %v231, 0
  %v310 = vsel %vm242, %v232, 0
  %v313 = vsel %vm242, %v233, 0
  %v316 = vsel %vm242, %v234, 0
  %v319 = vsel %vm242, %v235, 0
  %v322 = vsel %vm242, %v236, 0
  %v325 = vsel %vm242, %v237, 0
  %v328 = vsel %vm242, %v238, 0
  %v331 = vsel %vm242, %v239, 0
  %v334 = vsel %vm242, %v240, 0
  %v337 = vsel %vm242, %v241, 0
  %vm339 = vcmask 1043456
  %v341 = vsel %vm339, %v81, 0
  %343 = vmatprep.subr.bf16.mxu0 0
  %344 = vmatpush1.bf16.msra.mxu0 %v341
  %345 = vmatprep.subr.bf16.mxu0 0
  %346 = vmatpush1.bf16.msra.mxu0 0
  %347 = vmatprep.subr.bf16.mxu0 0
  %348 = vmatpush1.bf16.msra.mxu0 0
  %349 = vmatprep.subr.bf16.mxu0 0
  %350 = vmatpush1.bf16.msra.mxu0 0
  %351 = vmatprep.subr.bf16.mxu0 0
  %352 = vmatpush1.bf16.msra.mxu0 0
  %353 = vmatprep.subr.bf16.mxu0 0
  %354 = vmatpush1.bf16.msra.mxu0 0
  %355 = vmatprep.subr.bf16.mxu0 0
  %356 = vmatpush1.bf16.msra.mxu0 0
  %357 = vmatprep.subr.bf16.mxu0 0
  %358 = vmatpush1.bf16.msra.mxu0 0
  %359 = vmatprep.subr.bf16.mxu0 0
  %360 = vmatpush1.bf16.msra.mxu0 0
  %361 = vmatprep.subr.bf16.mxu0 0
  %362 = vmatpush1.bf16.msra.mxu0 0
  %363 = vmatprep.subr.bf16.mxu0 0
  %364 = vmatpush1.bf16.msra.mxu0 0
  %365 = vmatprep.subr.bf16.mxu0 0
  %366 = vmatpush1.bf16.msra.mxu0 0
  %367 = vmatprep.subr.bf16.mxu0 0
  %368 = vmatpush1.bf16.msra.mxu0 0
  %369 = vmatprep.subr.bf16.mxu0 0
  %370 = vmatpush1.bf16.msra.mxu0 0
  %371 = vmatprep.subr.bf16.mxu0 0
  %372 = vmatpush1.bf16.msra.mxu0 0
  %373 = vmatprep.subr.bf16.mxu0 0
  %374 = vmatpush1.bf16.msra.mxu0 0
  %375 = vmatprep.mubr.bf16.mxu0 0
  %376 = vmatmul.mubr.bf16.gmra.mrb[0].mxu0 %v244
  %v377 = vpop.f32.mrb[0].mxu0
  %v378 = vadd.f32 0.0, %v377
  %v379 = vpop.f32.mrb[0].mxu0
  %v380 = vpop.f32.mrb[0].mxu0
  %v381 = vadd.f32 0.0, %v380
  %v382 = vpop.f32.mrb[0].mxu0
  %383 = vmatprep.mubr.bf16.mxu0 0
  %384 = vmatmul.mubr.bf16.gmra.mrb[0].mxu0 %v247
  %v385 = vpop.f32.mrb[0].mxu0
  %v386 = vadd.f32 0.0, %v385
  %v387 = vpop.f32.mrb[0].mxu0
  %v388 = vpop.f32.mrb[0].mxu0
  %v389 = vadd.f32 0.0, %v388
  %v390 = vpop.f32.mrb[0].mxu0
  %391 = vmatprep.mubr.bf16.mxu0 0
  %392 = vmatmul.mubr.bf16.gmra.mrb[0].mxu0 %v250
  %v393 = vpop.f32.mrb[0].mxu0
  %v394 = vadd.f32 0.0, %v393
  %v395 = vpop.f32.mrb[0].mxu0
  %v396 = vpop.f32.mrb[0].mxu0
  %v397 = vadd.f32 0.0, %v396
  %v398 = vpop.f32.mrb[0].mxu0
  %399 = vmatprep.mubr.bf16.mxu0 0
  %400 = vmatmul.mubr.bf16.gmra.mrb[0].mxu0 %v253
  %v401 = vpop.f32.mrb[0].mxu0
  %v402 = vadd.f32 0.0, %v401
  %v403 = vpop.f32.mrb[0].mxu0
  %v404 = vpop.f32.mrb[0].mxu0
  %v405 = vadd.f32 0.0, %v404
  %v406 = vpop.f32.mrb[0].mxu0
  %407 = vmatprep.mubr.bf16.mxu0 0
  %408 = vmatmul.mubr.bf16.gmra.mrb[0].mxu0 %v256
  %v409 = vpop.f32.mrb[0].mxu0
  %v410 = vadd.f32 0.0, %v409
  %v411 = vpop.f32.mrb[0].mxu0
  %v412 = vpop.f32.mrb[0].mxu0
  %v413 = vadd.f32 0.0, %v412
  %v414 = vpop.f32.mrb[0].mxu0
  %415 = vmatprep.mubr.bf16.mxu0 0
  %416 = vmatmul.mubr.bf16.gmra.mrb[0].mxu0 %v259
  %v417 = vpop.f32.mrb[0].mxu0
  %v418 = vadd.f32 0.0, %v417
  %v419 = vpop.f32.mrb[0].mxu0
  %v420 = vpop.f32.mrb[0].mxu0
  %v421 = vadd.f32 0.0, %v420
  %v422 = vpop.f32.mrb[0].mxu0
  %423 = vmatprep.mubr.bf16.mxu0 0
  %424 = vmatmul.mubr.bf16.gmra.mrb[0].mxu0 %v262
  %v425 = vpop.f32.mrb[0].mxu0
  %v426 = vadd.f32 0.0, %v425
  %v427 = vpop.f32.mrb[0].mxu0
  %v428 = vpop.f32.mrb[0].mxu0
  %v429 = vadd.f32 0.0, %v428
  %v430 = vpop.f32.mrb[0].mxu0
  %431 = vmatprep.mubr.bf16.mxu0 0
  %432 = vmatmul.mubr.bf16.gmra.mrb[0].mxu0 %v265
  %v433 = vpop.f32.mrb[0].mxu0
  %v434 = vadd.f32 0.0, %v433
  %v435 = vpop.f32.mrb[0].mxu0
  %v436 = vpop.f32.mrb[0].mxu0
  %v437 = vadd.f32 0.0, %v436
  %v438 = vpop.f32.mrb[0].mxu0
  %439 = vmatprep.mubr.bf16.mxu0 0
  %440 = vmatmul.mubr.bf16.gmra.mrb[0].mxu0 %v268
  %v441 = vpop.f32.mrb[0].mxu0
  %v442 = vadd.f32 0.0, %v441
  %v443 = vpop.f32.mrb[0].mxu0
  %v444 = vpop.f32.mrb[0].mxu0
  %v445 = vadd.f32 0.0, %v444
  %v446 = vpop.f32.mrb[0].mxu0
  %447 = vmatprep.mubr.bf16.mxu0 0
  %448 = vmatmul.mubr.bf16.gmra.mrb[0].mxu0 %v271
  %v449 = vpop.f32.mrb[0].mxu0
  %v450 = vadd.f32 0.0, %v449
  %v451 = vpop.f32.mrb[0].mxu0
  %v452 = vpop.f32.mrb[0].mxu0
  %v453 = vadd.f32 0.0, %v452
  %v454 = vpop.f32.mrb[0].mxu0
  %455 = vmatprep.mubr.bf16.mxu0 0
  %456 = vmatmul.mubr.bf16.gmra.mrb[0].mxu0 %v274
  %v457 = vpop.f32.mrb[0].mxu0
  %v458 = vadd.f32 0.0, %v457
  %v459 = vpop.f32.mrb[0].mxu0
  %v460 = vpop.f32.mrb[0].mxu0
  %v461 = vadd.f32 0.0, %v460
  %v462 = vpop.f32.mrb[0].mxu0
  %463 = vmatprep.mubr.bf16.mxu0 0
  %464 = vmatmul.mubr.bf16.gmra.mrb[0].mxu0 %v277
  %v465 = vpop.f32.mrb[0].mxu0
  %v466 = vadd.f32 0.0, %v465
  %v467 = vpop.f32.mrb[0].mxu0
  %v468 = vpop.f32.mrb[0].mxu0
  %v469 = vadd.f32 0.0, %v468
  %v470 = vpop.f32.mrb[0].mxu0
  %471 = vmatprep.mubr.bf16.mxu0 0
  %472 = vmatmul.mubr.bf16.gmra.mrb[0].mxu0 %v280
  %v473 = vpop.f32.mrb[0].mxu0
  %v474 = vadd.f32 0.0, %v473
  %v475 = vpop.f32.mrb[0].mxu0
  %v476 = vpop.f32.mrb[0].mxu0
  %v477 = vadd.f32 0.0, %v476
  %v478 = vpop.f32.mrb[0].mxu0
  %479 = vmatprep.mubr.bf16.mxu0 0
  %480 = vmatmul.mubr.bf16.gmra.mrb[0].mxu0 %v283
  %v481 = vpop.f32.mrb[0].mxu0
  %v482 = vadd.f32 0.0, %v481
  %v483 = vpop.f32.mrb[0].mxu0
  %v484 = vpop.f32.mrb[0].mxu0
  %v485 = vadd.f32 0.0, %v484
  %v486 = vpop.f32.mrb[0].mxu0
  %487 = vmatprep.mubr.bf16.mxu0 0
  %488 = vmatmul.mubr.bf16.gmra.mrb[0].mxu0 %v286
  %v489 = vpop.f32.mrb[0].mxu0
  %v490 = vadd.f32 0.0, %v489
  %v491 = vpop.f32.mrb[0].mxu0
  %v492 = vpop.f32.mrb[0].mxu0
  %v493 = vadd.f32 0.0, %v492
  %v494 = vpop.f32.mrb[0].mxu0
  %495 = vmatprep.mubr.bf16.mxu0 0
  %496 = vmatmul.mubr.bf16.gmra.mrb[0].mxu0 %v289
  %v497 = vpop.f32.mrb[0].mxu0
  %v498 = vadd.f32 0.0, %v497
  %v499 = vpop.f32.mrb[0].mxu0
  %v500 = vpop.f32.mrb[0].mxu0
  %v501 = vadd.f32 0.0, %v500
  %v502 = vpop.f32.mrb[0].mxu0
  %503 = vmatprep.mubr.bf16.mxu0 0
  %504 = vmatmul.mubr.bf16.gmra.mrb[0].mxu0 %v292
  %v505 = vpop.f32.mrb[0].mxu0
  %v506 = vadd.f32 0.0, %v505
  %v507 = vpop.f32.mrb[0].mxu0
  %v508 = vpop.f32.mrb[0].mxu0
  %v509 = vadd.f32 0.0, %v508
  %v510 = vpop.f32.mrb[0].mxu0
  %511 = vmatprep.mubr.bf16.mxu0 0
  %512 = vmatmul.mubr.bf16.gmra.mrb[0].mxu0 %v295
  %v513 = vpop.f32.mrb[0].mxu0
  %v514 = vadd.f32 0.0, %v513
  %v515 = vpop.f32.mrb[0].mxu0
  %v516 = vpop.f32.mrb[0].mxu0
  %v517 = vadd.f32 0.0, %v516
  %v518 = vpop.f32.mrb[0].mxu0
  %519 = vmatprep.mubr.bf16.mxu0 0
  %520 = vmatmul.mubr.bf16.gmra.mrb[0].mxu0 %v298
  %v521 = vpop.f32.mrb[0].mxu0
  %v522 = vadd.f32 0.0, %v521
  %v523 = vpop.f32.mrb[0].mxu0
  %v524 = vpop.f32.mrb[0].mxu0
  %v525 = vadd.f32 0.0, %v524
  %v526 = vpop.f32.mrb[0].mxu0
  %527 = vmatprep.mubr.bf16.mxu0 0
  %528 = vmatmul.mubr.bf16.gmra.mrb[0].mxu0 %v301
  %v529 = vpop.f32.mrb[0].mxu0
  %v530 = vadd.f32 0.0, %v529
  %v531 = vpop.f32.mrb[0].mxu0
  %v532 = vpop.f32.mrb[0].mxu0
  %v533 = vadd.f32 0.0, %v532
  %v534 = vpop.f32.mrb[0].mxu0
  %535 = vmatprep.mubr.bf16.mxu0 0
  %536 = vmatmul.mubr.bf16.gmra.mrb[0].mxu0 %v304
  %v537 = vpop.f32.mrb[0].mxu0
  %v538 = vadd.f32 0.0, %v537
  %v539 = vpop.f32.mrb[0].mxu0
  %v540 = vpop.f32.mrb[0].mxu0
  %v541 = vadd.f32 0.0, %v540
  %v542 = vpop.f32.mrb[0].mxu0
  %543 = vmatprep.mubr.bf16.mxu0 0
  %544 = vmatmul.mubr.bf16.gmra.mrb[0].mxu0 %v307
  %v545 = vpop.f32.mrb[0].mxu0
  %v546 = vadd.f32 0.0, %v545
  %v547 = vpop.f32.mrb[0].mxu0
  %v548 = vpop.f32.mrb[0].mxu0
  %v549 = vadd.f32 0.0, %v548
  %v550 = vpop.f32.mrb[0].mxu0
  %551 = vmatprep.mubr.bf16.mxu0 0
  %552 = vmatmul.mubr.bf16.gmra.mrb[0].mxu0 %v310
  %v553 = vpop.f32.mrb[0].mxu0
  %v554 = vadd.f32 0.0, %v553
  %v555 = vpop.f32.mrb[0].mxu0
  %v556 = vpop.f32.mrb[0].mxu0
  %v557 = vadd.f32 0.0, %v556
  %v558 = vpop.f32.mrb[0].mxu0
  %559 = vmatprep.mubr.bf16.mxu0 0
  %560 = vmatmul.mubr.bf16.gmra.mrb[0].mxu0 %v313
  %v561 = vpop.f32.mrb[0].mxu0
  %v562 = vadd.f32 0.0, %v561
  %v563 = vpop.f32.mrb[0].mxu0
  %v564 = vpop.f32.mrb[0].mxu0
  %v565 = vadd.f32 0.0, %v564
  %v566 = vpop.f32.mrb[0].mxu0
  %567 = vmatprep.mubr.bf16.mxu0 0
  %568 = vmatmul.mubr.bf16.gmra.mrb[0].mxu0 %v316
  %v569 = vpop.f32.mrb[0].mxu0
  %v570 = vadd.f32 0.0, %v569
  %v571 = vpop.f32.mrb[0].mxu0
  %v572 = vpop.f32.mrb[0].mxu0
  %v573 = vadd.f32 0.0, %v572
  %v574 = vpop.f32.mrb[0].mxu0
  %575 = vmatprep.mubr.bf16.mxu0 0
  %576 = vmatmul.mubr.bf16.gmra.mrb[0].mxu0 %v319
  %v577 = vpop.f32.mrb[0].mxu0
  %v578 = vadd.f32 0.0, %v577
  %v579 = vpop.f32.mrb[0].mxu0
  %v580 = vpop.f32.mrb[0].mxu0
  %v581 = vadd.f32 0.0, %v580
  %v582 = vpop.f32.mrb[0].mxu0
  %583 = vmatprep.mubr.bf16.mxu0 0
  %584 = vmatmul.mubr.bf16.gmra.mrb[0].mxu0 %v322
  %v585 = vpop.f32.mrb[0].mxu0
  %v586 = vadd.f32 0.0, %v585
  %v587 = vpop.f32.mrb[0].mxu0
  %v588 = vpop.f32.mrb[0].mxu0
  %v589 = vadd.f32 0.0, %v588
  %v590 = vpop.f32.mrb[0].mxu0
  %591 = vmatprep.mubr.bf16.mxu0 0
  %592 = vmatmul.mubr.bf16.gmra.mrb[0].mxu0 %v325
  %v593 = vpop.f32.mrb[0].mxu0
  %v594 = vadd.f32 0.0, %v593
  %v595 = vpop.f32.mrb[0].mxu0
  %v596 = vpop.f32.mrb[0].mxu0
  %v597 = vadd.f32 0.0, %v596
  %v598 = vpop.f32.mrb[0].mxu0
  %599 = vmatprep.mubr.bf16.mxu0 0
  %600 = vmatmul.mubr.bf16.gmra.mrb[0].mxu0 %v328
  %v601 = vpop.f32.mrb[0].mxu0
  %v602 = vadd.f32 0.0, %v601
  %v603 = vpop.f32.mrb[0].mxu0
  %v604 = vpop.f32.mrb[0].mxu0
  %v605 = vadd.f32 0.0, %v604
  %v606 = vpop.f32.mrb[0].mxu0
  %607 = vmatprep.mubr.bf16.mxu0 0
  %608 = vmatmul.mubr.bf16.gmra.mrb[0].mxu0 %v331
  %v609 = vpop.f32.mrb[0].mxu0
  %v610 = vadd.f32 0.0, %v609
  %v611 = vpop.f32.mrb[0].mxu0
  %v612 = vpop.f32.mrb[0].mxu0
  %v613 = vadd.f32 0.0, %v612
  %v614 = vpop.f32.mrb[0].mxu0
  %615 = vmatprep.mubr.bf16.mxu0 0
  %616 = vmatmul.mubr.bf16.gmra.mrb[0].mxu0 %v334
  %v617 = vpop.f32.mrb[0].mxu0
  %v618 = vadd.f32 0.0, %v617
  %v619 = vpop.f32.mrb[0].mxu0
  %v620 = vpop.f32.mrb[0].mxu0
  %v621 = vadd.f32 0.0, %v620
  %v622 = vpop.f32.mrb[0].mxu0
  %623 = vmatprep.mubr.bf16.mxu0 0
  %624 = vmatmul.mubr.bf16.gmra.mrb[0].mxu0 %v337
  %v625 = vpop.f32.mrb[0].mxu0
  %v626 = vadd.f32 0.0, %v625
  %v627 = vpop.f32.mrb[0].mxu0
  %v628 = vpop.f32.mrb[0].mxu0
  %v629 = vadd.f32 0.0, %v628
  %v630 = vpop.f32.mrb[0].mxu0
  %631 = vdwg.mxu0
  %v632 = vpack.c.bf16 %v381, %v378
  %v633 = vpack.c.bf16 %v389, %v386
  %v634 = vpack.c.bf16 %v397, %v394
  %v635 = vpack.c.bf16 %v405, %v402
  %v636 = vpack.c.bf16 %v413, %v410
  %v637 = vpack.c.bf16 %v421, %v418
  %v638 = vpack.c.bf16 %v429, %v426
  %v639 = vpack.c.bf16 %v437, %v434
  %v640 = vpack.c.bf16 %v445, %v442
  %v641 = vpack.c.bf16 %v453, %v450
  %v642 = vpack.c.bf16 %v461, %v458
  %v643 = vpack.c.bf16 %v469, %v466
  %v644 = vpack.c.bf16 %v477, %v474
  %v645 = vpack.c.bf16 %v485, %v482
  %v646 = vpack.c.bf16 %v493, %v490
  %v647 = vpack.c.bf16 %v501, %v498
  %v648 = vpack.c.bf16 %v509, %v506
  %v649 = vpack.c.bf16 %v517, %v514
  %v650 = vpack.c.bf16 %v525, %v522
  %v651 = vpack.c.bf16 %v533, %v530
  %v652 = vpack.c.bf16 %v541, %v538
  %v653 = vpack.c.bf16 %v549, %v546
  %v654 = vpack.c.bf16 %v557, %v554
  %v655 = vpack.c.bf16 %v565, %v562
  %v656 = vpack.c.bf16 %v573, %v570
  %v657 = vpack.c.bf16 %v581, %v578
  %v658 = vpack.c.bf16 %v589, %v586
  %v659 = vpack.c.bf16 %v597, %v594
  %v660 = vpack.c.bf16 %v605, %v602
  %v661 = vpack.c.bf16 %v613, %v610
  %v662 = vpack.c.bf16 %v621, %v618
  %v663 = vpack.c.bf16 %v629, %v626
  %v666 = vunpack.c.l.b16 %v15
  %v667 = vunpack.c.l.b16 %v16
  %v668 = vpack.c.b16 %v667, %v666
  %v670 = vsel %vm242, %v668, 0
  %v673 = vsel %vm339, %v632, 0
  %675 = vmatprep.subr.bf16.mxu0 0
  %676 = vmatpush1.bf16.msra.mxu0 %v673
  %677 = vmatprep.subr.bf16.mxu0 0
  %678 = vmatpush1.bf16.msra.mxu0 0
  %679 = vmatprep.subr.bf16.mxu0 0
  %680 = vmatpush1.bf16.msra.mxu0 0
  %681 = vmatprep.subr.bf16.mxu0 0
  %682 = vmatpush1.bf16.msra.mxu0 0
  %683 = vmatprep.subr.bf16.mxu0 0
  %684 = vmatpush1.bf16.msra.mxu0 0
  %685 = vmatprep.subr.bf16.mxu0 0
  %686 = vmatpush1.bf16.msra.mxu0 0
  %687 = vmatprep.subr.bf16.mxu0 0
  %688 = vmatpush1.bf16.msra.mxu0 0
  %689 = vmatprep.subr.bf16.mxu0 0
  %690 = vmatpush1.bf16.msra.mxu0 0
  %691 = vmatprep.subr.bf16.mxu0 0
  %692 = vmatpush1.bf16.msra.mxu0 0
  %693 = vmatprep.subr.bf16.mxu0 0
  %694 = vmatpush1.bf16.msra.mxu0 0
  %695 = vmatprep.subr.bf16.mxu0 0
  %696 = vmatpush1.bf16.msra.mxu0 0
  %697 = vmatprep.subr.bf16.mxu0 0
  %698 = vmatpush1.bf16.msra.mxu0 0
  %699 = vmatprep.subr.bf16.mxu0 0
  %700 = vmatpush1.bf16.msra.mxu0 0
  %701 = vmatprep.subr.bf16.mxu0 0
  %702 = vmatpush1.bf16.msra.mxu0 0
  %703 = vmatprep.subr.bf16.mxu0 0
  %704 = vmatpush1.bf16.msra.mxu0 0
  %705 = vmatprep.subr.bf16.mxu0 0
  %706 = vmatpush1.bf16.msra.mxu0 0
  %707 = vmatprep.mubr.bf16.mxu0 0
  %708 = vmatmul.mubr.bf16.gmra.mrb[0].mxu0 %v670
  %v709 = vpop.f32.mrb[0].mxu0
  %v710 = vadd.f32 0.0, %v709
  %v711 = vpop.f32.mrb[0].mxu0
  %v712 = vpop.f32.mrb[0].mxu0
  %v713 = vadd.f32 0.0, %v712
  %v714 = vpop.f32.mrb[0].mxu0
  %715 = vdwg.mxu0
  %v716 = vpack.c.bf16 %v713, %v710
  %v718 = vunpack.c.l.b16 %v716
  %v719 = vunpack.c.h.b16 %v716
  %v720 = vpack.c.b16 %v718, %v718
  %v721 = vpack.c.b16 %v719, %v719
  %vm724 = vcmask 125952
  %725 = vst.msk [vmem:[%s3] sm:$0xf] %vm724, %v720
  %726 = vst.msk [vmem:[%s3 + $0x4] sm:$0xf] %vm724, %v721
  %v728 = vrot.slane %v632, 4
  %v730 = vsel %vm339, %v728, 0
  %732 = vmatprep.subr.bf16.mxu0 0
  %733 = vmatpush1.bf16.msra.mxu0 %v730
  %734 = vmatprep.subr.bf16.mxu0 0
  %735 = vmatpush1.bf16.msra.mxu0 0
  %736 = vmatprep.subr.bf16.mxu0 0
  %737 = vmatpush1.bf16.msra.mxu0 0
  %738 = vmatprep.subr.bf16.mxu0 0
  %739 = vmatpush1.bf16.msra.mxu0 0
  %740 = vmatprep.subr.bf16.mxu0 0
  %741 = vmatpush1.bf16.msra.mxu0 0
  %742 = vmatprep.subr.bf16.mxu0 0
  %743 = vmatpush1.bf16.msra.mxu0 0
  %744 = vmatprep.subr.bf16.mxu0 0
  %745 = vmatpush1.bf16.msra.mxu0 0
  %746 = vmatprep.subr.bf16.mxu0 0
  %747 = vmatpush1.bf16.msra.mxu0 0
  %748 = vmatprep.subr.bf16.mxu0 0
  %749 = vmatpush1.bf16.msra.mxu0 0
  %750 = vmatprep.subr.bf16.mxu0 0
  %751 = vmatpush1.bf16.msra.mxu0 0
  %752 = vmatprep.subr.bf16.mxu0 0
  %753 = vmatpush1.bf16.msra.mxu0 0
  %754 = vmatprep.subr.bf16.mxu0 0
  %755 = vmatpush1.bf16.msra.mxu0 0
  %756 = vmatprep.subr.bf16.mxu0 0
  %757 = vmatpush1.bf16.msra.mxu0 0
  %758 = vmatprep.subr.bf16.mxu0 0
  %759 = vmatpush1.bf16.msra.mxu0 0
  %760 = vmatprep.subr.bf16.mxu0 0
  %761 = vmatpush1.bf16.msra.mxu0 0
  %762 = vmatprep.subr.bf16.mxu0 0
  %763 = vmatpush1.bf16.msra.mxu0 0
  %764 = vmatprep.mubr.bf16.mxu0 0
  %765 = vmatmul.mubr.bf16.gmra.mrb[0].mxu0 %v670
  %v766 = vpop.f32.mrb[0].mxu0
  %v767 = vadd.f32 0.0, %v766
  %v768 = vpop.f32.mrb[0].mxu0
  %v769 = vpop.f32.mrb[0].mxu0
  %v770 = vadd.f32 0.0, %v769
  %v771 = vpop.f32.mrb[0].mxu0
  %772 = vdwg.mxu0
  %v773 = vpack.c.bf16 %v770, %v767
  %v775 = vunpack.c.l.b16 %v773
  %v776 = vunpack.c.h.b16 %v773
  %v777 = vpack.c.b16 %v775, %v775
  %v778 = vpack.c.b16 %v776, %v776
  %s781 = scalar_lea.vmem %s3, 8
  %782 = vst.msk [vmem:[%s781] sm:$0xf] %vm724, %v777
  %783 = vst.msk [vmem:[%s781 + $0x4] sm:$0xf] %vm724, %v778
  %v785 = vsel %vm339, %v633, 0
  %787 = vmatprep.subr.bf16.mxu0 0
  %788 = vmatpush1.bf16.msra.mxu0 %v785
  %789 = vmatprep.subr.bf16.mxu0 0
  %790 = vmatpush1.bf16.msra.mxu0 0
  %791 = vmatprep.subr.bf16.mxu0 0
  %792 = vmatpush1.bf16.msra.mxu0 0
  %793 = vmatprep.subr.bf16.mxu0 0
  %794 = vmatpush1.bf16.msra.mxu0 0
  %795 = vmatprep.subr.bf16.mxu0 0
  %796 = vmatpush1.bf16.msra.mxu0 0
  %797 = vmatprep.subr.bf16.mxu0 0
  %798 = vmatpush1.bf16.msra.mxu0 0
  %799 = vmatprep.subr.bf16.mxu0 0
  %800 = vmatpush1.bf16.msra.mxu0 0
  %801 = vmatprep.subr.bf16.mxu0 0
  %802 = vmatpush1.bf16.msra.mxu0 0
  %803 = vmatprep.subr.bf16.mxu0 0
  %804 = vmatpush1.bf16.msra.mxu0 0
  %805 = vmatprep.subr.bf16.mxu0 0
  %806 = vmatpush1.bf16.msra.mxu0 0
  %807 = vmatprep.subr.bf16.mxu0 0
  %808 = vmatpush1.bf16.msra.mxu0 0
  %809 = vmatprep.subr.bf16.mxu0 0
  %810 = vmatpush1.bf16.msra.mxu0 0
  %811 = vmatprep.subr.bf16.mxu0 0
  %812 = vmatpush1.bf16.msra.mxu0 0
  %813 = vmatprep.subr.bf16.mxu0 0
  %814 = vmatpush1.bf16.msra.mxu0 0
  %815 = vmatprep.subr.bf16.mxu0 0
  %816 = vmatpush1.bf16.msra.mxu0 0
  %817 = vmatprep.subr.bf16.mxu0 0
  %818 = vmatpush1.bf16.msra.mxu0 0
  %819 = vmatprep.mubr.bf16.mxu0 0
  %820 = vmatmul.mubr.bf16.gmra.mrb[0].mxu0 %v670
  %v821 = vpop.f32.mrb[0].mxu0
  %v822 = vadd.f32 0.0, %v821
  %v823 = vpop.f32.mrb[0].mxu0
  %v824 = vpop.f32.mrb[0].mxu0
  %v825 = vadd.f32 0.0, %v824
  %v826 = vpop.f32.mrb[0].mxu0
  %827 = vdwg.mxu0
  %v828 = vpack.c.bf16 %v825, %v822
  %v830 = vunpack.c.l.b16 %v828
  %v831 = vunpack.c.h.b16 %v828
  %v832 = vpack.c.b16 %v830, %v830
  %v833 = vpack.c.b16 %v831, %v831
  %s836 = scalar_lea.vmem %s3, 16
  %837 = vst.msk [vmem:[%s836] sm:$0xf] %vm724, %v832
  %838 = vst.msk [vmem:[%s836 + $0x4] sm:$0xf] %vm724, %v833
  %v840 = vrot.slane %v633, 4
  %v842 = vsel %vm339, %v840, 0
  %844 = vmatprep.subr.bf16.mxu0 0
  %845 = vmatpush1.bf16.msra.mxu0 %v842
  %846 = vmatprep.subr.bf16.mxu0 0
  %847 = vmatpush1.bf16.msra.mxu0 0
  %848 = vmatprep.subr.bf16.mxu0 0
  %849 = vmatpush1.bf16.msra.mxu0 0
  %850 = vmatprep.subr.bf16.mxu0 0
  %851 = vmatpush1.bf16.msra.mxu0 0
  %852 = vmatprep.subr.bf16.mxu0 0
  %853 = vmatpush1.bf16.msra.mxu0 0
  %854 = vmatprep.subr.bf16.mxu0 0
  %855 = vmatpush1.bf16.msra.mxu0 0
  %856 = vmatprep.subr.bf16.mxu0 0
  %857 = vmatpush1.bf16.msra.mxu0 0
  %858 = vmatprep.subr.bf16.mxu0 0
  %859 = vmatpush1.bf16.msra.mxu0 0
  %860 = vmatprep.subr.bf16.mxu0 0
  %861 = vmatpush1.bf16.msra.mxu0 0
  %862 = vmatprep.subr.bf16.mxu0 0
  %863 = vmatpush1.bf16.msra.mxu0 0
  %864 = vmatprep.subr.bf16.mxu0 0
  %865 = vmatpush1.bf16.msra.mxu0 0
  %866 = vmatprep.subr.bf16.mxu0 0
  %867 = vmatpush1.bf16.msra.mxu0 0
  %868 = vmatprep.subr.bf16.mxu0 0
  %869 = vmatpush1.bf16.msra.mxu0 0
  %870 = vmatprep.subr.bf16.mxu0 0
  %871 = vmatpush1.bf16.msra.mxu0 0
  %872 = vmatprep.subr.bf16.mxu0 0
  %873 = vmatpush1.bf16.msra.mxu0 0
  %874 = vmatprep.subr.bf16.mxu0 0
  %875 = vmatpush1.bf16.msra.mxu0 0
  %876 = vmatprep.mubr.bf16.mxu0 0
  %877 = vmatmul.mubr.bf16.gmra.mrb[0].mxu0 %v670
  %v878 = vpop.f32.mrb[0].mxu0
  %v879 = vadd.f32 0.0, %v878
  %v880 = vpop.f32.mrb[0].mxu0
  %v881 = vpop.f32.mrb[0].mxu0
  %v882 = vadd.f32 0.0, %v881
  %v883 = vpop.f32.mrb[0].mxu0
  %884 = vdwg.mxu0
  %v885 = vpack.c.bf16 %v882, %v879
  %v887 = vunpack.c.l.b16 %v885
  %v888 = vunpack.c.h.b16 %v885
  %v889 = vpack.c.b16 %v887, %v887
  %v890 = vpack.c.b16 %v888, %v888
  %s893 = scalar_lea.vmem %s3, 24
  %894 = vst.msk [vmem:[%s893] sm:$0xf] %vm724, %v889
  %895 = vst.msk [vmem:[%s893 + $0x4] sm:$0xf] %vm724, %v890
  %v897 = vsel %vm339, %v634, 0
  %899 = vmatprep.subr.bf16.mxu0 0
  %900 = vmatpush1.bf16.msra.mxu0 %v897
  %901 = vmatprep.subr.bf16.mxu0 0
  %902 = vmatpush1.bf16.msra.mxu0 0
  %903 = vmatprep.subr.bf16.mxu0 0
  %904 = vmatpush1.bf16.msra.mxu0 0
  %905 = vmatprep.subr.bf16.mxu0 0
  %906 = vmatpush1.bf16.msra.mxu0 0
  %907 = vmatprep.subr.bf16.mxu0 0
  %908 = vmatpush1.bf16.msra.mxu0 0
  %909 = vmatprep.subr.bf16.mxu0 0
  %910 = vmatpush1.bf16.msra.mxu0 0
  %911 = vmatprep.subr.bf16.mxu0 0
  %912 = vmatpush1.bf16.msra.mxu0 0
  %913 = vmatprep.subr.bf16.mxu0 0
  %914 = vmatpush1.bf16.msra.mxu0 0
  %915 = vmatprep.subr.bf16.mxu0 0
  %916 = vmatpush1.bf16.msra.mxu0 0
  %917 = vmatprep.subr.bf16.mxu0 0
  %918 = vmatpush1.bf16.msra.mxu0 0
  %919 = vmatprep.subr.bf16.mxu0 0
  %920 = vmatpush1.bf16.msra.mxu0 0
  %921 = vmatprep.subr.bf16.mxu0 0
  %922 = vmatpush1.bf16.msra.mxu0 0
  %923 = vmatprep.subr.bf16.mxu0 0
  %924 = vmatpush1.bf16.msra.mxu0 0
  %925 = vmatprep.subr.bf16.mxu0 0
  %926 = vmatpush1.bf16.msra.mxu0 0
  %927 = vmatprep.subr.bf16.mxu0 0
  %928 = vmatpush1.bf16.msra.mxu0 0
  %929 = vmatprep.subr.bf16.mxu0 0
  %930 = vmatpush1.bf16.msra.mxu0 0
  %931 = vmatprep.mubr.bf16.mxu0 0
  %932 = vmatmul.mubr.bf16.gmra.mrb[0].mxu0 %v670
  %v933 = vpop.f32.mrb[0].mxu0
  %v934 = vadd.f32 0.0, %v933
  %v935 = vpop.f32.mrb[0].mxu0
  %v936 = vpop.f32.mrb[0].mxu0
  %v937 = vadd.f32 0.0, %v936
  %v938 = vpop.f32.mrb[0].mxu0
  %939 = vdwg.mxu0
  %v940 = vpack.c.bf16 %v937, %v934
  %v942 = vunpack.c.l.b16 %v940
  %v943 = vunpack.c.h.b16 %v940
  %v944 = vpack.c.b16 %v942, %v942
  %v945 = vpack.c.b16 %v943, %v943
  %s948 = scalar_lea.vmem %s3, 32
  %949 = vst.msk [vmem:[%s948] sm:$0xf] %vm724, %v944
  %950 = vst.msk [vmem:[%s948 + $0x4] sm:$0xf] %vm724, %v945
  %v952 = vrot.slane %v634, 4
  %v954 = vsel %vm339, %v952, 0
  %956 = vmatprep.subr.bf16.mxu0 0
  %957 = vmatpush1.bf16.msra.mxu0 %v954
  %958 = vmatprep.subr.bf16.mxu0 0
  %959 = vmatpush1.bf16.msra.mxu0 0
  %960 = vmatprep.subr.bf16.mxu0 0
  %961 = vmatpush1.bf16.msra.mxu0 0
  %962 = vmatprep.subr.bf16.mxu0 0
  %963 = vmatpush1.bf16.msra.mxu0 0
  %964 = vmatprep.subr.bf16.mxu0 0
  %965 = vmatpush1.bf16.msra.mxu0 0
  %966 = vmatprep.subr.bf16.mxu0 0
  %967 = vmatpush1.bf16.msra.mxu0 0
  %968 = vmatprep.subr.bf16.mxu0 0
  %969 = vmatpush1.bf16.msra.mxu0 0
  %970 = vmatprep.subr.bf16.mxu0 0
  %971 = vmatpush1.bf16.msra.mxu0 0
  %972 = vmatprep.subr.bf16.mxu0 0
  %973 = vmatpush1.bf16.msra.mxu0 0
  %974 = vmatprep.subr.bf16.mxu0 0
  %975 = vmatpush1.bf16.msra.mxu0 0
  %976 = vmatprep.subr.bf16.mxu0 0
  %977 = vmatpush1.bf16.msra.mxu0 0
  %978 = vmatprep.subr.bf16.mxu0 0
  %979 = vmatpush1.bf16.msra.mxu0 0
  %980 = vmatprep.subr.bf16.mxu0 0
  %981 = vmatpush1.bf16.msra.mxu0 0
  %982 = vmatprep.subr.bf16.mxu0 0
  %983 = vmatpush1.bf16.msra.mxu0 0
  %984 = vmatprep.subr.bf16.mxu0 0
  %985 = vmatpush1.bf16.msra.mxu0 0
  %986 = vmatprep.subr.bf16.mxu0 0
  %987 = vmatpush1.bf16.msra.mxu0 0
  %988 = vmatprep.mubr.bf16.mxu0 0
  %989 = vmatmul.mubr.bf16.gmra.mrb[0].mxu0 %v670
  %v990 = vpop.f32.mrb[0].mxu0
  %v991 = vadd.f32 0.0, %v990
  %v992 = vpop.f32.mrb[0].mxu0
  %v993 = vpop.f32.mrb[0].mxu0
  %v994 = vadd.f32 0.0, %v993
  %v995 = vpop.f32.mrb[0].mxu0
  %996 = vdwg.mxu0
  %v997 = vpack.c.bf16 %v994, %v991
  %v999 = vunpack.c.l.b16 %v997
  %v1000 = vunpack.c.h.b16 %v997
  %v1001 = vpack.c.b16 %v999, %v999
  %v1002 = vpack.c.b16 %v1000, %v1000
  %s1005 = scalar_lea.vmem %s3, 40
  %1006 = vst.msk [vmem:[%s1005] sm:$0xf] %vm724, %v1001
  %1007 = vst.msk [vmem:[%s1005 + $0x4] sm:$0xf] %vm724, %v1002
  %v1009 = vsel %vm339, %v635, 0
  %1011 = vmatprep.subr.bf16.mxu0 0
  %1012 = vmatpush1.bf16.msra.mxu0 %v1009
  %1013 = vmatprep.subr.bf16.mxu0 0
  %1014 = vmatpush1.bf16.msra.mxu0 0
  %1015 = vmatprep.subr.bf16.mxu0 0
  %1016 = vmatpush1.bf16.msra.mxu0 0
  %1017 = vmatprep.subr.bf16.mxu0 0
  %1018 = vmatpush1.bf16.msra.mxu0 0
  %1019 = vmatprep.subr.bf16.mxu0 0
  %1020 = vmatpush1.bf16.msra.mxu0 0
  %1021 = vmatprep.subr.bf16.mxu0 0
  %1022 = vmatpush1.bf16.msra.mxu0 0
  %1023 = vmatprep.subr.bf16.mxu0 0
  %1024 = vmatpush1.bf16.msra.mxu0 0
  %1025 = vmatprep.subr.bf16.mxu0 0
  %1026 = vmatpush1.bf16.msra.mxu0 0
  %1027 = vmatprep.subr.bf16.mxu0 0
  %1028 = vmatpush1.bf16.msra.mxu0 0
  %1029 = vmatprep.subr.bf16.mxu0 0
  %1030 = vmatpush1.bf16.msra.mxu0 0
  %1031 = vmatprep.subr.bf16.mxu0 0
  %1032 = vmatpush1.bf16.msra.mxu0 0
  %1033 = vmatprep.subr.bf16.mxu0 0
  %1034 = vmatpush1.bf16.msra.mxu0 0
  %1035 = vmatprep.subr.bf16.mxu0 0
  %1036 = vmatpush1.bf16.msra.mxu0 0
  %1037 = vmatprep.subr.bf16.mxu0 0
  %1038 = vmatpush1.bf16.msra.mxu0 0
  %1039 = vmatprep.subr.bf16.mxu0 0
  %1040 = vmatpush1.bf16.msra.mxu0 0
  %1041 = vmatprep.subr.bf16.mxu0 0
  %1042 = vmatpush1.bf16.msra.mxu0 0
  %1043 = vmatprep.mubr.bf16.mxu0 0
  %1044 = vmatmul.mubr.bf16.gmra.mrb[0].mxu0 %v670
  %v1045 = vpop.f32.mrb[0].mxu0
  %v1046 = vadd.f32 0.0, %v1045
  %v1047 = vpop.f32.mrb[0].mxu0
  %v1048 = vpop.f32.mrb[0].mxu0
  %v1049 = vadd.f32 0.0, %v1048
  %v1050 = vpop.f32.mrb[0].mxu0
  %1051 = vdwg.mxu0
  %v1052 = vpack.c.bf16 %v1049, %v1046
  %v1054 = vunpack.c.l.b16 %v1052
  %v1055 = vunpack.c.h.b16 %v1052
  %v1056 = vpack.c.b16 %v1054, %v1054
  %v1057 = vpack.c.b16 %v1055, %v1055
  %s1060 = scalar_lea.vmem %s3, 48
  %1061 = vst.msk [vmem:[%s1060] sm:$0xf] %vm724, %v1056
  %1062 = vst.msk [vmem:[%s1060 + $0x4] sm:$0xf] %vm724, %v1057
  %v1064 = vrot.slane %v635, 4
  %v1066 = vsel %vm339, %v1064, 0
  %1068 = vmatprep.subr.bf16.mxu0 0
  %1069 = vmatpush1.bf16.msra.mxu0 %v1066
  %1070 = vmatprep.subr.bf16.mxu0 0
  %1071 = vmatpush1.bf16.msra.mxu0 0
  %1072 = vmatprep.subr.bf16.mxu0 0
  %1073 = vmatpush1.bf16.msra.mxu0 0
  %1074 = vmatprep.subr.bf16.mxu0 0
  %1075 = vmatpush1.bf16.msra.mxu0 0
  %1076 = vmatprep.subr.bf16.mxu0 0
  %1077 = vmatpush1.bf16.msra.mxu0 0
  %1078 = vmatprep.subr.bf16.mxu0 0
  %1079 = vmatpush1.bf16.msra.mxu0 0
  %1080 = vmatprep.subr.bf16.mxu0 0
  %1081 = vmatpush1.bf16.msra.mxu0 0
  %1082 = vmatprep.subr.bf16.mxu0 0
  %1083 = vmatpush1.bf16.msra.mxu0 0
  %1084 = vmatprep.subr.bf16.mxu0 0
  %1085 = vmatpush1.bf16.msra.mxu0 0
  %1086 = vmatprep.subr.bf16.mxu0 0
  %1087 = vmatpush1.bf16.msra.mxu0 0
  %1088 = vmatprep.subr.bf16.mxu0 0
  %1089 = vmatpush1.bf16.msra.mxu0 0
  %1090 = vmatprep.subr.bf16.mxu0 0
  %1091 = vmatpush1.bf16.msra.mxu0 0
  %1092 = vmatprep.subr.bf16.mxu0 0
  %1093 = vmatpush1.bf16.msra.mxu0 0
  %1094 = vmatprep.subr.bf16.mxu0 0
  %1095 = vmatpush1.bf16.msra.mxu0 0
  %1096 = vmatprep.subr.bf16.mxu0 0
  %1097 = vmatpush1.bf16.msra.mxu0 0
  %1098 = vmatprep.subr.bf16.mxu0 0
  %1099 = vmatpush1.bf16.msra.mxu0 0
  %1100 = vmatprep.mubr.bf16.mxu0 0
  %1101 = vmatmul.mubr.bf16.gmra.mrb[0].mxu0 %v670
  %v1102 = vpop.f32.mrb[0].mxu0
  %v1103 = vadd.f32 0.0, %v1102
  %v1104 = vpop.f32.mrb[0].mxu0
  %v1105 = vpop.f32.mrb[0].mxu0
  %v1106 = vadd.f32 0.0, %v1105
  %v1107 = vpop.f32.mrb[0].mxu0
  %1108 = vdwg.mxu0
  %v1109 = vpack.c.bf16 %v1106, %v1103
  %v1111 = vunpack.c.l.b16 %v1109
  %v1112 = vunpack.c.h.b16 %v1109
  %v1113 = vpack.c.b16 %v1111, %v1111
  %v1114 = vpack.c.b16 %v1112, %v1112
  %s1117 = scalar_lea.vmem %s3, 56
  %1118 = vst.msk [vmem:[%s1117] sm:$0xf] %vm724, %v1113
  %1119 = vst.msk [vmem:[%s1117 + $0x4] sm:$0xf] %vm724, %v1114
  %v1121 = vsel %vm339, %v636, 0
  %1123 = vmatprep.subr.bf16.mxu0 0
  %1124 = vmatpush1.bf16.msra.mxu0 %v1121
  %1125 = vmatprep.subr.bf16.mxu0 0
  %1126 = vmatpush1.bf16.msra.mxu0 0
  %1127 = vmatprep.subr.bf16.mxu0 0
  %1128 = vmatpush1.bf16.msra.mxu0 0
  %1129 = vmatprep.subr.bf16.mxu0 0
  %1130 = vmatpush1.bf16.msra.mxu0 0
  %1131 = vmatprep.subr.bf16.mxu0 0
  %1132 = vmatpush1.bf16.msra.mxu0 0
  %1133 = vmatprep.subr.bf16.mxu0 0
  %1134 = vmatpush1.bf16.msra.mxu0 0
  %1135 = vmatprep.subr.bf16.mxu0 0
  %1136 = vmatpush1.bf16.msra.mxu0 0
  %1137 = vmatprep.subr.bf16.mxu0 0
  %1138 = vmatpush1.bf16.msra.mxu0 0
  %1139 = vmatprep.subr.bf16.mxu0 0
  %1140 = vmatpush1.bf16.msra.mxu0 0
  %1141 = vmatprep.subr.bf16.mxu0 0
  %1142 = vmatpush1.bf16.msra.mxu0 0
  %1143 = vmatprep.subr.bf16.mxu0 0
  %1144 = vmatpush1.bf16.msra.mxu0 0
  %1145 = vmatprep.subr.bf16.mxu0 0
  %1146 = vmatpush1.bf16.msra.mxu0 0
  %1147 = vmatprep.subr.bf16.mxu0 0
  %1148 = vmatpush1.bf16.msra.mxu0 0
  %1149 = vmatprep.subr.bf16.mxu0 0
  %1150 = vmatpush1.bf16.msra.mxu0 0
  %1151 = vmatprep.subr.bf16.mxu0 0
  %1152 = vmatpush1.bf16.msra.mxu0 0
  %1153 = vmatprep.subr.bf16.mxu0 0
  %1154 = vmatpush1.bf16.msra.mxu0 0
  %1155 = vmatprep.mubr.bf16.mxu0 0
  %1156 = vmatmul.mubr.bf16.gmra.mrb[0].mxu0 %v670
  %v1157 = vpop.f32.mrb[0].mxu0
  %v1158 = vadd.f32 0.0, %v1157
  %v1159 = vpop.f32.mrb[0].mxu0
  %v1160 = vpop.f32.mrb[0].mxu0
  %v1161 = vadd.f32 0.0, %v1160
  %v1162 = vpop.f32.mrb[0].mxu0
  %1163 = vdwg.mxu0
  %v1164 = vpack.c.bf16 %v1161, %v1158
  %v1166 = vunpack.c.l.b16 %v1164
  %v1167 = vunpack.c.h.b16 %v1164
  %v1168 = vpack.c.b16 %v1166, %v1166
  %v1169 = vpack.c.b16 %v1167, %v1167
  %s1172 = scalar_lea.vmem %s3, 64
  %1173 = vst.msk [vmem:[%s1172] sm:$0xf] %vm724, %v1168
  %1174 = vst.msk [vmem:[%s1172 + $0x4] sm:$0xf] %vm724, %v1169
  %v1176 = vrot.slane %v636, 4
  %v1178 = vsel %vm339, %v1176, 0
  %1180 = vmatprep.subr.bf16.mxu0 0
  %1181 = vmatpush1.bf16.msra.mxu0 %v1178
  %1182 = vmatprep.subr.bf16.mxu0 0
  %1183 = vmatpush1.bf16.msra.mxu0 0
  %1184 = vmatprep.subr.bf16.mxu0 0
  %1185 = vmatpush1.bf16.msra.mxu0 0
  %1186 = vmatprep.subr.bf16.mxu0 0
  %1187 = vmatpush1.bf16.msra.mxu0 0
  %1188 = vmatprep.subr.bf16.mxu0 0
  %1189 = vmatpush1.bf16.msra.mxu0 0
  %1190 = vmatprep.subr.bf16.mxu0 0
  %1191 = vmatpush1.bf16.msra.mxu0 0
  %1192 = vmatprep.subr.bf16.mxu0 0
  %1193 = vmatpush1.bf16.msra.mxu0 0
  %1194 = vmatprep.subr.bf16.mxu0 0
  %1195 = vmatpush1.bf16.msra.mxu0 0
  %1196 = vmatprep.subr.bf16.mxu0 0
  %1197 = vmatpush1.bf16.msra.mxu0 0
  %1198 = vmatprep.subr.bf16.mxu0 0
  %1199 = vmatpush1.bf16.msra.mxu0 0
  %1200 = vmatprep.subr.bf16.mxu0 0
  %1201 = vmatpush1.bf16.msra.mxu0 0
  %1202 = vmatprep.subr.bf16.mxu0 0
  %1203 = vmatpush1.bf16.msra.mxu0 0
  %1204 = vmatprep.subr.bf16.mxu0 0
  %1205 = vmatpush1.bf16.msra.mxu0 0
  %1206 = vmatprep.subr.bf16.mxu0 0
  %1207 = vmatpush1.bf16.msra.mxu0 0
  %1208 = vmatprep.subr.bf16.mxu0 0
  %1209 = vmatpush1.bf16.msra.mxu0 0
  %1210 = vmatprep.subr.bf16.mxu0 0
  %1211 = vmatpush1.bf16.msra.mxu0 0
  %1212 = vmatprep.mubr.bf16.mxu0 0
  %1213 = vmatmul.mubr.bf16.gmra.mrb[0].mxu0 %v670
  %v1214 = vpop.f32.mrb[0].mxu0
  %v1215 = vadd.f32 0.0, %v1214
  %v1216 = vpop.f32.mrb[0].mxu0
  %v1217 = vpop.f32.mrb[0].mxu0
  %v1218 = vadd.f32 0.0, %v1217
  %v1219 = vpop.f32.mrb[0].mxu0
  %1220 = vdwg.mxu0
  %v1221 = vpack.c.bf16 %v1218, %v1215
  %v1223 = vunpack.c.l.b16 %v1221
  %v1224 = vunpack.c.h.b16 %v1221
  %v1225 = vpack.c.b16 %v1223, %v1223
  %v1226 = vpack.c.b16 %v1224, %v1224
  %s1229 = scalar_lea.vmem %s3, 72
  %1230 = vst.msk [vmem:[%s1229] sm:$0xf] %vm724, %v1225
  %1231 = vst.msk [vmem:[%s1229 + $0x4] sm:$0xf] %vm724, %v1226
  %v1233 = vsel %vm339, %v637, 0
  %1235 = vmatprep.subr.bf16.mxu0 0
  %1236 = vmatpush1.bf16.msra.mxu0 %v1233
  %1237 = vmatprep.subr.bf16.mxu0 0
  %1238 = vmatpush1.bf16.msra.mxu0 0
  %1239 = vmatprep.subr.bf16.mxu0 0
  %1240 = vmatpush1.bf16.msra.mxu0 0
  %1241 = vmatprep.subr.bf16.mxu0 0
  %1242 = vmatpush1.bf16.msra.mxu0 0
  %1243 = vmatprep.subr.bf16.mxu0 0
  %1244 = vmatpush1.bf16.msra.mxu0 0
  %1245 = vmatprep.subr.bf16.mxu0 0
  %1246 = vmatpush1.bf16.msra.mxu0 0
  %1247 = vmatprep.subr.bf16.mxu0 0
  %1248 = vmatpush1.bf16.msra.mxu0 0
  %1249 = vmatprep.subr.bf16.mxu0 0
  %1250 = vmatpush1.bf16.msra.mxu0 0
  %1251 = vmatprep.subr.bf16.mxu0 0
  %1252 = vmatpush1.bf16.msra.mxu0 0
  %1253 = vmatprep.subr.bf16.mxu0 0
  %1254 = vmatpush1.bf16.msra.mxu0 0
  %1255 = vmatprep.subr.bf16.mxu0 0
  %1256 = vmatpush1.bf16.msra.mxu0 0
  %1257 = vmatprep.subr.bf16.mxu0 0
  %1258 = vmatpush1.bf16.msra.mxu0 0
  %1259 = vmatprep.subr.bf16.mxu0 0
  %1260 = vmatpush1.bf16.msra.mxu0 0
  %1261 = vmatprep.subr.bf16.mxu0 0
  %1262 = vmatpush1.bf16.msra.mxu0 0
  %1263 = vmatprep.subr.bf16.mxu0 0
  %1264 = vmatpush1.bf16.msra.mxu0 0
  %1265 = vmatprep.subr.bf16.mxu0 0
  %1266 = vmatpush1.bf16.msra.mxu0 0
  %1267 = vmatprep.mubr.bf16.mxu0 0
  %1268 = vmatmul.mubr.bf16.gmra.mrb[0].mxu0 %v670
  %v1269 = vpop.f32.mrb[0].mxu0
  %v1270 = vadd.f32 0.0, %v1269
  %v1271 = vpop.f32.mrb[0].mxu0
  %v1272 = vpop.f32.mrb[0].mxu0
  %v1273 = vadd.f32 0.0, %v1272
  %v1274 = vpop.f32.mrb[0].mxu0
  %1275 = vdwg.mxu0
  %v1276 = vpack.c.bf16 %v1273, %v1270
  %v1278 = vunpack.c.l.b16 %v1276
  %v1279 = vunpack.c.h.b16 %v1276
  %v1280 = vpack.c.b16 %v1278, %v1278
  %v1281 = vpack.c.b16 %v1279, %v1279
  %s1284 = scalar_lea.vmem %s3, 80
  %1285 = vst.msk [vmem:[%s1284] sm:$0xf] %vm724, %v1280
  %1286 = vst.msk [vmem:[%s1284 + $0x4] sm:$0xf] %vm724, %v1281
  %v1288 = vrot.slane %v637, 4
  %v1290 = vsel %vm339, %v1288, 0
  %1292 = vmatprep.subr.bf16.mxu0 0
  %1293 = vmatpush1.bf16.msra.mxu0 %v1290
  %1294 = vmatprep.subr.bf16.mxu0 0
  %1295 = vmatpush1.bf16.msra.mxu0 0
  %1296 = vmatprep.subr.bf16.mxu0 0
  %1297 = vmatpush1.bf16.msra.mxu0 0
  %1298 = vmatprep.subr.bf16.mxu0 0
  %1299 = vmatpush1.bf16.msra.mxu0 0
  %1300 = vmatprep.subr.bf16.mxu0 0
  %1301 = vmatpush1.bf16.msra.mxu0 0
  %1302 = vmatprep.subr.bf16.mxu0 0
  %1303 = vmatpush1.bf16.msra.mxu0 0
  %1304 = vmatprep.subr.bf16.mxu0 0
  %1305 = vmatpush1.bf16.msra.mxu0 0
  %1306 = vmatprep.subr.bf16.mxu0 0
  %1307 = vmatpush1.bf16.msra.mxu0 0
  %1308 = vmatprep.subr.bf16.mxu0 0
  %1309 = vmatpush1.bf16.msra.mxu0 0
  %1310 = vmatprep.subr.bf16.mxu0 0
  %1311 = vmatpush1.bf16.msra.mxu0 0
  %1312 = vmatprep.subr.bf16.mxu0 0
  %1313 = vmatpush1.bf16.msra.mxu0 0
  %1314 = vmatprep.subr.bf16.mxu0 0
  %1315 = vmatpush1.bf16.msra.mxu0 0
  %1316 = vmatprep.subr.bf16.mxu0 0
  %1317 = vmatpush1.bf16.msra.mxu0 0
  %1318 = vmatprep.subr.bf16.mxu0 0
  %1319 = vmatpush1.bf16.msra.mxu0 0
  %1320 = vmatprep.subr.bf16.mxu0 0
  %1321 = vmatpush1.bf16.msra.mxu0 0
  %1322 = vmatprep.subr.bf16.mxu0 0
  %1323 = vmatpush1.bf16.msra.mxu0 0
  %1324 = vmatprep.mubr.bf16.mxu0 0
  %1325 = vmatmul.mubr.bf16.gmra.mrb[0].mxu0 %v670
  %v1326 = vpop.f32.mrb[0].mxu0
  %v1327 = vadd.f32 0.0, %v1326
  %v1328 = vpop.f32.mrb[0].mxu0
  %v1329 = vpop.f32.mrb[0].mxu0
  %v1330 = vadd.f32 0.0, %v1329
  %v1331 = vpop.f32.mrb[0].mxu0
  %1332 = vdwg.mxu0
  %v1333 = vpack.c.bf16 %v1330, %v1327
  %v1335 = vunpack.c.l.b16 %v1333
  %v1336 = vunpack.c.h.b16 %v1333
  %v1337 = vpack.c.b16 %v1335, %v1335
  %v1338 = vpack.c.b16 %v1336, %v1336
  %s1341 = scalar_lea.vmem %s3, 88
  %1342 = vst.msk [vmem:[%s1341] sm:$0xf] %vm724, %v1337
  %1343 = vst.msk [vmem:[%s1341 + $0x4] sm:$0xf] %vm724, %v1338
  %v1345 = vsel %vm339, %v638, 0
  %1347 = vmatprep.subr.bf16.mxu0 0
  %1348 = vmatpush1.bf16.msra.mxu0 %v1345
  %1349 = vmatprep.subr.bf16.mxu0 0
  %1350 = vmatpush1.bf16.msra.mxu0 0
  %1351 = vmatprep.subr.bf16.mxu0 0
  %1352 = vmatpush1.bf16.msra.mxu0 0
  %1353 = vmatprep.subr.bf16.mxu0 0
  %1354 = vmatpush1.bf16.msra.mxu0 0
  %1355 = vmatprep.subr.bf16.mxu0 0
  %1356 = vmatpush1.bf16.msra.mxu0 0
  %1357 = vmatprep.subr.bf16.mxu0 0
  %1358 = vmatpush1.bf16.msra.mxu0 0
  %1359 = vmatprep.subr.bf16.mxu0 0
  %1360 = vmatpush1.bf16.msra.mxu0 0
  %1361 = vmatprep.subr.bf16.mxu0 0
  %1362 = vmatpush1.bf16.msra.mxu0 0
  %1363 = vmatprep.subr.bf16.mxu0 0
  %1364 = vmatpush1.bf16.msra.mxu0 0
  %1365 = vmatprep.subr.bf16.mxu0 0
  %1366 = vmatpush1.bf16.msra.mxu0 0
  %1367 = vmatprep.subr.bf16.mxu0 0
  %1368 = vmatpush1.bf16.msra.mxu0 0
  %1369 = vmatprep.subr.bf16.mxu0 0
  %1370 = vmatpush1.bf16.msra.mxu0 0
  %1371 = vmatprep.subr.bf16.mxu0 0
  %1372 = vmatpush1.bf16.msra.mxu0 0
  %1373 = vmatprep.subr.bf16.mxu0 0
  %1374 = vmatpush1.bf16.msra.mxu0 0
  %1375 = vmatprep.subr.bf16.mxu0 0
  %1376 = vmatpush1.bf16.msra.mxu0 0
  %1377 = vmatprep.subr.bf16.mxu0 0
  %1378 = vmatpush1.bf16.msra.mxu0 0
  %1379 = vmatprep.mubr.bf16.mxu0 0
  %1380 = vmatmul.mubr.bf16.gmra.mrb[0].mxu0 %v670
  %v1381 = vpop.f32.mrb[0].mxu0
  %v1382 = vadd.f32 0.0, %v1381
  %v1383 = vpop.f32.mrb[0].mxu0
  %v1384 = vpop.f32.mrb[0].mxu0
  %v1385 = vadd.f32 0.0, %v1384
  %v1386 = vpop.f32.mrb[0].mxu0
  %1387 = vdwg.mxu0
  %v1388 = vpack.c.bf16 %v1385, %v1382
  %v1390 = vunpack.c.l.b16 %v1388
  %v1391 = vunpack.c.h.b16 %v1388
  %v1392 = vpack.c.b16 %v1390, %v1390
  %v1393 = vpack.c.b16 %v1391, %v1391
  %s1396 = scalar_lea.vmem %s3, 96
  %1397 = vst.msk [vmem:[%s1396] sm:$0xf] %vm724, %v1392
  %1398 = vst.msk [vmem:[%s1396 + $0x4] sm:$0xf] %vm724, %v1393
  %v1400 = vrot.slane %v638, 4
  %v1402 = vsel %vm339, %v1400, 0
  %1404 = vmatprep.subr.bf16.mxu0 0
  %1405 = vmatpush1.bf16.msra.mxu0 %v1402
  %1406 = vmatprep.subr.bf16.mxu0 0
  %1407 = vmatpush1.bf16.msra.mxu0 0
  %1408 = vmatprep.subr.bf16.mxu0 0
  %1409 = vmatpush1.bf16.msra.mxu0 0
  %1410 = vmatprep.subr.bf16.mxu0 0
  %1411 = vmatpush1.bf16.msra.mxu0 0
  %1412 = vmatprep.subr.bf16.mxu0 0
  %1413 = vmatpush1.bf16.msra.mxu0 0
  %1414 = vmatprep.subr.bf16.mxu0 0
  %1415 = vmatpush1.bf16.msra.mxu0 0
  %1416 = vmatprep.subr.bf16.mxu0 0
  %1417 = vmatpush1.bf16.msra.mxu0 0
  %1418 = vmatprep.subr.bf16.mxu0 0
  %1419 = vmatpush1.bf16.msra.mxu0 0
  %1420 = vmatprep.subr.bf16.mxu0 0
  %1421 = vmatpush1.bf16.msra.mxu0 0
  %1422 = vmatprep.subr.bf16.mxu0 0
  %1423 = vmatpush1.bf16.msra.mxu0 0
  %1424 = vmatprep.subr.bf16.mxu0 0
  %1425 = vmatpush1.bf16.msra.mxu0 0
  %1426 = vmatprep.subr.bf16.mxu0 0
  %1427 = vmatpush1.bf16.msra.mxu0 0
  %1428 = vmatprep.subr.bf16.mxu0 0
  %1429 = vmatpush1.bf16.msra.mxu0 0
  %1430 = vmatprep.subr.bf16.mxu0 0
  %1431 = vmatpush1.bf16.msra.mxu0 0
  %1432 = vmatprep.subr.bf16.mxu0 0
  %1433 = vmatpush1.bf16.msra.mxu0 0
  %1434 = vmatprep.subr.bf16.mxu0 0
  %1435 = vmatpush1.bf16.msra.mxu0 0
  %1436 = vmatprep.mubr.bf16.mxu0 0
  %1437 = vmatmul.mubr.bf16.gmra.mrb[0].mxu0 %v670
  %v1438 = vpop.f32.mrb[0].mxu0
  %v1439 = vadd.f32 0.0, %v1438
  %v1440 = vpop.f32.mrb[0].mxu0
  %v1441 = vpop.f32.mrb[0].mxu0
  %v1442 = vadd.f32 0.0, %v1441
  %v1443 = vpop.f32.mrb[0].mxu0
  %1444 = vdwg.mxu0
  %v1445 = vpack.c.bf16 %v1442, %v1439
  %v1447 = vunpack.c.l.b16 %v1445
  %v1448 = vunpack.c.h.b16 %v1445
  %v1449 = vpack.c.b16 %v1447, %v1447
  %v1450 = vpack.c.b16 %v1448, %v1448
  %s1453 = scalar_lea.vmem %s3, 104
  %1454 = vst.msk [vmem:[%s1453] sm:$0xf] %vm724, %v1449
  %1455 = vst.msk [vmem:[%s1453 + $0x4] sm:$0xf] %vm724, %v1450
  %v1457 = vsel %vm339, %v639, 0
  %1459 = vmatprep.subr.bf16.mxu0 0
  %1460 = vmatpush1.bf16.msra.mxu0 %v1457
  %1461 = vmatprep.subr.bf16.mxu0 0
  %1462 = vmatpush1.bf16.msra.mxu0 0
  %1463 = vmatprep.subr.bf16.mxu0 0
  %1464 = vmatpush1.bf16.msra.mxu0 0
  %1465 = vmatprep.subr.bf16.mxu0 0
  %1466 = vmatpush1.bf16.msra.mxu0 0
  %1467 = vmatprep.subr.bf16.mxu0 0
  %1468 = vmatpush1.bf16.msra.mxu0 0
  %1469 = vmatprep.subr.bf16.mxu0 0
  %1470 = vmatpush1.bf16.msra.mxu0 0
  %1471 = vmatprep.subr.bf16.mxu0 0
  %1472 = vmatpush1.bf16.msra.mxu0 0
  %1473 = vmatprep.subr.bf16.mxu0 0
  %1474 = vmatpush1.bf16.msra.mxu0 0
  %1475 = vmatprep.subr.bf16.mxu0 0
  %1476 = vmatpush1.bf16.msra.mxu0 0
  %1477 = vmatprep.subr.bf16.mxu0 0
  %1478 = vmatpush1.bf16.msra.mxu0 0
  %1479 = vmatprep.subr.bf16.mxu0 0
  %1480 = vmatpush1.bf16.msra.mxu0 0
  %1481 = vmatprep.subr.bf16.mxu0 0
  %1482 = vmatpush1.bf16.msra.mxu0 0
  %1483 = vmatprep.subr.bf16.mxu0 0
  %1484 = vmatpush1.bf16.msra.mxu0 0
  %1485 = vmatprep.subr.bf16.mxu0 0
  %1486 = vmatpush1.bf16.msra.mxu0 0
  %1487 = vmatprep.subr.bf16.mxu0 0
  %1488 = vmatpush1.bf16.msra.mxu0 0
  %1489 = vmatprep.subr.bf16.mxu0 0
  %1490 = vmatpush1.bf16.msra.mxu0 0
  %1491 = vmatprep.mubr.bf16.mxu0 0
  %1492 = vmatmul.mubr.bf16.gmra.mrb[0].mxu0 %v670
  %v1493 = vpop.f32.mrb[0].mxu0
  %v1494 = vadd.f32 0.0, %v1493
  %v1495 = vpop.f32.mrb[0].mxu0
  %v1496 = vpop.f32.mrb[0].mxu0
  %v1497 = vadd.f32 0.0, %v1496
  %v1498 = vpop.f32.mrb[0].mxu0
  %1499 = vdwg.mxu0
  %v1500 = vpack.c.bf16 %v1497, %v1494
  %v1502 = vunpack.c.l.b16 %v1500
  %v1503 = vunpack.c.h.b16 %v1500
  %v1504 = vpack.c.b16 %v1502, %v1502
  %v1505 = vpack.c.b16 %v1503, %v1503
  %s1508 = scalar_lea.vmem %s3, 112
  %1509 = vst.msk [vmem:[%s1508] sm:$0xf] %vm724, %v1504
  %1510 = vst.msk [vmem:[%s1508 + $0x4] sm:$0xf] %vm724, %v1505
  %v1512 = vrot.slane %v639, 4
  %v1514 = vsel %vm339, %v1512, 0
  %1516 = vmatprep.subr.bf16.mxu0 0
  %1517 = vmatpush1.bf16.msra.mxu0 %v1514
  %1518 = vmatprep.subr.bf16.mxu0 0
  %1519 = vmatpush1.bf16.msra.mxu0 0
  %1520 = vmatprep.subr.bf16.mxu0 0
  %1521 = vmatpush1.bf16.msra.mxu0 0
  %1522 = vmatprep.subr.bf16.mxu0 0
  %1523 = vmatpush1.bf16.msra.mxu0 0
  %1524 = vmatprep.subr.bf16.mxu0 0
  %1525 = vmatpush1.bf16.msra.mxu0 0
  %1526 = vmatprep.subr.bf16.mxu0 0
  %1527 = vmatpush1.bf16.msra.mxu0 0
  %1528 = vmatprep.subr.bf16.mxu0 0
  %1529 = vmatpush1.bf16.msra.mxu0 0
  %1530 = vmatprep.subr.bf16.mxu0 0
  %1531 = vmatpush1.bf16.msra.mxu0 0
  %1532 = vmatprep.subr.bf16.mxu0 0
  %1533 = vmatpush1.bf16.msra.mxu0 0
  %1534 = vmatprep.subr.bf16.mxu0 0
  %1535 = vmatpush1.bf16.msra.mxu0 0
  %1536 = vmatprep.subr.bf16.mxu0 0
  %1537 = vmatpush1.bf16.msra.mxu0 0
  %1538 = vmatprep.subr.bf16.mxu0 0
  %1539 = vmatpush1.bf16.msra.mxu0 0
  %1540 = vmatprep.subr.bf16.mxu0 0
  %1541 = vmatpush1.bf16.msra.mxu0 0
  %1542 = vmatprep.subr.bf16.mxu0 0
  %1543 = vmatpush1.bf16.msra.mxu0 0
  %1544 = vmatprep.subr.bf16.mxu0 0
  %1545 = vmatpush1.bf16.msra.mxu0 0
  %1546 = vmatprep.subr.bf16.mxu0 0
  %1547 = vmatpush1.bf16.msra.mxu0 0
  %1548 = vmatprep.mubr.bf16.mxu0 0
  %1549 = vmatmul.mubr.bf16.gmra.mrb[0].mxu0 %v670
  %v1550 = vpop.f32.mrb[0].mxu0
  %v1551 = vadd.f32 0.0, %v1550
  %v1552 = vpop.f32.mrb[0].mxu0
  %v1553 = vpop.f32.mrb[0].mxu0
  %v1554 = vadd.f32 0.0, %v1553
  %v1555 = vpop.f32.mrb[0].mxu0
  %1556 = vdwg.mxu0
  %v1557 = vpack.c.bf16 %v1554, %v1551
  %v1559 = vunpack.c.l.b16 %v1557
  %v1560 = vunpack.c.h.b16 %v1557
  %v1561 = vpack.c.b16 %v1559, %v1559
  %v1562 = vpack.c.b16 %v1560, %v1560
  %s1565 = scalar_lea.vmem %s3, 120
  %1566 = vst.msk [vmem:[%s1565] sm:$0xf] %vm724, %v1561
  %1567 = vst.msk [vmem:[%s1565 + $0x4] sm:$0xf] %vm724, %v1562
  %v1569 = vsel %vm339, %v640, 0
  %1571 = vmatprep.subr.bf16.mxu0 0
  %1572 = vmatpush1.bf16.msra.mxu0 %v1569
  %1573 = vmatprep.subr.bf16.mxu0 0
  %1574 = vmatpush1.bf16.msra.mxu0 0
  %1575 = vmatprep.subr.bf16.mxu0 0
  %1576 = vmatpush1.bf16.msra.mxu0 0
  %1577 = vmatprep.subr.bf16.mxu0 0
  %1578 = vmatpush1.bf16.msra.mxu0 0
  %1579 = vmatprep.subr.bf16.mxu0 0
  %1580 = vmatpush1.bf16.msra.mxu0 0
  %1581 = vmatprep.subr.bf16.mxu0 0
  %1582 = vmatpush1.bf16.msra.mxu0 0
  %1583 = vmatprep.subr.bf16.mxu0 0
  %1584 = vmatpush1.bf16.msra.mxu0 0
  %1585 = vmatprep.subr.bf16.mxu0 0
  %1586 = vmatpush1.bf16.msra.mxu0 0
  %1587 = vmatprep.subr.bf16.mxu0 0
  %1588 = vmatpush1.bf16.msra.mxu0 0
  %1589 = vmatprep.subr.bf16.mxu0 0
  %1590 = vmatpush1.bf16.msra.mxu0 0
  %1591 = vmatprep.subr.bf16.mxu0 0
  %1592 = vmatpush1.bf16.msra.mxu0 0
  %1593 = vmatprep.subr.bf16.mxu0 0
  %1594 = vmatpush1.bf16.msra.mxu0 0
  %1595 = vmatprep.subr.bf16.mxu0 0
  %1596 = vmatpush1.bf16.msra.mxu0 0
  %1597 = vmatprep.subr.bf16.mxu0 0
  %1598 = vmatpush1.bf16.msra.mxu0 0
  %1599 = vmatprep.subr.bf16.mxu0 0
  %1600 = vmatpush1.bf16.msra.mxu0 0
  %1601 = vmatprep.subr.bf16.mxu0 0
  %1602 = vmatpush1.bf16.msra.mxu0 0
  %1603 = vmatprep.mubr.bf16.mxu0 0
  %1604 = vmatmul.mubr.bf16.gmra.mrb[0].mxu0 %v670
  %v1605 = vpop.f32.mrb[0].mxu0
  %v1606 = vadd.f32 0.0, %v1605
  %v1607 = vpop.f32.mrb[0].mxu0
  %v1608 = vpop.f32.mrb[0].mxu0
  %v1609 = vadd.f32 0.0, %v1608
  %v1610 = vpop.f32.mrb[0].mxu0
  %1611 = vdwg.mxu0
  %v1612 = vpack.c.bf16 %v1609, %v1606
  %v1614 = vunpack.c.l.b16 %v1612
  %v1615 = vunpack.c.h.b16 %v1612
  %v1616 = vpack.c.b16 %v1614, %v1614
  %v1617 = vpack.c.b16 %v1615, %v1615
  %s1620 = scalar_lea.vmem %s3, 128
  %1621 = vst.msk [vmem:[%s1620] sm:$0xf] %vm724, %v1616
  %1622 = vst.msk [vmem:[%s1620 + $0x4] sm:$0xf] %vm724, %v1617
  %v1624 = vrot.slane %v640, 4
  %v1626 = vsel %vm339, %v1624, 0
  %1628 = vmatprep.subr.bf16.mxu0 0
  %1629 = vmatpush1.bf16.msra.mxu0 %v1626
  %1630 = vmatprep.subr.bf16.mxu0 0
  %1631 = vmatpush1.bf16.msra.mxu0 0
  %1632 = vmatprep.subr.bf16.mxu0 0
  %1633 = vmatpush1.bf16.msra.mxu0 0
  %1634 = vmatprep.subr.bf16.mxu0 0
  %1635 = vmatpush1.bf16.msra.mxu0 0
  %1636 = vmatprep.subr.bf16.mxu0 0
  %1637 = vmatpush1.bf16.msra.mxu0 0
  %1638 = vmatprep.subr.bf16.mxu0 0
  %1639 = vmatpush1.bf16.msra.mxu0 0
  %1640 = vmatprep.subr.bf16.mxu0 0
  %1641 = vmatpush1.bf16.msra.mxu0 0
  %1642 = vmatprep.subr.bf16.mxu0 0
  %1643 = vmatpush1.bf16.msra.mxu0 0
  %1644 = vmatprep.subr.bf16.mxu0 0
  %1645 = vmatpush1.bf16.msra.mxu0 0
  %1646 = vmatprep.subr.bf16.mxu0 0
  %1647 = vmatpush1.bf16.msra.mxu0 0
  %1648 = vmatprep.subr.bf16.mxu0 0
  %1649 = vmatpush1.bf16.msra.mxu0 0
  %1650 = vmatprep.subr.bf16.mxu0 0
  %1651 = vmatpush1.bf16.msra.mxu0 0
  %1652 = vmatprep.subr.bf16.mxu0 0
  %1653 = vmatpush1.bf16.msra.mxu0 0
  %1654 = vmatprep.subr.bf16.mxu0 0
  %1655 = vmatpush1.bf16.msra.mxu0 0
  %1656 = vmatprep.subr.bf16.mxu0 0
  %1657 = vmatpush1.bf16.msra.mxu0 0
  %1658 = vmatprep.subr.bf16.mxu0 0
  %1659 = vmatpush1.bf16.msra.mxu0 0
  %1660 = vmatprep.mubr.bf16.mxu0 0
  %1661 = vmatmul.mubr.bf16.gmra.mrb[0].mxu0 %v670
  %v1662 = vpop.f32.mrb[0].mxu0
  %v1663 = vadd.f32 0.0, %v1662
  %v1664 = vpop.f32.mrb[0].mxu0
  %v1665 = vpop.f32.mrb[0].mxu0
  %v1666 = vadd.f32 0.0, %v1665
  %v1667 = vpop.f32.mrb[0].mxu0
  %1668 = vdwg.mxu0
  %v1669 = vpack.c.bf16 %v1666, %v1663
  %v1671 = vunpack.c.l.b16 %v1669
  %v1672 = vunpack.c.h.b16 %v1669
  %v1673 = vpack.c.b16 %v1671, %v1671
  %v1674 = vpack.c.b16 %v1672, %v1672
  %s1677 = scalar_lea.vmem %s3, 136
  %1678 = vst.msk [vmem:[%s1677] sm:$0xf] %vm724, %v1673
  %1679 = vst.msk [vmem:[%s1677 + $0x4] sm:$0xf] %vm724, %v1674
  %v1681 = vsel %vm339, %v641, 0
  %1683 = vmatprep.subr.bf16.mxu0 0
  %1684 = vmatpush1.bf16.msra.mxu0 %v1681
  %1685 = vmatprep.subr.bf16.mxu0 0
  %1686 = vmatpush1.bf16.msra.mxu0 0
  %1687 = vmatprep.subr.bf16.mxu0 0
  %1688 = vmatpush1.bf16.msra.mxu0 0
  %1689 = vmatprep.subr.bf16.mxu0 0
  %1690 = vmatpush1.bf16.msra.mxu0 0
  %1691 = vmatprep.subr.bf16.mxu0 0
  %1692 = vmatpush1.bf16.msra.mxu0 0
  %1693 = vmatprep.subr.bf16.mxu0 0
  %1694 = vmatpush1.bf16.msra.mxu0 0
  %1695 = vmatprep.subr.bf16.mxu0 0
  %1696 = vmatpush1.bf16.msra.mxu0 0
  %1697 = vmatprep.subr.bf16.mxu0 0
  %1698 = vmatpush1.bf16.msra.mxu0 0
  %1699 = vmatprep.subr.bf16.mxu0 0
  %1700 = vmatpush1.bf16.msra.mxu0 0
  %1701 = vmatprep.subr.bf16.mxu0 0
  %1702 = vmatpush1.bf16.msra.mxu0 0
  %1703 = vmatprep.subr.bf16.mxu0 0
  %1704 = vmatpush1.bf16.msra.mxu0 0
  %1705 = vmatprep.subr.bf16.mxu0 0
  %1706 = vmatpush1.bf16.msra.mxu0 0
  %1707 = vmatprep.subr.bf16.mxu0 0
  %1708 = vmatpush1.bf16.msra.mxu0 0
  %1709 = vmatprep.subr.bf16.mxu0 0
  %1710 = vmatpush1.bf16.msra.mxu0 0
  %1711 = vmatprep.subr.bf16.mxu0 0
  %1712 = vmatpush1.bf16.msra.mxu0 0
  %1713 = vmatprep.subr.bf16.mxu0 0
  %1714 = vmatpush1.bf16.msra.mxu0 0
  %1715 = vmatprep.mubr.bf16.mxu0 0
  %1716 = vmatmul.mubr.bf16.gmra.mrb[0].mxu0 %v670
  %v1717 = vpop.f32.mrb[0].mxu0
  %v1718 = vadd.f32 0.0, %v1717
  %v1719 = vpop.f32.mrb[0].mxu0
  %v1720 = vpop.f32.mrb[0].mxu0
  %v1721 = vadd.f32 0.0, %v1720
  %v1722 = vpop.f32.mrb[0].mxu0
  %1723 = vdwg.mxu0
  %v1724 = vpack.c.bf16 %v1721, %v1718
  %v1726 = vunpack.c.l.b16 %v1724
  %v1727 = vunpack.c.h.b16 %v1724
  %v1728 = vpack.c.b16 %v1726, %v1726
  %v1729 = vpack.c.b16 %v1727, %v1727
  %s1732 = scalar_lea.vmem %s3, 144
  %1733 = vst.msk [vmem:[%s1732] sm:$0xf] %vm724, %v1728
  %1734 = vst.msk [vmem:[%s1732 + $0x4] sm:$0xf] %vm724, %v1729
  %v1736 = vrot.slane %v641, 4
  %v1738 = vsel %vm339, %v1736, 0
  %1740 = vmatprep.subr.bf16.mxu0 0
  %1741 = vmatpush1.bf16.msra.mxu0 %v1738
  %1742 = vmatprep.subr.bf16.mxu0 0
  %1743 = vmatpush1.bf16.msra.mxu0 0
  %1744 = vmatprep.subr.bf16.mxu0 0
  %1745 = vmatpush1.bf16.msra.mxu0 0
  %1746 = vmatprep.subr.bf16.mxu0 0
  %1747 = vmatpush1.bf16.msra.mxu0 0
  %1748 = vmatprep.subr.bf16.mxu0 0
  %1749 = vmatpush1.bf16.msra.mxu0 0
  %1750 = vmatprep.subr.bf16.mxu0 0
  %1751 = vmatpush1.bf16.msra.mxu0 0
  %1752 = vmatprep.subr.bf16.mxu0 0
  %1753 = vmatpush1.bf16.msra.mxu0 0
  %1754 = vmatprep.subr.bf16.mxu0 0
  %1755 = vmatpush1.bf16.msra.mxu0 0
  %1756 = vmatprep.subr.bf16.mxu0 0
  %1757 = vmatpush1.bf16.msra.mxu0 0
  %1758 = vmatprep.subr.bf16.mxu0 0
  %1759 = vmatpush1.bf16.msra.mxu0 0
  %1760 = vmatprep.subr.bf16.mxu0 0
  %1761 = vmatpush1.bf16.msra.mxu0 0
  %1762 = vmatprep.subr.bf16.mxu0 0
  %1763 = vmatpush1.bf16.msra.mxu0 0
  %1764 = vmatprep.subr.bf16.mxu0 0
  %1765 = vmatpush1.bf16.msra.mxu0 0
  %1766 = vmatprep.subr.bf16.mxu0 0
  %1767 = vmatpush1.bf16.msra.mxu0 0
  %1768 = vmatprep.subr.bf16.mxu0 0
  %1769 = vmatpush1.bf16.msra.mxu0 0
  %1770 = vmatprep.subr.bf16.mxu0 0
  %1771 = vmatpush1.bf16.msra.mxu0 0
  %1772 = vmatprep.mubr.bf16.mxu0 0
  %1773 = vmatmul.mubr.bf16.gmra.mrb[0].mxu0 %v670
  %v1774 = vpop.f32.mrb[0].mxu0
  %v1775 = vadd.f32 0.0, %v1774
  %v1776 = vpop.f32.mrb[0].mxu0
  %v1777 = vpop.f32.mrb[0].mxu0
  %v1778 = vadd.f32 0.0, %v1777
  %v1779 = vpop.f32.mrb[0].mxu0
  %1780 = vdwg.mxu0
  %v1781 = vpack.c.bf16 %v1778, %v1775
  %v1783 = vunpack.c.l.b16 %v1781
  %v1784 = vunpack.c.h.b16 %v1781
  %v1785 = vpack.c.b16 %v1783, %v1783
  %v1786 = vpack.c.b16 %v1784, %v1784
  %s1789 = scalar_lea.vmem %s3, 152
  %1790 = vst.msk [vmem:[%s1789] sm:$0xf] %vm724, %v1785
  %1791 = vst.msk [vmem:[%s1789 + $0x4] sm:$0xf] %vm724, %v1786
  %v1793 = vsel %vm339, %v642, 0
  %1795 = vmatprep.subr.bf16.mxu0 0
  %1796 = vmatpush1.bf16.msra.mxu0 %v1793
  %1797 = vmatprep.subr.bf16.mxu0 0
  %1798 = vmatpush1.bf16.msra.mxu0 0
  %1799 = vmatprep.subr.bf16.mxu0 0
  %1800 = vmatpush1.bf16.msra.mxu0 0
  %1801 = vmatprep.subr.bf16.mxu0 0
  %1802 = vmatpush1.bf16.msra.mxu0 0
  %1803 = vmatprep.subr.bf16.mxu0 0
  %1804 = vmatpush1.bf16.msra.mxu0 0
  %1805 = vmatprep.subr.bf16.mxu0 0
  %1806 = vmatpush1.bf16.msra.mxu0 0
  %1807 = vmatprep.subr.bf16.mxu0 0
  %1808 = vmatpush1.bf16.msra.mxu0 0
  %1809 = vmatprep.subr.bf16.mxu0 0
  %1810 = vmatpush1.bf16.msra.mxu0 0
  %1811 = vmatprep.subr.bf16.mxu0 0
  %1812 = vmatpush1.bf16.msra.mxu0 0
  %1813 = vmatprep.subr.bf16.mxu0 0
  %1814 = vmatpush1.bf16.msra.mxu0 0
  %1815 = vmatprep.subr.bf16.mxu0 0
  %1816 = vmatpush1.bf16.msra.mxu0 0
  %1817 = vmatprep.subr.bf16.mxu0 0
  %1818 = vmatpush1.bf16.msra.mxu0 0
  %1819 = vmatprep.subr.bf16.mxu0 0
  %1820 = vmatpush1.bf16.msra.mxu0 0
  %1821 = vmatprep.subr.bf16.mxu0 0
  %1822 = vmatpush1.bf16.msra.mxu0 0
  %1823 = vmatprep.subr.bf16.mxu0 0
  %1824 = vmatpush1.bf16.msra.mxu0 0
  %1825 = vmatprep.subr.bf16.mxu0 0
  %1826 = vmatpush1.bf16.msra.mxu0 0
  %1827 = vmatprep.mubr.bf16.mxu0 0
  %1828 = vmatmul.mubr.bf16.gmra.mrb[0].mxu0 %v670
  %v1829 = vpop.f32.mrb[0].mxu0
  %v1830 = vadd.f32 0.0, %v1829
  %v1831 = vpop.f32.mrb[0].mxu0
  %v1832 = vpop.f32.mrb[0].mxu0
  %v1833 = vadd.f32 0.0, %v1832
  %v1834 = vpop.f32.mrb[0].mxu0
  %1835 = vdwg.mxu0
  %v1836 = vpack.c.bf16 %v1833, %v1830
  %v1838 = vunpack.c.l.b16 %v1836
  %v1839 = vunpack.c.h.b16 %v1836
  %v1840 = vpack.c.b16 %v1838, %v1838
  %v1841 = vpack.c.b16 %v1839, %v1839
  %s1844 = scalar_lea.vmem %s3, 160
  %1845 = vst.msk [vmem:[%s1844] sm:$0xf] %vm724, %v1840
  %1846 = vst.msk [vmem:[%s1844 + $0x4] sm:$0xf] %vm724, %v1841
  %v1848 = vrot.slane %v642, 4
  %v1850 = vsel %vm339, %v1848, 0
  %1852 = vmatprep.subr.bf16.mxu0 0
  %1853 = vmatpush1.bf16.msra.mxu0 %v1850
  %1854 = vmatprep.subr.bf16.mxu0 0
  %1855 = vmatpush1.bf16.msra.mxu0 0
  %1856 = vmatprep.subr.bf16.mxu0 0
  %1857 = vmatpush1.bf16.msra.mxu0 0
  %1858 = vmatprep.subr.bf16.mxu0 0
  %1859 = vmatpush1.bf16.msra.mxu0 0
  %1860 = vmatprep.subr.bf16.mxu0 0
  %1861 = vmatpush1.bf16.msra.mxu0 0
  %1862 = vmatprep.subr.bf16.mxu0 0
  %1863 = vmatpush1.bf16.msra.mxu0 0
  %1864 = vmatprep.subr.bf16.mxu0 0
  %1865 = vmatpush1.bf16.msra.mxu0 0
  %1866 = vmatprep.subr.bf16.mxu0 0
  %1867 = vmatpush1.bf16.msra.mxu0 0
  %1868 = vmatprep.subr.bf16.mxu0 0
  %1869 = vmatpush1.bf16.msra.mxu0 0
  %1870 = vmatprep.subr.bf16.mxu0 0
  %1871 = vmatpush1.bf16.msra.mxu0 0
  %1872 = vmatprep.subr.bf16.mxu0 0
  %1873 = vmatpush1.bf16.msra.mxu0 0
  %1874 = vmatprep.subr.bf16.mxu0 0
  %1875 = vmatpush1.bf16.msra.mxu0 0
  %1876 = vmatprep.subr.bf16.mxu0 0
  %1877 = vmatpush1.bf16.msra.mxu0 0
  %1878 = vmatprep.subr.bf16.mxu0 0
  %1879 = vmatpush1.bf16.msra.mxu0 0
  %1880 = vmatprep.subr.bf16.mxu0 0
  %1881 = vmatpush1.bf16.msra.mxu0 0
  %1882 = vmatprep.subr.bf16.mxu0 0
  %1883 = vmatpush1.bf16.msra.mxu0 0
  %1884 = vmatprep.mubr.bf16.mxu0 0
  %1885 = vmatmul.mubr.bf16.gmra.mrb[0].mxu0 %v670
  %v1886 = vpop.f32.mrb[0].mxu0
  %v1887 = vadd.f32 0.0, %v1886
  %v1888 = vpop.f32.mrb[0].mxu0
  %v1889 = vpop.f32.mrb[0].mxu0
  %v1890 = vadd.f32 0.0, %v1889
  %v1891 = vpop.f32.mrb[0].mxu0
  %1892 = vdwg.mxu0
  %v1893 = vpack.c.bf16 %v1890, %v1887
  %v1895 = vunpack.c.l.b16 %v1893
  %v1896 = vunpack.c.h.b16 %v1893
  %v1897 = vpack.c.b16 %v1895, %v1895
  %v1898 = vpack.c.b16 %v1896, %v1896
  %s1901 = scalar_lea.vmem %s3, 168
  %1902 = vst.msk [vmem:[%s1901] sm:$0xf] %vm724, %v1897
  %1903 = vst.msk [vmem:[%s1901 + $0x4] sm:$0xf] %vm724, %v1898
  %v1905 = vsel %vm339, %v643, 0
  %1907 = vmatprep.subr.bf16.mxu0 0
  %1908 = vmatpush1.bf16.msra.mxu0 %v1905
  %1909 = vmatprep.subr.bf16.mxu0 0
  %1910 = vmatpush1.bf16.msra.mxu0 0
  %1911 = vmatprep.subr.bf16.mxu0 0
  %1912 = vmatpush1.bf16.msra.mxu0 0
  %1913 = vmatprep.subr.bf16.mxu0 0
  %1914 = vmatpush1.bf16.msra.mxu0 0
  %1915 = vmatprep.subr.bf16.mxu0 0
  %1916 = vmatpush1.bf16.msra.mxu0 0
  %1917 = vmatprep.subr.bf16.mxu0 0
  %1918 = vmatpush1.bf16.msra.mxu0 0
  %1919 = vmatprep.subr.bf16.mxu0 0
  %1920 = vmatpush1.bf16.msra.mxu0 0
  %1921 = vmatprep.subr.bf16.mxu0 0
  %1922 = vmatpush1.bf16.msra.mxu0 0
  %1923 = vmatprep.subr.bf16.mxu0 0
  %1924 = vmatpush1.bf16.msra.mxu0 0
  %1925 = vmatprep.subr.bf16.mxu0 0
  %1926 = vmatpush1.bf16.msra.mxu0 0
  %1927 = vmatprep.subr.bf16.mxu0 0
  %1928 = vmatpush1.bf16.msra.mxu0 0
  %1929 = vmatprep.subr.bf16.mxu0 0
  %1930 = vmatpush1.bf16.msra.mxu0 0
  %1931 = vmatprep.subr.bf16.mxu0 0
  %1932 = vmatpush1.bf16.msra.mxu0 0
  %1933 = vmatprep.subr.bf16.mxu0 0
  %1934 = vmatpush1.bf16.msra.mxu0 0
  %1935 = vmatprep.subr.bf16.mxu0 0
  %1936 = vmatpush1.bf16.msra.mxu0 0
  %1937 = vmatprep.subr.bf16.mxu0 0
  %1938 = vmatpush1.bf16.msra.mxu0 0
  %1939 = vmatprep.mubr.bf16.mxu0 0
  %1940 = vmatmul.mubr.bf16.gmra.mrb[0].mxu0 %v670
  %v1941 = vpop.f32.mrb[0].mxu0
  %v1942 = vadd.f32 0.0, %v1941
  %v1943 = vpop.f32.mrb[0].mxu0
  %v1944 = vpop.f32.mrb[0].mxu0
  %v1945 = vadd.f32 0.0, %v1944
  %v1946 = vpop.f32.mrb[0].mxu0
  %1947 = vdwg.mxu0
  %v1948 = vpack.c.bf16 %v1945, %v1942
  %v1950 = vunpack.c.l.b16 %v1948
  %v1951 = vunpack.c.h.b16 %v1948
  %v1952 = vpack.c.b16 %v1950, %v1950
  %v1953 = vpack.c.b16 %v1951, %v1951
  %s1956 = scalar_lea.vmem %s3, 176
  %1957 = vst.msk [vmem:[%s1956] sm:$0xf] %vm724, %v1952
  %1958 = vst.msk [vmem:[%s1956 + $0x4] sm:$0xf] %vm724, %v1953
  %v1960 = vrot.slane %v643, 4
  %v1962 = vsel %vm339, %v1960, 0
  %1964 = vmatprep.subr.bf16.mxu0 0
  %1965 = vmatpush1.bf16.msra.mxu0 %v1962
  %1966 = vmatprep.subr.bf16.mxu0 0
  %1967 = vmatpush1.bf16.msra.mxu0 0
  %1968 = vmatprep.subr.bf16.mxu0 0
  %1969 = vmatpush1.bf16.msra.mxu0 0
  %1970 = vmatprep.subr.bf16.mxu0 0
  %1971 = vmatpush1.bf16.msra.mxu0 0
  %1972 = vmatprep.subr.bf16.mxu0 0
  %1973 = vmatpush1.bf16.msra.mxu0 0
  %1974 = vmatprep.subr.bf16.mxu0 0
  %1975 = vmatpush1.bf16.msra.mxu0 0
  %1976 = vmatprep.subr.bf16.mxu0 0
  %1977 = vmatpush1.bf16.msra.mxu0 0
  %1978 = vmatprep.subr.bf16.mxu0 0
  %1979 = vmatpush1.bf16.msra.mxu0 0
  %1980 = vmatprep.subr.bf16.mxu0 0
  %1981 = vmatpush1.bf16.msra.mxu0 0
  %1982 = vmatprep.subr.bf16.mxu0 0
  %1983 = vmatpush1.bf16.msra.mxu0 0
  %1984 = vmatprep.subr.bf16.mxu0 0
  %1985 = vmatpush1.bf16.msra.mxu0 0
  %1986 = vmatprep.subr.bf16.mxu0 0
  %1987 = vmatpush1.bf16.msra.mxu0 0
  %1988 = vmatprep.subr.bf16.mxu0 0
  %1989 = vmatpush1.bf16.msra.mxu0 0
  %1990 = vmatprep.subr.bf16.mxu0 0
  %1991 = vmatpush1.bf16.msra.mxu0 0
  %1992 = vmatprep.subr.bf16.mxu0 0
  %1993 = vmatpush1.bf16.msra.mxu0 0
  %1994 = vmatprep.subr.bf16.mxu0 0
  %1995 = vmatpush1.bf16.msra.mxu0 0
  %1996 = vmatprep.mubr.bf16.mxu0 0
  %1997 = vmatmul.mubr.bf16.gmra.mrb[0].mxu0 %v670
  %v1998 = vpop.f32.mrb[0].mxu0
  %v1999 = vadd.f32 0.0, %v1998
  %v2000 = vpop.f32.mrb[0].mxu0
  %v2001 = vpop.f32.mrb[0].mxu0
  %v2002 = vadd.f32 0.0, %v2001
  %v2003 = vpop.f32.mrb[0].mxu0
  %2004 = vdwg.mxu0
  %v2005 = vpack.c.bf16 %v2002, %v1999
  %v2007 = vunpack.c.l.b16 %v2005
  %v2008 = vunpack.c.h.b16 %v2005
  %v2009 = vpack.c.b16 %v2007, %v2007
  %v2010 = vpack.c.b16 %v2008, %v2008
  %s2013 = scalar_lea.vmem %s3, 184
  %2014 = vst.msk [vmem:[%s2013] sm:$0xf] %vm724, %v2009
  %2015 = vst.msk [vmem:[%s2013 + $0x4] sm:$0xf] %vm724, %v2010
  %v2017 = vsel %vm339, %v644, 0
  %2019 = vmatprep.subr.bf16.mxu0 0
  %2020 = vmatpush1.bf16.msra.mxu0 %v2017
  %2021 = vmatprep.subr.bf16.mxu0 0
  %2022 = vmatpush1.bf16.msra.mxu0 0
  %2023 = vmatprep.subr.bf16.mxu0 0
  %2024 = vmatpush1.bf16.msra.mxu0 0
  %2025 = vmatprep.subr.bf16.mxu0 0
  %2026 = vmatpush1.bf16.msra.mxu0 0
  %2027 = vmatprep.subr.bf16.mxu0 0
  %2028 = vmatpush1.bf16.msra.mxu0 0
  %2029 = vmatprep.subr.bf16.mxu0 0
  %2030 = vmatpush1.bf16.msra.mxu0 0
  %2031 = vmatprep.subr.bf16.mxu0 0
  %2032 = vmatpush1.bf16.msra.mxu0 0
  %2033 = vmatprep.subr.bf16.mxu0 0
  %2034 = vmatpush1.bf16.msra.mxu0 0
  %2035 = vmatprep.subr.bf16.mxu0 0
  %2036 = vmatpush1.bf16.msra.mxu0 0
  %2037 = vmatprep.subr.bf16.mxu0 0
  %2038 = vmatpush1.bf16.msra.mxu0 0
  %2039 = vmatprep.subr.bf16.mxu0 0
  %2040 = vmatpush1.bf16.msra.mxu0 0
  %2041 = vmatprep.subr.bf16.mxu0 0
  %2042 = vmatpush1.bf16.msra.mxu0 0
  %2043 = vmatprep.subr.bf16.mxu0 0
  %2044 = vmatpush1.bf16.msra.mxu0 0
  %2045 = vmatprep.subr.bf16.mxu0 0
  %2046 = vmatpush1.bf16.msra.mxu0 0
  %2047 = vmatprep.subr.bf16.mxu0 0
  %2048 = vmatpush1.bf16.msra.mxu0 0
  %2049 = vmatprep.subr.bf16.mxu0 0
  %2050 = vmatpush1.bf16.msra.mxu0 0
  %2051 = vmatprep.mubr.bf16.mxu0 0
  %2052 = vmatmul.mubr.bf16.gmra.mrb[0].mxu0 %v670
  %v2053 = vpop.f32.mrb[0].mxu0
  %v2054 = vadd.f32 0.0, %v2053
  %v2055 = vpop.f32.mrb[0].mxu0
  %v2056 = vpop.f32.mrb[0].mxu0
  %v2057 = vadd.f32 0.0, %v2056
  %v2058 = vpop.f32.mrb[0].mxu0
  %2059 = vdwg.mxu0
  %v2060 = vpack.c.bf16 %v2057, %v2054
  %v2062 = vunpack.c.l.b16 %v2060
  %v2063 = vunpack.c.h.b16 %v2060
  %v2064 = vpack.c.b16 %v2062, %v2062
  %v2065 = vpack.c.b16 %v2063, %v2063
  %s2068 = scalar_lea.vmem %s3, 192
  %2069 = vst.msk [vmem:[%s2068] sm:$0xf] %vm724, %v2064
  %2070 = vst.msk [vmem:[%s2068 + $0x4] sm:$0xf] %vm724, %v2065
  %v2072 = vrot.slane %v644, 4
  %v2074 = vsel %vm339, %v2072, 0
  %2076 = vmatprep.subr.bf16.mxu0 0
  %2077 = vmatpush1.bf16.msra.mxu0 %v2074
  %2078 = vmatprep.subr.bf16.mxu0 0
  %2079 = vmatpush1.bf16.msra.mxu0 0
  %2080 = vmatprep.subr.bf16.mxu0 0
  %2081 = vmatpush1.bf16.msra.mxu0 0
  %2082 = vmatprep.subr.bf16.mxu0 0
  %2083 = vmatpush1.bf16.msra.mxu0 0
  %2084 = vmatprep.subr.bf16.mxu0 0
  %2085 = vmatpush1.bf16.msra.mxu0 0
  %2086 = vmatprep.subr.bf16.mxu0 0
  %2087 = vmatpush1.bf16.msra.mxu0 0
  %2088 = vmatprep.subr.bf16.mxu0 0
  %2089 = vmatpush1.bf16.msra.mxu0 0
  %2090 = vmatprep.subr.bf16.mxu0 0
  %2091 = vmatpush1.bf16.msra.mxu0 0
  %2092 = vmatprep.subr.bf16.mxu0 0
  %2093 = vmatpush1.bf16.msra.mxu0 0
  %2094 = vmatprep.subr.bf16.mxu0 0
  %2095 = vmatpush1.bf16.msra.mxu0 0
  %2096 = vmatprep.subr.bf16.mxu0 0
  %2097 = vmatpush1.bf16.msra.mxu0 0
  %2098 = vmatprep.subr.bf16.mxu0 0
  %2099 = vmatpush1.bf16.msra.mxu0 0
  %2100 = vmatprep.subr.bf16.mxu0 0
  %2101 = vmatpush1.bf16.msra.mxu0 0
  %2102 = vmatprep.subr.bf16.mxu0 0
  %2103 = vmatpush1.bf16.msra.mxu0 0
  %2104 = vmatprep.subr.bf16.mxu0 0
  %2105 = vmatpush1.bf16.msra.mxu0 0
  %2106 = vmatprep.subr.bf16.mxu0 0
  %2107 = vmatpush1.bf16.msra.mxu0 0
  %2108 = vmatprep.mubr.bf16.mxu0 0
  %2109 = vmatmul.mubr.bf16.gmra.mrb[0].mxu0 %v670
  %v2110 = vpop.f32.mrb[0].mxu0
  %v2111 = vadd.f32 0.0, %v2110
  %v2112 = vpop.f32.mrb[0].mxu0
  %v2113 = vpop.f32.mrb[0].mxu0
  %v2114 = vadd.f32 0.0, %v2113
  %v2115 = vpop.f32.mrb[0].mxu0
  %2116 = vdwg.mxu0
  %v2117 = vpack.c.bf16 %v2114, %v2111
  %v2119 = vunpack.c.l.b16 %v2117
  %v2120 = vunpack.c.h.b16 %v2117
  %v2121 = vpack.c.b16 %v2119, %v2119
  %v2122 = vpack.c.b16 %v2120, %v2120
  %s2125 = scalar_lea.vmem %s3, 200
  %2126 = vst.msk [vmem:[%s2125] sm:$0xf] %vm724, %v2121
  %2127 = vst.msk [vmem:[%s2125 + $0x4] sm:$0xf] %vm724, %v2122
  %v2129 = vsel %vm339, %v645, 0
  %2131 = vmatprep.subr.bf16.mxu0 0
  %2132 = vmatpush1.bf16.msra.mxu0 %v2129
  %2133 = vmatprep.subr.bf16.mxu0 0
  %2134 = vmatpush1.bf16.msra.mxu0 0
  %2135 = vmatprep.subr.bf16.mxu0 0
  %2136 = vmatpush1.bf16.msra.mxu0 0
  %2137 = vmatprep.subr.bf16.mxu0 0
  %2138 = vmatpush1.bf16.msra.mxu0 0
  %2139 = vmatprep.subr.bf16.mxu0 0
  %2140 = vmatpush1.bf16.msra.mxu0 0
  %2141 = vmatprep.subr.bf16.mxu0 0
  %2142 = vmatpush1.bf16.msra.mxu0 0
  %2143 = vmatprep.subr.bf16.mxu0 0
  %2144 = vmatpush1.bf16.msra.mxu0 0
  %2145 = vmatprep.subr.bf16.mxu0 0
  %2146 = vmatpush1.bf16.msra.mxu0 0
  %2147 = vmatprep.subr.bf16.mxu0 0
  %2148 = vmatpush1.bf16.msra.mxu0 0
  %2149 = vmatprep.subr.bf16.mxu0 0
  %2150 = vmatpush1.bf16.msra.mxu0 0
  %2151 = vmatprep.subr.bf16.mxu0 0
  %2152 = vmatpush1.bf16.msra.mxu0 0
  %2153 = vmatprep.subr.bf16.mxu0 0
  %2154 = vmatpush1.bf16.msra.mxu0 0
  %2155 = vmatprep.subr.bf16.mxu0 0
  %2156 = vmatpush1.bf16.msra.mxu0 0
  %2157 = vmatprep.subr.bf16.mxu0 0
  %2158 = vmatpush1.bf16.msra.mxu0 0
  %2159 = vmatprep.subr.bf16.mxu0 0
  %2160 = vmatpush1.bf16.msra.mxu0 0
  %2161 = vmatprep.subr.bf16.mxu0 0
  %2162 = vmatpush1.bf16.msra.mxu0 0
  %2163 = vmatprep.mubr.bf16.mxu0 0
  %2164 = vmatmul.mubr.bf16.gmra.mrb[0].mxu0 %v670
  %v2165 = vpop.f32.mrb[0].mxu0
  %v2166 = vadd.f32 0.0, %v2165
  %v2167 = vpop.f32.mrb[0].mxu0
  %v2168 = vpop.f32.mrb[0].mxu0
  %v2169 = vadd.f32 0.0, %v2168
  %v2170 = vpop.f32.mrb[0].mxu0
  %2171 = vdwg.mxu0
  %v2172 = vpack.c.bf16 %v2169, %v2166
  %v2174 = vunpack.c.l.b16 %v2172
  %v2175 = vunpack.c.h.b16 %v2172
  %v2176 = vpack.c.b16 %v2174, %v2174
  %v2177 = vpack.c.b16 %v2175, %v2175
  %s2180 = scalar_lea.vmem %s3, 208
  %2181 = vst.msk [vmem:[%s2180] sm:$0xf] %vm724, %v2176
  %2182 = vst.msk [vmem:[%s2180 + $0x4] sm:$0xf] %vm724, %v2177
  %v2184 = vrot.slane %v645, 4
  %v2186 = vsel %vm339, %v2184, 0
  %2188 = vmatprep.subr.bf16.mxu0 0
  %2189 = vmatpush1.bf16.msra.mxu0 %v2186
  %2190 = vmatprep.subr.bf16.mxu0 0
  %2191 = vmatpush1.bf16.msra.mxu0 0
  %2192 = vmatprep.subr.bf16.mxu0 0
  %2193 = vmatpush1.bf16.msra.mxu0 0
  %2194 = vmatprep.subr.bf16.mxu0 0
  %2195 = vmatpush1.bf16.msra.mxu0 0
  %2196 = vmatprep.subr.bf16.mxu0 0
  %2197 = vmatpush1.bf16.msra.mxu0 0
  %2198 = vmatprep.subr.bf16.mxu0 0
  %2199 = vmatpush1.bf16.msra.mxu0 0
  %2200 = vmatprep.subr.bf16.mxu0 0
  %2201 = vmatpush1.bf16.msra.mxu0 0
  %2202 = vmatprep.subr.bf16.mxu0 0
  %2203 = vmatpush1.bf16.msra.mxu0 0
  %2204 = vmatprep.subr.bf16.mxu0 0
  %2205 = vmatpush1.bf16.msra.mxu0 0
  %2206 = vmatprep.subr.bf16.mxu0 0
  %2207 = vmatpush1.bf16.msra.mxu0 0
  %2208 = vmatprep.subr.bf16.mxu0 0
  %2209 = vmatpush1.bf16.msra.mxu0 0
  %2210 = vmatprep.subr.bf16.mxu0 0
  %2211 = vmatpush1.bf16.msra.mxu0 0
  %2212 = vmatprep.subr.bf16.mxu0 0
  %2213 = vmatpush1.bf16.msra.mxu0 0
  %2214 = vmatprep.subr.bf16.mxu0 0
  %2215 = vmatpush1.bf16.msra.mxu0 0
  %2216 = vmatprep.subr.bf16.mxu0 0
  %2217 = vmatpush1.bf16.msra.mxu0 0
  %2218 = vmatprep.subr.bf16.mxu0 0
  %2219 = vmatpush1.bf16.msra.mxu0 0
  %2220 = vmatprep.mubr.bf16.mxu0 0
  %2221 = vmatmul.mubr.bf16.gmra.mrb[0].mxu0 %v670
  %v2222 = vpop.f32.mrb[0].mxu0
  %v2223 = vadd.f32 0.0, %v2222
  %v2224 = vpop.f32.mrb[0].mxu0
  %v2225 = vpop.f32.mrb[0].mxu0
  %v2226 = vadd.f32 0.0, %v2225
  %v2227 = vpop.f32.mrb[0].mxu0
  %2228 = vdwg.mxu0
  %v2229 = vpack.c.bf16 %v2226, %v2223
  %v2231 = vunpack.c.l.b16 %v2229
  %v2232 = vunpack.c.h.b16 %v2229
  %v2233 = vpack.c.b16 %v2231, %v2231
  %v2234 = vpack.c.b16 %v2232, %v2232
  %s2237 = scalar_lea.vmem %s3, 216
  %2238 = vst.msk [vmem:[%s2237] sm:$0xf] %vm724, %v2233
  %2239 = vst.msk [vmem:[%s2237 + $0x4] sm:$0xf] %vm724, %v2234
  %v2241 = vsel %vm339, %v646, 0
  %2243 = vmatprep.subr.bf16.mxu0 0
  %2244 = vmatpush1.bf16.msra.mxu0 %v2241
  %2245 = vmatprep.subr.bf16.mxu0 0
  %2246 = vmatpush1.bf16.msra.mxu0 0
  %2247 = vmatprep.subr.bf16.mxu0 0
  %2248 = vmatpush1.bf16.msra.mxu0 0
  %2249 = vmatprep.subr.bf16.mxu0 0
  %2250 = vmatpush1.bf16.msra.mxu0 0
  %2251 = vmatprep.subr.bf16.mxu0 0
  %2252 = vmatpush1.bf16.msra.mxu0 0
  %2253 = vmatprep.subr.bf16.mxu0 0
  %2254 = vmatpush1.bf16.msra.mxu0 0
  %2255 = vmatprep.subr.bf16.mxu0 0
  %2256 = vmatpush1.bf16.msra.mxu0 0
  %2257 = vmatprep.subr.bf16.mxu0 0
  %2258 = vmatpush1.bf16.msra.mxu0 0
  %2259 = vmatprep.subr.bf16.mxu0 0
  %2260 = vmatpush1.bf16.msra.mxu0 0
  %2261 = vmatprep.subr.bf16.mxu0 0
  %2262 = vmatpush1.bf16.msra.mxu0 0
  %2263 = vmatprep.subr.bf16.mxu0 0
  %2264 = vmatpush1.bf16.msra.mxu0 0
  %2265 = vmatprep.subr.bf16.mxu0 0
  %2266 = vmatpush1.bf16.msra.mxu0 0
  %2267 = vmatprep.subr.bf16.mxu0 0
  %2268 = vmatpush1.bf16.msra.mxu0 0
  %2269 = vmatprep.subr.bf16.mxu0 0
  %2270 = vmatpush1.bf16.msra.mxu0 0
  %2271 = vmatprep.subr.bf16.mxu0 0
  %2272 = vmatpush1.bf16.msra.mxu0 0
  %2273 = vmatprep.subr.bf16.mxu0 0
  %2274 = vmatpush1.bf16.msra.mxu0 0
  %2275 = vmatprep.mubr.bf16.mxu0 0
  %2276 = vmatmul.mubr.bf16.gmra.mrb[0].mxu0 %v670
  %v2277 = vpop.f32.mrb[0].mxu0
  %v2278 = vadd.f32 0.0, %v2277
  %v2279 = vpop.f32.mrb[0].mxu0
  %v2280 = vpop.f32.mrb[0].mxu0
  %v2281 = vadd.f32 0.0, %v2280
  %v2282 = vpop.f32.mrb[0].mxu0
  %2283 = vdwg.mxu0
  %v2284 = vpack.c.bf16 %v2281, %v2278
  %v2286 = vunpack.c.l.b16 %v2284
  %v2287 = vunpack.c.h.b16 %v2284
  %v2288 = vpack.c.b16 %v2286, %v2286
  %v2289 = vpack.c.b16 %v2287, %v2287
  %s2292 = scalar_lea.vmem %s3, 224
  %2293 = vst.msk [vmem:[%s2292] sm:$0xf] %vm724, %v2288
  %2294 = vst.msk [vmem:[%s2292 + $0x4] sm:$0xf] %vm724, %v2289
  %v2296 = vrot.slane %v646, 4
  %v2298 = vsel %vm339, %v2296, 0
  %2300 = vmatprep.subr.bf16.mxu0 0
  %2301 = vmatpush1.bf16.msra.mxu0 %v2298
  %2302 = vmatprep.subr.bf16.mxu0 0
  %2303 = vmatpush1.bf16.msra.mxu0 0
  %2304 = vmatprep.subr.bf16.mxu0 0
  %2305 = vmatpush1.bf16.msra.mxu0 0
  %2306 = vmatprep.subr.bf16.mxu0 0
  %2307 = vmatpush1.bf16.msra.mxu0 0
  %2308 = vmatprep.subr.bf16.mxu0 0
  %2309 = vmatpush1.bf16.msra.mxu0 0
  %2310 = vmatprep.subr.bf16.mxu0 0
  %2311 = vmatpush1.bf16.msra.mxu0 0
  %2312 = vmatprep.subr.bf16.mxu0 0
  %2313 = vmatpush1.bf16.msra.mxu0 0
  %2314 = vmatprep.subr.bf16.mxu0 0
  %2315 = vmatpush1.bf16.msra.mxu0 0
  %2316 = vmatprep.subr.bf16.mxu0 0
  %2317 = vmatpush1.bf16.msra.mxu0 0
  %2318 = vmatprep.subr.bf16.mxu0 0
  %2319 = vmatpush1.bf16.msra.mxu0 0
  %2320 = vmatprep.subr.bf16.mxu0 0
  %2321 = vmatpush1.bf16.msra.mxu0 0
  %2322 = vmatprep.subr.bf16.mxu0 0
  %2323 = vmatpush1.bf16.msra.mxu0 0
  %2324 = vmatprep.subr.bf16.mxu0 0
  %2325 = vmatpush1.bf16.msra.mxu0 0
  %2326 = vmatprep.subr.bf16.mxu0 0
  %2327 = vmatpush1.bf16.msra.mxu0 0
  %2328 = vmatprep.subr.bf16.mxu0 0
  %2329 = vmatpush1.bf16.msra.mxu0 0
  %2330 = vmatprep.subr.bf16.mxu0 0
  %2331 = vmatpush1.bf16.msra.mxu0 0
  %2332 = vmatprep.mubr.bf16.mxu0 0
  %2333 = vmatmul.mubr.bf16.gmra.mrb[0].mxu0 %v670
  %v2334 = vpop.f32.mrb[0].mxu0
  %v2335 = vadd.f32 0.0, %v2334
  %v2336 = vpop.f32.mrb[0].mxu0
  %v2337 = vpop.f32.mrb[0].mxu0
  %v2338 = vadd.f32 0.0, %v2337
  %v2339 = vpop.f32.mrb[0].mxu0
  %2340 = vdwg.mxu0
  %v2341 = vpack.c.bf16 %v2338, %v2335
  %v2343 = vunpack.c.l.b16 %v2341
  %v2344 = vunpack.c.h.b16 %v2341
  %v2345 = vpack.c.b16 %v2343, %v2343
  %v2346 = vpack.c.b16 %v2344, %v2344
  %s2349 = scalar_lea.vmem %s3, 232
  %2350 = vst.msk [vmem:[%s2349] sm:$0xf] %vm724, %v2345
  %2351 = vst.msk [vmem:[%s2349 + $0x4] sm:$0xf] %vm724, %v2346
  %v2353 = vsel %vm339, %v647, 0
  %2355 = vmatprep.subr.bf16.mxu0 0
  %2356 = vmatpush1.bf16.msra.mxu0 %v2353
  %2357 = vmatprep.subr.bf16.mxu0 0
  %2358 = vmatpush1.bf16.msra.mxu0 0
  %2359 = vmatprep.subr.bf16.mxu0 0
  %2360 = vmatpush1.bf16.msra.mxu0 0
  %2361 = vmatprep.subr.bf16.mxu0 0
  %2362 = vmatpush1.bf16.msra.mxu0 0
  %2363 = vmatprep.subr.bf16.mxu0 0
  %2364 = vmatpush1.bf16.msra.mxu0 0
  %2365 = vmatprep.subr.bf16.mxu0 0
  %2366 = vmatpush1.bf16.msra.mxu0 0
  %2367 = vmatprep.subr.bf16.mxu0 0
  %2368 = vmatpush1.bf16.msra.mxu0 0
  %2369 = vmatprep.subr.bf16.mxu0 0
  %2370 = vmatpush1.bf16.msra.mxu0 0
  %2371 = vmatprep.subr.bf16.mxu0 0
  %2372 = vmatpush1.bf16.msra.mxu0 0
  %2373 = vmatprep.subr.bf16.mxu0 0
  %2374 = vmatpush1.bf16.msra.mxu0 0
  %2375 = vmatprep.subr.bf16.mxu0 0
  %2376 = vmatpush1.bf16.msra.mxu0 0
  %2377 = vmatprep.subr.bf16.mxu0 0
  %2378 = vmatpush1.bf16.msra.mxu0 0
  %2379 = vmatprep.subr.bf16.mxu0 0
  %2380 = vmatpush1.bf16.msra.mxu0 0
  %2381 = vmatprep.subr.bf16.mxu0 0
  %2382 = vmatpush1.bf16.msra.mxu0 0
  %2383 = vmatprep.subr.bf16.mxu0 0
  %2384 = vmatpush1.bf16.msra.mxu0 0
  %2385 = vmatprep.subr.bf16.mxu0 0
  %2386 = vmatpush1.bf16.msra.mxu0 0
  %2387 = vmatprep.mubr.bf16.mxu0 0
  %2388 = vmatmul.mubr.bf16.gmra.mrb[0].mxu0 %v670
  %v2389 = vpop.f32.mrb[0].mxu0
  %v2390 = vadd.f32 0.0, %v2389
  %v2391 = vpop.f32.mrb[0].mxu0
  %v2392 = vpop.f32.mrb[0].mxu0
  %v2393 = vadd.f32 0.0, %v2392
  %v2394 = vpop.f32.mrb[0].mxu0
  %2395 = vdwg.mxu0
  %v2396 = vpack.c.bf16 %v2393, %v2390
  %v2398 = vunpack.c.l.b16 %v2396
  %v2399 = vunpack.c.h.b16 %v2396
  %v2400 = vpack.c.b16 %v2398, %v2398
  %v2401 = vpack.c.b16 %v2399, %v2399
  %s2404 = scalar_lea.vmem %s3, 240
  %2405 = vst.msk [vmem:[%s2404] sm:$0xf] %vm724, %v2400
  %2406 = vst.msk [vmem:[%s2404 + $0x4] sm:$0xf] %vm724, %v2401
  %v2408 = vrot.slane %v647, 4
  %v2410 = vsel %vm339, %v2408, 0
  %2412 = vmatprep.subr.bf16.mxu0 0
  %2413 = vmatpush1.bf16.msra.mxu0 %v2410
  %2414 = vmatprep.subr.bf16.mxu0 0
  %2415 = vmatpush1.bf16.msra.mxu0 0
  %2416 = vmatprep.subr.bf16.mxu0 0
  %2417 = vmatpush1.bf16.msra.mxu0 0
  %2418 = vmatprep.subr.bf16.mxu0 0
  %2419 = vmatpush1.bf16.msra.mxu0 0
  %2420 = vmatprep.subr.bf16.mxu0 0
  %2421 = vmatpush1.bf16.msra.mxu0 0
  %2422 = vmatprep.subr.bf16.mxu0 0
  %2423 = vmatpush1.bf16.msra.mxu0 0
  %2424 = vmatprep.subr.bf16.mxu0 0
  %2425 = vmatpush1.bf16.msra.mxu0 0
  %2426 = vmatprep.subr.bf16.mxu0 0
  %2427 = vmatpush1.bf16.msra.mxu0 0
  %2428 = vmatprep.subr.bf16.mxu0 0
  %2429 = vmatpush1.bf16.msra.mxu0 0
  %2430 = vmatprep.subr.bf16.mxu0 0
  %2431 = vmatpush1.bf16.msra.mxu0 0
  %2432 = vmatprep.subr.bf16.mxu0 0
  %2433 = vmatpush1.bf16.msra.mxu0 0
  %2434 = vmatprep.subr.bf16.mxu0 0
  %2435 = vmatpush1.bf16.msra.mxu0 0
  %2436 = vmatprep.subr.bf16.mxu0 0
  %2437 = vmatpush1.bf16.msra.mxu0 0
  %2438 = vmatprep.subr.bf16.mxu0 0
  %2439 = vmatpush1.bf16.msra.mxu0 0
  %2440 = vmatprep.subr.bf16.mxu0 0
  %2441 = vmatpush1.bf16.msra.mxu0 0
  %2442 = vmatprep.subr.bf16.mxu0 0
  %2443 = vmatpush1.bf16.msra.mxu0 0
  %2444 = vmatprep.mubr.bf16.mxu0 0
  %2445 = vmatmul.mubr.bf16.gmra.mrb[0].mxu0 %v670
  %v2446 = vpop.f32.mrb[0].mxu0
  %v2447 = vadd.f32 0.0, %v2446
  %v2448 = vpop.f32.mrb[0].mxu0
  %v2449 = vpop.f32.mrb[0].mxu0
  %v2450 = vadd.f32 0.0, %v2449
  %v2451 = vpop.f32.mrb[0].mxu0
  %2452 = vdwg.mxu0
  %v2453 = vpack.c.bf16 %v2450, %v2447
  %v2455 = vunpack.c.l.b16 %v2453
  %v2456 = vunpack.c.h.b16 %v2453
  %v2457 = vpack.c.b16 %v2455, %v2455
  %v2458 = vpack.c.b16 %v2456, %v2456
  %s2461 = scalar_lea.vmem %s3, 248
  %2462 = vst.msk [vmem:[%s2461] sm:$0xf] %vm724, %v2457
  %2463 = vst.msk [vmem:[%s2461 + $0x4] sm:$0xf] %vm724, %v2458
  %v2465 = vsel %vm339, %v648, 0
  %2467 = vmatprep.subr.bf16.mxu0 0
  %2468 = vmatpush1.bf16.msra.mxu0 %v2465
  %2469 = vmatprep.subr.bf16.mxu0 0
  %2470 = vmatpush1.bf16.msra.mxu0 0
  %2471 = vmatprep.subr.bf16.mxu0 0
  %2472 = vmatpush1.bf16.msra.mxu0 0
  %2473 = vmatprep.subr.bf16.mxu0 0
  %2474 = vmatpush1.bf16.msra.mxu0 0
  %2475 = vmatprep.subr.bf16.mxu0 0
  %2476 = vmatpush1.bf16.msra.mxu0 0
  %2477 = vmatprep.subr.bf16.mxu0 0
  %2478 = vmatpush1.bf16.msra.mxu0 0
  %2479 = vmatprep.subr.bf16.mxu0 0
  %2480 = vmatpush1.bf16.msra.mxu0 0
  %2481 = vmatprep.subr.bf16.mxu0 0
  %2482 = vmatpush1.bf16.msra.mxu0 0
  %2483 = vmatprep.subr.bf16.mxu0 0
  %2484 = vmatpush1.bf16.msra.mxu0 0
  %2485 = vmatprep.subr.bf16.mxu0 0
  %2486 = vmatpush1.bf16.msra.mxu0 0
  %2487 = vmatprep.subr.bf16.mxu0 0
  %2488 = vmatpush1.bf16.msra.mxu0 0
  %2489 = vmatprep.subr.bf16.mxu0 0
  %2490 = vmatpush1.bf16.msra.mxu0 0
  %2491 = vmatprep.subr.bf16.mxu0 0
  %2492 = vmatpush1.bf16.msra.mxu0 0
  %2493 = vmatprep.subr.bf16.mxu0 0
  %2494 = vmatpush1.bf16.msra.mxu0 0
  %2495 = vmatprep.subr.bf16.mxu0 0
  %2496 = vmatpush1.bf16.msra.mxu0 0
  %2497 = vmatprep.subr.bf16.mxu0 0
  %2498 = vmatpush1.bf16.msra.mxu0 0
  %2499 = vmatprep.mubr.bf16.mxu0 0
  %2500 = vmatmul.mubr.bf16.gmra.mrb[0].mxu0 %v670
  %v2501 = vpop.f32.mrb[0].mxu0
  %v2502 = vadd.f32 0.0, %v2501
  %v2503 = vpop.f32.mrb[0].mxu0
  %v2504 = vpop.f32.mrb[0].mxu0
  %v2505 = vadd.f32 0.0, %v2504
  %v2506 = vpop.f32.mrb[0].mxu0
  %2507 = vdwg.mxu0
  %v2508 = vpack.c.bf16 %v2505, %v2502
  %v2510 = vunpack.c.l.b16 %v2508
  %v2511 = vunpack.c.h.b16 %v2508
  %v2512 = vpack.c.b16 %v2510, %v2510
  %v2513 = vpack.c.b16 %v2511, %v2511
  %s2516 = scalar_lea.vmem %s3, 256
  %2517 = vst.msk [vmem:[%s2516] sm:$0xf] %vm724, %v2512
  %2518 = vst.msk [vmem:[%s2516 + $0x4] sm:$0xf] %vm724, %v2513
  %v2520 = vrot.slane %v648, 4
  %v2522 = vsel %vm339, %v2520, 0
  %2524 = vmatprep.subr.bf16.mxu0 0
  %2525 = vmatpush1.bf16.msra.mxu0 %v2522
  %2526 = vmatprep.subr.bf16.mxu0 0
  %2527 = vmatpush1.bf16.msra.mxu0 0
  %2528 = vmatprep.subr.bf16.mxu0 0
  %2529 = vmatpush1.bf16.msra.mxu0 0
  %2530 = vmatprep.subr.bf16.mxu0 0
  %2531 = vmatpush1.bf16.msra.mxu0 0
  %2532 = vmatprep.subr.bf16.mxu0 0
  %2533 = vmatpush1.bf16.msra.mxu0 0
  %2534 = vmatprep.subr.bf16.mxu0 0
  %2535 = vmatpush1.bf16.msra.mxu0 0
  %2536 = vmatprep.subr.bf16.mxu0 0
  %2537 = vmatpush1.bf16.msra.mxu0 0
  %2538 = vmatprep.subr.bf16.mxu0 0
  %2539 = vmatpush1.bf16.msra.mxu0 0
  %2540 = vmatprep.subr.bf16.mxu0 0
  %2541 = vmatpush1.bf16.msra.mxu0 0
  %2542 = vmatprep.subr.bf16.mxu0 0
  %2543 = vmatpush1.bf16.msra.mxu0 0
  %2544 = vmatprep.subr.bf16.mxu0 0
  %2545 = vmatpush1.bf16.msra.mxu0 0
  %2546 = vmatprep.subr.bf16.mxu0 0
  %2547 = vmatpush1.bf16.msra.mxu0 0
  %2548 = vmatprep.subr.bf16.mxu0 0
  %2549 = vmatpush1.bf16.msra.mxu0 0
  %2550 = vmatprep.subr.bf16.mxu0 0
  %2551 = vmatpush1.bf16.msra.mxu0 0
  %2552 = vmatprep.subr.bf16.mxu0 0
  %2553 = vmatpush1.bf16.msra.mxu0 0
  %2554 = vmatprep.subr.bf16.mxu0 0
  %2555 = vmatpush1.bf16.msra.mxu0 0
  %2556 = vmatprep.mubr.bf16.mxu0 0
  %2557 = vmatmul.mubr.bf16.gmra.mrb[0].mxu0 %v670
  %v2558 = vpop.f32.mrb[0].mxu0
  %v2559 = vadd.f32 0.0, %v2558
  %v2560 = vpop.f32.mrb[0].mxu0
  %v2561 = vpop.f32.mrb[0].mxu0
  %v2562 = vadd.f32 0.0, %v2561
  %v2563 = vpop.f32.mrb[0].mxu0
  %2564 = vdwg.mxu0
  %v2565 = vpack.c.bf16 %v2562, %v2559
  %v2567 = vunpack.c.l.b16 %v2565
  %v2568 = vunpack.c.h.b16 %v2565
  %v2569 = vpack.c.b16 %v2567, %v2567
  %v2570 = vpack.c.b16 %v2568, %v2568
  %s2573 = scalar_lea.vmem %s3, 264
  %2574 = vst.msk [vmem:[%s2573] sm:$0xf] %vm724, %v2569
  %2575 = vst.msk [vmem:[%s2573 + $0x4] sm:$0xf] %vm724, %v2570
  %v2577 = vsel %vm339, %v649, 0
  %2579 = vmatprep.subr.bf16.mxu0 0
  %2580 = vmatpush1.bf16.msra.mxu0 %v2577
  %2581 = vmatprep.subr.bf16.mxu0 0
  %2582 = vmatpush1.bf16.msra.mxu0 0
  %2583 = vmatprep.subr.bf16.mxu0 0
  %2584 = vmatpush1.bf16.msra.mxu0 0
  %2585 = vmatprep.subr.bf16.mxu0 0
  %2586 = vmatpush1.bf16.msra.mxu0 0
  %2587 = vmatprep.subr.bf16.mxu0 0
  %2588 = vmatpush1.bf16.msra.mxu0 0
  %2589 = vmatprep.subr.bf16.mxu0 0
  %2590 = vmatpush1.bf16.msra.mxu0 0
  %2591 = vmatprep.subr.bf16.mxu0 0
  %2592 = vmatpush1.bf16.msra.mxu0 0
  %2593 = vmatprep.subr.bf16.mxu0 0
  %2594 = vmatpush1.bf16.msra.mxu0 0
  %2595 = vmatprep.subr.bf16.mxu0 0
  %2596 = vmatpush1.bf16.msra.mxu0 0
  %2597 = vmatprep.subr.bf16.mxu0 0
  %2598 = vmatpush1.bf16.msra.mxu0 0
  %2599 = vmatprep.subr.bf16.mxu0 0
  %2600 = vmatpush1.bf16.msra.mxu0 0
  %2601 = vmatprep.subr.bf16.mxu0 0
  %2602 = vmatpush1.bf16.msra.mxu0 0
  %2603 = vmatprep.subr.bf16.mxu0 0
  %2604 = vmatpush1.bf16.msra.mxu0 0
  %2605 = vmatprep.subr.bf16.mxu0 0
  %2606 = vmatpush1.bf16.msra.mxu0 0
  %2607 = vmatprep.subr.bf16.mxu0 0
  %2608 = vmatpush1.bf16.msra.mxu0 0
  %2609 = vmatprep.subr.bf16.mxu0 0
  %2610 = vmatpush1.bf16.msra.mxu0 0
  %2611 = vmatprep.mubr.bf16.mxu0 0
  %2612 = vmatmul.mubr.bf16.gmra.mrb[0].mxu0 %v670
  %v2613 = vpop.f32.mrb[0].mxu0
  %v2614 = vadd.f32 0.0, %v2613
  %v2615 = vpop.f32.mrb[0].mxu0
  %v2616 = vpop.f32.mrb[0].mxu0
  %v2617 = vadd.f32 0.0, %v2616
  %v2618 = vpop.f32.mrb[0].mxu0
  %2619 = vdwg.mxu0
  %v2620 = vpack.c.bf16 %v2617, %v2614
  %v2622 = vunpack.c.l.b16 %v2620
  %v2623 = vunpack.c.h.b16 %v2620
  %v2624 = vpack.c.b16 %v2622, %v2622
  %v2625 = vpack.c.b16 %v2623, %v2623
  %s2628 = scalar_lea.vmem %s3, 272
  %2629 = vst.msk [vmem:[%s2628] sm:$0xf] %vm724, %v2624
  %2630 = vst.msk [vmem:[%s2628 + $0x4] sm:$0xf] %vm724, %v2625
  %v2632 = vrot.slane %v649, 4
  %v2634 = vsel %vm339, %v2632, 0
  %2636 = vmatprep.subr.bf16.mxu0 0
  %2637 = vmatpush1.bf16.msra.mxu0 %v2634
  %2638 = vmatprep.subr.bf16.mxu0 0
  %2639 = vmatpush1.bf16.msra.mxu0 0
  %2640 = vmatprep.subr.bf16.mxu0 0
  %2641 = vmatpush1.bf16.msra.mxu0 0
  %2642 = vmatprep.subr.bf16.mxu0 0
  %2643 = vmatpush1.bf16.msra.mxu0 0
  %2644 = vmatprep.subr.bf16.mxu0 0
  %2645 = vmatpush1.bf16.msra.mxu0 0
  %2646 = vmatprep.subr.bf16.mxu0 0
  %2647 = vmatpush1.bf16.msra.mxu0 0
  %2648 = vmatprep.subr.bf16.mxu0 0
  %2649 = vmatpush1.bf16.msra.mxu0 0
  %2650 = vmatprep.subr.bf16.mxu0 0
  %2651 = vmatpush1.bf16.msra.mxu0 0
  %2652 = vmatprep.subr.bf16.mxu0 0
  %2653 = vmatpush1.bf16.msra.mxu0 0
  %2654 = vmatprep.subr.bf16.mxu0 0
  %2655 = vmatpush1.bf16.msra.mxu0 0
  %2656 = vmatprep.subr.bf16.mxu0 0
  %2657 = vmatpush1.bf16.msra.mxu0 0
  %2658 = vmatprep.subr.bf16.mxu0 0
  %2659 = vmatpush1.bf16.msra.mxu0 0
  %2660 = vmatprep.subr.bf16.mxu0 0
  %2661 = vmatpush1.bf16.msra.mxu0 0
  %2662 = vmatprep.subr.bf16.mxu0 0
  %2663 = vmatpush1.bf16.msra.mxu0 0
  %2664 = vmatprep.subr.bf16.mxu0 0
  %2665 = vmatpush1.bf16.msra.mxu0 0
  %2666 = vmatprep.subr.bf16.mxu0 0
  %2667 = vmatpush1.bf16.msra.mxu0 0
  %2668 = vmatprep.mubr.bf16.mxu0 0
  %2669 = vmatmul.mubr.bf16.gmra.mrb[0].mxu0 %v670
  %v2670 = vpop.f32.mrb[0].mxu0
  %v2671 = vadd.f32 0.0, %v2670
  %v2672 = vpop.f32.mrb[0].mxu0
  %v2673 = vpop.f32.mrb[0].mxu0
  %v2674 = vadd.f32 0.0, %v2673
  %v2675 = vpop.f32.mrb[0].mxu0
  %2676 = vdwg.mxu0
  %v2677 = vpack.c.bf16 %v2674, %v2671
  %v2679 = vunpack.c.l.b16 %v2677
  %v2680 = vunpack.c.h.b16 %v2677
  %v2681 = vpack.c.b16 %v2679, %v2679
  %v2682 = vpack.c.b16 %v2680, %v2680
  %s2685 = scalar_lea.vmem %s3, 280
  %2686 = vst.msk [vmem:[%s2685] sm:$0xf] %vm724, %v2681
  %2687 = vst.msk [vmem:[%s2685 + $0x4] sm:$0xf] %vm724, %v2682
  %v2689 = vsel %vm339, %v650, 0
  %2691 = vmatprep.subr.bf16.mxu0 0
  %2692 = vmatpush1.bf16.msra.mxu0 %v2689
  %2693 = vmatprep.subr.bf16.mxu0 0
  %2694 = vmatpush1.bf16.msra.mxu0 0
  %2695 = vmatprep.subr.bf16.mxu0 0
  %2696 = vmatpush1.bf16.msra.mxu0 0
  %2697 = vmatprep.subr.bf16.mxu0 0
  %2698 = vmatpush1.bf16.msra.mxu0 0
  %2699 = vmatprep.subr.bf16.mxu0 0
  %2700 = vmatpush1.bf16.msra.mxu0 0
  %2701 = vmatprep.subr.bf16.mxu0 0
  %2702 = vmatpush1.bf16.msra.mxu0 0
  %2703 = vmatprep.subr.bf16.mxu0 0
  %2704 = vmatpush1.bf16.msra.mxu0 0
  %2705 = vmatprep.subr.bf16.mxu0 0
  %2706 = vmatpush1.bf16.msra.mxu0 0
  %2707 = vmatprep.subr.bf16.mxu0 0
  %2708 = vmatpush1.bf16.msra.mxu0 0
  %2709 = vmatprep.subr.bf16.mxu0 0
  %2710 = vmatpush1.bf16.msra.mxu0 0
  %2711 = vmatprep.subr.bf16.mxu0 0
  %2712 = vmatpush1.bf16.msra.mxu0 0
  %2713 = vmatprep.subr.bf16.mxu0 0
  %2714 = vmatpush1.bf16.msra.mxu0 0
  %2715 = vmatprep.subr.bf16.mxu0 0
  %2716 = vmatpush1.bf16.msra.mxu0 0
  %2717 = vmatprep.subr.bf16.mxu0 0
  %2718 = vmatpush1.bf16.msra.mxu0 0
  %2719 = vmatprep.subr.bf16.mxu0 0
  %2720 = vmatpush1.bf16.msra.mxu0 0
  %2721 = vmatprep.subr.bf16.mxu0 0
  %2722 = vmatpush1.bf16.msra.mxu0 0
  %2723 = vmatprep.mubr.bf16.mxu0 0
  %2724 = vmatmul.mubr.bf16.gmra.mrb[0].mxu0 %v670
  %v2725 = vpop.f32.mrb[0].mxu0
  %v2726 = vadd.f32 0.0, %v2725
  %v2727 = vpop.f32.mrb[0].mxu0
  %v2728 = vpop.f32.mrb[0].mxu0
  %v2729 = vadd.f32 0.0, %v2728
  %v2730 = vpop.f32.mrb[0].mxu0
  %2731 = vdwg.mxu0
  %v2732 = vpack.c.bf16 %v2729, %v2726
  %v2734 = vunpack.c.l.b16 %v2732
  %v2735 = vunpack.c.h.b16 %v2732
  %v2736 = vpack.c.b16 %v2734, %v2734
  %v2737 = vpack.c.b16 %v2735, %v2735
  %s2740 = scalar_lea.vmem %s3, 288
  %2741 = vst.msk [vmem:[%s2740] sm:$0xf] %vm724, %v2736
  %2742 = vst.msk [vmem:[%s2740 + $0x4] sm:$0xf] %vm724, %v2737
  %v2744 = vrot.slane %v650, 4
  %v2746 = vsel %vm339, %v2744, 0
  %2748 = vmatprep.subr.bf16.mxu0 0
  %2749 = vmatpush1.bf16.msra.mxu0 %v2746
  %2750 = vmatprep.subr.bf16.mxu0 0
  %2751 = vmatpush1.bf16.msra.mxu0 0
  %2752 = vmatprep.subr.bf16.mxu0 0
  %2753 = vmatpush1.bf16.msra.mxu0 0
  %2754 = vmatprep.subr.bf16.mxu0 0
  %2755 = vmatpush1.bf16.msra.mxu0 0
  %2756 = vmatprep.subr.bf16.mxu0 0
  %2757 = vmatpush1.bf16.msra.mxu0 0
  %2758 = vmatprep.subr.bf16.mxu0 0
  %2759 = vmatpush1.bf16.msra.mxu0 0
  %2760 = vmatprep.subr.bf16.mxu0 0
  %2761 = vmatpush1.bf16.msra.mxu0 0
  %2762 = vmatprep.subr.bf16.mxu0 0
  %2763 = vmatpush1.bf16.msra.mxu0 0
  %2764 = vmatprep.subr.bf16.mxu0 0
  %2765 = vmatpush1.bf16.msra.mxu0 0
  %2766 = vmatprep.subr.bf16.mxu0 0
  %2767 = vmatpush1.bf16.msra.mxu0 0
  %2768 = vmatprep.subr.bf16.mxu0 0
  %2769 = vmatpush1.bf16.msra.mxu0 0
  %2770 = vmatprep.subr.bf16.mxu0 0
  %2771 = vmatpush1.bf16.msra.mxu0 0
  %2772 = vmatprep.subr.bf16.mxu0 0
  %2773 = vmatpush1.bf16.msra.mxu0 0
  %2774 = vmatprep.subr.bf16.mxu0 0
  %2775 = vmatpush1.bf16.msra.mxu0 0
  %2776 = vmatprep.subr.bf16.mxu0 0
  %2777 = vmatpush1.bf16.msra.mxu0 0
  %2778 = vmatprep.subr.bf16.mxu0 0
  %2779 = vmatpush1.bf16.msra.mxu0 0
  %2780 = vmatprep.mubr.bf16.mxu0 0
  %2781 = vmatmul.mubr.bf16.gmra.mrb[0].mxu0 %v670
  %v2782 = vpop.f32.mrb[0].mxu0
  %v2783 = vadd.f32 0.0, %v2782
  %v2784 = vpop.f32.mrb[0].mxu0
  %v2785 = vpop.f32.mrb[0].mxu0
  %v2786 = vadd.f32 0.0, %v2785
  %v2787 = vpop.f32.mrb[0].mxu0
  %2788 = vdwg.mxu0
  %v2789 = vpack.c.bf16 %v2786, %v2783
  %v2791 = vunpack.c.l.b16 %v2789
  %v2792 = vunpack.c.h.b16 %v2789
  %v2793 = vpack.c.b16 %v2791, %v2791
  %v2794 = vpack.c.b16 %v2792, %v2792
  %s2797 = scalar_lea.vmem %s3, 296
  %2798 = vst.msk [vmem:[%s2797] sm:$0xf] %vm724, %v2793
  %2799 = vst.msk [vmem:[%s2797 + $0x4] sm:$0xf] %vm724, %v2794
  %v2801 = vsel %vm339, %v651, 0
  %2803 = vmatprep.subr.bf16.mxu0 0
  %2804 = vmatpush1.bf16.msra.mxu0 %v2801
  %2805 = vmatprep.subr.bf16.mxu0 0
  %2806 = vmatpush1.bf16.msra.mxu0 0
  %2807 = vmatprep.subr.bf16.mxu0 0
  %2808 = vmatpush1.bf16.msra.mxu0 0
  %2809 = vmatprep.subr.bf16.mxu0 0
  %2810 = vmatpush1.bf16.msra.mxu0 0
  %2811 = vmatprep.subr.bf16.mxu0 0
  %2812 = vmatpush1.bf16.msra.mxu0 0
  %2813 = vmatprep.subr.bf16.mxu0 0
  %2814 = vmatpush1.bf16.msra.mxu0 0
  %2815 = vmatprep.subr.bf16.mxu0 0
  %2816 = vmatpush1.bf16.msra.mxu0 0
  %2817 = vmatprep.subr.bf16.mxu0 0
  %2818 = vmatpush1.bf16.msra.mxu0 0
  %2819 = vmatprep.subr.bf16.mxu0 0
  %2820 = vmatpush1.bf16.msra.mxu0 0
  %2821 = vmatprep.subr.bf16.mxu0 0
  %2822 = vmatpush1.bf16.msra.mxu0 0
  %2823 = vmatprep.subr.bf16.mxu0 0
  %2824 = vmatpush1.bf16.msra.mxu0 0
  %2825 = vmatprep.subr.bf16.mxu0 0
  %2826 = vmatpush1.bf16.msra.mxu0 0
  %2827 = vmatprep.subr.bf16.mxu0 0
  %2828 = vmatpush1.bf16.msra.mxu0 0
  %2829 = vmatprep.subr.bf16.mxu0 0
  %2830 = vmatpush1.bf16.msra.mxu0 0
  %2831 = vmatprep.subr.bf16.mxu0 0
  %2832 = vmatpush1.bf16.msra.mxu0 0
  %2833 = vmatprep.subr.bf16.mxu0 0
  %2834 = vmatpush1.bf16.msra.mxu0 0
  %2835 = vmatprep.mubr.bf16.mxu0 0
  %2836 = vmatmul.mubr.bf16.gmra.mrb[0].mxu0 %v670
  %v2837 = vpop.f32.mrb[0].mxu0
  %v2838 = vadd.f32 0.0, %v2837
  %v2839 = vpop.f32.mrb[0].mxu0
  %v2840 = vpop.f32.mrb[0].mxu0
  %v2841 = vadd.f32 0.0, %v2840
  %v2842 = vpop.f32.mrb[0].mxu0
  %2843 = vdwg.mxu0
  %v2844 = vpack.c.bf16 %v2841, %v2838
  %v2846 = vunpack.c.l.b16 %v2844
  %v2847 = vunpack.c.h.b16 %v2844
  %v2848 = vpack.c.b16 %v2846, %v2846
  %v2849 = vpack.c.b16 %v2847, %v2847
  %s2852 = scalar_lea.vmem %s3, 304
  %2853 = vst.msk [vmem:[%s2852] sm:$0xf] %vm724, %v2848
  %2854 = vst.msk [vmem:[%s2852 + $0x4] sm:$0xf] %vm724, %v2849
  %v2856 = vrot.slane %v651, 4
  %v2858 = vsel %vm339, %v2856, 0
  %2860 = vmatprep.subr.bf16.mxu0 0
  %2861 = vmatpush1.bf16.msra.mxu0 %v2858
  %2862 = vmatprep.subr.bf16.mxu0 0
  %2863 = vmatpush1.bf16.msra.mxu0 0
  %2864 = vmatprep.subr.bf16.mxu0 0
  %2865 = vmatpush1.bf16.msra.mxu0 0
  %2866 = vmatprep.subr.bf16.mxu0 0
  %2867 = vmatpush1.bf16.msra.mxu0 0
  %2868 = vmatprep.subr.bf16.mxu0 0
  %2869 = vmatpush1.bf16.msra.mxu0 0
  %2870 = vmatprep.subr.bf16.mxu0 0
  %2871 = vmatpush1.bf16.msra.mxu0 0
  %2872 = vmatprep.subr.bf16.mxu0 0
  %2873 = vmatpush1.bf16.msra.mxu0 0
  %2874 = vmatprep.subr.bf16.mxu0 0
  %2875 = vmatpush1.bf16.msra.mxu0 0
  %2876 = vmatprep.subr.bf16.mxu0 0
  %2877 = vmatpush1.bf16.msra.mxu0 0
  %2878 = vmatprep.subr.bf16.mxu0 0
  %2879 = vmatpush1.bf16.msra.mxu0 0
  %2880 = vmatprep.subr.bf16.mxu0 0
  %2881 = vmatpush1.bf16.msra.mxu0 0
  %2882 = vmatprep.subr.bf16.mxu0 0
  %2883 = vmatpush1.bf16.msra.mxu0 0
  %2884 = vmatprep.subr.bf16.mxu0 0
  %2885 = vmatpush1.bf16.msra.mxu0 0
  %2886 = vmatprep.subr.bf16.mxu0 0
  %2887 = vmatpush1.bf16.msra.mxu0 0
  %2888 = vmatprep.subr.bf16.mxu0 0
  %2889 = vmatpush1.bf16.msra.mxu0 0
  %2890 = vmatprep.subr.bf16.mxu0 0
  %2891 = vmatpush1.bf16.msra.mxu0 0
  %2892 = vmatprep.mubr.bf16.mxu0 0
  %2893 = vmatmul.mubr.bf16.gmra.mrb[0].mxu0 %v670
  %v2894 = vpop.f32.mrb[0].mxu0
  %v2895 = vadd.f32 0.0, %v2894
  %v2896 = vpop.f32.mrb[0].mxu0
  %v2897 = vpop.f32.mrb[0].mxu0
  %v2898 = vadd.f32 0.0, %v2897
  %v2899 = vpop.f32.mrb[0].mxu0
  %2900 = vdwg.mxu0
  %v2901 = vpack.c.bf16 %v2898, %v2895
  %v2903 = vunpack.c.l.b16 %v2901
  %v2904 = vunpack.c.h.b16 %v2901
  %v2905 = vpack.c.b16 %v2903, %v2903
  %v2906 = vpack.c.b16 %v2904, %v2904
  %s2909 = scalar_lea.vmem %s3, 312
  %2910 = vst.msk [vmem:[%s2909] sm:$0xf] %vm724, %v2905
  %2911 = vst.msk [vmem:[%s2909 + $0x4] sm:$0xf] %vm724, %v2906
  %v2913 = vsel %vm339, %v652, 0
  %2915 = vmatprep.subr.bf16.mxu0 0
  %2916 = vmatpush1.bf16.msra.mxu0 %v2913
  %2917 = vmatprep.subr.bf16.mxu0 0
  %2918 = vmatpush1.bf16.msra.mxu0 0
  %2919 = vmatprep.subr.bf16.mxu0 0
  %2920 = vmatpush1.bf16.msra.mxu0 0
  %2921 = vmatprep.subr.bf16.mxu0 0
  %2922 = vmatpush1.bf16.msra.mxu0 0
  %2923 = vmatprep.subr.bf16.mxu0 0
  %2924 = vmatpush1.bf16.msra.mxu0 0
  %2925 = vmatprep.subr.bf16.mxu0 0
  %2926 = vmatpush1.bf16.msra.mxu0 0
  %2927 = vmatprep.subr.bf16.mxu0 0
  %2928 = vmatpush1.bf16.msra.mxu0 0
  %2929 = vmatprep.subr.bf16.mxu0 0
  %2930 = vmatpush1.bf16.msra.mxu0 0
  %2931 = vmatprep.subr.bf16.mxu0 0
  %2932 = vmatpush1.bf16.msra.mxu0 0
  %2933 = vmatprep.subr.bf16.mxu0 0
  %2934 = vmatpush1.bf16.msra.mxu0 0
  %2935 = vmatprep.subr.bf16.mxu0 0
  %2936 = vmatpush1.bf16.msra.mxu0 0
  %2937 = vmatprep.subr.bf16.mxu0 0
  %2938 = vmatpush1.bf16.msra.mxu0 0
  %2939 = vmatprep.subr.bf16.mxu0 0
  %2940 = vmatpush1.bf16.msra.mxu0 0
  %2941 = vmatprep.subr.bf16.mxu0 0
  %2942 = vmatpush1.bf16.msra.mxu0 0
  %2943 = vmatprep.subr.bf16.mxu0 0
  %2944 = vmatpush1.bf16.msra.mxu0 0
  %2945 = vmatprep.subr.bf16.mxu0 0
  %2946 = vmatpush1.bf16.msra.mxu0 0
  %2947 = vmatprep.mubr.bf16.mxu0 0
  %2948 = vmatmul.mubr.bf16.gmra.mrb[0].mxu0 %v670
  %v2949 = vpop.f32.mrb[0].mxu0
  %v2950 = vadd.f32 0.0, %v2949
  %v2951 = vpop.f32.mrb[0].mxu0
  %v2952 = vpop.f32.mrb[0].mxu0
  %v2953 = vadd.f32 0.0, %v2952
  %v2954 = vpop.f32.mrb[0].mxu0
  %2955 = vdwg.mxu0
  %v2956 = vpack.c.bf16 %v2953, %v2950
  %v2958 = vunpack.c.l.b16 %v2956
  %v2959 = vunpack.c.h.b16 %v2956
  %v2960 = vpack.c.b16 %v2958, %v2958
  %v2961 = vpack.c.b16 %v2959, %v2959
  %s2964 = scalar_lea.vmem %s3, 320
  %2965 = vst.msk [vmem:[%s2964] sm:$0xf] %vm724, %v2960
  %2966 = vst.msk [vmem:[%s2964 + $0x4] sm:$0xf] %vm724, %v2961
  %v2968 = vrot.slane %v652, 4
  %v2970 = vsel %vm339, %v2968, 0
  %2972 = vmatprep.subr.bf16.mxu0 0
  %2973 = vmatpush1.bf16.msra.mxu0 %v2970
  %2974 = vmatprep.subr.bf16.mxu0 0
  %2975 = vmatpush1.bf16.msra.mxu0 0
  %2976 = vmatprep.subr.bf16.mxu0 0
  %2977 = vmatpush1.bf16.msra.mxu0 0
  %2978 = vmatprep.subr.bf16.mxu0 0
  %2979 = vmatpush1.bf16.msra.mxu0 0
  %2980 = vmatprep.subr.bf16.mxu0 0
  %2981 = vmatpush1.bf16.msra.mxu0 0
  %2982 = vmatprep.subr.bf16.mxu0 0
  %2983 = vmatpush1.bf16.msra.mxu0 0
  %2984 = vmatprep.subr.bf16.mxu0 0
  %2985 = vmatpush1.bf16.msra.mxu0 0
  %2986 = vmatprep.subr.bf16.mxu0 0
  %2987 = vmatpush1.bf16.msra.mxu0 0
  %2988 = vmatprep.subr.bf16.mxu0 0
  %2989 = vmatpush1.bf16.msra.mxu0 0
  %2990 = vmatprep.subr.bf16.mxu0 0
  %2991 = vmatpush1.bf16.msra.mxu0 0
  %2992 = vmatprep.subr.bf16.mxu0 0
  %2993 = vmatpush1.bf16.msra.mxu0 0
  %2994 = vmatprep.subr.bf16.mxu0 0
  %2995 = vmatpush1.bf16.msra.mxu0 0
  %2996 = vmatprep.subr.bf16.mxu0 0
  %2997 = vmatpush1.bf16.msra.mxu0 0
  %2998 = vmatprep.subr.bf16.mxu0 0
  %2999 = vmatpush1.bf16.msra.mxu0 0
  %3000 = vmatprep.subr.bf16.mxu0 0
  %3001 = vmatpush1.bf16.msra.mxu0 0
  %3002 = vmatprep.subr.bf16.mxu0 0
  %3003 = vmatpush1.bf16.msra.mxu0 0
  %3004 = vmatprep.mubr.bf16.mxu0 0
  %3005 = vmatmul.mubr.bf16.gmra.mrb[0].mxu0 %v670
  %v3006 = vpop.f32.mrb[0].mxu0
  %v3007 = vadd.f32 0.0, %v3006
  %v3008 = vpop.f32.mrb[0].mxu0
  %v3009 = vpop.f32.mrb[0].mxu0
  %v3010 = vadd.f32 0.0, %v3009
  %v3011 = vpop.f32.mrb[0].mxu0
  %3012 = vdwg.mxu0
  %v3013 = vpack.c.bf16 %v3010, %v3007
  %v3015 = vunpack.c.l.b16 %v3013
  %v3016 = vunpack.c.h.b16 %v3013
  %v3017 = vpack.c.b16 %v3015, %v3015
  %v3018 = vpack.c.b16 %v3016, %v3016
  %s3021 = scalar_lea.vmem %s3, 328
  %3022 = vst.msk [vmem:[%s3021] sm:$0xf] %vm724, %v3017
  %3023 = vst.msk [vmem:[%s3021 + $0x4] sm:$0xf] %vm724, %v3018
  %v3025 = vsel %vm339, %v653, 0
  %3027 = vmatprep.subr.bf16.mxu0 0
  %3028 = vmatpush1.bf16.msra.mxu0 %v3025
  %3029 = vmatprep.subr.bf16.mxu0 0
  %3030 = vmatpush1.bf16.msra.mxu0 0
  %3031 = vmatprep.subr.bf16.mxu0 0
  %3032 = vmatpush1.bf16.msra.mxu0 0
  %3033 = vmatprep.subr.bf16.mxu0 0
  %3034 = vmatpush1.bf16.msra.mxu0 0
  %3035 = vmatprep.subr.bf16.mxu0 0
  %3036 = vmatpush1.bf16.msra.mxu0 0
  %3037 = vmatprep.subr.bf16.mxu0 0
  %3038 = vmatpush1.bf16.msra.mxu0 0
  %3039 = vmatprep.subr.bf16.mxu0 0
  %3040 = vmatpush1.bf16.msra.mxu0 0
  %3041 = vmatprep.subr.bf16.mxu0 0
  %3042 = vmatpush1.bf16.msra.mxu0 0
  %3043 = vmatprep.subr.bf16.mxu0 0
  %3044 = vmatpush1.bf16.msra.mxu0 0
  %3045 = vmatprep.subr.bf16.mxu0 0
  %3046 = vmatpush1.bf16.msra.mxu0 0
  %3047 = vmatprep.subr.bf16.mxu0 0
  %3048 = vmatpush1.bf16.msra.mxu0 0
  %3049 = vmatprep.subr.bf16.mxu0 0
  %3050 = vmatpush1.bf16.msra.mxu0 0
  %3051 = vmatprep.subr.bf16.mxu0 0
  %3052 = vmatpush1.bf16.msra.mxu0 0
  %3053 = vmatprep.subr.bf16.mxu0 0
  %3054 = vmatpush1.bf16.msra.mxu0 0
  %3055 = vmatprep.subr.bf16.mxu0 0
  %3056 = vmatpush1.bf16.msra.mxu0 0
  %3057 = vmatprep.subr.bf16.mxu0 0
  %3058 = vmatpush1.bf16.msra.mxu0 0
  %3059 = vmatprep.mubr.bf16.mxu0 0
  %3060 = vmatmul.mubr.bf16.gmra.mrb[0].mxu0 %v670
  %v3061 = vpop.f32.mrb[0].mxu0
  %v3062 = vadd.f32 0.0, %v3061
  %v3063 = vpop.f32.mrb[0].mxu0
  %v3064 = vpop.f32.mrb[0].mxu0
  %v3065 = vadd.f32 0.0, %v3064
  %v3066 = vpop.f32.mrb[0].mxu0
  %3067 = vdwg.mxu0
  %v3068 = vpack.c.bf16 %v3065, %v3062
  %v3070 = vunpack.c.l.b16 %v3068
  %v3071 = vunpack.c.h.b16 %v3068
  %v3072 = vpack.c.b16 %v3070, %v3070
  %v3073 = vpack.c.b16 %v3071, %v3071
  %s3076 = scalar_lea.vmem %s3, 336
  %3077 = vst.msk [vmem:[%s3076] sm:$0xf] %vm724, %v3072
  %3078 = vst.msk [vmem:[%s3076 + $0x4] sm:$0xf] %vm724, %v3073
  %v3080 = vrot.slane %v653, 4
  %v3082 = vsel %vm339, %v3080, 0
  %3084 = vmatprep.subr.bf16.mxu0 0
  %3085 = vmatpush1.bf16.msra.mxu0 %v3082
  %3086 = vmatprep.subr.bf16.mxu0 0
  %3087 = vmatpush1.bf16.msra.mxu0 0
  %3088 = vmatprep.subr.bf16.mxu0 0
  %3089 = vmatpush1.bf16.msra.mxu0 0
  %3090 = vmatprep.subr.bf16.mxu0 0
  %3091 = vmatpush1.bf16.msra.mxu0 0
  %3092 = vmatprep.subr.bf16.mxu0 0
  %3093 = vmatpush1.bf16.msra.mxu0 0
  %3094 = vmatprep.subr.bf16.mxu0 0
  %3095 = vmatpush1.bf16.msra.mxu0 0
  %3096 = vmatprep.subr.bf16.mxu0 0
  %3097 = vmatpush1.bf16.msra.mxu0 0
  %3098 = vmatprep.subr.bf16.mxu0 0
  %3099 = vmatpush1.bf16.msra.mxu0 0
  %3100 = vmatprep.subr.bf16.mxu0 0
  %3101 = vmatpush1.bf16.msra.mxu0 0
  %3102 = vmatprep.subr.bf16.mxu0 0
  %3103 = vmatpush1.bf16.msra.mxu0 0
  %3104 = vmatprep.subr.bf16.mxu0 0
  %3105 = vmatpush1.bf16.msra.mxu0 0
  %3106 = vmatprep.subr.bf16.mxu0 0
  %3107 = vmatpush1.bf16.msra.mxu0 0
  %3108 = vmatprep.subr.bf16.mxu0 0
  %3109 = vmatpush1.bf16.msra.mxu0 0
  %3110 = vmatprep.subr.bf16.mxu0 0
  %3111 = vmatpush1.bf16.msra.mxu0 0
  %3112 = vmatprep.subr.bf16.mxu0 0
  %3113 = vmatpush1.bf16.msra.mxu0 0
  %3114 = vmatprep.subr.bf16.mxu0 0
  %3115 = vmatpush1.bf16.msra.mxu0 0
  %3116 = vmatprep.mubr.bf16.mxu0 0
  %3117 = vmatmul.mubr.bf16.gmra.mrb[0].mxu0 %v670
  %v3118 = vpop.f32.mrb[0].mxu0
  %v3119 = vadd.f32 0.0, %v3118
  %v3120 = vpop.f32.mrb[0].mxu0
  %v3121 = vpop.f32.mrb[0].mxu0
  %v3122 = vadd.f32 0.0, %v3121
  %v3123 = vpop.f32.mrb[0].mxu0
  %3124 = vdwg.mxu0
  %v3125 = vpack.c.bf16 %v3122, %v3119
  %v3127 = vunpack.c.l.b16 %v3125
  %v3128 = vunpack.c.h.b16 %v3125
  %v3129 = vpack.c.b16 %v3127, %v3127
  %v3130 = vpack.c.b16 %v3128, %v3128
  %s3133 = scalar_lea.vmem %s3, 344
  %3134 = vst.msk [vmem:[%s3133] sm:$0xf] %vm724, %v3129
  %3135 = vst.msk [vmem:[%s3133 + $0x4] sm:$0xf] %vm724, %v3130
  %v3137 = vsel %vm339, %v654, 0
  %3139 = vmatprep.subr.bf16.mxu0 0
  %3140 = vmatpush1.bf16.msra.mxu0 %v3137
  %3141 = vmatprep.subr.bf16.mxu0 0
  %3142 = vmatpush1.bf16.msra.mxu0 0
  %3143 = vmatprep.subr.bf16.mxu0 0
  %3144 = vmatpush1.bf16.msra.mxu0 0
  %3145 = vmatprep.subr.bf16.mxu0 0
  %3146 = vmatpush1.bf16.msra.mxu0 0
  %3147 = vmatprep.subr.bf16.mxu0 0
  %3148 = vmatpush1.bf16.msra.mxu0 0
  %3149 = vmatprep.subr.bf16.mxu0 0
  %3150 = vmatpush1.bf16.msra.mxu0 0
  %3151 = vmatprep.subr.bf16.mxu0 0
  %3152 = vmatpush1.bf16.msra.mxu0 0
  %3153 = vmatprep.subr.bf16.mxu0 0
  %3154 = vmatpush1.bf16.msra.mxu0 0
  %3155 = vmatprep.subr.bf16.mxu0 0
  %3156 = vmatpush1.bf16.msra.mxu0 0
  %3157 = vmatprep.subr.bf16.mxu0 0
  %3158 = vmatpush1.bf16.msra.mxu0 0
  %3159 = vmatprep.subr.bf16.mxu0 0
  %3160 = vmatpush1.bf16.msra.mxu0 0
  %3161 = vmatprep.subr.bf16.mxu0 0
  %3162 = vmatpush1.bf16.msra.mxu0 0
  %3163 = vmatprep.subr.bf16.mxu0 0
  %3164 = vmatpush1.bf16.msra.mxu0 0
  %3165 = vmatprep.subr.bf16.mxu0 0
  %3166 = vmatpush1.bf16.msra.mxu0 0
  %3167 = vmatprep.subr.bf16.mxu0 0
  %3168 = vmatpush1.bf16.msra.mxu0 0
  %3169 = vmatprep.subr.bf16.mxu0 0
  %3170 = vmatpush1.bf16.msra.mxu0 0
  %3171 = vmatprep.mubr.bf16.mxu0 0
  %3172 = vmatmul.mubr.bf16.gmra.mrb[0].mxu0 %v670
  %v3173 = vpop.f32.mrb[0].mxu0
  %v3174 = vadd.f32 0.0, %v3173
  %v3175 = vpop.f32.mrb[0].mxu0
  %v3176 = vpop.f32.mrb[0].mxu0
  %v3177 = vadd.f32 0.0, %v3176
  %v3178 = vpop.f32.mrb[0].mxu0
  %3179 = vdwg.mxu0
  %v3180 = vpack.c.bf16 %v3177, %v3174
  %v3182 = vunpack.c.l.b16 %v3180
  %v3183 = vunpack.c.h.b16 %v3180
  %v3184 = vpack.c.b16 %v3182, %v3182
  %v3185 = vpack.c.b16 %v3183, %v3183
  %s3188 = scalar_lea.vmem %s3, 352
  %3189 = vst.msk [vmem:[%s3188] sm:$0xf] %vm724, %v3184
  %3190 = vst.msk [vmem:[%s3188 + $0x4] sm:$0xf] %vm724, %v3185
  %v3192 = vrot.slane %v654, 4
  %v3194 = vsel %vm339, %v3192, 0
  %3196 = vmatprep.subr.bf16.mxu0 0
  %3197 = vmatpush1.bf16.msra.mxu0 %v3194
  %3198 = vmatprep.subr.bf16.mxu0 0
  %3199 = vmatpush1.bf16.msra.mxu0 0
  %3200 = vmatprep.subr.bf16.mxu0 0
  %3201 = vmatpush1.bf16.msra.mxu0 0
  %3202 = vmatprep.subr.bf16.mxu0 0
  %3203 = vmatpush1.bf16.msra.mxu0 0
  %3204 = vmatprep.subr.bf16.mxu0 0
  %3205 = vmatpush1.bf16.msra.mxu0 0
  %3206 = vmatprep.subr.bf16.mxu0 0
  %3207 = vmatpush1.bf16.msra.mxu0 0
  %3208 = vmatprep.subr.bf16.mxu0 0
  %3209 = vmatpush1.bf16.msra.mxu0 0
  %3210 = vmatprep.subr.bf16.mxu0 0
  %3211 = vmatpush1.bf16.msra.mxu0 0
  %3212 = vmatprep.subr.bf16.mxu0 0
  %3213 = vmatpush1.bf16.msra.mxu0 0
  %3214 = vmatprep.subr.bf16.mxu0 0
  %3215 = vmatpush1.bf16.msra.mxu0 0
  %3216 = vmatprep.subr.bf16.mxu0 0
  %3217 = vmatpush1.bf16.msra.mxu0 0
  %3218 = vmatprep.subr.bf16.mxu0 0
  %3219 = vmatpush1.bf16.msra.mxu0 0
  %3220 = vmatprep.subr.bf16.mxu0 0
  %3221 = vmatpush1.bf16.msra.mxu0 0
  %3222 = vmatprep.subr.bf16.mxu0 0
  %3223 = vmatpush1.bf16.msra.mxu0 0
  %3224 = vmatprep.subr.bf16.mxu0 0
  %3225 = vmatpush1.bf16.msra.mxu0 0
  %3226 = vmatprep.subr.bf16.mxu0 0
  %3227 = vmatpush1.bf16.msra.mxu0 0
  %3228 = vmatprep.mubr.bf16.mxu0 0
  %3229 = vmatmul.mubr.bf16.gmra.mrb[0].mxu0 %v670
  %v3230 = vpop.f32.mrb[0].mxu0
  %v3231 = vadd.f32 0.0, %v3230
  %v3232 = vpop.f32.mrb[0].mxu0
  %v3233 = vpop.f32.mrb[0].mxu0
  %v3234 = vadd.f32 0.0, %v3233
  %v3235 = vpop.f32.mrb[0].mxu0
  %3236 = vdwg.mxu0
  %v3237 = vpack.c.bf16 %v3234, %v3231
  %v3239 = vunpack.c.l.b16 %v3237
  %v3240 = vunpack.c.h.b16 %v3237
  %v3241 = vpack.c.b16 %v3239, %v3239
  %v3242 = vpack.c.b16 %v3240, %v3240
  %s3245 = scalar_lea.vmem %s3, 360
  %3246 = vst.msk [vmem:[%s3245] sm:$0xf] %vm724, %v3241
  %3247 = vst.msk [vmem:[%s3245 + $0x4] sm:$0xf] %vm724, %v3242
  %v3249 = vsel %vm339, %v655, 0
  %3251 = vmatprep.subr.bf16.mxu0 0
  %3252 = vmatpush1.bf16.msra.mxu0 %v3249
  %3253 = vmatprep.subr.bf16.mxu0 0
  %3254 = vmatpush1.bf16.msra.mxu0 0
  %3255 = vmatprep.subr.bf16.mxu0 0
  %3256 = vmatpush1.bf16.msra.mxu0 0
  %3257 = vmatprep.subr.bf16.mxu0 0
  %3258 = vmatpush1.bf16.msra.mxu0 0
  %3259 = vmatprep.subr.bf16.mxu0 0
  %3260 = vmatpush1.bf16.msra.mxu0 0
  %3261 = vmatprep.subr.bf16.mxu0 0
  %3262 = vmatpush1.bf16.msra.mxu0 0
  %3263 = vmatprep.subr.bf16.mxu0 0
  %3264 = vmatpush1.bf16.msra.mxu0 0
  %3265 = vmatprep.subr.bf16.mxu0 0
  %3266 = vmatpush1.bf16.msra.mxu0 0
  %3267 = vmatprep.subr.bf16.mxu0 0
  %3268 = vmatpush1.bf16.msra.mxu0 0
  %3269 = vmatprep.subr.bf16.mxu0 0
  %3270 = vmatpush1.bf16.msra.mxu0 0
  %3271 = vmatprep.subr.bf16.mxu0 0
  %3272 = vmatpush1.bf16.msra.mxu0 0
  %3273 = vmatprep.subr.bf16.mxu0 0
  %3274 = vmatpush1.bf16.msra.mxu0 0
  %3275 = vmatprep.subr.bf16.mxu0 0
  %3276 = vmatpush1.bf16.msra.mxu0 0
  %3277 = vmatprep.subr.bf16.mxu0 0
  %3278 = vmatpush1.bf16.msra.mxu0 0
  %3279 = vmatprep.subr.bf16.mxu0 0
  %3280 = vmatpush1.bf16.msra.mxu0 0
  %3281 = vmatprep.subr.bf16.mxu0 0
  %3282 = vmatpush1.bf16.msra.mxu0 0
  %3283 = vmatprep.mubr.bf16.mxu0 0
  %3284 = vmatmul.mubr.bf16.gmra.mrb[0].mxu0 %v670
  %v3285 = vpop.f32.mrb[0].mxu0
  %v3286 = vadd.f32 0.0, %v3285
  %v3287 = vpop.f32.mrb[0].mxu0
  %v3288 = vpop.f32.mrb[0].mxu0
  %v3289 = vadd.f32 0.0, %v3288
  %v3290 = vpop.f32.mrb[0].mxu0
  %3291 = vdwg.mxu0
  %v3292 = vpack.c.bf16 %v3289, %v3286
  %v3294 = vunpack.c.l.b16 %v3292
  %v3295 = vunpack.c.h.b16 %v3292
  %v3296 = vpack.c.b16 %v3294, %v3294
  %v3297 = vpack.c.b16 %v3295, %v3295
  %s3300 = scalar_lea.vmem %s3, 368
  %3301 = vst.msk [vmem:[%s3300] sm:$0xf] %vm724, %v3296
  %3302 = vst.msk [vmem:[%s3300 + $0x4] sm:$0xf] %vm724, %v3297
  %v3304 = vrot.slane %v655, 4
  %v3306 = vsel %vm339, %v3304, 0
  %3308 = vmatprep.subr.bf16.mxu0 0
  %3309 = vmatpush1.bf16.msra.mxu0 %v3306
  %3310 = vmatprep.subr.bf16.mxu0 0
  %3311 = vmatpush1.bf16.msra.mxu0 0
  %3312 = vmatprep.subr.bf16.mxu0 0
  %3313 = vmatpush1.bf16.msra.mxu0 0
  %3314 = vmatprep.subr.bf16.mxu0 0
  %3315 = vmatpush1.bf16.msra.mxu0 0
  %3316 = vmatprep.subr.bf16.mxu0 0
  %3317 = vmatpush1.bf16.msra.mxu0 0
  %3318 = vmatprep.subr.bf16.mxu0 0
  %3319 = vmatpush1.bf16.msra.mxu0 0
  %3320 = vmatprep.subr.bf16.mxu0 0
  %3321 = vmatpush1.bf16.msra.mxu0 0
  %3322 = vmatprep.subr.bf16.mxu0 0
  %3323 = vmatpush1.bf16.msra.mxu0 0
  %3324 = vmatprep.subr.bf16.mxu0 0
  %3325 = vmatpush1.bf16.msra.mxu0 0
  %3326 = vmatprep.subr.bf16.mxu0 0
  %3327 = vmatpush1.bf16.msra.mxu0 0
  %3328 = vmatprep.subr.bf16.mxu0 0
  %3329 = vmatpush1.bf16.msra.mxu0 0
  %3330 = vmatprep.subr.bf16.mxu0 0
  %3331 = vmatpush1.bf16.msra.mxu0 0
  %3332 = vmatprep.subr.bf16.mxu0 0
  %3333 = vmatpush1.bf16.msra.mxu0 0
  %3334 = vmatprep.subr.bf16.mxu0 0
  %3335 = vmatpush1.bf16.msra.mxu0 0
  %3336 = vmatprep.subr.bf16.mxu0 0
  %3337 = vmatpush1.bf16.msra.mxu0 0
  %3338 = vmatprep.subr.bf16.mxu0 0
  %3339 = vmatpush1.bf16.msra.mxu0 0
  %3340 = vmatprep.mubr.bf16.mxu0 0
  %3341 = vmatmul.mubr.bf16.gmra.mrb[0].mxu0 %v670
  %v3342 = vpop.f32.mrb[0].mxu0
  %v3343 = vadd.f32 0.0, %v3342
  %v3344 = vpop.f32.mrb[0].mxu0
  %v3345 = vpop.f32.mrb[0].mxu0
  %v3346 = vadd.f32 0.0, %v3345
  %v3347 = vpop.f32.mrb[0].mxu0
  %3348 = vdwg.mxu0
  %v3349 = vpack.c.bf16 %v3346, %v3343
  %v3351 = vunpack.c.l.b16 %v3349
  %v3352 = vunpack.c.h.b16 %v3349
  %v3353 = vpack.c.b16 %v3351, %v3351
  %v3354 = vpack.c.b16 %v3352, %v3352
  %s3357 = scalar_lea.vmem %s3, 376
  %3358 = vst.msk [vmem:[%s3357] sm:$0xf] %vm724, %v3353
  %3359 = vst.msk [vmem:[%s3357 + $0x4] sm:$0xf] %vm724, %v3354
  %v3361 = vsel %vm339, %v656, 0
  %3363 = vmatprep.subr.bf16.mxu0 0
  %3364 = vmatpush1.bf16.msra.mxu0 %v3361
  %3365 = vmatprep.subr.bf16.mxu0 0
  %3366 = vmatpush1.bf16.msra.mxu0 0
  %3367 = vmatprep.subr.bf16.mxu0 0
  %3368 = vmatpush1.bf16.msra.mxu0 0
  %3369 = vmatprep.subr.bf16.mxu0 0
  %3370 = vmatpush1.bf16.msra.mxu0 0
  %3371 = vmatprep.subr.bf16.mxu0 0
  %3372 = vmatpush1.bf16.msra.mxu0 0
  %3373 = vmatprep.subr.bf16.mxu0 0
  %3374 = vmatpush1.bf16.msra.mxu0 0
  %3375 = vmatprep.subr.bf16.mxu0 0
  %3376 = vmatpush1.bf16.msra.mxu0 0
  %3377 = vmatprep.subr.bf16.mxu0 0
  %3378 = vmatpush1.bf16.msra.mxu0 0
  %3379 = vmatprep.subr.bf16.mxu0 0
  %3380 = vmatpush1.bf16.msra.mxu0 0
  %3381 = vmatprep.subr.bf16.mxu0 0
  %3382 = vmatpush1.bf16.msra.mxu0 0
  %3383 = vmatprep.subr.bf16.mxu0 0
  %3384 = vmatpush1.bf16.msra.mxu0 0
  %3385 = vmatprep.subr.bf16.mxu0 0
  %3386 = vmatpush1.bf16.msra.mxu0 0
  %3387 = vmatprep.subr.bf16.mxu0 0
  %3388 = vmatpush1.bf16.msra.mxu0 0
  %3389 = vmatprep.subr.bf16.mxu0 0
  %3390 = vmatpush1.bf16.msra.mxu0 0
  %3391 = vmatprep.subr.bf16.mxu0 0
  %3392 = vmatpush1.bf16.msra.mxu0 0
  %3393 = vmatprep.subr.bf16.mxu0 0
  %3394 = vmatpush1.bf16.msra.mxu0 0
  %3395 = vmatprep.mubr.bf16.mxu0 0
  %3396 = vmatmul.mubr.bf16.gmra.mrb[0].mxu0 %v670
  %v3397 = vpop.f32.mrb[0].mxu0
  %v3398 = vadd.f32 0.0, %v3397
  %v3399 = vpop.f32.mrb[0].mxu0
  %v3400 = vpop.f32.mrb[0].mxu0
  %v3401 = vadd.f32 0.0, %v3400
  %v3402 = vpop.f32.mrb[0].mxu0
  %3403 = vdwg.mxu0
  %v3404 = vpack.c.bf16 %v3401, %v3398
  %v3406 = vunpack.c.l.b16 %v3404
  %v3407 = vunpack.c.h.b16 %v3404
  %v3408 = vpack.c.b16 %v3406, %v3406
  %v3409 = vpack.c.b16 %v3407, %v3407
  %s3412 = scalar_lea.vmem %s3, 384
  %3413 = vst.msk [vmem:[%s3412] sm:$0xf] %vm724, %v3408
  %3414 = vst.msk [vmem:[%s3412 + $0x4] sm:$0xf] %vm724, %v3409
  %v3416 = vrot.slane %v656, 4
  %v3418 = vsel %vm339, %v3416, 0
  %3420 = vmatprep.subr.bf16.mxu0 0
  %3421 = vmatpush1.bf16.msra.mxu0 %v3418
  %3422 = vmatprep.subr.bf16.mxu0 0
  %3423 = vmatpush1.bf16.msra.mxu0 0
  %3424 = vmatprep.subr.bf16.mxu0 0
  %3425 = vmatpush1.bf16.msra.mxu0 0
  %3426 = vmatprep.subr.bf16.mxu0 0
  %3427 = vmatpush1.bf16.msra.mxu0 0
  %3428 = vmatprep.subr.bf16.mxu0 0
  %3429 = vmatpush1.bf16.msra.mxu0 0
  %3430 = vmatprep.subr.bf16.mxu0 0
  %3431 = vmatpush1.bf16.msra.mxu0 0
  %3432 = vmatprep.subr.bf16.mxu0 0
  %3433 = vmatpush1.bf16.msra.mxu0 0
  %3434 = vmatprep.subr.bf16.mxu0 0
  %3435 = vmatpush1.bf16.msra.mxu0 0
  %3436 = vmatprep.subr.bf16.mxu0 0
  %3437 = vmatpush1.bf16.msra.mxu0 0
  %3438 = vmatprep.subr.bf16.mxu0 0
  %3439 = vmatpush1.bf16.msra.mxu0 0
  %3440 = vmatprep.subr.bf16.mxu0 0
  %3441 = vmatpush1.bf16.msra.mxu0 0
  %3442 = vmatprep.subr.bf16.mxu0 0
  %3443 = vmatpush1.bf16.msra.mxu0 0
  %3444 = vmatprep.subr.bf16.mxu0 0
  %3445 = vmatpush1.bf16.msra.mxu0 0
  %3446 = vmatprep.subr.bf16.mxu0 0
  %3447 = vmatpush1.bf16.msra.mxu0 0
  %3448 = vmatprep.subr.bf16.mxu0 0
  %3449 = vmatpush1.bf16.msra.mxu0 0
  %3450 = vmatprep.subr.bf16.mxu0 0
  %3451 = vmatpush1.bf16.msra.mxu0 0
  %3452 = vmatprep.mubr.bf16.mxu0 0
  %3453 = vmatmul.mubr.bf16.gmra.mrb[0].mxu0 %v670
  %v3454 = vpop.f32.mrb[0].mxu0
  %v3455 = vadd.f32 0.0, %v3454
  %v3456 = vpop.f32.mrb[0].mxu0
  %v3457 = vpop.f32.mrb[0].mxu0
  %v3458 = vadd.f32 0.0, %v3457
  %v3459 = vpop.f32.mrb[0].mxu0
  %3460 = vdwg.mxu0
  %v3461 = vpack.c.bf16 %v3458, %v3455
  %v3463 = vunpack.c.l.b16 %v3461
  %v3464 = vunpack.c.h.b16 %v3461
  %v3465 = vpack.c.b16 %v3463, %v3463
  %v3466 = vpack.c.b16 %v3464, %v3464
  %s3469 = scalar_lea.vmem %s3, 392
  %3470 = vst.msk [vmem:[%s3469] sm:$0xf] %vm724, %v3465
  %3471 = vst.msk [vmem:[%s3469 + $0x4] sm:$0xf] %vm724, %v3466
  %v3473 = vsel %vm339, %v657, 0
  %3475 = vmatprep.subr.bf16.mxu0 0
  %3476 = vmatpush1.bf16.msra.mxu0 %v3473
  %3477 = vmatprep.subr.bf16.mxu0 0
  %3478 = vmatpush1.bf16.msra.mxu0 0
  %3479 = vmatprep.subr.bf16.mxu0 0
  %3480 = vmatpush1.bf16.msra.mxu0 0
  %3481 = vmatprep.subr.bf16.mxu0 0
  %3482 = vmatpush1.bf16.msra.mxu0 0
  %3483 = vmatprep.subr.bf16.mxu0 0
  %3484 = vmatpush1.bf16.msra.mxu0 0
  %3485 = vmatprep.subr.bf16.mxu0 0
  %3486 = vmatpush1.bf16.msra.mxu0 0
  %3487 = vmatprep.subr.bf16.mxu0 0
  %3488 = vmatpush1.bf16.msra.mxu0 0
  %3489 = vmatprep.subr.bf16.mxu0 0
  %3490 = vmatpush1.bf16.msra.mxu0 0
  %3491 = vmatprep.subr.bf16.mxu0 0
  %3492 = vmatpush1.bf16.msra.mxu0 0
  %3493 = vmatprep.subr.bf16.mxu0 0
  %3494 = vmatpush1.bf16.msra.mxu0 0
  %3495 = vmatprep.subr.bf16.mxu0 0
  %3496 = vmatpush1.bf16.msra.mxu0 0
  %3497 = vmatprep.subr.bf16.mxu0 0
  %3498 = vmatpush1.bf16.msra.mxu0 0
  %3499 = vmatprep.subr.bf16.mxu0 0
  %3500 = vmatpush1.bf16.msra.mxu0 0
  %3501 = vmatprep.subr.bf16.mxu0 0
  %3502 = vmatpush1.bf16.msra.mxu0 0
  %3503 = vmatprep.subr.bf16.mxu0 0
  %3504 = vmatpush1.bf16.msra.mxu0 0
  %3505 = vmatprep.subr.bf16.mxu0 0
  %3506 = vmatpush1.bf16.msra.mxu0 0
  %3507 = vmatprep.mubr.bf16.mxu0 0
  %3508 = vmatmul.mubr.bf16.gmra.mrb[0].mxu0 %v670
  %v3509 = vpop.f32.mrb[0].mxu0
  %v3510 = vadd.f32 0.0, %v3509
  %v3511 = vpop.f32.mrb[0].mxu0
  %v3512 = vpop.f32.mrb[0].mxu0
  %v3513 = vadd.f32 0.0, %v3512
  %v3514 = vpop.f32.mrb[0].mxu0
  %3515 = vdwg.mxu0
  %v3516 = vpack.c.bf16 %v3513, %v3510
  %v3518 = vunpack.c.l.b16 %v3516
  %v3519 = vunpack.c.h.b16 %v3516
  %v3520 = vpack.c.b16 %v3518, %v3518
  %v3521 = vpack.c.b16 %v3519, %v3519
  %s3524 = scalar_lea.vmem %s3, 400
  %3525 = vst.msk [vmem:[%s3524] sm:$0xf] %vm724, %v3520
  %3526 = vst.msk [vmem:[%s3524 + $0x4] sm:$0xf] %vm724, %v3521
  %v3528 = vrot.slane %v657, 4
  %v3530 = vsel %vm339, %v3528, 0
  %3532 = vmatprep.subr.bf16.mxu0 0
  %3533 = vmatpush1.bf16.msra.mxu0 %v3530
  %3534 = vmatprep.subr.bf16.mxu0 0
  %3535 = vmatpush1.bf16.msra.mxu0 0
  %3536 = vmatprep.subr.bf16.mxu0 0
  %3537 = vmatpush1.bf16.msra.mxu0 0
  %3538 = vmatprep.subr.bf16.mxu0 0
  %3539 = vmatpush1.bf16.msra.mxu0 0
  %3540 = vmatprep.subr.bf16.mxu0 0
  %3541 = vmatpush1.bf16.msra.mxu0 0
  %3542 = vmatprep.subr.bf16.mxu0 0
  %3543 = vmatpush1.bf16.msra.mxu0 0
  %3544 = vmatprep.subr.bf16.mxu0 0
  %3545 = vmatpush1.bf16.msra.mxu0 0
  %3546 = vmatprep.subr.bf16.mxu0 0
  %3547 = vmatpush1.bf16.msra.mxu0 0
  %3548 = vmatprep.subr.bf16.mxu0 0
  %3549 = vmatpush1.bf16.msra.mxu0 0
  %3550 = vmatprep.subr.bf16.mxu0 0
  %3551 = vmatpush1.bf16.msra.mxu0 0
  %3552 = vmatprep.subr.bf16.mxu0 0
  %3553 = vmatpush1.bf16.msra.mxu0 0
  %3554 = vmatprep.subr.bf16.mxu0 0
  %3555 = vmatpush1.bf16.msra.mxu0 0
  %3556 = vmatprep.subr.bf16.mxu0 0
  %3557 = vmatpush1.bf16.msra.mxu0 0
  %3558 = vmatprep.subr.bf16.mxu0 0
  %3559 = vmatpush1.bf16.msra.mxu0 0
  %3560 = vmatprep.subr.bf16.mxu0 0
  %3561 = vmatpush1.bf16.msra.mxu0 0
  %3562 = vmatprep.subr.bf16.mxu0 0
  %3563 = vmatpush1.bf16.msra.mxu0 0
  %3564 = vmatprep.mubr.bf16.mxu0 0
  %3565 = vmatmul.mubr.bf16.gmra.mrb[0].mxu0 %v670
  %v3566 = vpop.f32.mrb[0].mxu0
  %v3567 = vadd.f32 0.0, %v3566
  %v3568 = vpop.f32.mrb[0].mxu0
  %v3569 = vpop.f32.mrb[0].mxu0
  %v3570 = vadd.f32 0.0, %v3569
  %v3571 = vpop.f32.mrb[0].mxu0
  %3572 = vdwg.mxu0
  %v3573 = vpack.c.bf16 %v3570, %v3567
  %v3575 = vunpack.c.l.b16 %v3573
  %v3576 = vunpack.c.h.b16 %v3573
  %v3577 = vpack.c.b16 %v3575, %v3575
  %v3578 = vpack.c.b16 %v3576, %v3576
  %s3581 = scalar_lea.vmem %s3, 408
  %3582 = vst.msk [vmem:[%s3581] sm:$0xf] %vm724, %v3577
  %3583 = vst.msk [vmem:[%s3581 + $0x4] sm:$0xf] %vm724, %v3578
  %v3585 = vsel %vm339, %v658, 0
  %3587 = vmatprep.subr.bf16.mxu0 0
  %3588 = vmatpush1.bf16.msra.mxu0 %v3585
  %3589 = vmatprep.subr.bf16.mxu0 0
  %3590 = vmatpush1.bf16.msra.mxu0 0
  %3591 = vmatprep.subr.bf16.mxu0 0
  %3592 = vmatpush1.bf16.msra.mxu0 0
  %3593 = vmatprep.subr.bf16.mxu0 0
  %3594 = vmatpush1.bf16.msra.mxu0 0
  %3595 = vmatprep.subr.bf16.mxu0 0
  %3596 = vmatpush1.bf16.msra.mxu0 0
  %3597 = vmatprep.subr.bf16.mxu0 0
  %3598 = vmatpush1.bf16.msra.mxu0 0
  %3599 = vmatprep.subr.bf16.mxu0 0
  %3600 = vmatpush1.bf16.msra.mxu0 0
  %3601 = vmatprep.subr.bf16.mxu0 0
  %3602 = vmatpush1.bf16.msra.mxu0 0
  %3603 = vmatprep.subr.bf16.mxu0 0
  %3604 = vmatpush1.bf16.msra.mxu0 0
  %3605 = vmatprep.subr.bf16.mxu0 0
  %3606 = vmatpush1.bf16.msra.mxu0 0
  %3607 = vmatprep.subr.bf16.mxu0 0
  %3608 = vmatpush1.bf16.msra.mxu0 0
  %3609 = vmatprep.subr.bf16.mxu0 0
  %3610 = vmatpush1.bf16.msra.mxu0 0
  %3611 = vmatprep.subr.bf16.mxu0 0
  %3612 = vmatpush1.bf16.msra.mxu0 0
  %3613 = vmatprep.subr.bf16.mxu0 0
  %3614 = vmatpush1.bf16.msra.mxu0 0
  %3615 = vmatprep.subr.bf16.mxu0 0
  %3616 = vmatpush1.bf16.msra.mxu0 0
  %3617 = vmatprep.subr.bf16.mxu0 0
  %3618 = vmatpush1.bf16.msra.mxu0 0
  %3619 = vmatprep.mubr.bf16.mxu0 0
  %3620 = vmatmul.mubr.bf16.gmra.mrb[0].mxu0 %v670
  %v3621 = vpop.f32.mrb[0].mxu0
  %v3622 = vadd.f32 0.0, %v3621
  %v3623 = vpop.f32.mrb[0].mxu0
  %v3624 = vpop.f32.mrb[0].mxu0
  %v3625 = vadd.f32 0.0, %v3624
  %v3626 = vpop.f32.mrb[0].mxu0
  %3627 = vdwg.mxu0
  %v3628 = vpack.c.bf16 %v3625, %v3622
  %v3630 = vunpack.c.l.b16 %v3628
  %v3631 = vunpack.c.h.b16 %v3628
  %v3632 = vpack.c.b16 %v3630, %v3630
  %v3633 = vpack.c.b16 %v3631, %v3631
  %s3636 = scalar_lea.vmem %s3, 416
  %3637 = vst.msk [vmem:[%s3636] sm:$0xf] %vm724, %v3632
  %3638 = vst.msk [vmem:[%s3636 + $0x4] sm:$0xf] %vm724, %v3633
  %v3640 = vrot.slane %v658, 4
  %v3642 = vsel %vm339, %v3640, 0
  %3644 = vmatprep.subr.bf16.mxu0 0
  %3645 = vmatpush1.bf16.msra.mxu0 %v3642
  %3646 = vmatprep.subr.bf16.mxu0 0
  %3647 = vmatpush1.bf16.msra.mxu0 0
  %3648 = vmatprep.subr.bf16.mxu0 0
  %3649 = vmatpush1.bf16.msra.mxu0 0
  %3650 = vmatprep.subr.bf16.mxu0 0
  %3651 = vmatpush1.bf16.msra.mxu0 0
  %3652 = vmatprep.subr.bf16.mxu0 0
  %3653 = vmatpush1.bf16.msra.mxu0 0
  %3654 = vmatprep.subr.bf16.mxu0 0
  %3655 = vmatpush1.bf16.msra.mxu0 0
  %3656 = vmatprep.subr.bf16.mxu0 0
  %3657 = vmatpush1.bf16.msra.mxu0 0
  %3658 = vmatprep.subr.bf16.mxu0 0
  %3659 = vmatpush1.bf16.msra.mxu0 0
  %3660 = vmatprep.subr.bf16.mxu0 0
  %3661 = vmatpush1.bf16.msra.mxu0 0
  %3662 = vmatprep.subr.bf16.mxu0 0
  %3663 = vmatpush1.bf16.msra.mxu0 0
  %3664 = vmatprep.subr.bf16.mxu0 0
  %3665 = vmatpush1.bf16.msra.mxu0 0
  %3666 = vmatprep.subr.bf16.mxu0 0
  %3667 = vmatpush1.bf16.msra.mxu0 0
  %3668 = vmatprep.subr.bf16.mxu0 0
  %3669 = vmatpush1.bf16.msra.mxu0 0
  %3670 = vmatprep.subr.bf16.mxu0 0
  %3671 = vmatpush1.bf16.msra.mxu0 0
  %3672 = vmatprep.subr.bf16.mxu0 0
  %3673 = vmatpush1.bf16.msra.mxu0 0
  %3674 = vmatprep.subr.bf16.mxu0 0
  %3675 = vmatpush1.bf16.msra.mxu0 0
  %3676 = vmatprep.mubr.bf16.mxu0 0
  %3677 = vmatmul.mubr.bf16.gmra.mrb[0].mxu0 %v670
  %v3678 = vpop.f32.mrb[0].mxu0
  %v3679 = vadd.f32 0.0, %v3678
  %v3680 = vpop.f32.mrb[0].mxu0
  %v3681 = vpop.f32.mrb[0].mxu0
  %v3682 = vadd.f32 0.0, %v3681
  %v3683 = vpop.f32.mrb[0].mxu0
  %3684 = vdwg.mxu0
  %v3685 = vpack.c.bf16 %v3682, %v3679
  %v3687 = vunpack.c.l.b16 %v3685
  %v3688 = vunpack.c.h.b16 %v3685
  %v3689 = vpack.c.b16 %v3687, %v3687
  %v3690 = vpack.c.b16 %v3688, %v3688
  %s3693 = scalar_lea.vmem %s3, 424
  %3694 = vst.msk [vmem:[%s3693] sm:$0xf] %vm724, %v3689
  %3695 = vst.msk [vmem:[%s3693 + $0x4] sm:$0xf] %vm724, %v3690
  %v3697 = vsel %vm339, %v659, 0
  %3699 = vmatprep.subr.bf16.mxu0 0
  %3700 = vmatpush1.bf16.msra.mxu0 %v3697
  %3701 = vmatprep.subr.bf16.mxu0 0
  %3702 = vmatpush1.bf16.msra.mxu0 0
  %3703 = vmatprep.subr.bf16.mxu0 0
  %3704 = vmatpush1.bf16.msra.mxu0 0
  %3705 = vmatprep.subr.bf16.mxu0 0
  %3706 = vmatpush1.bf16.msra.mxu0 0
  %3707 = vmatprep.subr.bf16.mxu0 0
  %3708 = vmatpush1.bf16.msra.mxu0 0
  %3709 = vmatprep.subr.bf16.mxu0 0
  %3710 = vmatpush1.bf16.msra.mxu0 0
  %3711 = vmatprep.subr.bf16.mxu0 0
  %3712 = vmatpush1.bf16.msra.mxu0 0
  %3713 = vmatprep.subr.bf16.mxu0 0
  %3714 = vmatpush1.bf16.msra.mxu0 0
  %3715 = vmatprep.subr.bf16.mxu0 0
  %3716 = vmatpush1.bf16.msra.mxu0 0
  %3717 = vmatprep.subr.bf16.mxu0 0
  %3718 = vmatpush1.bf16.msra.mxu0 0
  %3719 = vmatprep.subr.bf16.mxu0 0
  %3720 = vmatpush1.bf16.msra.mxu0 0
  %3721 = vmatprep.subr.bf16.mxu0 0
  %3722 = vmatpush1.bf16.msra.mxu0 0
  %3723 = vmatprep.subr.bf16.mxu0 0
  %3724 = vmatpush1.bf16.msra.mxu0 0
  %3725 = vmatprep.subr.bf16.mxu0 0
  %3726 = vmatpush1.bf16.msra.mxu0 0
  %3727 = vmatprep.subr.bf16.mxu0 0
  %3728 = vmatpush1.bf16.msra.mxu0 0
  %3729 = vmatprep.subr.bf16.mxu0 0
  %3730 = vmatpush1.bf16.msra.mxu0 0
  %3731 = vmatprep.mubr.bf16.mxu0 0
  %3732 = vmatmul.mubr.bf16.gmra.mrb[0].mxu0 %v670
  %v3733 = vpop.f32.mrb[0].mxu0
  %v3734 = vadd.f32 0.0, %v3733
  %v3735 = vpop.f32.mrb[0].mxu0
  %v3736 = vpop.f32.mrb[0].mxu0
  %v3737 = vadd.f32 0.0, %v3736
  %v3738 = vpop.f32.mrb[0].mxu0
  %3739 = vdwg.mxu0
  %v3740 = vpack.c.bf16 %v3737, %v3734
  %v3742 = vunpack.c.l.b16 %v3740
  %v3743 = vunpack.c.h.b16 %v3740
  %v3744 = vpack.c.b16 %v3742, %v3742
  %v3745 = vpack.c.b16 %v3743, %v3743
  %s3748 = scalar_lea.vmem %s3, 432
  %3749 = vst.msk [vmem:[%s3748] sm:$0xf] %vm724, %v3744
  %3750 = vst.msk [vmem:[%s3748 + $0x4] sm:$0xf] %vm724, %v3745
  %v3752 = vrot.slane %v659, 4
  %v3754 = vsel %vm339, %v3752, 0
  %3756 = vmatprep.subr.bf16.mxu0 0
  %3757 = vmatpush1.bf16.msra.mxu0 %v3754
  %3758 = vmatprep.subr.bf16.mxu0 0
  %3759 = vmatpush1.bf16.msra.mxu0 0
  %3760 = vmatprep.subr.bf16.mxu0 0
  %3761 = vmatpush1.bf16.msra.mxu0 0
  %3762 = vmatprep.subr.bf16.mxu0 0
  %3763 = vmatpush1.bf16.msra.mxu0 0
  %3764 = vmatprep.subr.bf16.mxu0 0
  %3765 = vmatpush1.bf16.msra.mxu0 0
  %3766 = vmatprep.subr.bf16.mxu0 0
  %3767 = vmatpush1.bf16.msra.mxu0 0
  %3768 = vmatprep.subr.bf16.mxu0 0
  %3769 = vmatpush1.bf16.msra.mxu0 0
  %3770 = vmatprep.subr.bf16.mxu0 0
  %3771 = vmatpush1.bf16.msra.mxu0 0
  %3772 = vmatprep.subr.bf16.mxu0 0
  %3773 = vmatpush1.bf16.msra.mxu0 0
  %3774 = vmatprep.subr.bf16.mxu0 0
  %3775 = vmatpush1.bf16.msra.mxu0 0
  %3776 = vmatprep.subr.bf16.mxu0 0
  %3777 = vmatpush1.bf16.msra.mxu0 0
  %3778 = vmatprep.subr.bf16.mxu0 0
  %3779 = vmatpush1.bf16.msra.mxu0 0
  %3780 = vmatprep.subr.bf16.mxu0 0
  %3781 = vmatpush1.bf16.msra.mxu0 0
  %3782 = vmatprep.subr.bf16.mxu0 0
  %3783 = vmatpush1.bf16.msra.mxu0 0
  %3784 = vmatprep.subr.bf16.mxu0 0
  %3785 = vmatpush1.bf16.msra.mxu0 0
  %3786 = vmatprep.subr.bf16.mxu0 0
  %3787 = vmatpush1.bf16.msra.mxu0 0
  %3788 = vmatprep.mubr.bf16.mxu0 0
  %3789 = vmatmul.mubr.bf16.gmra.mrb[0].mxu0 %v670
  %v3790 = vpop.f32.mrb[0].mxu0
  %v3791 = vadd.f32 0.0, %v3790
  %v3792 = vpop.f32.mrb[0].mxu0
  %v3793 = vpop.f32.mrb[0].mxu0
  %v3794 = vadd.f32 0.0, %v3793
  %v3795 = vpop.f32.mrb[0].mxu0
  %3796 = vdwg.mxu0
  %v3797 = vpack.c.bf16 %v3794, %v3791
  %v3799 = vunpack.c.l.b16 %v3797
  %v3800 = vunpack.c.h.b16 %v3797
  %v3801 = vpack.c.b16 %v3799, %v3799
  %v3802 = vpack.c.b16 %v3800, %v3800
  %s3805 = scalar_lea.vmem %s3, 440
  %3806 = vst.msk [vmem:[%s3805] sm:$0xf] %vm724, %v3801
  %3807 = vst.msk [vmem:[%s3805 + $0x4] sm:$0xf] %vm724, %v3802
  %v3809 = vsel %vm339, %v660, 0
  %3811 = vmatprep.subr.bf16.mxu0 0
  %3812 = vmatpush1.bf16.msra.mxu0 %v3809
  %3813 = vmatprep.subr.bf16.mxu0 0
  %3814 = vmatpush1.bf16.msra.mxu0 0
  %3815 = vmatprep.subr.bf16.mxu0 0
  %3816 = vmatpush1.bf16.msra.mxu0 0
  %3817 = vmatprep.subr.bf16.mxu0 0
  %3818 = vmatpush1.bf16.msra.mxu0 0
  %3819 = vmatprep.subr.bf16.mxu0 0
  %3820 = vmatpush1.bf16.msra.mxu0 0
  %3821 = vmatprep.subr.bf16.mxu0 0
  %3822 = vmatpush1.bf16.msra.mxu0 0
  %3823 = vmatprep.subr.bf16.mxu0 0
  %3824 = vmatpush1.bf16.msra.mxu0 0
  %3825 = vmatprep.subr.bf16.mxu0 0
  %3826 = vmatpush1.bf16.msra.mxu0 0
  %3827 = vmatprep.subr.bf16.mxu0 0
  %3828 = vmatpush1.bf16.msra.mxu0 0
  %3829 = vmatprep.subr.bf16.mxu0 0
  %3830 = vmatpush1.bf16.msra.mxu0 0
  %3831 = vmatprep.subr.bf16.mxu0 0
  %3832 = vmatpush1.bf16.msra.mxu0 0
  %3833 = vmatprep.subr.bf16.mxu0 0
  %3834 = vmatpush1.bf16.msra.mxu0 0
  %3835 = vmatprep.subr.bf16.mxu0 0
  %3836 = vmatpush1.bf16.msra.mxu0 0
  %3837 = vmatprep.subr.bf16.mxu0 0
  %3838 = vmatpush1.bf16.msra.mxu0 0
  %3839 = vmatprep.subr.bf16.mxu0 0
  %3840 = vmatpush1.bf16.msra.mxu0 0
  %3841 = vmatprep.subr.bf16.mxu0 0
  %3842 = vmatpush1.bf16.msra.mxu0 0
  %3843 = vmatprep.mubr.bf16.mxu0 0
  %3844 = vmatmul.mubr.bf16.gmra.mrb[0].mxu0 %v670
  %v3845 = vpop.f32.mrb[0].mxu0
  %v3846 = vadd.f32 0.0, %v3845
  %v3847 = vpop.f32.mrb[0].mxu0
  %v3848 = vpop.f32.mrb[0].mxu0
  %v3849 = vadd.f32 0.0, %v3848
  %v3850 = vpop.f32.mrb[0].mxu0
  %3851 = vdwg.mxu0
  %v3852 = vpack.c.bf16 %v3849, %v3846
  %v3854 = vunpack.c.l.b16 %v3852
  %v3855 = vunpack.c.h.b16 %v3852
  %v3856 = vpack.c.b16 %v3854, %v3854
  %v3857 = vpack.c.b16 %v3855, %v3855
  %s3860 = scalar_lea.vmem %s3, 448
  %3861 = vst.msk [vmem:[%s3860] sm:$0xf] %vm724, %v3856
  %3862 = vst.msk [vmem:[%s3860 + $0x4] sm:$0xf] %vm724, %v3857
  %v3864 = vrot.slane %v660, 4
  %v3866 = vsel %vm339, %v3864, 0
  %3868 = vmatprep.subr.bf16.mxu0 0
  %3869 = vmatpush1.bf16.msra.mxu0 %v3866
  %3870 = vmatprep.subr.bf16.mxu0 0
  %3871 = vmatpush1.bf16.msra.mxu0 0
  %3872 = vmatprep.subr.bf16.mxu0 0
  %3873 = vmatpush1.bf16.msra.mxu0 0
  %3874 = vmatprep.subr.bf16.mxu0 0
  %3875 = vmatpush1.bf16.msra.mxu0 0
  %3876 = vmatprep.subr.bf16.mxu0 0
  %3877 = vmatpush1.bf16.msra.mxu0 0
  %3878 = vmatprep.subr.bf16.mxu0 0
  %3879 = vmatpush1.bf16.msra.mxu0 0
  %3880 = vmatprep.subr.bf16.mxu0 0
  %3881 = vmatpush1.bf16.msra.mxu0 0
  %3882 = vmatprep.subr.bf16.mxu0 0
  %3883 = vmatpush1.bf16.msra.mxu0 0
  %3884 = vmatprep.subr.bf16.mxu0 0
  %3885 = vmatpush1.bf16.msra.mxu0 0
  %3886 = vmatprep.subr.bf16.mxu0 0
  %3887 = vmatpush1.bf16.msra.mxu0 0
  %3888 = vmatprep.subr.bf16.mxu0 0
  %3889 = vmatpush1.bf16.msra.mxu0 0
  %3890 = vmatprep.subr.bf16.mxu0 0
  %3891 = vmatpush1.bf16.msra.mxu0 0
  %3892 = vmatprep.subr.bf16.mxu0 0
  %3893 = vmatpush1.bf16.msra.mxu0 0
  %3894 = vmatprep.subr.bf16.mxu0 0
  %3895 = vmatpush1.bf16.msra.mxu0 0
  %3896 = vmatprep.subr.bf16.mxu0 0
  %3897 = vmatpush1.bf16.msra.mxu0 0
  %3898 = vmatprep.subr.bf16.mxu0 0
  %3899 = vmatpush1.bf16.msra.mxu0 0
  %3900 = vmatprep.mubr.bf16.mxu0 0
  %3901 = vmatmul.mubr.bf16.gmra.mrb[0].mxu0 %v670
  %v3902 = vpop.f32.mrb[0].mxu0
  %v3903 = vadd.f32 0.0, %v3902
  %v3904 = vpop.f32.mrb[0].mxu0
  %v3905 = vpop.f32.mrb[0].mxu0
  %v3906 = vadd.f32 0.0, %v3905
  %v3907 = vpop.f32.mrb[0].mxu0
  %3908 = vdwg.mxu0
  %v3909 = vpack.c.bf16 %v3906, %v3903
  %v3911 = vunpack.c.l.b16 %v3909
  %v3912 = vunpack.c.h.b16 %v3909
  %v3913 = vpack.c.b16 %v3911, %v3911
  %v3914 = vpack.c.b16 %v3912, %v3912
  %s3917 = scalar_lea.vmem %s3, 456
  %3918 = vst.msk [vmem:[%s3917] sm:$0xf] %vm724, %v3913
  %3919 = vst.msk [vmem:[%s3917 + $0x4] sm:$0xf] %vm724, %v3914
  %v3921 = vsel %vm339, %v661, 0
  %3923 = vmatprep.subr.bf16.mxu0 0
  %3924 = vmatpush1.bf16.msra.mxu0 %v3921
  %3925 = vmatprep.subr.bf16.mxu0 0
  %3926 = vmatpush1.bf16.msra.mxu0 0
  %3927 = vmatprep.subr.bf16.mxu0 0
  %3928 = vmatpush1.bf16.msra.mxu0 0
  %3929 = vmatprep.subr.bf16.mxu0 0
  %3930 = vmatpush1.bf16.msra.mxu0 0
  %3931 = vmatprep.subr.bf16.mxu0 0
  %3932 = vmatpush1.bf16.msra.mxu0 0
  %3933 = vmatprep.subr.bf16.mxu0 0
  %3934 = vmatpush1.bf16.msra.mxu0 0
  %3935 = vmatprep.subr.bf16.mxu0 0
  %3936 = vmatpush1.bf16.msra.mxu0 0
  %3937 = vmatprep.subr.bf16.mxu0 0
  %3938 = vmatpush1.bf16.msra.mxu0 0
  %3939 = vmatprep.subr.bf16.mxu0 0
  %3940 = vmatpush1.bf16.msra.mxu0 0
  %3941 = vmatprep.subr.bf16.mxu0 0
  %3942 = vmatpush1.bf16.msra.mxu0 0
  %3943 = vmatprep.subr.bf16.mxu0 0
  %3944 = vmatpush1.bf16.msra.mxu0 0
  %3945 = vmatprep.subr.bf16.mxu0 0
  %3946 = vmatpush1.bf16.msra.mxu0 0
  %3947 = vmatprep.subr.bf16.mxu0 0
  %3948 = vmatpush1.bf16.msra.mxu0 0
  %3949 = vmatprep.subr.bf16.mxu0 0
  %3950 = vmatpush1.bf16.msra.mxu0 0
  %3951 = vmatprep.subr.bf16.mxu0 0
  %3952 = vmatpush1.bf16.msra.mxu0 0
  %3953 = vmatprep.subr.bf16.mxu0 0
  %3954 = vmatpush1.bf16.msra.mxu0 0
  %3955 = vmatprep.mubr.bf16.mxu0 0
  %3956 = vmatmul.mubr.bf16.gmra.mrb[0].mxu0 %v670
  %v3957 = vpop.f32.mrb[0].mxu0
  %v3958 = vadd.f32 0.0, %v3957
  %v3959 = vpop.f32.mrb[0].mxu0
  %v3960 = vpop.f32.mrb[0].mxu0
  %v3961 = vadd.f32 0.0, %v3960
  %v3962 = vpop.f32.mrb[0].mxu0
  %3963 = vdwg.mxu0
  %v3964 = vpack.c.bf16 %v3961, %v3958
  %v3966 = vunpack.c.l.b16 %v3964
  %v3967 = vunpack.c.h.b16 %v3964
  %v3968 = vpack.c.b16 %v3966, %v3966
  %v3969 = vpack.c.b16 %v3967, %v3967
  %s3972 = scalar_lea.vmem %s3, 464
  %3973 = vst.msk [vmem:[%s3972] sm:$0xf] %vm724, %v3968
  %3974 = vst.msk [vmem:[%s3972 + $0x4] sm:$0xf] %vm724, %v3969
  %v3976 = vrot.slane %v661, 4
  %v3978 = vsel %vm339, %v3976, 0
  %3980 = vmatprep.subr.bf16.mxu0 0
  %3981 = vmatpush1.bf16.msra.mxu0 %v3978
  %3982 = vmatprep.subr.bf16.mxu0 0
  %3983 = vmatpush1.bf16.msra.mxu0 0
  %3984 = vmatprep.subr.bf16.mxu0 0
  %3985 = vmatpush1.bf16.msra.mxu0 0
  %3986 = vmatprep.subr.bf16.mxu0 0
  %3987 = vmatpush1.bf16.msra.mxu0 0
  %3988 = vmatprep.subr.bf16.mxu0 0
  %3989 = vmatpush1.bf16.msra.mxu0 0
  %3990 = vmatprep.subr.bf16.mxu0 0
  %3991 = vmatpush1.bf16.msra.mxu0 0
  %3992 = vmatprep.subr.bf16.mxu0 0
  %3993 = vmatpush1.bf16.msra.mxu0 0
  %3994 = vmatprep.subr.bf16.mxu0 0
  %3995 = vmatpush1.bf16.msra.mxu0 0
  %3996 = vmatprep.subr.bf16.mxu0 0
  %3997 = vmatpush1.bf16.msra.mxu0 0
  %3998 = vmatprep.subr.bf16.mxu0 0
  %3999 = vmatpush1.bf16.msra.mxu0 0
  %4000 = vmatprep.subr.bf16.mxu0 0
  %4001 = vmatpush1.bf16.msra.mxu0 0
  %4002 = vmatprep.subr.bf16.mxu0 0
  %4003 = vmatpush1.bf16.msra.mxu0 0
  %4004 = vmatprep.subr.bf16.mxu0 0
  %4005 = vmatpush1.bf16.msra.mxu0 0
  %4006 = vmatprep.subr.bf16.mxu0 0
  %4007 = vmatpush1.bf16.msra.mxu0 0
  %4008 = vmatprep.subr.bf16.mxu0 0
  %4009 = vmatpush1.bf16.msra.mxu0 0
  %4010 = vmatprep.subr.bf16.mxu0 0
  %4011 = vmatpush1.bf16.msra.mxu0 0
  %4012 = vmatprep.mubr.bf16.mxu0 0
  %4013 = vmatmul.mubr.bf16.gmra.mrb[0].mxu0 %v670
  %v4014 = vpop.f32.mrb[0].mxu0
  %v4015 = vadd.f32 0.0, %v4014
  %v4016 = vpop.f32.mrb[0].mxu0
  %v4017 = vpop.f32.mrb[0].mxu0
  %v4018 = vadd.f32 0.0, %v4017
  %v4019 = vpop.f32.mrb[0].mxu0
  %4020 = vdwg.mxu0
  %v4021 = vpack.c.bf16 %v4018, %v4015
  %v4023 = vunpack.c.l.b16 %v4021
  %v4024 = vunpack.c.h.b16 %v4021
  %v4025 = vpack.c.b16 %v4023, %v4023
  %v4026 = vpack.c.b16 %v4024, %v4024
  %s4029 = scalar_lea.vmem %s3, 472
  %4030 = vst.msk [vmem:[%s4029] sm:$0xf] %vm724, %v4025
  %4031 = vst.msk [vmem:[%s4029 + $0x4] sm:$0xf] %vm724, %v4026
  %v4033 = vsel %vm339, %v662, 0
  %4035 = vmatprep.subr.bf16.mxu0 0
  %4036 = vmatpush1.bf16.msra.mxu0 %v4033
  %4037 = vmatprep.subr.bf16.mxu0 0
  %4038 = vmatpush1.bf16.msra.mxu0 0
  %4039 = vmatprep.subr.bf16.mxu0 0
  %4040 = vmatpush1.bf16.msra.mxu0 0
  %4041 = vmatprep.subr.bf16.mxu0 0
  %4042 = vmatpush1.bf16.msra.mxu0 0
  %4043 = vmatprep.subr.bf16.mxu0 0
  %4044 = vmatpush1.bf16.msra.mxu0 0
  %4045 = vmatprep.subr.bf16.mxu0 0
  %4046 = vmatpush1.bf16.msra.mxu0 0
  %4047 = vmatprep.subr.bf16.mxu0 0
  %4048 = vmatpush1.bf16.msra.mxu0 0
  %4049 = vmatprep.subr.bf16.mxu0 0
  %4050 = vmatpush1.bf16.msra.mxu0 0
  %4051 = vmatprep.subr.bf16.mxu0 0
  %4052 = vmatpush1.bf16.msra.mxu0 0
  %4053 = vmatprep.subr.bf16.mxu0 0
  %4054 = vmatpush1.bf16.msra.mxu0 0
  %4055 = vmatprep.subr.bf16.mxu0 0
  %4056 = vmatpush1.bf16.msra.mxu0 0
  %4057 = vmatprep.subr.bf16.mxu0 0
  %4058 = vmatpush1.bf16.msra.mxu0 0
  %4059 = vmatprep.subr.bf16.mxu0 0
  %4060 = vmatpush1.bf16.msra.mxu0 0
  %4061 = vmatprep.subr.bf16.mxu0 0
  %4062 = vmatpush1.bf16.msra.mxu0 0
  %4063 = vmatprep.subr.bf16.mxu0 0
  %4064 = vmatpush1.bf16.msra.mxu0 0
  %4065 = vmatprep.subr.bf16.mxu0 0
  %4066 = vmatpush1.bf16.msra.mxu0 0
  %4067 = vmatprep.mubr.bf16.mxu0 0
  %4068 = vmatmul.mubr.bf16.gmra.mrb[0].mxu0 %v670
  %v4069 = vpop.f32.mrb[0].mxu0
  %v4070 = vadd.f32 0.0, %v4069
  %v4071 = vpop.f32.mrb[0].mxu0
  %v4072 = vpop.f32.mrb[0].mxu0
  %v4073 = vadd.f32 0.0, %v4072
  %v4074 = vpop.f32.mrb[0].mxu0
  %4075 = vdwg.mxu0
  %v4076 = vpack.c.bf16 %v4073, %v4070
  %v4078 = vunpack.c.l.b16 %v4076
  %v4079 = vunpack.c.h.b16 %v4076
  %v4080 = vpack.c.b16 %v4078, %v4078
  %v4081 = vpack.c.b16 %v4079, %v4079
  %s4084 = scalar_lea.vmem %s3, 480
  %4085 = vst.msk [vmem:[%s4084] sm:$0xf] %vm724, %v4080
  %4086 = vst.msk [vmem:[%s4084 + $0x4] sm:$0xf] %vm724, %v4081
  %v4088 = vrot.slane %v662, 4
  %v4090 = vsel %vm339, %v4088, 0
  %4092 = vmatprep.subr.bf16.mxu0 0
  %4093 = vmatpush1.bf16.msra.mxu0 %v4090
  %4094 = vmatprep.subr.bf16.mxu0 0
  %4095 = vmatpush1.bf16.msra.mxu0 0
  %4096 = vmatprep.subr.bf16.mxu0 0
  %4097 = vmatpush1.bf16.msra.mxu0 0
  %4098 = vmatprep.subr.bf16.mxu0 0
  %4099 = vmatpush1.bf16.msra.mxu0 0
  %4100 = vmatprep.subr.bf16.mxu0 0
  %4101 = vmatpush1.bf16.msra.mxu0 0
  %4102 = vmatprep.subr.bf16.mxu0 0
  %4103 = vmatpush1.bf16.msra.mxu0 0
  %4104 = vmatprep.subr.bf16.mxu0 0
  %4105 = vmatpush1.bf16.msra.mxu0 0
  %4106 = vmatprep.subr.bf16.mxu0 0
  %4107 = vmatpush1.bf16.msra.mxu0 0
  %4108 = vmatprep.subr.bf16.mxu0 0
  %4109 = vmatpush1.bf16.msra.mxu0 0
  %4110 = vmatprep.subr.bf16.mxu0 0
  %4111 = vmatpush1.bf16.msra.mxu0 0
  %4112 = vmatprep.subr.bf16.mxu0 0
  %4113 = vmatpush1.bf16.msra.mxu0 0
  %4114 = vmatprep.subr.bf16.mxu0 0
  %4115 = vmatpush1.bf16.msra.mxu0 0
  %4116 = vmatprep.subr.bf16.mxu0 0
  %4117 = vmatpush1.bf16.msra.mxu0 0
  %4118 = vmatprep.subr.bf16.mxu0 0
  %4119 = vmatpush1.bf16.msra.mxu0 0
  %4120 = vmatprep.subr.bf16.mxu0 0
  %4121 = vmatpush1.bf16.msra.mxu0 0
  %4122 = vmatprep.subr.bf16.mxu0 0
  %4123 = vmatpush1.bf16.msra.mxu0 0
  %4124 = vmatprep.mubr.bf16.mxu0 0
  %4125 = vmatmul.mubr.bf16.gmra.mrb[0].mxu0 %v670
  %v4126 = vpop.f32.mrb[0].mxu0
  %v4127 = vadd.f32 0.0, %v4126
  %v4128 = vpop.f32.mrb[0].mxu0
  %v4129 = vpop.f32.mrb[0].mxu0
  %v4130 = vadd.f32 0.0, %v4129
  %v4131 = vpop.f32.mrb[0].mxu0
  %4132 = vdwg.mxu0
  %v4133 = vpack.c.bf16 %v4130, %v4127
  %v4135 = vunpack.c.l.b16 %v4133
  %v4136 = vunpack.c.h.b16 %v4133
  %v4137 = vpack.c.b16 %v4135, %v4135
  %v4138 = vpack.c.b16 %v4136, %v4136
  %s4141 = scalar_lea.vmem %s3, 488
  %4142 = vst.msk [vmem:[%s4141] sm:$0xf] %vm724, %v4137
  %4143 = vst.msk [vmem:[%s4141 + $0x4] sm:$0xf] %vm724, %v4138
  %v4145 = vsel %vm339, %v663, 0
  %4147 = vmatprep.subr.bf16.mxu0 0
  %4148 = vmatpush1.bf16.msra.mxu0 %v4145
  %4149 = vmatprep.subr.bf16.mxu0 0
  %4150 = vmatpush1.bf16.msra.mxu0 0
  %4151 = vmatprep.subr.bf16.mxu0 0
  %4152 = vmatpush1.bf16.msra.mxu0 0
  %4153 = vmatprep.subr.bf16.mxu0 0
  %4154 = vmatpush1.bf16.msra.mxu0 0
  %4155 = vmatprep.subr.bf16.mxu0 0
  %4156 = vmatpush1.bf16.msra.mxu0 0
  %4157 = vmatprep.subr.bf16.mxu0 0
  %4158 = vmatpush1.bf16.msra.mxu0 0
  %4159 = vmatprep.subr.bf16.mxu0 0
  %4160 = vmatpush1.bf16.msra.mxu0 0
  %4161 = vmatprep.subr.bf16.mxu0 0
  %4162 = vmatpush1.bf16.msra.mxu0 0
  %4163 = vmatprep.subr.bf16.mxu0 0
  %4164 = vmatpush1.bf16.msra.mxu0 0
  %4165 = vmatprep.subr.bf16.mxu0 0
  %4166 = vmatpush1.bf16.msra.mxu0 0
  %4167 = vmatprep.subr.bf16.mxu0 0
  %4168 = vmatpush1.bf16.msra.mxu0 0
  %4169 = vmatprep.subr.bf16.mxu0 0
  %4170 = vmatpush1.bf16.msra.mxu0 0
  %4171 = vmatprep.subr.bf16.mxu0 0
  %4172 = vmatpush1.bf16.msra.mxu0 0
  %4173 = vmatprep.subr.bf16.mxu0 0
  %4174 = vmatpush1.bf16.msra.mxu0 0
  %4175 = vmatprep.subr.bf16.mxu0 0
  %4176 = vmatpush1.bf16.msra.mxu0 0
  %4177 = vmatprep.subr.bf16.mxu0 0
  %4178 = vmatpush1.bf16.msra.mxu0 0
  %4179 = vmatprep.mubr.bf16.mxu0 0
  %4180 = vmatmul.mubr.bf16.gmra.mrb[0].mxu0 %v670
  %v4181 = vpop.f32.mrb[0].mxu0
  %v4182 = vadd.f32 0.0, %v4181
  %v4183 = vpop.f32.mrb[0].mxu0
  %v4184 = vpop.f32.mrb[0].mxu0
  %v4185 = vadd.f32 0.0, %v4184
  %v4186 = vpop.f32.mrb[0].mxu0
  %4187 = vdwg.mxu0
  %v4188 = vpack.c.bf16 %v4185, %v4182
  %v4190 = vunpack.c.l.b16 %v4188
  %v4191 = vunpack.c.h.b16 %v4188
  %v4192 = vpack.c.b16 %v4190, %v4190
  %v4193 = vpack.c.b16 %v4191, %v4191
  %s4196 = scalar_lea.vmem %s3, 496
  %4197 = vst.msk [vmem:[%s4196] sm:$0xf] %vm724, %v4192
  %4198 = vst.msk [vmem:[%s4196 + $0x4] sm:$0xf] %vm724, %v4193
  %v4200 = vrot.slane %v663, 4
  %v4202 = vsel %vm339, %v4200, 0
  %4204 = vmatprep.subr.bf16.mxu0 0
  %4205 = vmatpush1.bf16.msra.mxu0 %v4202
  %4206 = vmatprep.subr.bf16.mxu0 0
  %4207 = vmatpush1.bf16.msra.mxu0 0
  %4208 = vmatprep.subr.bf16.mxu0 0
  %4209 = vmatpush1.bf16.msra.mxu0 0
  %4210 = vmatprep.subr.bf16.mxu0 0
  %4211 = vmatpush1.bf16.msra.mxu0 0
  %4212 = vmatprep.subr.bf16.mxu0 0
  %4213 = vmatpush1.bf16.msra.mxu0 0
  %4214 = vmatprep.subr.bf16.mxu0 0
  %4215 = vmatpush1.bf16.msra.mxu0 0
  %4216 = vmatprep.subr.bf16.mxu0 0
  %4217 = vmatpush1.bf16.msra.mxu0 0
  %4218 = vmatprep.subr.bf16.mxu0 0
  %4219 = vmatpush1.bf16.msra.mxu0 0
  %4220 = vmatprep.subr.bf16.mxu0 0
  %4221 = vmatpush1.bf16.msra.mxu0 0
  %4222 = vmatprep.subr.bf16.mxu0 0
  %4223 = vmatpush1.bf16.msra.mxu0 0
  %4224 = vmatprep.subr.bf16.mxu0 0
  %4225 = vmatpush1.bf16.msra.mxu0 0
  %4226 = vmatprep.subr.bf16.mxu0 0
  %4227 = vmatpush1.bf16.msra.mxu0 0
  %4228 = vmatprep.subr.bf16.mxu0 0
  %4229 = vmatpush1.bf16.msra.mxu0 0
  %4230 = vmatprep.subr.bf16.mxu0 0
  %4231 = vmatpush1.bf16.msra.mxu0 0
  %4232 = vmatprep.subr.bf16.mxu0 0
  %4233 = vmatpush1.bf16.msra.mxu0 0
  %4234 = vmatprep.subr.bf16.mxu0 0
  %4235 = vmatpush1.bf16.msra.mxu0 0
  %4236 = vmatprep.mubr.bf16.mxu0 0
  %4237 = vmatmul.mubr.bf16.gmra.mrb[0].mxu0 %v670
  %v4238 = vpop.f32.mrb[0].mxu0
  %v4239 = vadd.f32 0.0, %v4238
  %v4240 = vpop.f32.mrb[0].mxu0
  %v4241 = vpop.f32.mrb[0].mxu0
  %v4242 = vadd.f32 0.0, %v4241
  %v4243 = vpop.f32.mrb[0].mxu0
  %4244 = vdwg.mxu0
  %v4245 = vpack.c.bf16 %v4242, %v4239
  %v4247 = vunpack.c.l.b16 %v4245
  %v4248 = vunpack.c.h.b16 %v4245
  %v4249 = vpack.c.b16 %v4247, %v4247
  %v4250 = vpack.c.b16 %v4248, %v4248
  %s4253 = scalar_lea.vmem %s3, 504
  %4254 = vst.msk [vmem:[%s4253] sm:$0xf] %vm724, %v4249
  %4255 = vst.msk [vmem:[%s4253 + $0x4] sm:$0xf] %vm724, %v4250
  // Predicated region
  $region14: #{_lambda_.5} parent=0 // pred_check
    _
  $region15: #{_lambda_.5} parent=0 // pred_check_branch
    %4257 = sbr.rel (0) target = $region17
  $region16: #{_lambda_.5} parent=0 // pred_region
    _
  $region17: #{_lambda_.5} parent=0 // pred_fallthru
    _
  // Predicated region
  $region18: #{_lambda_.5} parent=0 // pred_check
    _
  $region19: #{_lambda_.5} parent=0 // pred_check_branch
    %4259 = sbr.rel (0) target = $region21
  $region20: #{_lambda_.5} parent=0 // pred_region
    _
  $region21: #{_lambda_.5} parent=0 // pred_fallthru
    _

// kernel: _lambda_.7
$region0: #{_lambda_.7}
  #allocation0 [shape = 'u32[]', space=smem, size = 0x4, offset = 0x4, fixed_abs, tag = 'smem constant byte address 0x4 - core index']
  #allocation1 [shape = 'u32[144,128]{1,0:T(1,128)}', space=vmem, size = 0x12000, scoped, tag = 'internal scratch']
  %s0 = inlined_call_operand.vmem [shape: f32[128,16], index: 0, kind: input, shape index: {}]
  %s1 = inlined_call_operand.vmem [shape: f32[32,16], index: 1, kind: input, shape index: {}]
  %s2 = inlined_call_operand.vmem [shape: f32[16,128], index: 2, kind: input, shape index: {}]
  %s3 = inlined_call_operand.hbm [shape: f32[2,128,128], index: 3, kind: output, shape index: {}]
  %s4 = sld [smem:[#allocation0]]
  $region22: #{_lambda_.7} parent=0
    _
  %s6 = ssub.s32 1, %s4
  %s7 = scalar_select 0, %s6, %s4
  $region1: #{_lambda_.7} parent=0
    #allocation2 [shape = 'u8[131072]{0}', space=vmem, size = 0x20000, scoped, tag = 'output window, operand 0, single buffered']
    #allocation3 [shape = 's32[1]{0}', space=sflag, size = 0x4, scoped, tag = 'scoped memory for _lambda_.7']
    %8 = vsyncpa [#allocation3], 0
    // Predicated region
    $region2: #{_lambda_.7} parent=1 // pred_check
      _
    $region3: #{_lambda_.7} parent=1 // pred_check_branch
      %10 = sbr.rel (0) target = $region5
    $region4: #{_lambda_.7} parent=1 // pred_region
      _
    $region5: #{_lambda_.7} parent=1 // pred_fallthru
      _
    // Predicated region
    $region6: #{_lambda_.7} parent=1 // pred_check
      _
    $region7: #{_lambda_.7} parent=1 // pred_check_branch
      %12 = sbr.rel (0) target = $region9
    $region8: #{_lambda_.7} parent=1 // pred_region
      _
    $region9: #{_lambda_.7} parent=1 // pred_fallthru
      _
    // Predicated region
    $region10: #{_lambda_.7} parent=1 // pred_check
      _
    $region11: #{_lambda_.7} parent=1 // pred_check_branch
      %14 = sbr.rel (0) target = $region13
    $region12: #{_lambda_.7} parent=1 // pred_region
      _
    $region13: #{_lambda_.7} parent=1 // pred_fallthru
      _
    %v15 = vld [vmem:[%s0] sm:$0xff]
    %v16 = vld [vmem:[%s0 + $0x8] sm:$0xff]
    %v17 = vld [vmem:[%s0 + $0x10] sm:$0xff]
    %v18 = vld [vmem:[%s0 + $0x18] sm:$0xff]
    %v19 = vld [vmem:[%s0 + $0x20] sm:$0xff]
    %v20 = vld [vmem:[%s0 + $0x28] sm:$0xff]
    %v21 = vld [vmem:[%s0 + $0x30] sm:$0xff]
    %v22 = vld [vmem:[%s0 + $0x38] sm:$0xff]
    %v23 = vld [vmem:[%s0 + $0x40] sm:$0xff]
    %v24 = vld [vmem:[%s0 + $0x48] sm:$0xff]
    %v25 = vld [vmem:[%s0 + $0x50] sm:$0xff]
    %v26 = vld [vmem:[%s0 + $0x58] sm:$0xff]
    %v27 = vld [vmem:[%s0 + $0x60] sm:$0xff]
    %v28 = vld [vmem:[%s0 + $0x68] sm:$0xff]
    %v29 = vld [vmem:[%s0 + $0x70] sm:$0xff]
    %v30 = vld [vmem:[%s0 + $0x78] sm:$0xff]
    %v31 = vld [vmem:[%s1] sm:$0xff]
    %v32 = vld [vmem:[%s1 + $0x8] sm:$0xff]
    %v33 = vld [vmem:[%s1 + $0x10] sm:$0xff]
    %v34 = vld [vmem:[%s1 + $0x18] sm:$0xff]
    %v35 = vld [vmem:[%s2] sm:$0xff]
    %v36 = vld [vmem:[%s2 + $0x8] sm:$0xff]
    %vm37 = vcmask 130048
    %v39 = vsel %vm37, %v31, 0
    %v42 = vsel %vm37, %v32, 0
    %v45 = vsel %vm37, %v33, 0
    %v48 = vsel %vm37, %v34, 0
    %50 = vmatprep.subr.mxu0 0.0
    %51 = vmatpush1.msra.mxu0 %v35
    %52 = vmatprep.subr.mxu0 0.0
    %53 = vmatpush1.msra.mxu0 %v36
    %54 = vmatprep.subr.mxu0 0.0
    %55 = vmatpush1.msra.mxu0 0.0
    %56 = vmatprep.subr.mxu0 0.0
    %57 = vmatpush1.msra.mxu0 0.0
    %58 = vmatprep.subr.mxu0 0.0
    %59 = vmatpush1.msra.mxu0 0.0
    %60 = vmatprep.subr.mxu0 0.0
    %61 = vmatpush1.msra.mxu0 0.0
    %62 = vmatprep.subr.mxu0 0.0
    %63 = vmatpush1.msra.mxu0 0.0
    %64 = vmatprep.subr.mxu0 0.0
    %65 = vmatpush1.msra.mxu0 0.0
    %66 = vmatprep.subr.mxu0 0.0
    %67 = vmatpush1.msra.mxu0 0.0
    %68 = vmatprep.subr.mxu0 0.0
    %69 = vmatpush1.msra.mxu0 0.0
    %70 = vmatprep.subr.mxu0 0.0
    %71 = vmatpush1.msra.mxu0 0.0
    %72 = vmatprep.subr.mxu0 0.0
    %73 = vmatpush1.msra.mxu0 0.0
    %74 = vmatprep.subr.mxu0 0.0
    %75 = vmatpush1.msra.mxu0 0.0
    %76 = vmatprep.subr.mxu0 0.0
    %77 = vmatpush1.msra.mxu0 0.0
    %78 = vmatprep.subr.mxu0 0.0
    %79 = vmatpush1.msra.mxu0 0.0
    %80 = vmatprep.subr.mxu0 0.0
    %81 = vmatpush1.msra.mxu0 0.0
    %82 = vmatprep.subr.mxu0 0.0
    %83 = vmatpush1.msra.mxu0 0.0
    %84 = vmatprep.subr.mxu0 0.0
    %85 = vmatpush1.msra.mxu0 0.0
    %86 = vmatprep.subr.mxu0 0.0
    %87 = vmatpush1.msra.mxu0 0.0
    %88 = vmatprep.subr.mxu0 0.0
    %89 = vmatpush1.msra.mxu0 0.0
    %90 = vmatprep.subr.mxu0 0.0
    %91 = vmatpush1.msra.mxu0 0.0
    %92 = vmatprep.subr.mxu0 0.0
    %93 = vmatpush1.msra.mxu0 0.0
    %94 = vmatprep.subr.mxu0 0.0
    %95 = vmatpush1.msra.mxu0 0.0
    %96 = vmatprep.subr.mxu0 0.0
    %97 = vmatpush1.msra.mxu0 0.0
    %98 = vmatprep.subr.mxu0 0.0
    %99 = vmatpush1.msra.mxu0 0.0
    %100 = vmatprep.subr.mxu0 0.0
    %101 = vmatpush1.msra.mxu0 0.0
    %102 = vmatprep.subr.mxu0 0.0
    %103 = vmatpush1.msra.mxu0 0.0
    %104 = vmatprep.subr.mxu0 0.0
    %105 = vmatpush1.msra.mxu0 0.0
    %106 = vmatprep.subr.mxu0 0.0
    %107 = vmatpush1.msra.mxu0 0.0
    %108 = vmatprep.subr.mxu0 0.0
    %109 = vmatpush1.msra.mxu0 0.0
    %110 = vmatprep.subr.mxu0 0.0
    %111 = vmatpush1.msra.mxu0 0.0
    %112 = vmatprep.subr.mxu0 0.0
    %113 = vmatpush1.msra.mxu0 0.0
    %114 = vmatprep.mubr.f32.mxu0 0.0
    %115 = vmatmul.mubr.f32.gmra.mrb[0].mxu0 %v39
    %v116 = vpop.f32.mrb[0].mxu0
    %v117 = vadd.f32 0.0, %v116
    %v118 = vpop.f32.mrb[0].mxu0
    %119 = vmatprep.mubr.f32.mxu0 0.0
    %120 = vmatmul.mubr.f32.gmra.mrb[0].mxu0 %v42
    %v121 = vpop.f32.mrb[0].mxu0
    %v122 = vadd.f32 0.0, %v121
    %v123 = vpop.f32.mrb[0].mxu0
    %124 = vmatprep.mubr.f32.mxu0 0.0
    %125 = vmatmul.mubr.f32.gmra.mrb[0].mxu0 %v45
    %v126 = vpop.f32.mrb[0].mxu0
    %v127 = vadd.f32 0.0, %v126
    %v128 = vpop.f32.mrb[0].mxu0
    %129 = vmatprep.mubr.f32.mxu0 0.0
    %130 = vmatmul.mubr.f32.gmra.mrb[0].mxu0 %v48
    %v131 = vpop.f32.mrb[0].mxu0
    %v132 = vadd.f32 0.0, %v131
    %v133 = vpop.f32.mrb[0].mxu0
    %134 = vdwg.mxu0
    %v136 = vsel %vm37, %v15, 0
    %v139 = vsel %vm37, %v16, 0
    %v142 = vsel %vm37, %v17, 0
    %v145 = vsel %vm37, %v18, 0
    %v148 = vsel %vm37, %v19, 0
    %v151 = vsel %vm37, %v20, 0
    %v154 = vsel %vm37, %v21, 0
    %v157 = vsel %vm37, %v22, 0
    %v160 = vsel %vm37, %v23, 0
    %v163 = vsel %vm37, %v24, 0
    %v166 = vsel %vm37, %v25, 0
    %v169 = vsel %vm37, %v26, 0
    %v172 = vsel %vm37, %v27, 0
    %v175 = vsel %vm37, %v28, 0
    %v178 = vsel %vm37, %v29, 0
    %v181 = vsel %vm37, %v30, 0
    %183 = vmatprep.subr.mxu0 0.0
    %184 = vmatpush1.msra.mxu0 %v117
    %185 = vmatprep.subr.mxu0 0.0
    %186 = vmatpush1.msra.mxu0 %v122
    %187 = vmatprep.subr.mxu0 0.0
    %188 = vmatpush1.msra.mxu0 0.0
    %189 = vmatprep.subr.mxu0 0.0
    %190 = vmatpush1.msra.mxu0 0.0
    %191 = vmatprep.subr.mxu0 0.0
    %192 = vmatpush1.msra.mxu0 0.0
    %193 = vmatprep.subr.mxu0 0.0
    %194 = vmatpush1.msra.mxu0 0.0
    %195 = vmatprep.subr.mxu0 0.0
    %196 = vmatpush1.msra.mxu0 0.0
    %197 = vmatprep.subr.mxu0 0.0
    %198 = vmatpush1.msra.mxu0 0.0
    %199 = vmatprep.subr.mxu0 0.0
    %200 = vmatpush1.msra.mxu0 0.0
    %201 = vmatprep.subr.mxu0 0.0
    %202 = vmatpush1.msra.mxu0 0.0
    %203 = vmatprep.subr.mxu0 0.0
    %204 = vmatpush1.msra.mxu0 0.0
    %205 = vmatprep.subr.mxu0 0.0
    %206 = vmatpush1.msra.mxu0 0.0
    %207 = vmatprep.subr.mxu0 0.0
    %208 = vmatpush1.msra.mxu0 0.0
    %209 = vmatprep.subr.mxu0 0.0
    %210 = vmatpush1.msra.mxu0 0.0
    %211 = vmatprep.subr.mxu0 0.0
    %212 = vmatpush1.msra.mxu0 0.0
    %213 = vmatprep.subr.mxu0 0.0
    %214 = vmatpush1.msra.mxu0 0.0
    %215 = vmatprep.subr.mxu0 0.0
    %216 = vmatpush1.msra.mxu0 0.0
    %217 = vmatprep.subr.mxu0 0.0
    %218 = vmatpush1.msra.mxu0 0.0
    %219 = vmatprep.subr.mxu0 0.0
    %220 = vmatpush1.msra.mxu0 0.0
    %221 = vmatprep.subr.mxu0 0.0
    %222 = vmatpush1.msra.mxu0 0.0
    %223 = vmatprep.subr.mxu0 0.0
    %224 = vmatpush1.msra.mxu0 0.0
    %225 = vmatprep.subr.mxu0 0.0
    %226 = vmatpush1.msra.mxu0 0.0
    %227 = vmatprep.subr.mxu0 0.0
    %228 = vmatpush1.msra.mxu0 0.0
    %229 = vmatprep.subr.mxu0 0.0
    %230 = vmatpush1.msra.mxu0 0.0
    %231 = vmatprep.subr.mxu0 0.0
    %232 = vmatpush1.msra.mxu0 0.0
    %233 = vmatprep.subr.mxu0 0.0
    %234 = vmatpush1.msra.mxu0 0.0
    %235 = vmatprep.subr.mxu0 0.0
    %236 = vmatpush1.msra.mxu0 0.0
    %237 = vmatprep.subr.mxu0 0.0
    %238 = vmatpush1.msra.mxu0 0.0
    %239 = vmatprep.subr.mxu0 0.0
    %240 = vmatpush1.msra.mxu0 0.0
    %241 = vmatprep.subr.mxu0 0.0
    %242 = vmatpush1.msra.mxu0 0.0
    %243 = vmatprep.subr.mxu0 0.0
    %244 = vmatpush1.msra.mxu0 0.0
    %245 = vmatprep.subr.mxu0 0.0
    %246 = vmatpush1.msra.mxu0 0.0
    %247 = vmatprep.mubr.f32.mxu0 0.0
    %248 = vmatmul.mubr.f32.gmra.mrb[0].mxu0 %v136
    %v249 = vpop.f32.mrb[0].mxu0
    %v250 = vadd.f32 0.0, %v249
    %v251 = vpop.f32.mrb[0].mxu0
    %252 = vmatprep.mubr.f32.mxu0 0.0
    %253 = vmatmul.mubr.f32.gmra.mrb[0].mxu0 %v139
    %v254 = vpop.f32.mrb[0].mxu0
    %v255 = vadd.f32 0.0, %v254
    %v256 = vpop.f32.mrb[0].mxu0
    %257 = vmatprep.mubr.f32.mxu0 0.0
    %258 = vmatmul.mubr.f32.gmra.mrb[0].mxu0 %v142
    %v259 = vpop.f32.mrb[0].mxu0
    %v260 = vadd.f32 0.0, %v259
    %v261 = vpop.f32.mrb[0].mxu0
    %262 = vmatprep.mubr.f32.mxu0 0.0
    %263 = vmatmul.mubr.f32.gmra.mrb[0].mxu0 %v145
    %v264 = vpop.f32.mrb[0].mxu0
    %v265 = vadd.f32 0.0, %v264
    %v266 = vpop.f32.mrb[0].mxu0
    %267 = vmatprep.mubr.f32.mxu0 0.0
    %268 = vmatmul.mubr.f32.gmra.mrb[0].mxu0 %v148
    %v269 = vpop.f32.mrb[0].mxu0
    %v270 = vadd.f32 0.0, %v269
    %v271 = vpop.f32.mrb[0].mxu0
    %272 = vmatprep.mubr.f32.mxu0 0.0
    %273 = vmatmul.mubr.f32.gmra.mrb[0].mxu0 %v151
    %v274 = vpop.f32.mrb[0].mxu0
    %v275 = vadd.f32 0.0, %v274
    %v276 = vpop.f32.mrb[0].mxu0
    %277 = vmatprep.mubr.f32.mxu0 0.0
    %278 = vmatmul.mubr.f32.gmra.mrb[0].mxu0 %v154
    %v279 = vpop.f32.mrb[0].mxu0
    %v280 = vadd.f32 0.0, %v279
    %v281 = vpop.f32.mrb[0].mxu0
    %282 = vmatprep.mubr.f32.mxu0 0.0
    %283 = vmatmul.mubr.f32.gmra.mrb[0].mxu0 %v157
    %v284 = vpop.f32.mrb[0].mxu0
    %v285 = vadd.f32 0.0, %v284
    %v286 = vpop.f32.mrb[0].mxu0
    %287 = vmatprep.mubr.f32.mxu0 0.0
    %288 = vmatmul.mubr.f32.gmra.mrb[0].mxu0 %v160
    %v289 = vpop.f32.mrb[0].mxu0
    %v290 = vadd.f32 0.0, %v289
    %v291 = vpop.f32.mrb[0].mxu0
    %292 = vmatprep.mubr.f32.mxu0 0.0
    %293 = vmatmul.mubr.f32.gmra.mrb[0].mxu0 %v163
    %v294 = vpop.f32.mrb[0].mxu0
    %v295 = vadd.f32 0.0, %v294
    %v296 = vpop.f32.mrb[0].mxu0
    %297 = vmatprep.mubr.f32.mxu0 0.0
    %298 = vmatmul.mubr.f32.gmra.mrb[0].mxu0 %v166
    %v299 = vpop.f32.mrb[0].mxu0
    %v300 = vadd.f32 0.0, %v299
    %v301 = vpop.f32.mrb[0].mxu0
    %302 = vmatprep.mubr.f32.mxu0 0.0
    %303 = vmatmul.mubr.f32.gmra.mrb[0].mxu0 %v169
    %v304 = vpop.f32.mrb[0].mxu0
    %v305 = vadd.f32 0.0, %v304
    %v306 = vpop.f32.mrb[0].mxu0
    %307 = vmatprep.mubr.f32.mxu0 0.0
    %308 = vmatmul.mubr.f32.gmra.mrb[0].mxu0 %v172
    %v309 = vpop.f32.mrb[0].mxu0
    %v310 = vadd.f32 0.0, %v309
    %v311 = vpop.f32.mrb[0].mxu0
    %312 = vmatprep.mubr.f32.mxu0 0.0
    %313 = vmatmul.mubr.f32.gmra.mrb[0].mxu0 %v175
    %v314 = vpop.f32.mrb[0].mxu0
    %v315 = vadd.f32 0.0, %v314
    %v316 = vpop.f32.mrb[0].mxu0
    %317 = vmatprep.mubr.f32.mxu0 0.0
    %318 = vmatmul.mubr.f32.gmra.mrb[0].mxu0 %v178
    %v319 = vpop.f32.mrb[0].mxu0
    %v320 = vadd.f32 0.0, %v319
    %v321 = vpop.f32.mrb[0].mxu0
    %322 = vmatprep.mubr.f32.mxu0 0.0
    %323 = vmatmul.mubr.f32.gmra.mrb[0].mxu0 %v181
    %v324 = vpop.f32.mrb[0].mxu0
    %v325 = vadd.f32 0.0, %v324
    %v326 = vpop.f32.mrb[0].mxu0
    %327 = vdwg.mxu0
    %328 = vst [vmem:[#allocation2] sm:$0xff] %v250
    %329 = vst [vmem:[#allocation2 + $0x8] sm:$0xff] %v255
    %330 = vst [vmem:[#allocation2 + $0x10] sm:$0xff] %v260
    %331 = vst [vmem:[#allocation2 + $0x18] sm:$0xff] %v265
    %332 = vst [vmem:[#allocation2 + $0x20] sm:$0xff] %v270
    %333 = vst [vmem:[#allocation2 + $0x28] sm:$0xff] %v275
    %334 = vst [vmem:[#allocation2 + $0x30] sm:$0xff] %v280
    %335 = vst [vmem:[#allocation2 + $0x38] sm:$0xff] %v285
    %336 = vst [vmem:[#allocation2 + $0x40] sm:$0xff] %v290
    %337 = vst [vmem:[#allocation2 + $0x48] sm:$0xff] %v295
    %338 = vst [vmem:[#allocation2 + $0x50] sm:$0xff] %v300
    %339 = vst [vmem:[#allocation2 + $0x58] sm:$0xff] %v305
    %340 = vst [vmem:[#allocation2 + $0x60] sm:$0xff] %v310
    %341 = vst [vmem:[#allocation2 + $0x68] sm:$0xff] %v315
    %342 = vst [vmem:[#allocation2 + $0x70] sm:$0xff] %v320
    %343 = vst [vmem:[#allocation2 + $0x78] sm:$0xff] %v325
    %344 = vmatprep.subr.mxu0 0.0
    %345 = vmatpush1.msra.mxu0 %v127
    %346 = vmatprep.subr.mxu0 0.0
    %347 = vmatpush1.msra.mxu0 %v132
    %348 = vmatprep.subr.mxu0 0.0
    %349 = vmatpush1.msra.mxu0 0.0
    %350 = vmatprep.subr.mxu0 0.0
    %351 = vmatpush1.msra.mxu0 0.0
    %352 = vmatprep.subr.mxu0 0.0
    %353 = vmatpush1.msra.mxu0 0.0
    %354 = vmatprep.subr.mxu0 0.0
    %355 = vmatpush1.msra.mxu0 0.0
    %356 = vmatprep.subr.mxu0 0.0
    %357 = vmatpush1.msra.mxu0 0.0
    %358 = vmatprep.subr.mxu0 0.0
    %359 = vmatpush1.msra.mxu0 0.0
    %360 = vmatprep.subr.mxu0 0.0
    %361 = vmatpush1.msra.mxu0 0.0
    %362 = vmatprep.subr.mxu0 0.0
    %363 = vmatpush1.msra.mxu0 0.0
    %364 = vmatprep.subr.mxu0 0.0
    %365 = vmatpush1.msra.mxu0 0.0
    %366 = vmatprep.subr.mxu0 0.0
    %367 = vmatpush1.msra.mxu0 0.0
    %368 = vmatprep.subr.mxu0 0.0
    %369 = vmatpush1.msra.mxu0 0.0
    %370 = vmatprep.subr.mxu0 0.0
    %371 = vmatpush1.msra.mxu0 0.0
    %372 = vmatprep.subr.mxu0 0.0
    %373 = vmatpush1.msra.mxu0 0.0
    %374 = vmatprep.subr.mxu0 0.0
    %375 = vmatpush1.msra.mxu0 0.0
    %376 = vmatprep.subr.mxu0 0.0
    %377 = vmatpush1.msra.mxu0 0.0
    %378 = vmatprep.subr.mxu0 0.0
    %379 = vmatpush1.msra.mxu0 0.0
    %380 = vmatprep.subr.mxu0 0.0
    %381 = vmatpush1.msra.mxu0 0.0
    %382 = vmatprep.subr.mxu0 0.0
    %383 = vmatpush1.msra.mxu0 0.0
    %384 = vmatprep.subr.mxu0 0.0
    %385 = vmatpush1.msra.mxu0 0.0
    %386 = vmatprep.subr.mxu0 0.0
    %387 = vmatpush1.msra.mxu0 0.0
    %388 = vmatprep.subr.mxu0 0.0
    %389 = vmatpush1.msra.mxu0 0.0
    %390 = vmatprep.subr.mxu0 0.0
    %391 = vmatpush1.msra.mxu0 0.0
    %392 = vmatprep.subr.mxu0 0.0
    %393 = vmatpush1.msra.mxu0 0.0
    %394 = vmatprep.subr.mxu0 0.0
    %395 = vmatpush1.msra.mxu0 0.0
    %396 = vmatprep.subr.mxu0 0.0
    %397 = vmatpush1.msra.mxu0 0.0
    %398 = vmatprep.subr.mxu0 0.0
    %399 = vmatpush1.msra.mxu0 0.0
    %400 = vmatprep.subr.mxu0 0.0
    %401 = vmatpush1.msra.mxu0 0.0
    %402 = vmatprep.subr.mxu0 0.0
    %403 = vmatpush1.msra.mxu0 0.0
    %404 = vmatprep.subr.mxu0 0.0
    %405 = vmatpush1.msra.mxu0 0.0
    %406 = vmatprep.subr.mxu0 0.0
    %407 = vmatpush1.msra.mxu0 0.0
    %408 = vmatprep.mubr.f32.mxu0 0.0
    %409 = vmatmul.mubr.f32.gmra.mrb[0].mxu0 %v136
    %v410 = vpop.f32.mrb[0].mxu0
    %v411 = vadd.f32 0.0, %v410
    %v412 = vpop.f32.mrb[0].mxu0
    %413 = vmatprep.mubr.f32.mxu0 0.0
    %414 = vmatmul.mubr.f32.gmra.mrb[0].mxu0 %v139
    %v415 = vpop.f32.mrb[0].mxu0
    %v416 = vadd.f32 0.0, %v415
    %v417 = vpop.f32.mrb[0].mxu0
    %418 = vmatprep.mubr.f32.mxu0 0.0
    %419 = vmatmul.mubr.f32.gmra.mrb[0].mxu0 %v142
    %v420 = vpop.f32.mrb[0].mxu0
    %v421 = vadd.f32 0.0, %v420
    %v422 = vpop.f32.mrb[0].mxu0
    %423 = vmatprep.mubr.f32.mxu0 0.0
    %424 = vmatmul.mubr.f32.gmra.mrb[0].mxu0 %v145
    %v425 = vpop.f32.mrb[0].mxu0
    %v426 = vadd.f32 0.0, %v425
    %v427 = vpop.f32.mrb[0].mxu0
    %428 = vmatprep.mubr.f32.mxu0 0.0
    %429 = vmatmul.mubr.f32.gmra.mrb[0].mxu0 %v148
    %v430 = vpop.f32.mrb[0].mxu0
    %v431 = vadd.f32 0.0, %v430
    %v432 = vpop.f32.mrb[0].mxu0
    %433 = vmatprep.mubr.f32.mxu0 0.0
    %434 = vmatmul.mubr.f32.gmra.mrb[0].mxu0 %v151
    %v435 = vpop.f32.mrb[0].mxu0
    %v436 = vadd.f32 0.0, %v435
    %v437 = vpop.f32.mrb[0].mxu0
    %438 = vmatprep.mubr.f32.mxu0 0.0
    %439 = vmatmul.mubr.f32.gmra.mrb[0].mxu0 %v154
    %v440 = vpop.f32.mrb[0].mxu0
    %v441 = vadd.f32 0.0, %v440
    %v442 = vpop.f32.mrb[0].mxu0
    %443 = vmatprep.mubr.f32.mxu0 0.0
    %444 = vmatmul.mubr.f32.gmra.mrb[0].mxu0 %v157
    %v445 = vpop.f32.mrb[0].mxu0
    %v446 = vadd.f32 0.0, %v445
    %v447 = vpop.f32.mrb[0].mxu0
    %448 = vmatprep.mubr.f32.mxu0 0.0
    %449 = vmatmul.mubr.f32.gmra.mrb[0].mxu0 %v160
    %v450 = vpop.f32.mrb[0].mxu0
    %v451 = vadd.f32 0.0, %v450
    %v452 = vpop.f32.mrb[0].mxu0
    %453 = vmatprep.mubr.f32.mxu0 0.0
    %454 = vmatmul.mubr.f32.gmra.mrb[0].mxu0 %v163
    %v455 = vpop.f32.mrb[0].mxu0
    %v456 = vadd.f32 0.0, %v455
    %v457 = vpop.f32.mrb[0].mxu0
    %458 = vmatprep.mubr.f32.mxu0 0.0
    %459 = vmatmul.mubr.f32.gmra.mrb[0].mxu0 %v166
    %v460 = vpop.f32.mrb[0].mxu0
    %v461 = vadd.f32 0.0, %v460
    %v462 = vpop.f32.mrb[0].mxu0
    %463 = vmatprep.mubr.f32.mxu0 0.0
    %464 = vmatmul.mubr.f32.gmra.mrb[0].mxu0 %v169
    %v465 = vpop.f32.mrb[0].mxu0
    %v466 = vadd.f32 0.0, %v465
    %v467 = vpop.f32.mrb[0].mxu0
    %468 = vmatprep.mubr.f32.mxu0 0.0
    %469 = vmatmul.mubr.f32.gmra.mrb[0].mxu0 %v172
    %v470 = vpop.f32.mrb[0].mxu0
    %v471 = vadd.f32 0.0, %v470
    %v472 = vpop.f32.mrb[0].mxu0
    %473 = vmatprep.mubr.f32.mxu0 0.0
    %474 = vmatmul.mubr.f32.gmra.mrb[0].mxu0 %v175
    %v475 = vpop.f32.mrb[0].mxu0
    %v476 = vadd.f32 0.0, %v475
    %v477 = vpop.f32.mrb[0].mxu0
    %478 = vmatprep.mubr.f32.mxu0 0.0
    %479 = vmatmul.mubr.f32.gmra.mrb[0].mxu0 %v178
    %v480 = vpop.f32.mrb[0].mxu0
    %v481 = vadd.f32 0.0, %v480
    %v482 = vpop.f32.mrb[0].mxu0
    %483 = vmatprep.mubr.f32.mxu0 0.0
    %484 = vmatmul.mubr.f32.gmra.mrb[0].mxu0 %v181
    %v485 = vpop.f32.mrb[0].mxu0
    %v486 = vadd.f32 0.0, %v485
    %v487 = vpop.f32.mrb[0].mxu0
    %488 = vdwg.mxu0
    %s489 = scalar_lea.vmem [#allocation2], 128
    %490 = vst [vmem:[%s489] sm:$0xff] %v411
    %491 = vst [vmem:[%s489 + $0x8] sm:$0xff] %v416
    %492 = vst [vmem:[%s489 + $0x10] sm:$0xff] %v421
    %493 = vst [vmem:[%s489 + $0x18] sm:$0xff] %v426
    %494 = vst [vmem:[%s489 + $0x20] sm:$0xff] %v431
    %495 = vst [vmem:[%s489 + $0x28] sm:$0xff] %v436
    %496 = vst [vmem:[%s489 + $0x30] sm:$0xff] %v441
    %497 = vst [vmem:[%s489 + $0x38] sm:$0xff] %v446
    %498 = vst [vmem:[%s489 + $0x40] sm:$0xff] %v451
    %499 = vst [vmem:[%s489 + $0x48] sm:$0xff] %v456
    %500 = vst [vmem:[%s489 + $0x50] sm:$0xff] %v461
    %501 = vst [vmem:[%s489 + $0x58] sm:$0xff] %v466
    %502 = vst [vmem:[%s489 + $0x60] sm:$0xff] %v471
    %503 = vst [vmem:[%s489 + $0x68] sm:$0xff] %v476
    %504 = vst [vmem:[%s489 + $0x70] sm:$0xff] %v481
    %505 = vst [vmem:[%s489 + $0x78] sm:$0xff] %v486
    // Predicated region
    $region14: #{_lambda_.7} parent=1 // pred_check
      _
    $region15: #{_lambda_.7} parent=1 // pred_check_branch
      %507 = sbr.rel (0) target = $region17
    $region16: #{_lambda_.7} parent=1 // pred_region
      %s509 = ssub.s32 4096, 4096
      %510 = vsyncadd [#allocation3], %s509
      %s511 = sshll.u32 [#allocation2], 4
      %s512 = int_to_ptr.vmem [resolvable:$true] %s511
      %517 = dma.vmem_to_hbm [thread:$0]  %s512, 4096, %s3, [#allocation3], 128, 128, 8
    $region17: #{_lambda_.7} parent=1 // pred_fallthru
      _
    // Predicated region
    $region18: #{_lambda_.7} parent=1 // pred_check
      _
    $region19: #{_lambda_.7} parent=1 // pred_check_branch
      %519 = sbr.rel (0) target = $region21
    $region20: #{_lambda_.7} parent=1 // pred_region
      %520 = dma.done [#allocation3], 4096
    $region21: #{_lambda_.7} parent=1 // pred_fallthru
      _
    %521 = vsyncpa [#allocation3], 1

</llo_original>
